<compile_context>
chip_gen: v7x
topology: tpu7x:2x2x1
jax: 0.10.0
libtpu: 0.0.40
codegen_flags: <defaults>
</compile_context>

<pallas_src>
import functools

import jax
import jax.numpy as jnp
from jax.experimental import pallas as pl
from jax.experimental.pallas import tpu as pltpu


# ----------------------------------------------------------------------------
# Pallas kernel: full L-layer DCGRU encoder step for one batch tile
# ----------------------------------------------------------------------------
def _encoder_kernel(sup_ref, x_ref, h_ref, *refs, L, n_sup, K, U, N, TB):
    """Layouts (node-major; the batch tile is packed densely into lanes):
         sup_ref : (n_sup, N, N)            bf16 graph supports
         x_ref   : (1, N, TB*D0)            layer-0 inputs, lane = tb*D0 + d
         h_ref   : (L, 1, N, TB*U)          previous hidden, lane = tb*U + u
         params  : per layer
             wi  : (M, TB*D, 3*TB*U) bf16   fused input weights, cols [r|u|c]
             ws1 : (M, TB*U, 2*TB*U) bf16   gate weights (from h), cols [r|u]
             ws2 : (M, TB*U,   TB*U) bf16   candidate weights (from r*h)
             b1  : (1, 2*TB*U) f32, b2 : (1, TB*U) f32
         out_ref : (L, 1, N, TB*U)          new hidden state (all layers)
       All weight blocks are block-diagonal I_TB (x) W_m, so every gconv output
       lands directly in the hidden-state lane packing (no relayouts).
    """
    param_refs = refs[:5 * L]
    out_ref = refs[5 * L]
    TBU = TB * U

    def sigmoid(z):
        # exp + approximate reciprocal both use the EUP slot; error << bf16's.
        return pl.reciprocal(1.0 + jnp.exp(-z), approx=True)

    def gconv_chain(x_start, w_ref):
        """sum_m (P_m(S) @ x_start) @ W_m, with W_m = w_ref[m] block-diagonal.

        x_start: (N, TB*feat) f32.  Each diffusion output is fed to its
        accumulating weight matmul immediately, so only the two recurrence
        carries (x1, x0) stay live (no M-long list -> no vreg spills).
        NOTE: x1/x0 carry over across supports, matching the PyTorch module.
        """
        x0_bf = x_start.astype(jnp.bfloat16)
        acc = jnp.dot(x0_bf, w_ref[0], preferred_element_type=jnp.float32)
        if K > 0:
            x0 = x_start
            m = 1
            for s in range(n_sup):
                S = sup_ref[s]                                     # (N, N) bf16
                x1 = jnp.dot(S, x0.astype(jnp.bfloat16),
                             preferred_element_type=jnp.float32)
                acc = acc + jnp.dot(x1.astype(jnp.bfloat16), w_ref[m],
                                    preferred_element_type=jnp.float32)
                m += 1
                for _ in range(2, K + 1):
                    x2 = (2.0 * jnp.dot(S, x1.astype(jnp.bfloat16),
                                        preferred_element_type=jnp.float32)
                          - x0)
                    acc = acc + jnp.dot(x2.astype(jnp.bfloat16), w_ref[m],
                                        preferred_element_type=jnp.float32)
                    m += 1
                    x1, x0 = x2, x1   # intentional carry (matches torch code)
        return acc

    x_nc = x_ref[0]                                                # (N, TB*D0)
    for l in range(L):
        wi, ws1, ws2, b1, b2 = param_refs[5 * l:5 * (l + 1)]
        h_nc = h_ref[l, 0]                                         # (N, TB*U)

        # Input-feature chain: computed once, shared by gate + candidate gconvs.
        xin = gconv_chain(x_nc, wi)                                # (N, 3*TBU)

        # r / u gates: sigmoid(gconv(x, h; bias_start=1.0))
        gh = gconv_chain(h_nc, ws1)                                # (N, 2*TBU)
        ru = sigmoid(xin[:, :2 * TBU] + gh + b1[...])
        r, u = ru[:, :TBU], ru[:, TBU:]

        # candidate: tanh(gconv(x, r*h; bias_start=0.0))
        ch = gconv_chain(r * h_nc, ws2)                            # (N, TBU)
        c = jnp.tanh(xin[:, 2 * TBU:] + ch + b2[...])

        # f32 gating (v5e has no bf16 VPU; VPU is not the binding slot anyway).
        h_new = u * h_nc + (1.0 - u) * c                           # (N, TBU)
        out_ref[l, 0] = h_new
        x_nc = h_new                                               # next layer


# ----------------------------------------------------------------------------
# Host-side one-time weight packing (PyTorch layout -> kernel layout)
# ----------------------------------------------------------------------------
def pack_encoder_params(layer_params, *, U, input_dim, n_sup, K, batch_tile):
    """layer_params: per layer (W1 (F*M, 2U), b1 (2U,), W2 (F*M, U), b2 (U,)),
    PyTorch row index = f*M + m.  Returns the flat kernel params (5 per layer).
    Weights are constants across timesteps, so this runs once outside the step.
    """
    TB = batch_tile
    M = 1 + n_sup * K
    eye = jnp.eye(TB, dtype=jnp.float32)

    def kron_blockdiag(Wm):        # (M, fin, O) -> (M, TB*fin, TB*O) = I_TB (x) W_m
        Mm, fin, O = Wm.shape
        return jnp.einsum('ab,mfo->mafbo', eye, Wm).reshape(Mm, TB * fin, TB * O)

    flat = []
    D = input_dim
    for (W1, b1, W2, b2) in layer_params:
        F = D + U

        def split(W, D=D, F=F, M=M):
            Wr = W.reshape(F, M, W.shape[-1])             # row = f*M + m
            return (jnp.transpose(Wr[:D], (1, 0, 2)),     # (M, D, O) input rows
                    jnp.transpose(Wr[D:], (1, 0, 2)))     # (M, U, O) state rows

        W1i, W1s = split(W1)
        W2i, W2s = split(W2)
        # fused input weights: output column blocks [r | u | c], each TB*U wide,
        # within-block column = tb*U + unit (same packing as the hidden state).
        wi_all = jnp.concatenate([kron_blockdiag(W1i[..., :U]),
                                  kron_blockdiag(W1i[..., U:]),
                                  kron_blockdiag(W2i)], axis=-1).astype(jnp.bfloat16)
        ws1 = jnp.concatenate([kron_blockdiag(W1s[..., :U]),
                               kron_blockdiag(W1s[..., U:])], axis=-1).astype(jnp.bfloat16)
        ws2 = kron_blockdiag(W2s).astype(jnp.bfloat16)
        b1p = jnp.concatenate([jnp.tile(b1[:U], TB),
                               jnp.tile(b1[U:], TB)])[None, :].astype(jnp.float32)
        b2p = jnp.tile(b2, TB)[None, :].astype(jnp.float32)
        flat += [wi_all, ws1, ws2, b1p, b2p]
        D = U
    return flat


# ----------------------------------------------------------------------------
# Host glue: EncoderModel.forward (one pallas_call for the whole layer stack)
# ----------------------------------------------------------------------------
def encoder_forward(inputs, hidden_state, supports, packed_params, *,
                    N, U, input_dim, n_sup, K, batch_tile):
    assert len(packed_params) % 5 == 0
    L = len(packed_params) // 5
    B = inputs.shape[0]
    D0 = input_dim
    TB = batch_tile
    assert B % TB == 0
    G = B // TB

    # Node-major activation layout: x[g, n, tb*D0 + d], h[l, g, n, tb*U + u].
    # (For multi-timestep use, keep h in this layout / bf16 between calls to
    #  avoid the transpose + f32 HBM round trip each step.)
    x_t = (inputs.reshape(G, TB, N, D0).transpose(0, 2, 1, 3)
           .reshape(G, N, TB * D0))
    h_t = (hidden_state.reshape(L, G, TB, N, U).transpose(0, 1, 3, 2, 4)
           .reshape(L, G, N, TB * U))
    sup_bf16 = supports.astype(jnp.bfloat16)

    kernel = functools.partial(_encoder_kernel, L=L, n_sup=n_sup, K=K, U=U,
                               N=N, TB=TB)

    def full(a):  # whole-array block, constant across the grid
        return pl.BlockSpec(a.shape, lambda g, nd=a.ndim: (0,) * nd)

    in_specs = [full(sup_bf16),
                pl.BlockSpec((1, N, TB * D0), lambda g: (g, 0, 0)),
                pl.BlockSpec((L, 1, N, TB * U), lambda g: (0, g, 0, 0))]
    in_specs += [full(p) for p in packed_params]
    out_spec = pl.BlockSpec((L, 1, N, TB * U), lambda g: (0, g, 0, 0))

    # Scoped-VMEM request sized from the actual footprint (v7x only has 64 MiB).
    def nbytes(a):
        return int(a.size) * a.dtype.itemsize
    footprint = (nbytes(sup_bf16) + sum(nbytes(p) for p in packed_params)
                 + N * TB * D0 * 4 + 2 * L * N * TB * U * 4)
    vmem_limit = int(min(64 << 20, max(16 << 20, 4 * footprint)))

    out = pl.pallas_call(
        kernel,
        out_shape=jax.ShapeDtypeStruct((L, G, N, TB * U), jnp.float32),
        grid=(G,),
        in_specs=in_specs,
        out_specs=out_spec,
        compiler_params=pltpu.CompilerParams(
            dimension_semantics=("parallel",),   # batch tiles -> both TCs on v7x
            vmem_limit_bytes=vmem_limit),
    )(sup_bf16, x_t, h_t, *packed_params)

    # Back to the PyTorch (L, B, N*U) flattened layout.
    h_new = (out.reshape(L, G, N, TB, U).transpose(0, 1, 3, 2, 4)
             .reshape(L, B, N * U))
    return h_new[-1], h_new


# ----------------------------------------------------------------------------
# Deterministic parameter construction (PyTorch LayerParams layout per cell)
# ----------------------------------------------------------------------------
def init_layer_params(key, D, U, M):
    F = D + U
    k1, k2 = jax.random.split(key)

    def xavier(k, rows, cols):  # xavier_normal_: std = sqrt(2/(fan_in+fan_out))
        std = (2.0 / (rows + cols)) ** 0.5
        return std * jax.random.normal(k, (rows, cols), jnp.float32)

    W1 = xavier(k1, F * M, 2 * U)            # gate gconv weights   (bias_start=1.0)
    W2 = xavier(k2, F * M, U)                # candidate gconv      (bias_start=0.0)
    b1 = jnp.ones((2 * U,), jnp.float32)
    b2 = jnp.zeros((U,), jnp.float32)
    return W1, b1, W2, b2


# ----------------------------------------------------------------------------
# Pure-JAX reference (line-by-line port of the PyTorch forward) for validation
# ----------------------------------------------------------------------------
def ref_gconv(inputs, state, supports, W, b, N, K):
    B = inputs.shape[0]
    x = jnp.concatenate([inputs.reshape(B, N, -1), state.reshape(B, N, -1)], axis=2)
    input_size = x.shape[2]
    x0 = x.transpose(1, 2, 0).reshape(N, input_size * B)
    xs = [x0]
    if K > 0:
        for S in supports:
            x1 = S @ x0
            xs.append(x1)
            for _ in range(2, K + 1):
                x2 = 2.0 * (S @ x1) - x0
                xs.append(x2)
                x1, x0 = x2, x1          # carries across supports, like the module
    M = len(xs)
    xcat = (jnp.stack(xs, 0).reshape(M, N, input_size, B)
            .transpose(3, 1, 2, 0).reshape(B * N, input_size * M))
    out = xcat @ W + b
    return out.reshape(B, N * W.shape[1])


def ref_cell(inputs, hx, supports, W1, b1, W2, b2, N, U, K):
    value = jax.nn.sigmoid(ref_gconv(inputs, hx, supports, W1, b1, N, K))
    value = value.reshape(-1, N, 2 * U)
    r = value[..., :U].reshape(-1, N * U)
    u = value[..., U:].reshape(-1, N * U)
    c = jnp.tanh(ref_gconv(inputs, r * hx, supports, W2, b2, N, K))
    return u * hx + (1.0 - u) * c


# ----------------------------------------------------------------------------
if __name__ == "__main__":
    # arg dict analog: rnn_units=32, max_diffusion_step=2, num_rnn_layers=2, input_dim=4
    B, N, input_dim, U, K, n_sup, L = 8, 16, 4, 32, 2, 2, 2
    TB = 4                # TB*U = 128 -> lane-dense blocks; grid G = B//TB = 2
                          # (use TB=B / G=1 on single-TensorCore v5e/v6e)
    M = 1 + n_sup * K     # num_matrices

    key = jax.random.PRNGKey(0)
    k_sup, k_in, k_h, k_p = jax.random.split(key, 4)

    # dense stand-ins for the sparse random-walk transition matrices (supports)
    A = jax.random.uniform(k_sup, (n_sup, N, N), jnp.float32)
    supports = A / jnp.sum(A, axis=-1, keepdims=True)

    inputs = jax.random.normal(k_in, (B, N * input_dim), jnp.float32)
    # tanh-squashed so the hidden state has GRU-typical magnitude
    hidden = jnp.tanh(jax.random.normal(k_h, (L, B, N * U), jnp.float32))

    layer_params = []
    pkeys = jax.random.split(k_p, L)
    D = input_dim
    for l in range(L):
        layer_params.append(init_layer_params(pkeys[l], D, U, M))
        D = U                                # deeper layers take rnn_units-wide input

    # pack weights once (constants across timesteps), outside the jitted step
    packed = pack_encoder_params(layer_params, U=U, input_dim=input_dim,
                                 n_sup=n_sup, K=K, batch_tile=TB)

    fwd = jax.jit(functools.partial(
        encoder_forward, N=N, U=U, input_dim=input_dim,
        n_sup=n_sup, K=K, batch_tile=TB))
    output, new_hidden = fwd(inputs, hidden, supports, packed)
    output = jax.block_until_ready(output)
    new_hidden = jax.block_until_ready(new_hidden)

    # validate against the pure-JAX reference of the PyTorch forward
    sup_list = [supports[s] for s in range(n_sup)]
    ref_x = inputs
    ref_h = []
    for l in range(L):
        W1, b1, W2, b2 = layer_params[l]
        nh = ref_cell(ref_x, hidden[l], sup_list, W1, b1, W2, b2, N, U, K)
        ref_h.append(nh)
        ref_x = nh
    ref_hidden = jnp.stack(ref_h)

    assert output.shape == (B, N * U) and new_hidden.shape == (L, B, N * U)
    assert jnp.allclose(output, ref_x, atol=2e-2, rtol=2e-2)
    assert jnp.allclose(new_hidden, ref_hidden, atol=2e-2, rtol=2e-2)
    print("KERNEL_OK")
</pallas_src>

<mosaic_0001>
module attributes {stable_mosaic.version = 11 : i64} {
  func.func @_encoder_kernel(%arg0: i32, %arg1: memref<2x16x16xbf16, #tpu.memory_space<vmem>>, %arg2: memref<1x16x16xf32, #tpu.memory_space<vmem>>, %arg3: memref<2x1x16x128xf32, #tpu.memory_space<vmem>>, %arg4: memref<5x16x384xbf16, #tpu.memory_space<vmem>>, %arg5: memref<5x128x256xbf16, #tpu.memory_space<vmem>>, %arg6: memref<5x128x128xbf16, #tpu.memory_space<vmem>>, %arg7: memref<1x256xf32, #tpu.memory_space<vmem>>, %arg8: memref<1x128xf32, #tpu.memory_space<vmem>>, %arg9: memref<5x128x384xbf16, #tpu.memory_space<vmem>>, %arg10: memref<5x128x256xbf16, #tpu.memory_space<vmem>>, %arg11: memref<5x128x128xbf16, #tpu.memory_space<vmem>>, %arg12: memref<1x256xf32, #tpu.memory_space<vmem>>, %arg13: memref<1x128xf32, #tpu.memory_space<vmem>>, %arg14: memref<2x1x16x128xf32, #tpu.memory_space<vmem>>) attributes {dimension_semantics = [#tpu.dimension_semantics<parallel>], iteration_bounds = array<i64: 2>, scalar_prefetch = 0 : i64, scratch_operands = 0 : i64, tpu.core_type = #tpu.core_type<tc>, window_params = [{pipeline_mode = #tpu.pipeline_mode<synchronous>, transform_indices = @transform_0, window_bounds = array<i64: 2, 16, 16>}, {transform_indices = @transform_1, window_bounds = array<i64: 1, 16, 16>}, {transform_indices = @transform_2, window_bounds = array<i64: 2, 1, 16, 128>}, {pipeline_mode = #tpu.pipeline_mode<synchronous>, transform_indices = @transform_3, window_bounds = array<i64: 5, 16, 384>}, {pipeline_mode = #tpu.pipeline_mode<synchronous>, transform_indices = @transform_4, window_bounds = array<i64: 5, 128, 256>}, {pipeline_mode = #tpu.pipeline_mode<synchronous>, transform_indices = @transform_5, window_bounds = array<i64: 5, 128, 128>}, {pipeline_mode = #tpu.pipeline_mode<synchronous>, transform_indices = @transform_6, window_bounds = array<i64: 1, 256>}, {pipeline_mode = #tpu.pipeline_mode<synchronous>, transform_indices = @transform_7, window_bounds = array<i64: 1, 128>}, {pipeline_mode = #tpu.pipeline_mode<synchronous>, transform_indices = @transform_8, window_bounds = array<i64: 5, 128, 384>}, {pipeline_mode = #tpu.pipeline_mode<synchronous>, transform_indices = @transform_9, window_bounds = array<i64: 5, 128, 256>}, {pipeline_mode = #tpu.pipeline_mode<synchronous>, transform_indices = @transform_10, window_bounds = array<i64: 5, 128, 128>}, {pipeline_mode = #tpu.pipeline_mode<synchronous>, transform_indices = @transform_11, window_bounds = array<i64: 1, 256>}, {pipeline_mode = #tpu.pipeline_mode<synchronous>, transform_indices = @transform_12, window_bounds = array<i64: 1, 128>}, {transform_indices = @transform_13, window_bounds = array<i64: 2, 1, 16, 128>}]} {
    %c0 = arith.constant 0 : index
    %c0_0 = arith.constant 0 : index
    %c0_1 = arith.constant 0 : index
    %0 = vector.load %arg2[%c0, %c0_0, %c0_1] : memref<1x16x16xf32, #tpu.memory_space<vmem>>, vector<1x16x16xf32>
    %1 = vector.shape_cast %0 : vector<1x16x16xf32> to vector<16x16xf32>
    %c0_2 = arith.constant 0 : index
    %c0_3 = arith.constant 0 : index
    %c0_4 = arith.constant 0 : index
    %c0_5 = arith.constant 0 : index
    %2 = vector.load %arg3[%c0_2, %c0_3, %c0_4, %c0_5] : memref<2x1x16x128xf32, #tpu.memory_space<vmem>>, vector<1x1x16x128xf32>
    %3 = vector.shape_cast %2 : vector<1x1x16x128xf32> to vector<16x128xf32>
    %4 = arith.truncf %1 : vector<16x16xf32> to vector<16x16xbf16>
    %c0_6 = arith.constant 0 : index
    %c0_7 = arith.constant 0 : index
    %c0_8 = arith.constant 0 : index
    %5 = vector.load %arg4[%c0_6, %c0_7, %c0_8] : memref<5x16x384xbf16, #tpu.memory_space<vmem>>, vector<1x16x384xbf16>
    %6 = vector.shape_cast %5 : vector<1x16x384xbf16> to vector<16x384xbf16>
    %cst = arith.constant dense<0.000000e+00> : vector<16x384xf32>
    %7 = tpu.matmul %4, %6, %cst {dimension_numbers = #tpu.dot_dimension_numbers<[1], [0], [0], [1], [0, 0, 1, 1], [], []>} : vector<16x16xbf16>, vector<16x384xbf16>, vector<16x384xf32> -> vector<16x384xf32>
    %c0_9 = arith.constant 0 : index
    %c0_10 = arith.constant 0 : index
    %c0_11 = arith.constant 0 : index
    %8 = vector.load %arg1[%c0_9, %c0_10, %c0_11] : memref<2x16x16xbf16, #tpu.memory_space<vmem>>, vector<1x16x16xbf16>
    %9 = vector.shape_cast %8 : vector<1x16x16xbf16> to vector<16x16xbf16>
    %10 = arith.truncf %1 : vector<16x16xf32> to vector<16x16xbf16>
    %cst_12 = arith.constant dense<0.000000e+00> : vector<16x16xf32>
    %11 = tpu.matmul %9, %10, %cst_12 {dimension_numbers = #tpu.dot_dimension_numbers<[1], [0], [0], [1], [0, 0, 1, 1], [], []>} : vector<16x16xbf16>, vector<16x16xbf16>, vector<16x16xf32> -> vector<16x16xf32>
    %12 = arith.truncf %11 : vector<16x16xf32> to vector<16x16xbf16>
    %c1 = arith.constant 1 : index
    %c0_13 = arith.constant 0 : index
    %c0_14 = arith.constant 0 : index
    %13 = vector.load %arg4[%c1, %c0_13, %c0_14] : memref<5x16x384xbf16, #tpu.memory_space<vmem>>, vector<1x16x384xbf16>
    %14 = vector.shape_cast %13 : vector<1x16x384xbf16> to vector<16x384xbf16>
    %cst_15 = arith.constant dense<0.000000e+00> : vector<16x384xf32>
    %15 = tpu.matmul %12, %14, %cst_15 {dimension_numbers = #tpu.dot_dimension_numbers<[1], [0], [0], [1], [0, 0, 1, 1], [], []>} : vector<16x16xbf16>, vector<16x384xbf16>, vector<16x384xf32> -> vector<16x384xf32>
    %16 = arith.addf %7, %15 : vector<16x384xf32>
    %17 = arith.truncf %11 : vector<16x16xf32> to vector<16x16xbf16>
    %cst_16 = arith.constant dense<0.000000e+00> : vector<16x16xf32>
    %18 = tpu.matmul %9, %17, %cst_16 {dimension_numbers = #tpu.dot_dimension_numbers<[1], [0], [0], [1], [0, 0, 1, 1], [], []>} : vector<16x16xbf16>, vector<16x16xbf16>, vector<16x16xf32> -> vector<16x16xf32>
    %cst_17 = arith.constant 2.000000e+00 : f32
    %19 = vector.broadcast %cst_17 : f32 to vector<16x16xf32>
    %20 = arith.mulf %19, %18 : vector<16x16xf32>
    %21 = arith.subf %20, %1 : vector<16x16xf32>
    %22 = arith.truncf %21 : vector<16x16xf32> to vector<16x16xbf16>
    %c2 = arith.constant 2 : index
    %c0_18 = arith.constant 0 : index
    %c0_19 = arith.constant 0 : index
    %23 = vector.load %arg4[%c2, %c0_18, %c0_19] : memref<5x16x384xbf16, #tpu.memory_space<vmem>>, vector<1x16x384xbf16>
    %24 = vector.shape_cast %23 : vector<1x16x384xbf16> to vector<16x384xbf16>
    %cst_20 = arith.constant dense<0.000000e+00> : vector<16x384xf32>
    %25 = tpu.matmul %22, %24, %cst_20 {dimension_numbers = #tpu.dot_dimension_numbers<[1], [0], [0], [1], [0, 0, 1, 1], [], []>} : vector<16x16xbf16>, vector<16x384xbf16>, vector<16x384xf32> -> vector<16x384xf32>
    %26 = arith.addf %16, %25 : vector<16x384xf32>
    %c1_21 = arith.constant 1 : index
    %c0_22 = arith.constant 0 : index
    %c0_23 = arith.constant 0 : index
    %27 = vector.load %arg1[%c1_21, %c0_22, %c0_23] : memref<2x16x16xbf16, #tpu.memory_space<vmem>>, vector<1x16x16xbf16>
    %28 = vector.shape_cast %27 : vector<1x16x16xbf16> to vector<16x16xbf16>
    %29 = arith.truncf %11 : vector<16x16xf32> to vector<16x16xbf16>
    %cst_24 = arith.constant dense<0.000000e+00> : vector<16x16xf32>
    %30 = tpu.matmul %28, %29, %cst_24 {dimension_numbers = #tpu.dot_dimension_numbers<[1], [0], [0], [1], [0, 0, 1, 1], [], []>} : vector<16x16xbf16>, vector<16x16xbf16>, vector<16x16xf32> -> vector<16x16xf32>
    %31 = arith.truncf %30 : vector<16x16xf32> to vector<16x16xbf16>
    %c3 = arith.constant 3 : index
    %c0_25 = arith.constant 0 : index
    %c0_26 = arith.constant 0 : index
    %32 = vector.load %arg4[%c3, %c0_25, %c0_26] : memref<5x16x384xbf16, #tpu.memory_space<vmem>>, vector<1x16x384xbf16>
    %33 = vector.shape_cast %32 : vector<1x16x384xbf16> to vector<16x384xbf16>
    %cst_27 = arith.constant dense<0.000000e+00> : vector<16x384xf32>
    %34 = tpu.matmul %31, %33, %cst_27 {dimension_numbers = #tpu.dot_dimension_numbers<[1], [0], [0], [1], [0, 0, 1, 1], [], []>} : vector<16x16xbf16>, vector<16x384xbf16>, vector<16x384xf32> -> vector<16x384xf32>
    %35 = arith.addf %26, %34 : vector<16x384xf32>
    %36 = arith.truncf %30 : vector<16x16xf32> to vector<16x16xbf16>
    %cst_28 = arith.constant dense<0.000000e+00> : vector<16x16xf32>
    %37 = tpu.matmul %28, %36, %cst_28 {dimension_numbers = #tpu.dot_dimension_numbers<[1], [0], [0], [1], [0, 0, 1, 1], [], []>} : vector<16x16xbf16>, vector<16x16xbf16>, vector<16x16xf32> -> vector<16x16xf32>
    %cst_29 = arith.constant 2.000000e+00 : f32
    %38 = vector.broadcast %cst_29 : f32 to vector<16x16xf32>
    %39 = arith.mulf %38, %37 : vector<16x16xf32>
    %40 = arith.subf %39, %11 : vector<16x16xf32>
    %41 = arith.truncf %40 : vector<16x16xf32> to vector<16x16xbf16>
    %c4 = arith.constant 4 : index
    %c0_30 = arith.constant 0 : index
    %c0_31 = arith.constant 0 : index
    %42 = vector.load %arg4[%c4, %c0_30, %c0_31] : memref<5x16x384xbf16, #tpu.memory_space<vmem>>, vector<1x16x384xbf16>
    %43 = vector.shape_cast %42 : vector<1x16x384xbf16> to vector<16x384xbf16>
    %cst_32 = arith.constant dense<0.000000e+00> : vector<16x384xf32>
    %44 = tpu.matmul %41, %43, %cst_32 {dimension_numbers = #tpu.dot_dimension_numbers<[1], [0], [0], [1], [0, 0, 1, 1], [], []>} : vector<16x16xbf16>, vector<16x384xbf16>, vector<16x384xf32> -> vector<16x384xf32>
    %45 = arith.addf %35, %44 : vector<16x384xf32>
    %46 = arith.truncf %3 : vector<16x128xf32> to vector<16x128xbf16>
    %c0_33 = arith.constant 0 : index
    %c0_34 = arith.constant 0 : index
    %c0_35 = arith.constant 0 : index
    %47 = vector.load %arg5[%c0_33, %c0_34, %c0_35] : memref<5x128x256xbf16, #tpu.memory_space<vmem>>, vector<1x128x256xbf16>
    %48 = vector.shape_cast %47 : vector<1x128x256xbf16> to vector<128x256xbf16>
    %cst_36 = arith.constant dense<0.000000e+00> : vector<16x256xf32>
    %49 = tpu.matmul %46, %48, %cst_36 {dimension_numbers = #tpu.dot_dimension_numbers<[1], [0], [0], [1], [0, 0, 1, 1], [], []>} : vector<16x128xbf16>, vector<128x256xbf16>, vector<16x256xf32> -> vector<16x256xf32>
    %c0_37 = arith.constant 0 : index
    %c0_38 = arith.constant 0 : index
    %c0_39 = arith.constant 0 : index
    %50 = vector.load %arg1[%c0_37, %c0_38, %c0_39] : memref<2x16x16xbf16, #tpu.memory_space<vmem>>, vector<1x16x16xbf16>
    %51 = vector.shape_cast %50 : vector<1x16x16xbf16> to vector<16x16xbf16>
    %52 = arith.truncf %3 : vector<16x128xf32> to vector<16x128xbf16>
    %cst_40 = arith.constant dense<0.000000e+00> : vector<16x128xf32>
    %53 = tpu.matmul %51, %52, %cst_40 {dimension_numbers = #tpu.dot_dimension_numbers<[1], [0], [0], [1], [0, 0, 1, 1], [], []>} : vector<16x16xbf16>, vector<16x128xbf16>, vector<16x128xf32> -> vector<16x128xf32>
    %54 = arith.truncf %53 : vector<16x128xf32> to vector<16x128xbf16>
    %c1_41 = arith.constant 1 : index
    %c0_42 = arith.constant 0 : index
    %c0_43 = arith.constant 0 : index
    %55 = vector.load %arg5[%c1_41, %c0_42, %c0_43] : memref<5x128x256xbf16, #tpu.memory_space<vmem>>, vector<1x128x256xbf16>
    %56 = vector.shape_cast %55 : vector<1x128x256xbf16> to vector<128x256xbf16>
    %cst_44 = arith.constant dense<0.000000e+00> : vector<16x256xf32>
    %57 = tpu.matmul %54, %56, %cst_44 {dimension_numbers = #tpu.dot_dimension_numbers<[1], [0], [0], [1], [0, 0, 1, 1], [], []>} : vector<16x128xbf16>, vector<128x256xbf16>, vector<16x256xf32> -> vector<16x256xf32>
    %58 = arith.addf %49, %57 : vector<16x256xf32>
    %59 = arith.truncf %53 : vector<16x128xf32> to vector<16x128xbf16>
    %cst_45 = arith.constant dense<0.000000e+00> : vector<16x128xf32>
    %60 = tpu.matmul %51, %59, %cst_45 {dimension_numbers = #tpu.dot_dimension_numbers<[1], [0], [0], [1], [0, 0, 1, 1], [], []>} : vector<16x16xbf16>, vector<16x128xbf16>, vector<16x128xf32> -> vector<16x128xf32>
    %cst_46 = arith.constant 2.000000e+00 : f32
    %61 = vector.broadcast %cst_46 : f32 to vector<16x128xf32>
    %62 = arith.mulf %61, %60 : vector<16x128xf32>
    %63 = arith.subf %62, %3 : vector<16x128xf32>
    %64 = arith.truncf %63 : vector<16x128xf32> to vector<16x128xbf16>
    %c2_47 = arith.constant 2 : index
    %c0_48 = arith.constant 0 : index
    %c0_49 = arith.constant 0 : index
    %65 = vector.load %arg5[%c2_47, %c0_48, %c0_49] : memref<5x128x256xbf16, #tpu.memory_space<vmem>>, vector<1x128x256xbf16>
    %66 = vector.shape_cast %65 : vector<1x128x256xbf16> to vector<128x256xbf16>
    %cst_50 = arith.constant dense<0.000000e+00> : vector<16x256xf32>
    %67 = tpu.matmul %64, %66, %cst_50 {dimension_numbers = #tpu.dot_dimension_numbers<[1], [0], [0], [1], [0, 0, 1, 1], [], []>} : vector<16x128xbf16>, vector<128x256xbf16>, vector<16x256xf32> -> vector<16x256xf32>
    %68 = arith.addf %58, %67 : vector<16x256xf32>
    %c1_51 = arith.constant 1 : index
    %c0_52 = arith.constant 0 : index
    %c0_53 = arith.constant 0 : index
    %69 = vector.load %arg1[%c1_51, %c0_52, %c0_53] : memref<2x16x16xbf16, #tpu.memory_space<vmem>>, vector<1x16x16xbf16>
    %70 = vector.shape_cast %69 : vector<1x16x16xbf16> to vector<16x16xbf16>
    %71 = arith.truncf %53 : vector<16x128xf32> to vector<16x128xbf16>
    %cst_54 = arith.constant dense<0.000000e+00> : vector<16x128xf32>
    %72 = tpu.matmul %70, %71, %cst_54 {dimension_numbers = #tpu.dot_dimension_numbers<[1], [0], [0], [1], [0, 0, 1, 1], [], []>} : vector<16x16xbf16>, vector<16x128xbf16>, vector<16x128xf32> -> vector<16x128xf32>
    %73 = arith.truncf %72 : vector<16x128xf32> to vector<16x128xbf16>
    %c3_55 = arith.constant 3 : index
    %c0_56 = arith.constant 0 : index
    %c0_57 = arith.constant 0 : index
    %74 = vector.load %arg5[%c3_55, %c0_56, %c0_57] : memref<5x128x256xbf16, #tpu.memory_space<vmem>>, vector<1x128x256xbf16>
    %75 = vector.shape_cast %74 : vector<1x128x256xbf16> to vector<128x256xbf16>
    %cst_58 = arith.constant dense<0.000000e+00> : vector<16x256xf32>
    %76 = tpu.matmul %73, %75, %cst_58 {dimension_numbers = #tpu.dot_dimension_numbers<[1], [0], [0], [1], [0, 0, 1, 1], [], []>} : vector<16x128xbf16>, vector<128x256xbf16>, vector<16x256xf32> -> vector<16x256xf32>
    %77 = arith.addf %68, %76 : vector<16x256xf32>
    %78 = arith.truncf %72 : vector<16x128xf32> to vector<16x128xbf16>
    %cst_59 = arith.constant dense<0.000000e+00> : vector<16x128xf32>
    %79 = tpu.matmul %70, %78, %cst_59 {dimension_numbers = #tpu.dot_dimension_numbers<[1], [0], [0], [1], [0, 0, 1, 1], [], []>} : vector<16x16xbf16>, vector<16x128xbf16>, vector<16x128xf32> -> vector<16x128xf32>
    %cst_60 = arith.constant 2.000000e+00 : f32
    %80 = vector.broadcast %cst_60 : f32 to vector<16x128xf32>
    %81 = arith.mulf %80, %79 : vector<16x128xf32>
    %82 = arith.subf %81, %53 : vector<16x128xf32>
    %83 = arith.truncf %82 : vector<16x128xf32> to vector<16x128xbf16>
    %c4_61 = arith.constant 4 : index
    %c0_62 = arith.constant 0 : index
    %c0_63 = arith.constant 0 : index
    %84 = vector.load %arg5[%c4_61, %c0_62, %c0_63] : memref<5x128x256xbf16, #tpu.memory_space<vmem>>, vector<1x128x256xbf16>
    %85 = vector.shape_cast %84 : vector<1x128x256xbf16> to vector<128x256xbf16>
    %cst_64 = arith.constant dense<0.000000e+00> : vector<16x256xf32>
    %86 = tpu.matmul %83, %85, %cst_64 {dimension_numbers = #tpu.dot_dimension_numbers<[1], [0], [0], [1], [0, 0, 1, 1], [], []>} : vector<16x128xbf16>, vector<128x256xbf16>, vector<16x256xf32> -> vector<16x256xf32>
    %87 = arith.addf %77, %86 : vector<16x256xf32>
    %88 = vector.extract_strided_slice %45 {offsets = [0, 0], sizes = [16, 256], strides = [1, 1]} : vector<16x384xf32> to vector<16x256xf32>
    %89 = arith.addf %88, %87 : vector<16x256xf32>
    %c0_65 = arith.constant 0 : index
    %c0_66 = arith.constant 0 : index
    %90 = vector.load %arg7[%c0_65, %c0_66] : memref<1x256xf32, #tpu.memory_space<vmem>>, vector<1x256xf32>
    %91 = vector.broadcast %90 : vector<1x256xf32> to vector<16x256xf32>
    %92 = arith.addf %89, %91 : vector<16x256xf32>
    %cst_67 = arith.constant 0.000000e+00 : f32
    %93 = vector.broadcast %cst_67 : f32 to vector<16x256xf32>
    %94 = arith.subf %93, %92 : vector<16x256xf32>
    %95 = math.exp %94 : vector<16x256xf32>
    %cst_68 = arith.constant 1.000000e+00 : f32
    %96 = vector.broadcast %cst_68 : f32 to vector<16x256xf32>
    %97 = arith.addf %96, %95 : vector<16x256xf32>
    %98 = tpu.reciprocal %97 {approx = true} : vector<16x256xf32> -> vector<16x256xf32>
    %99 = vector.extract_strided_slice %98 {offsets = [0, 0], sizes = [16, 128], strides = [1, 1]} : vector<16x256xf32> to vector<16x128xf32>
    %100 = vector.extract_strided_slice %98 {offsets = [0, 128], sizes = [16, 128], strides = [1, 1]} : vector<16x256xf32> to vector<16x128xf32>
    %101 = arith.mulf %99, %3 : vector<16x128xf32>
    %102 = arith.truncf %101 : vector<16x128xf32> to vector<16x128xbf16>
    %c0_69 = arith.constant 0 : index
    %c0_70 = arith.constant 0 : index
    %c0_71 = arith.constant 0 : index
    %103 = vector.load %arg6[%c0_69, %c0_70, %c0_71] : memref<5x128x128xbf16, #tpu.memory_space<vmem>>, vector<1x128x128xbf16>
    %104 = vector.shape_cast %103 : vector<1x128x128xbf16> to vector<128x128xbf16>
    %cst_72 = arith.constant dense<0.000000e+00> : vector<16x128xf32>
    %105 = tpu.matmul %102, %104, %cst_72 {dimension_numbers = #tpu.dot_dimension_numbers<[1], [0], [0], [1], [0, 0, 1, 1], [], []>} : vector<16x128xbf16>, vector<128x128xbf16>, vector<16x128xf32> -> vector<16x128xf32>
    %c0_73 = arith.constant 0 : index
    %c0_74 = arith.constant 0 : index
    %c0_75 = arith.constant 0 : index
    %106 = vector.load %arg1[%c0_73, %c0_74, %c0_75] : memref<2x16x16xbf16, #tpu.memory_space<vmem>>, vector<1x16x16xbf16>
    %107 = vector.shape_cast %106 : vector<1x16x16xbf16> to vector<16x16xbf16>
    %108 = arith.truncf %101 : vector<16x128xf32> to vector<16x128xbf16>
    %cst_76 = arith.constant dense<0.000000e+00> : vector<16x128xf32>
    %109 = tpu.matmul %107, %108, %cst_76 {dimension_numbers = #tpu.dot_dimension_numbers<[1], [0], [0], [1], [0, 0, 1, 1], [], []>} : vector<16x16xbf16>, vector<16x128xbf16>, vector<16x128xf32> -> vector<16x128xf32>
    %110 = arith.truncf %109 : vector<16x128xf32> to vector<16x128xbf16>
    %c1_77 = arith.constant 1 : index
    %c0_78 = arith.constant 0 : index
    %c0_79 = arith.constant 0 : index
    %111 = vector.load %arg6[%c1_77, %c0_78, %c0_79] : memref<5x128x128xbf16, #tpu.memory_space<vmem>>, vector<1x128x128xbf16>
    %112 = vector.shape_cast %111 : vector<1x128x128xbf16> to vector<128x128xbf16>
    %cst_80 = arith.constant dense<0.000000e+00> : vector<16x128xf32>
    %113 = tpu.matmul %110, %112, %cst_80 {dimension_numbers = #tpu.dot_dimension_numbers<[1], [0], [0], [1], [0, 0, 1, 1], [], []>} : vector<16x128xbf16>, vector<128x128xbf16>, vector<16x128xf32> -> vector<16x128xf32>
    %114 = arith.addf %105, %113 : vector<16x128xf32>
    %115 = arith.truncf %109 : vector<16x128xf32> to vector<16x128xbf16>
    %cst_81 = arith.constant dense<0.000000e+00> : vector<16x128xf32>
    %116 = tpu.matmul %107, %115, %cst_81 {dimension_numbers = #tpu.dot_dimension_numbers<[1], [0], [0], [1], [0, 0, 1, 1], [], []>} : vector<16x16xbf16>, vector<16x128xbf16>, vector<16x128xf32> -> vector<16x128xf32>
    %cst_82 = arith.constant 2.000000e+00 : f32
    %117 = vector.broadcast %cst_82 : f32 to vector<16x128xf32>
    %118 = arith.mulf %117, %116 : vector<16x128xf32>
    %119 = arith.subf %118, %101 : vector<16x128xf32>
    %120 = arith.truncf %119 : vector<16x128xf32> to vector<16x128xbf16>
    %c2_83 = arith.constant 2 : index
    %c0_84 = arith.constant 0 : index
    %c0_85 = arith.constant 0 : index
    %121 = vector.load %arg6[%c2_83, %c0_84, %c0_85] : memref<5x128x128xbf16, #tpu.memory_space<vmem>>, vector<1x128x128xbf16>
    %122 = vector.shape_cast %121 : vector<1x128x128xbf16> to vector<128x128xbf16>
    %cst_86 = arith.constant dense<0.000000e+00> : vector<16x128xf32>
    %123 = tpu.matmul %120, %122, %cst_86 {dimension_numbers = #tpu.dot_dimension_numbers<[1], [0], [0], [1], [0, 0, 1, 1], [], []>} : vector<16x128xbf16>, vector<128x128xbf16>, vector<16x128xf32> -> vector<16x128xf32>
    %124 = arith.addf %114, %123 : vector<16x128xf32>
    %c1_87 = arith.constant 1 : index
    %c0_88 = arith.constant 0 : index
    %c0_89 = arith.constant 0 : index
    %125 = vector.load %arg1[%c1_87, %c0_88, %c0_89] : memref<2x16x16xbf16, #tpu.memory_space<vmem>>, vector<1x16x16xbf16>
    %126 = vector.shape_cast %125 : vector<1x16x16xbf16> to vector<16x16xbf16>
    %127 = arith.truncf %109 : vector<16x128xf32> to vector<16x128xbf16>
    %cst_90 = arith.constant dense<0.000000e+00> : vector<16x128xf32>
    %128 = tpu.matmul %126, %127, %cst_90 {dimension_numbers = #tpu.dot_dimension_numbers<[1], [0], [0], [1], [0, 0, 1, 1], [], []>} : vector<16x16xbf16>, vector<16x128xbf16>, vector<16x128xf32> -> vector<16x128xf32>
    %129 = arith.truncf %128 : vector<16x128xf32> to vector<16x128xbf16>
    %c3_91 = arith.constant 3 : index
    %c0_92 = arith.constant 0 : index
    %c0_93 = arith.constant 0 : index
    %130 = vector.load %arg6[%c3_91, %c0_92, %c0_93] : memref<5x128x128xbf16, #tpu.memory_space<vmem>>, vector<1x128x128xbf16>
    %131 = vector.shape_cast %130 : vector<1x128x128xbf16> to vector<128x128xbf16>
    %cst_94 = arith.constant dense<0.000000e+00> : vector<16x128xf32>
    %132 = tpu.matmul %129, %131, %cst_94 {dimension_numbers = #tpu.dot_dimension_numbers<[1], [0], [0], [1], [0, 0, 1, 1], [], []>} : vector<16x128xbf16>, vector<128x128xbf16>, vector<16x128xf32> -> vector<16x128xf32>
    %133 = arith.addf %124, %132 : vector<16x128xf32>
    %134 = arith.truncf %128 : vector<16x128xf32> to vector<16x128xbf16>
    %cst_95 = arith.constant dense<0.000000e+00> : vector<16x128xf32>
    %135 = tpu.matmul %126, %134, %cst_95 {dimension_numbers = #tpu.dot_dimension_numbers<[1], [0], [0], [1], [0, 0, 1, 1], [], []>} : vector<16x16xbf16>, vector<16x128xbf16>, vector<16x128xf32> -> vector<16x128xf32>
    %cst_96 = arith.constant 2.000000e+00 : f32
    %136 = vector.broadcast %cst_96 : f32 to vector<16x128xf32>
    %137 = arith.mulf %136, %135 : vector<16x128xf32>
    %138 = arith.subf %137, %109 : vector<16x128xf32>
    %139 = arith.truncf %138 : vector<16x128xf32> to vector<16x128xbf16>
    %c4_97 = arith.constant 4 : index
    %c0_98 = arith.constant 0 : index
    %c0_99 = arith.constant 0 : index
    %140 = vector.load %arg6[%c4_97, %c0_98, %c0_99] : memref<5x128x128xbf16, #tpu.memory_space<vmem>>, vector<1x128x128xbf16>
    %141 = vector.shape_cast %140 : vector<1x128x128xbf16> to vector<128x128xbf16>
    %cst_100 = arith.constant dense<0.000000e+00> : vector<16x128xf32>
    %142 = tpu.matmul %139, %141, %cst_100 {dimension_numbers = #tpu.dot_dimension_numbers<[1], [0], [0], [1], [0, 0, 1, 1], [], []>} : vector<16x128xbf16>, vector<128x128xbf16>, vector<16x128xf32> -> vector<16x128xf32>
    %143 = arith.addf %133, %142 : vector<16x128xf32>
    %144 = vector.extract_strided_slice %45 {offsets = [0, 256], sizes = [16, 128], strides = [1, 1]} : vector<16x384xf32> to vector<16x128xf32>
    %145 = arith.addf %144, %143 : vector<16x128xf32>
    %c0_101 = arith.constant 0 : index
    %c0_102 = arith.constant 0 : index
    %146 = vector.load %arg8[%c0_101, %c0_102] : memref<1x128xf32, #tpu.memory_space<vmem>>, vector<1x128xf32>
    %147 = vector.broadcast %146 : vector<1x128xf32> to vector<16x128xf32>
    %148 = arith.addf %145, %147 : vector<16x128xf32>
    %149 = math.tanh %148 : vector<16x128xf32>
    %150 = arith.mulf %100, %3 : vector<16x128xf32>
    %cst_103 = arith.constant 1.000000e+00 : f32
    %151 = vector.broadcast %cst_103 : f32 to vector<16x128xf32>
    %152 = arith.subf %151, %100 : vector<16x128xf32>
    %153 = arith.mulf %152, %149 : vector<16x128xf32>
    %154 = arith.addf %150, %153 : vector<16x128xf32>
    %c0_104 = arith.constant 0 : index
    %c0_105 = arith.constant 0 : index
    %c0_106 = arith.constant 0 : index
    %c0_107 = arith.constant 0 : index
    %155 = vector.load %arg14[%c0_104, %c0_105, %c0_106, %c0_107] : memref<2x1x16x128xf32, #tpu.memory_space<vmem>>, vector<1x1x16x128xf32>
    %156 = vector.shape_cast %155 : vector<1x1x16x128xf32> to vector<16x128xf32>
    %157 = vector.shape_cast %154 : vector<16x128xf32> to vector<1x1x16x128xf32>
    tpu.vector_store %arg14[%c0_104, %c0_105, %c0_106, %c0_107], %157 {strides = array<i32>} : memref<2x1x16x128xf32, #tpu.memory_space<vmem>>, vector<1x1x16x128xf32>,
    %c1_108 = arith.constant 1 : index
    %c0_109 = arith.constant 0 : index
    %c0_110 = arith.constant 0 : index
    %c0_111 = arith.constant 0 : index
    %158 = vector.load %arg3[%c1_108, %c0_109, %c0_110, %c0_111] : memref<2x1x16x128xf32, #tpu.memory_space<vmem>>, vector<1x1x16x128xf32>
    %159 = vector.shape_cast %158 : vector<1x1x16x128xf32> to vector<16x128xf32>
    %160 = arith.truncf %154 : vector<16x128xf32> to vector<16x128xbf16>
    %c0_112 = arith.constant 0 : index
    %c0_113 = arith.constant 0 : index
    %c0_114 = arith.constant 0 : index
    %161 = vector.load %arg9[%c0_112, %c0_113, %c0_114] : memref<5x128x384xbf16, #tpu.memory_space<vmem>>, vector<1x128x384xbf16>
    %162 = vector.shape_cast %161 : vector<1x128x384xbf16> to vector<128x384xbf16>
    %cst_115 = arith.constant dense<0.000000e+00> : vector<16x384xf32>
    %163 = tpu.matmul %160, %162, %cst_115 {dimension_numbers = #tpu.dot_dimension_numbers<[1], [0], [0], [1], [0, 0, 1, 1], [], []>} : vector<16x128xbf16>, vector<128x384xbf16>, vector<16x384xf32> -> vector<16x384xf32>
    %c0_116 = arith.constant 0 : index
    %c0_117 = arith.constant 0 : index
    %c0_118 = arith.constant 0 : index
    %164 = vector.load %arg1[%c0_116, %c0_117, %c0_118] : memref<2x16x16xbf16, #tpu.memory_space<vmem>>, vector<1x16x16xbf16>
    %165 = vector.shape_cast %164 : vector<1x16x16xbf16> to vector<16x16xbf16>
    %166 = arith.truncf %154 : vector<16x128xf32> to vector<16x128xbf16>
    %cst_119 = arith.constant dense<0.000000e+00> : vector<16x128xf32>
    %167 = tpu.matmul %165, %166, %cst_119 {dimension_numbers = #tpu.dot_dimension_numbers<[1], [0], [0], [1], [0, 0, 1, 1], [], []>} : vector<16x16xbf16>, vector<16x128xbf16>, vector<16x128xf32> -> vector<16x128xf32>
    %168 = arith.truncf %167 : vector<16x128xf32> to vector<16x128xbf16>
    %c1_120 = arith.constant 1 : index
    %c0_121 = arith.constant 0 : index
    %c0_122 = arith.constant 0 : index
    %169 = vector.load %arg9[%c1_120, %c0_121, %c0_122] : memref<5x128x384xbf16, #tpu.memory_space<vmem>>, vector<1x128x384xbf16>
    %170 = vector.shape_cast %169 : vector<1x128x384xbf16> to vector<128x384xbf16>
    %cst_123 = arith.constant dense<0.000000e+00> : vector<16x384xf32>
    %171 = tpu.matmul %168, %170, %cst_123 {dimension_numbers = #tpu.dot_dimension_numbers<[1], [0], [0], [1], [0, 0, 1, 1], [], []>} : vector<16x128xbf16>, vector<128x384xbf16>, vector<16x384xf32> -> vector<16x384xf32>
    %172 = arith.addf %163, %171 : vector<16x384xf32>
    %173 = arith.truncf %167 : vector<16x128xf32> to vector<16x128xbf16>
    %cst_124 = arith.constant dense<0.000000e+00> : vector<16x128xf32>
    %174 = tpu.matmul %165, %173, %cst_124 {dimension_numbers = #tpu.dot_dimension_numbers<[1], [0], [0], [1], [0, 0, 1, 1], [], []>} : vector<16x16xbf16>, vector<16x128xbf16>, vector<16x128xf32> -> vector<16x128xf32>
    %cst_125 = arith.constant 2.000000e+00 : f32
    %175 = vector.broadcast %cst_125 : f32 to vector<16x128xf32>
    %176 = arith.mulf %175, %174 : vector<16x128xf32>
    %177 = arith.subf %176, %154 : vector<16x128xf32>
    %178 = arith.truncf %177 : vector<16x128xf32> to vector<16x128xbf16>
    %c2_126 = arith.constant 2 : index
    %c0_127 = arith.constant 0 : index
    %c0_128 = arith.constant 0 : index
    %179 = vector.load %arg9[%c2_126, %c0_127, %c0_128] : memref<5x128x384xbf16, #tpu.memory_space<vmem>>, vector<1x128x384xbf16>
    %180 = vector.shape_cast %179 : vector<1x128x384xbf16> to vector<128x384xbf16>
    %cst_129 = arith.constant dense<0.000000e+00> : vector<16x384xf32>
    %181 = tpu.matmul %178, %180, %cst_129 {dimension_numbers = #tpu.dot_dimension_numbers<[1], [0], [0], [1], [0, 0, 1, 1], [], []>} : vector<16x128xbf16>, vector<128x384xbf16>, vector<16x384xf32> -> vector<16x384xf32>
    %182 = arith.addf %172, %181 : vector<16x384xf32>
    %c1_130 = arith.constant 1 : index
    %c0_131 = arith.constant 0 : index
    %c0_132 = arith.constant 0 : index
    %183 = vector.load %arg1[%c1_130, %c0_131, %c0_132] : memref<2x16x16xbf16, #tpu.memory_space<vmem>>, vector<1x16x16xbf16>
    %184 = vector.shape_cast %183 : vector<1x16x16xbf16> to vector<16x16xbf16>
    %185 = arith.truncf %167 : vector<16x128xf32> to vector<16x128xbf16>
    %cst_133 = arith.constant dense<0.000000e+00> : vector<16x128xf32>
    %186 = tpu.matmul %184, %185, %cst_133 {dimension_numbers = #tpu.dot_dimension_numbers<[1], [0], [0], [1], [0, 0, 1, 1], [], []>} : vector<16x16xbf16>, vector<16x128xbf16>, vector<16x128xf32> -> vector<16x128xf32>
    %187 = arith.truncf %186 : vector<16x128xf32> to vector<16x128xbf16>
    %c3_134 = arith.constant 3 : index
    %c0_135 = arith.constant 0 : index
    %c0_136 = arith.constant 0 : index
    %188 = vector.load %arg9[%c3_134, %c0_135, %c0_136] : memref<5x128x384xbf16, #tpu.memory_space<vmem>>, vector<1x128x384xbf16>
    %189 = vector.shape_cast %188 : vector<1x128x384xbf16> to vector<128x384xbf16>
    %cst_137 = arith.constant dense<0.000000e+00> : vector<16x384xf32>
    %190 = tpu.matmul %187, %189, %cst_137 {dimension_numbers = #tpu.dot_dimension_numbers<[1], [0], [0], [1], [0, 0, 1, 1], [], []>} : vector<16x128xbf16>, vector<128x384xbf16>, vector<16x384xf32> -> vector<16x384xf32>
    %191 = arith.addf %182, %190 : vector<16x384xf32>
    %192 = arith.truncf %186 : vector<16x128xf32> to vector<16x128xbf16>
    %cst_138 = arith.constant dense<0.000000e+00> : vector<16x128xf32>
    %193 = tpu.matmul %184, %192, %cst_138 {dimension_numbers = #tpu.dot_dimension_numbers<[1], [0], [0], [1], [0, 0, 1, 1], [], []>} : vector<16x16xbf16>, vector<16x128xbf16>, vector<16x128xf32> -> vector<16x128xf32>
    %cst_139 = arith.constant 2.000000e+00 : f32
    %194 = vector.broadcast %cst_139 : f32 to vector<16x128xf32>
    %195 = arith.mulf %194, %193 : vector<16x128xf32>
    %196 = arith.subf %195, %167 : vector<16x128xf32>
    %197 = arith.truncf %196 : vector<16x128xf32> to vector<16x128xbf16>
    %c4_140 = arith.constant 4 : index
    %c0_141 = arith.constant 0 : index
    %c0_142 = arith.constant 0 : index
    %198 = vector.load %arg9[%c4_140, %c0_141, %c0_142] : memref<5x128x384xbf16, #tpu.memory_space<vmem>>, vector<1x128x384xbf16>
    %199 = vector.shape_cast %198 : vector<1x128x384xbf16> to vector<128x384xbf16>
    %cst_143 = arith.constant dense<0.000000e+00> : vector<16x384xf32>
    %200 = tpu.matmul %197, %199, %cst_143 {dimension_numbers = #tpu.dot_dimension_numbers<[1], [0], [0], [1], [0, 0, 1, 1], [], []>} : vector<16x128xbf16>, vector<128x384xbf16>, vector<16x384xf32> -> vector<16x384xf32>
    %201 = arith.addf %191, %200 : vector<16x384xf32>
    %202 = arith.truncf %159 : vector<16x128xf32> to vector<16x128xbf16>
    %c0_144 = arith.constant 0 : index
    %c0_145 = arith.constant 0 : index
    %c0_146 = arith.constant 0 : index
    %203 = vector.load %arg10[%c0_144, %c0_145, %c0_146] : memref<5x128x256xbf16, #tpu.memory_space<vmem>>, vector<1x128x256xbf16>
    %204 = vector.shape_cast %203 : vector<1x128x256xbf16> to vector<128x256xbf16>
    %cst_147 = arith.constant dense<0.000000e+00> : vector<16x256xf32>
    %205 = tpu.matmul %202, %204, %cst_147 {dimension_numbers = #tpu.dot_dimension_numbers<[1], [0], [0], [1], [0, 0, 1, 1], [], []>} : vector<16x128xbf16>, vector<128x256xbf16>, vector<16x256xf32> -> vector<16x256xf32>
    %c0_148 = arith.constant 0 : index
    %c0_149 = arith.constant 0 : index
    %c0_150 = arith.constant 0 : index
    %206 = vector.load %arg1[%c0_148, %c0_149, %c0_150] : memref<2x16x16xbf16, #tpu.memory_space<vmem>>, vector<1x16x16xbf16>
    %207 = vector.shape_cast %206 : vector<1x16x16xbf16> to vector<16x16xbf16>
    %208 = arith.truncf %159 : vector<16x128xf32> to vector<16x128xbf16>
    %cst_151 = arith.constant dense<0.000000e+00> : vector<16x128xf32>
    %209 = tpu.matmul %207, %208, %cst_151 {dimension_numbers = #tpu.dot_dimension_numbers<[1], [0], [0], [1], [0, 0, 1, 1], [], []>} : vector<16x16xbf16>, vector<16x128xbf16>, vector<16x128xf32> -> vector<16x128xf32>
    %210 = arith.truncf %209 : vector<16x128xf32> to vector<16x128xbf16>
    %c1_152 = arith.constant 1 : index
    %c0_153 = arith.constant 0 : index
    %c0_154 = arith.constant 0 : index
    %211 = vector.load %arg10[%c1_152, %c0_153, %c0_154] : memref<5x128x256xbf16, #tpu.memory_space<vmem>>, vector<1x128x256xbf16>
    %212 = vector.shape_cast %211 : vector<1x128x256xbf16> to vector<128x256xbf16>
    %cst_155 = arith.constant dense<0.000000e+00> : vector<16x256xf32>
    %213 = tpu.matmul %210, %212, %cst_155 {dimension_numbers = #tpu.dot_dimension_numbers<[1], [0], [0], [1], [0, 0, 1, 1], [], []>} : vector<16x128xbf16>, vector<128x256xbf16>, vector<16x256xf32> -> vector<16x256xf32>
    %214 = arith.addf %205, %213 : vector<16x256xf32>
    %215 = arith.truncf %209 : vector<16x128xf32> to vector<16x128xbf16>
    %cst_156 = arith.constant dense<0.000000e+00> : vector<16x128xf32>
    %216 = tpu.matmul %207, %215, %cst_156 {dimension_numbers = #tpu.dot_dimension_numbers<[1], [0], [0], [1], [0, 0, 1, 1], [], []>} : vector<16x16xbf16>, vector<16x128xbf16>, vector<16x128xf32> -> vector<16x128xf32>
    %cst_157 = arith.constant 2.000000e+00 : f32
    %217 = vector.broadcast %cst_157 : f32 to vector<16x128xf32>
    %218 = arith.mulf %217, %216 : vector<16x128xf32>
    %219 = arith.subf %218, %159 : vector<16x128xf32>
    %220 = arith.truncf %219 : vector<16x128xf32> to vector<16x128xbf16>
    %c2_158 = arith.constant 2 : index
    %c0_159 = arith.constant 0 : index
    %c0_160 = arith.constant 0 : index
    %221 = vector.load %arg10[%c2_158, %c0_159, %c0_160] : memref<5x128x256xbf16, #tpu.memory_space<vmem>>, vector<1x128x256xbf16>
    %222 = vector.shape_cast %221 : vector<1x128x256xbf16> to vector<128x256xbf16>
    %cst_161 = arith.constant dense<0.000000e+00> : vector<16x256xf32>
    %223 = tpu.matmul %220, %222, %cst_161 {dimension_numbers = #tpu.dot_dimension_numbers<[1], [0], [0], [1], [0, 0, 1, 1], [], []>} : vector<16x128xbf16>, vector<128x256xbf16>, vector<16x256xf32> -> vector<16x256xf32>
    %224 = arith.addf %214, %223 : vector<16x256xf32>
    %c1_162 = arith.constant 1 : index
    %c0_163 = arith.constant 0 : index
    %c0_164 = arith.constant 0 : index
    %225 = vector.load %arg1[%c1_162, %c0_163, %c0_164] : memref<2x16x16xbf16, #tpu.memory_space<vmem>>, vector<1x16x16xbf16>
    %226 = vector.shape_cast %225 : vector<1x16x16xbf16> to vector<16x16xbf16>
    %227 = arith.truncf %209 : vector<16x128xf32> to vector<16x128xbf16>
    %cst_165 = arith.constant dense<0.000000e+00> : vector<16x128xf32>
    %228 = tpu.matmul %226, %227, %cst_165 {dimension_numbers = #tpu.dot_dimension_numbers<[1], [0], [0], [1], [0, 0, 1, 1], [], []>} : vector<16x16xbf16>, vector<16x128xbf16>, vector<16x128xf32> -> vector<16x128xf32>
    %229 = arith.truncf %228 : vector<16x128xf32> to vector<16x128xbf16>
    %c3_166 = arith.constant 3 : index
    %c0_167 = arith.constant 0 : index
    %c0_168 = arith.constant 0 : index
    %230 = vector.load %arg10[%c3_166, %c0_167, %c0_168] : memref<5x128x256xbf16, #tpu.memory_space<vmem>>, vector<1x128x256xbf16>
    %231 = vector.shape_cast %230 : vector<1x128x256xbf16> to vector<128x256xbf16>
    %cst_169 = arith.constant dense<0.000000e+00> : vector<16x256xf32>
    %232 = tpu.matmul %229, %231, %cst_169 {dimension_numbers = #tpu.dot_dimension_numbers<[1], [0], [0], [1], [0, 0, 1, 1], [], []>} : vector<16x128xbf16>, vector<128x256xbf16>, vector<16x256xf32> -> vector<16x256xf32>
    %233 = arith.addf %224, %232 : vector<16x256xf32>
    %234 = arith.truncf %228 : vector<16x128xf32> to vector<16x128xbf16>
    %cst_170 = arith.constant dense<0.000000e+00> : vector<16x128xf32>
    %235 = tpu.matmul %226, %234, %cst_170 {dimension_numbers = #tpu.dot_dimension_numbers<[1], [0], [0], [1], [0, 0, 1, 1], [], []>} : vector<16x16xbf16>, vector<16x128xbf16>, vector<16x128xf32> -> vector<16x128xf32>
    %cst_171 = arith.constant 2.000000e+00 : f32
    %236 = vector.broadcast %cst_171 : f32 to vector<16x128xf32>
    %237 = arith.mulf %236, %235 : vector<16x128xf32>
    %238 = arith.subf %237, %209 : vector<16x128xf32>
    %239 = arith.truncf %238 : vector<16x128xf32> to vector<16x128xbf16>
    %c4_172 = arith.constant 4 : index
    %c0_173 = arith.constant 0 : index
    %c0_174 = arith.constant 0 : index
    %240 = vector.load %arg10[%c4_172, %c0_173, %c0_174] : memref<5x128x256xbf16, #tpu.memory_space<vmem>>, vector<1x128x256xbf16>
    %241 = vector.shape_cast %240 : vector<1x128x256xbf16> to vector<128x256xbf16>
    %cst_175 = arith.constant dense<0.000000e+00> : vector<16x256xf32>
    %242 = tpu.matmul %239, %241, %cst_175 {dimension_numbers = #tpu.dot_dimension_numbers<[1], [0], [0], [1], [0, 0, 1, 1], [], []>} : vector<16x128xbf16>, vector<128x256xbf16>, vector<16x256xf32> -> vector<16x256xf32>
    %243 = arith.addf %233, %242 : vector<16x256xf32>
    %244 = vector.extract_strided_slice %201 {offsets = [0, 0], sizes = [16, 256], strides = [1, 1]} : vector<16x384xf32> to vector<16x256xf32>
    %245 = arith.addf %244, %243 : vector<16x256xf32>
    %c0_176 = arith.constant 0 : index
    %c0_177 = arith.constant 0 : index
    %246 = vector.load %arg12[%c0_176, %c0_177] : memref<1x256xf32, #tpu.memory_space<vmem>>, vector<1x256xf32>
    %247 = vector.broadcast %246 : vector<1x256xf32> to vector<16x256xf32>
    %248 = arith.addf %245, %247 : vector<16x256xf32>
    %cst_178 = arith.constant 0.000000e+00 : f32
    %249 = vector.broadcast %cst_178 : f32 to vector<16x256xf32>
    %250 = arith.subf %249, %248 : vector<16x256xf32>
    %251 = math.exp %250 : vector<16x256xf32>
    %cst_179 = arith.constant 1.000000e+00 : f32
    %252 = vector.broadcast %cst_179 : f32 to vector<16x256xf32>
    %253 = arith.addf %252, %251 : vector<16x256xf32>
    %254 = tpu.reciprocal %253 {approx = true} : vector<16x256xf32> -> vector<16x256xf32>
    %255 = vector.extract_strided_slice %254 {offsets = [0, 0], sizes = [16, 128], strides = [1, 1]} : vector<16x256xf32> to vector<16x128xf32>
    %256 = vector.extract_strided_slice %254 {offsets = [0, 128], sizes = [16, 128], strides = [1, 1]} : vector<16x256xf32> to vector<16x128xf32>
    %257 = arith.mulf %255, %159 : vector<16x128xf32>
    %258 = arith.truncf %257 : vector<16x128xf32> to vector<16x128xbf16>
    %c0_180 = arith.constant 0 : index
    %c0_181 = arith.constant 0 : index
    %c0_182 = arith.constant 0 : index
    %259 = vector.load %arg11[%c0_180, %c0_181, %c0_182] : memref<5x128x128xbf16, #tpu.memory_space<vmem>>, vector<1x128x128xbf16>
    %260 = vector.shape_cast %259 : vector<1x128x128xbf16> to vector<128x128xbf16>
    %cst_183 = arith.constant dense<0.000000e+00> : vector<16x128xf32>
    %261 = tpu.matmul %258, %260, %cst_183 {dimension_numbers = #tpu.dot_dimension_numbers<[1], [0], [0], [1], [0, 0, 1, 1], [], []>} : vector<16x128xbf16>, vector<128x128xbf16>, vector<16x128xf32> -> vector<16x128xf32>
    %c0_184 = arith.constant 0 : index
    %c0_185 = arith.constant 0 : index
    %c0_186 = arith.constant 0 : index
    %262 = vector.load %arg1[%c0_184, %c0_185, %c0_186] : memref<2x16x16xbf16, #tpu.memory_space<vmem>>, vector<1x16x16xbf16>
    %263 = vector.shape_cast %262 : vector<1x16x16xbf16> to vector<16x16xbf16>
    %264 = arith.truncf %257 : vector<16x128xf32> to vector<16x128xbf16>
    %cst_187 = arith.constant dense<0.000000e+00> : vector<16x128xf32>
    %265 = tpu.matmul %263, %264, %cst_187 {dimension_numbers = #tpu.dot_dimension_numbers<[1], [0], [0], [1], [0, 0, 1, 1], [], []>} : vector<16x16xbf16>, vector<16x128xbf16>, vector<16x128xf32> -> vector<16x128xf32>
    %266 = arith.truncf %265 : vector<16x128xf32> to vector<16x128xbf16>
    %c1_188 = arith.constant 1 : index
    %c0_189 = arith.constant 0 : index
    %c0_190 = arith.constant 0 : index
    %267 = vector.load %arg11[%c1_188, %c0_189, %c0_190] : memref<5x128x128xbf16, #tpu.memory_space<vmem>>, vector<1x128x128xbf16>
    %268 = vector.shape_cast %267 : vector<1x128x128xbf16> to vector<128x128xbf16>
    %cst_191 = arith.constant dense<0.000000e+00> : vector<16x128xf32>
    %269 = tpu.matmul %266, %268, %cst_191 {dimension_numbers = #tpu.dot_dimension_numbers<[1], [0], [0], [1], [0, 0, 1, 1], [], []>} : vector<16x128xbf16>, vector<128x128xbf16>, vector<16x128xf32> -> vector<16x128xf32>
    %270 = arith.addf %261, %269 : vector<16x128xf32>
    %271 = arith.truncf %265 : vector<16x128xf32> to vector<16x128xbf16>
    %cst_192 = arith.constant dense<0.000000e+00> : vector<16x128xf32>
    %272 = tpu.matmul %263, %271, %cst_192 {dimension_numbers = #tpu.dot_dimension_numbers<[1], [0], [0], [1], [0, 0, 1, 1], [], []>} : vector<16x16xbf16>, vector<16x128xbf16>, vector<16x128xf32> -> vector<16x128xf32>
    %cst_193 = arith.constant 2.000000e+00 : f32
    %273 = vector.broadcast %cst_193 : f32 to vector<16x128xf32>
    %274 = arith.mulf %273, %272 : vector<16x128xf32>
    %275 = arith.subf %274, %257 : vector<16x128xf32>
    %276 = arith.truncf %275 : vector<16x128xf32> to vector<16x128xbf16>
    %c2_194 = arith.constant 2 : index
    %c0_195 = arith.constant 0 : index
    %c0_196 = arith.constant 0 : index
    %277 = vector.load %arg11[%c2_194, %c0_195, %c0_196] : memref<5x128x128xbf16, #tpu.memory_space<vmem>>, vector<1x128x128xbf16>
    %278 = vector.shape_cast %277 : vector<1x128x128xbf16> to vector<128x128xbf16>
    %cst_197 = arith.constant dense<0.000000e+00> : vector<16x128xf32>
    %279 = tpu.matmul %276, %278, %cst_197 {dimension_numbers = #tpu.dot_dimension_numbers<[1], [0], [0], [1], [0, 0, 1, 1], [], []>} : vector<16x128xbf16>, vector<128x128xbf16>, vector<16x128xf32> -> vector<16x128xf32>
    %280 = arith.addf %270, %279 : vector<16x128xf32>
    %c1_198 = arith.constant 1 : index
    %c0_199 = arith.constant 0 : index
    %c0_200 = arith.constant 0 : index
    %281 = vector.load %arg1[%c1_198, %c0_199, %c0_200] : memref<2x16x16xbf16, #tpu.memory_space<vmem>>, vector<1x16x16xbf16>
    %282 = vector.shape_cast %281 : vector<1x16x16xbf16> to vector<16x16xbf16>
    %283 = arith.truncf %265 : vector<16x128xf32> to vector<16x128xbf16>
    %cst_201 = arith.constant dense<0.000000e+00> : vector<16x128xf32>
    %284 = tpu.matmul %282, %283, %cst_201 {dimension_numbers = #tpu.dot_dimension_numbers<[1], [0], [0], [1], [0, 0, 1, 1], [], []>} : vector<16x16xbf16>, vector<16x128xbf16>, vector<16x128xf32> -> vector<16x128xf32>
    %285 = arith.truncf %284 : vector<16x128xf32> to vector<16x128xbf16>
    %c3_202 = arith.constant 3 : index
    %c0_203 = arith.constant 0 : index
    %c0_204 = arith.constant 0 : index
    %286 = vector.load %arg11[%c3_202, %c0_203, %c0_204] : memref<5x128x128xbf16, #tpu.memory_space<vmem>>, vector<1x128x128xbf16>
    %287 = vector.shape_cast %286 : vector<1x128x128xbf16> to vector<128x128xbf16>
    %cst_205 = arith.constant dense<0.000000e+00> : vector<16x128xf32>
    %288 = tpu.matmul %285, %287, %cst_205 {dimension_numbers = #tpu.dot_dimension_numbers<[1], [0], [0], [1], [0, 0, 1, 1], [], []>} : vector<16x128xbf16>, vector<128x128xbf16>, vector<16x128xf32> -> vector<16x128xf32>
    %289 = arith.addf %280, %288 : vector<16x128xf32>
    %290 = arith.truncf %284 : vector<16x128xf32> to vector<16x128xbf16>
    %cst_206 = arith.constant dense<0.000000e+00> : vector<16x128xf32>
    %291 = tpu.matmul %282, %290, %cst_206 {dimension_numbers = #tpu.dot_dimension_numbers<[1], [0], [0], [1], [0, 0, 1, 1], [], []>} : vector<16x16xbf16>, vector<16x128xbf16>, vector<16x128xf32> -> vector<16x128xf32>
    %cst_207 = arith.constant 2.000000e+00 : f32
    %292 = vector.broadcast %cst_207 : f32 to vector<16x128xf32>
    %293 = arith.mulf %292, %291 : vector<16x128xf32>
    %294 = arith.subf %293, %265 : vector<16x128xf32>
    %295 = arith.truncf %294 : vector<16x128xf32> to vector<16x128xbf16>
    %c4_208 = arith.constant 4 : index
    %c0_209 = arith.constant 0 : index
    %c0_210 = arith.constant 0 : index
    %296 = vector.load %arg11[%c4_208, %c0_209, %c0_210] : memref<5x128x128xbf16, #tpu.memory_space<vmem>>, vector<1x128x128xbf16>
    %297 = vector.shape_cast %296 : vector<1x128x128xbf16> to vector<128x128xbf16>
    %cst_211 = arith.constant dense<0.000000e+00> : vector<16x128xf32>
    %298 = tpu.matmul %295, %297, %cst_211 {dimension_numbers = #tpu.dot_dimension_numbers<[1], [0], [0], [1], [0, 0, 1, 1], [], []>} : vector<16x128xbf16>, vector<128x128xbf16>, vector<16x128xf32> -> vector<16x128xf32>
    %299 = arith.addf %289, %298 : vector<16x128xf32>
    %300 = vector.extract_strided_slice %201 {offsets = [0, 256], sizes = [16, 128], strides = [1, 1]} : vector<16x384xf32> to vector<16x128xf32>
    %301 = arith.addf %300, %299 : vector<16x128xf32>
    %c0_212 = arith.constant 0 : index
    %c0_213 = arith.constant 0 : index
    %302 = vector.load %arg13[%c0_212, %c0_213] : memref<1x128xf32, #tpu.memory_space<vmem>>, vector<1x128xf32>
    %303 = vector.broadcast %302 : vector<1x128xf32> to vector<16x128xf32>
    %304 = arith.addf %301, %303 : vector<16x128xf32>
    %305 = math.tanh %304 : vector<16x128xf32>
    %306 = arith.mulf %256, %159 : vector<16x128xf32>
    %cst_214 = arith.constant 1.000000e+00 : f32
    %307 = vector.broadcast %cst_214 : f32 to vector<16x128xf32>
    %308 = arith.subf %307, %256 : vector<16x128xf32>
    %309 = arith.mulf %308, %305 : vector<16x128xf32>
    %310 = arith.addf %306, %309 : vector<16x128xf32>
    %c1_215 = arith.constant 1 : index
    %c0_216 = arith.constant 0 : index
    %c0_217 = arith.constant 0 : index
    %c0_218 = arith.constant 0 : index
    %311 = vector.load %arg14[%c1_215, %c0_216, %c0_217, %c0_218] : memref<2x1x16x128xf32, #tpu.memory_space<vmem>>, vector<1x1x16x128xf32>
    %312 = vector.shape_cast %311 : vector<1x1x16x128xf32> to vector<16x128xf32>
    %313 = vector.shape_cast %310 : vector<16x128xf32> to vector<1x1x16x128xf32>
    tpu.vector_store %arg14[%c1_215, %c0_216, %c0_217, %c0_218], %313 {strides = array<i32>} : memref<2x1x16x128xf32, #tpu.memory_space<vmem>>, vector<1x1x16x128xf32>,
    return
  }
  func.func @transform_0(%arg0: i32) -> (i32, i32, i32) {
    %c0_i32 = arith.constant 0 : i32
    %c0_i32_0 = arith.constant 0 : i32
    %c0_i32_1 = arith.constant 0 : i32
    %c0_i32_2 = arith.constant 0 : i32
    return %c0_i32, %c0_i32_0, %c0_i32_1 : i32, i32, i32
  }
  func.func @transform_1(%arg0: i32) -> (i32, i32, i32) {
    %c0_i32 = arith.constant 0 : i32
    %c0_i32_0 = arith.constant 0 : i32
    %c0_i32_1 = arith.constant 0 : i32
    return %arg0, %c0_i32, %c0_i32_0 : i32, i32, i32
  }
  func.func @transform_2(%arg0: i32) -> (i32, i32, i32, i32) {
    %c0_i32 = arith.constant 0 : i32
    %c0_i32_0 = arith.constant 0 : i32
    %c0_i32_1 = arith.constant 0 : i32
    %c0_i32_2 = arith.constant 0 : i32
    return %c0_i32, %arg0, %c0_i32_0, %c0_i32_1 : i32, i32, i32, i32
  }
  func.func @transform_3(%arg0: i32) -> (i32, i32, i32) {
    %c0_i32 = arith.constant 0 : i32
    %c0_i32_0 = arith.constant 0 : i32
    %c0_i32_1 = arith.constant 0 : i32
    %c0_i32_2 = arith.constant 0 : i32
    return %c0_i32, %c0_i32_0, %c0_i32_1 : i32, i32, i32
  }
  func.func @transform_4(%arg0: i32) -> (i32, i32, i32) {
    %c0_i32 = arith.constant 0 : i32
    %c0_i32_0 = arith.constant 0 : i32
    %c0_i32_1 = arith.constant 0 : i32
    %c0_i32_2 = arith.constant 0 : i32
    return %c0_i32, %c0_i32_0, %c0_i32_1 : i32, i32, i32
  }
  func.func @transform_5(%arg0: i32) -> (i32, i32, i32) {
    %c0_i32 = arith.constant 0 : i32
    %c0_i32_0 = arith.constant 0 : i32
    %c0_i32_1 = arith.constant 0 : i32
    %c0_i32_2 = arith.constant 0 : i32
    return %c0_i32, %c0_i32_0, %c0_i32_1 : i32, i32, i32
  }
  func.func @transform_6(%arg0: i32) -> (i32, i32) {
    %c0_i32 = arith.constant 0 : i32
    %c0_i32_0 = arith.constant 0 : i32
    %c0_i32_1 = arith.constant 0 : i32
    return %c0_i32, %c0_i32_0 : i32, i32
  }
  func.func @transform_7(%arg0: i32) -> (i32, i32) {
    %c0_i32 = arith.constant 0 : i32
    %c0_i32_0 = arith.constant 0 : i32
    %c0_i32_1 = arith.constant 0 : i32
    return %c0_i32, %c0_i32_0 : i32, i32
  }
  func.func @transform_8(%arg0: i32) -> (i32, i32, i32) {
    %c0_i32 = arith.constant 0 : i32
    %c0_i32_0 = arith.constant 0 : i32
    %c0_i32_1 = arith.constant 0 : i32
    %c0_i32_2 = arith.constant 0 : i32
    return %c0_i32, %c0_i32_0, %c0_i32_1 : i32, i32, i32
  }
  func.func @transform_9(%arg0: i32) -> (i32, i32, i32) {
    %c0_i32 = arith.constant 0 : i32
    %c0_i32_0 = arith.constant 0 : i32
    %c0_i32_1 = arith.constant 0 : i32
    %c0_i32_2 = arith.constant 0 : i32
    return %c0_i32, %c0_i32_0, %c0_i32_1 : i32, i32, i32
  }
  func.func @transform_10(%arg0: i32) -> (i32, i32, i32) {
    %c0_i32 = arith.constant 0 : i32
    %c0_i32_0 = arith.constant 0 : i32
    %c0_i32_1 = arith.constant 0 : i32
    %c0_i32_2 = arith.constant 0 : i32
    return %c0_i32, %c0_i32_0, %c0_i32_1 : i32, i32, i32
  }
  func.func @transform_11(%arg0: i32) -> (i32, i32) {
    %c0_i32 = arith.constant 0 : i32
    %c0_i32_0 = arith.constant 0 : i32
    %c0_i32_1 = arith.constant 0 : i32
    return %c0_i32, %c0_i32_0 : i32, i32
  }
  func.func @transform_12(%arg0: i32) -> (i32, i32) {
    %c0_i32 = arith.constant 0 : i32
    %c0_i32_0 = arith.constant 0 : i32
    %c0_i32_1 = arith.constant 0 : i32
    return %c0_i32, %c0_i32_0 : i32, i32
  }
  func.func @transform_13(%arg0: i32) -> (i32, i32, i32, i32) {
    %c0_i32 = arith.constant 0 : i32
    %c0_i32_0 = arith.constant 0 : i32
    %c0_i32_1 = arith.constant 0 : i32
    %c0_i32_2 = arith.constant 0 : i32
    return %c0_i32, %arg0, %c0_i32_0, %c0_i32_1 : i32, i32, i32, i32
  }
}

</mosaic_0001>

<llo_original>
// kernel: encoder_forward.1
$region0: #{encoder_forward.1}
  #allocation0 [shape = 'u32[]', space=smem, size = 0x4, offset = 0x4, fixed_abs, tag = 'smem constant byte address 0x4 - core index']
  #allocation1 [shape = 'u32[144,128]{1,0:T(1,128)}', space=vmem, size = 0x12000, scoped, tag = 'internal scratch']
  %s0 = inlined_call_operand.vmem [shape: bf16[2,16,16], index: 0, kind: input, shape index: {}]
  %s1 = inlined_call_operand.vmem [shape: f32[2,16,16], index: 1, kind: input, shape index: {}]
  %s2 = inlined_call_operand.vmem [shape: f32[2,2,16,128], index: 2, kind: input, shape index: {}]
  %s3 = inlined_call_operand.vmem [shape: bf16[5,16,384], index: 3, kind: input, shape index: {}]
  %s4 = inlined_call_operand.hbm [shape: bf16[5,128,256], index: 4, kind: input, shape index: {}]
  %s5 = inlined_call_operand.vmem [shape: bf16[5,128,128], index: 5, kind: input, shape index: {}]
  %s6 = inlined_call_operand.vmem [shape: f32[1,256], index: 6, kind: input, shape index: {}]
  %s7 = inlined_call_operand.vmem [shape: f32[1,128], index: 7, kind: input, shape index: {}]
  %s8 = inlined_call_operand.vmem [shape: bf16[5,128,384], index: 8, kind: input, shape index: {}]
  %s9 = inlined_call_operand.hbm [shape: bf16[5,128,256], index: 9, kind: input, shape index: {}]
  %s10 = inlined_call_operand.hbm [shape: bf16[5,128,128], index: 10, kind: input, shape index: {}]
  %s11 = inlined_call_operand.vmem [shape: f32[1,256], index: 11, kind: input, shape index: {}]
  %s12 = inlined_call_operand.vmem [shape: f32[1,128], index: 12, kind: input, shape index: {}]
  %s13 = inlined_call_operand.vmem [shape: f32[2,2,16,128], index: 13, kind: output, shape index: {}]
  %s14 = sld [smem:[#allocation0]]
  $region169: #{encoder_forward.1} parent=0
    _
  %s16 = ssub.s32 1, %s14
  %s17 = scalar_select 0, %s16, %s14
  $region1: #{encoder_forward.1} parent=0
    #allocation2 [shape = 'u8[32768]{0}', space=vmem, size = 0x8000, scoped, tag = 'input window, operand 2']
    #allocation3 [shape = 'u8[327680]{0}', space=vmem, size = 0x50000, scoped, tag = 'input window, operand 4, single buffered']
    #allocation4 [shape = 's32[2]{0}', space=sflag, size = 0x8, scoped, tag = 'scoped memory for encoder_forward.1']
    #allocation5 [shape = 'u8[327680]{0}', space=vmem, size = 0x50000, scoped, tag = 'input window, operand 9, single buffered']
    #allocation6 [shape = 's32[1]{0}', space=sflag, size = 0x4, scoped, tag = 'scoped memory for encoder_forward.1']
    #allocation7 [shape = 'u8[163840]{0}', space=vmem, size = 0x28000, scoped, tag = 'input window, operand 10, single buffered']
    #allocation8 [shape = 'u8[32768]{0}', space=vmem, size = 0x8000, scoped, tag = 'output window, operand 0']
    %18 = vsyncpa [#allocation4], 0
    %19 = vsyncpa [#allocation6], 0
    loop: start=0, step=1, limit=4
    $region2: #{encoder_forward.1} parent=1 // loop_pre_header
      _
    $region3: #{encoder_forward.1} parent=1 // loop_header
      %s21 = sphi 0, %s25
      %p22 = scmp.ge.s32.totalorder %s21, 4
      %s29 = sphi 0, %s29
      %s31 = sphi 0, %s29
      %s32 = sphi 0, %s31
      %s46 = sphi 0, %s32
      %s52 = sphi 0, %s54
      %s55 = sphi 0, %s52
      %s56 = sphi 0, %s55
      %s72 = sphi 0, %s56
      %s78 = sphi 0, %s80
      %s81 = sphi 0, %s78
      %s82 = sphi 0, %s81
      %s98 = sphi 0, %s82
      %s102 = sphi 0, %s102
      %s104 = sphi 0, %s102
      %s105 = sphi 0, %s104
      %s119 = sphi 0, %s105
      %s123 = sphi 0, %s123
      %s125 = sphi 0, %s123
      %s126 = sphi 0, %s125
      %s140 = sphi 0, %s126
      %s144 = sphi 0, %s144
      %s146 = sphi 0, %s144
      %s147 = sphi 0, %s146
      %s161 = sphi 0, %s147
      %s165 = sphi 0, %s165
      %s167 = sphi 0, %s165
      %s168 = sphi 0, %s167
      %s182 = sphi 0, %s168
      %s186 = sphi 0, %s186
      %s188 = sphi 0, %s186
      %s189 = sphi 0, %s188
      %s203 = sphi 0, %s189
      %s207 = sphi 0, %s207
      %s209 = sphi 0, %s207
      %s210 = sphi 0, %s209
      %s224 = sphi 0, %s210
      %s228 = sphi 0, %s228
      %s230 = sphi 0, %s228
      %s231 = sphi 0, %s230
      %s245 = sphi 0, %s231
      %s249 = sphi 0, %s249
      %s251 = sphi 0, %s249
      %s252 = sphi 0, %s251
      %s266 = sphi 0, %s252
      %s270 = sphi 0, %s270
      %s272 = sphi 0, %s270
      %s273 = sphi 0, %s272
      %s287 = sphi 0, %s273
      %s291 = sphi 0, %s291
      %s293 = sphi 0, %s291
      %s294 = sphi 0, %s293
      %s308 = sphi 0, %s294
      %s314 = sphi 0, %s316
      %s317 = sphi 0, %s314
      %s318 = sphi 0, %s317
      %s334 = sphi 0, %s318
    $region4: #{encoder_forward.1} parent=1 // loop_header_branch
      %24 = sbr.rel (%p22) target = $region8
    $region5: #{encoder_forward.1} parent=1 // loop_body
      %s26 = ssub.s32 %s21, 1
      %s27 = ssub.s32 %s21, 2
      %s28 = sadd.s32 %s21, 1
      %s30 = sadd.s32 %s29, 1
      %p33 = scmp.eq.s32.totalorder %s21, 1
      %p34 = scmp.ne.s32.totalorder %s29, %s31
      %p35 = scmp.eq.s32.totalorder %s21, 0
      %p36 = por %p34, %p35
      %p37 = scmp.ne.s32.totalorder %s29, %s31
      %p38 = scmp.eq.s32.totalorder %s26, 1
      %p39 = por %p37, %p38
      %p40 = scmp.ne.s32.totalorder %s31, %s32
      %p41 = scmp.eq.s32.totalorder %s26, 0
      %p42 = por %p40, %p41
      %p43 = scmp.ne.s32.totalorder %s31, %s32
      %p44 = scmp.eq.s32.totalorder %s27, 1
      %p45 = por %p43, %p44
      %p47 = scmp.ne.s32.totalorder %s32, %s46
      %p48 = scmp.eq.s32.totalorder %s27, 0
      %p49 = por %p47, %p48
      %s50 = ssub.s32 %s21, %s28
      %p51 = scmp.eq.s32.totalorder %s50, 0
      %s53 = sadd.s32 %s52, 1
      %s54 = scalar_select %p51, %s52, %s53
      %p57 = pneg %p51
      %p58 = scmp.eq.s32.totalorder %s21, 1
      %p59 = por %p57, %p58
      %p60 = scmp.ne.s32.totalorder %s52, %s55
      %p61 = scmp.eq.s32.totalorder %s21, 0
      %p62 = por %p60, %p61
      %p63 = scmp.ne.s32.totalorder %s52, %s55
      %p64 = scmp.eq.s32.totalorder %s26, 1
      %p65 = por %p63, %p64
      %p66 = scmp.ne.s32.totalorder %s55, %s56
      %p67 = scmp.eq.s32.totalorder %s26, 0
      %p68 = por %p66, %p67
      %p69 = scmp.ne.s32.totalorder %s55, %s56
      %p70 = scmp.eq.s32.totalorder %s27, 1
      %p71 = por %p69, %p70
      %p73 = scmp.ne.s32.totalorder %s56, %s72
      %p74 = scmp.eq.s32.totalorder %s27, 0
      %p75 = por %p73, %p74
      %s76 = ssub.s32 %s21, %s28
      %p77 = scmp.eq.s32.totalorder %s76, 0
      %s79 = sadd.s32 %s78, 1
      %s80 = scalar_select %p77, %s78, %s79
      %p83 = pneg %p77
      %p84 = scmp.eq.s32.totalorder %s21, 1
      %p85 = por %p83, %p84
      %p86 = scmp.ne.s32.totalorder %s78, %s81
      %p87 = scmp.eq.s32.totalorder %s21, 0
      %p88 = por %p86, %p87
      %p89 = scmp.ne.s32.totalorder %s78, %s81
      %p90 = scmp.eq.s32.totalorder %s26, 1
      %p91 = por %p89, %p90
      %p92 = scmp.ne.s32.totalorder %s81, %s82
      %p93 = scmp.eq.s32.totalorder %s26, 0
      %p94 = por %p92, %p93
      %p95 = scmp.ne.s32.totalorder %s81, %s82
      %p96 = scmp.eq.s32.totalorder %s27, 1
      %p97 = por %p95, %p96
      %p99 = scmp.ne.s32.totalorder %s82, %s98
      %p100 = scmp.eq.s32.totalorder %s27, 0
      %p101 = por %p99, %p100
      %s103 = sadd.s32 %s102, 1
      %p106 = scmp.eq.s32.totalorder %s21, 1
      %p107 = scmp.ne.s32.totalorder %s102, %s104
      %p108 = scmp.eq.s32.totalorder %s21, 0
      %p109 = por %p107, %p108
      %p110 = scmp.ne.s32.totalorder %s102, %s104
      %p111 = scmp.eq.s32.totalorder %s26, 1
      %p112 = por %p110, %p111
      %p113 = scmp.ne.s32.totalorder %s104, %s105
      %p114 = scmp.eq.s32.totalorder %s26, 0
      %p115 = por %p113, %p114
      %p116 = scmp.ne.s32.totalorder %s104, %s105
      %p117 = scmp.eq.s32.totalorder %s27, 1
      %p118 = por %p116, %p117
      %p120 = scmp.ne.s32.totalorder %s105, %s119
      %p121 = scmp.eq.s32.totalorder %s27, 0
      %p122 = por %p120, %p121
      %s124 = sadd.s32 %s123, 1
      %p127 = scmp.eq.s32.totalorder %s21, 1
      %p128 = scmp.ne.s32.totalorder %s123, %s125
      %p129 = scmp.eq.s32.totalorder %s21, 0
      %p130 = por %p128, %p129
      %p131 = scmp.ne.s32.totalorder %s123, %s125
      %p132 = scmp.eq.s32.totalorder %s26, 1
      %p133 = por %p131, %p132
      %p134 = scmp.ne.s32.totalorder %s125, %s126
      %p135 = scmp.eq.s32.totalorder %s26, 0
      %p136 = por %p134, %p135
      %p137 = scmp.ne.s32.totalorder %s125, %s126
      %p138 = scmp.eq.s32.totalorder %s27, 1
      %p139 = por %p137, %p138
      %p141 = scmp.ne.s32.totalorder %s126, %s140
      %p142 = scmp.eq.s32.totalorder %s27, 0
      %p143 = por %p141, %p142
      %s145 = sadd.s32 %s144, 1
      %p148 = scmp.eq.s32.totalorder %s21, 1
      %p149 = scmp.ne.s32.totalorder %s144, %s146
      %p150 = scmp.eq.s32.totalorder %s21, 0
      %p151 = por %p149, %p150
      %p152 = scmp.ne.s32.totalorder %s144, %s146
      %p153 = scmp.eq.s32.totalorder %s26, 1
      %p154 = por %p152, %p153
      %p155 = scmp.ne.s32.totalorder %s146, %s147
      %p156 = scmp.eq.s32.totalorder %s26, 0
      %p157 = por %p155, %p156
      %p158 = scmp.ne.s32.totalorder %s146, %s147
      %p159 = scmp.eq.s32.totalorder %s27, 1
      %p160 = por %p158, %p159
      %p162 = scmp.ne.s32.totalorder %s147, %s161
      %p163 = scmp.eq.s32.totalorder %s27, 0
      %p164 = por %p162, %p163
      %s166 = sadd.s32 %s165, 1
      %p169 = scmp.eq.s32.totalorder %s21, 1
      %p170 = scmp.ne.s32.totalorder %s165, %s167
      %p171 = scmp.eq.s32.totalorder %s21, 0
      %p172 = por %p170, %p171
      %p173 = scmp.ne.s32.totalorder %s165, %s167
      %p174 = scmp.eq.s32.totalorder %s26, 1
      %p175 = por %p173, %p174
      %p176 = scmp.ne.s32.totalorder %s167, %s168
      %p177 = scmp.eq.s32.totalorder %s26, 0
      %p178 = por %p176, %p177
      %p179 = scmp.ne.s32.totalorder %s167, %s168
      %p180 = scmp.eq.s32.totalorder %s27, 1
      %p181 = por %p179, %p180
      %p183 = scmp.ne.s32.totalorder %s168, %s182
      %p184 = scmp.eq.s32.totalorder %s27, 0
      %p185 = por %p183, %p184
      %s187 = sadd.s32 %s186, 1
      %p190 = scmp.eq.s32.totalorder %s21, 1
      %p191 = scmp.ne.s32.totalorder %s186, %s188
      %p192 = scmp.eq.s32.totalorder %s21, 0
      %p193 = por %p191, %p192
      %p194 = scmp.ne.s32.totalorder %s186, %s188
      %p195 = scmp.eq.s32.totalorder %s26, 1
      %p196 = por %p194, %p195
      %p197 = scmp.ne.s32.totalorder %s188, %s189
      %p198 = scmp.eq.s32.totalorder %s26, 0
      %p199 = por %p197, %p198
      %p200 = scmp.ne.s32.totalorder %s188, %s189
      %p201 = scmp.eq.s32.totalorder %s27, 1
      %p202 = por %p200, %p201
      %p204 = scmp.ne.s32.totalorder %s189, %s203
      %p205 = scmp.eq.s32.totalorder %s27, 0
      %p206 = por %p204, %p205
      %s208 = sadd.s32 %s207, 1
      %p211 = scmp.eq.s32.totalorder %s21, 1
      %p212 = scmp.ne.s32.totalorder %s207, %s209
      %p213 = scmp.eq.s32.totalorder %s21, 0
      %p214 = por %p212, %p213
      %p215 = scmp.ne.s32.totalorder %s207, %s209
      %p216 = scmp.eq.s32.totalorder %s26, 1
      %p217 = por %p215, %p216
      %p218 = scmp.ne.s32.totalorder %s209, %s210
      %p219 = scmp.eq.s32.totalorder %s26, 0
      %p220 = por %p218, %p219
      %p221 = scmp.ne.s32.totalorder %s209, %s210
      %p222 = scmp.eq.s32.totalorder %s27, 1
      %p223 = por %p221, %p222
      %p225 = scmp.ne.s32.totalorder %s210, %s224
      %p226 = scmp.eq.s32.totalorder %s27, 0
      %p227 = por %p225, %p226
      %s229 = sadd.s32 %s228, 1
      %p232 = scmp.eq.s32.totalorder %s21, 1
      %p233 = scmp.ne.s32.totalorder %s228, %s230
      %p234 = scmp.eq.s32.totalorder %s21, 0
      %p235 = por %p233, %p234
      %p236 = scmp.ne.s32.totalorder %s228, %s230
      %p237 = scmp.eq.s32.totalorder %s26, 1
      %p238 = por %p236, %p237
      %p239 = scmp.ne.s32.totalorder %s230, %s231
      %p240 = scmp.eq.s32.totalorder %s26, 0
      %p241 = por %p239, %p240
      %p242 = scmp.ne.s32.totalorder %s230, %s231
      %p243 = scmp.eq.s32.totalorder %s27, 1
      %p244 = por %p242, %p243
      %p246 = scmp.ne.s32.totalorder %s231, %s245
      %p247 = scmp.eq.s32.totalorder %s27, 0
      %p248 = por %p246, %p247
      %s250 = sadd.s32 %s249, 1
      %p253 = scmp.eq.s32.totalorder %s21, 1
      %p254 = scmp.ne.s32.totalorder %s249, %s251
      %p255 = scmp.eq.s32.totalorder %s21, 0
      %p256 = por %p254, %p255
      %p257 = scmp.ne.s32.totalorder %s249, %s251
      %p258 = scmp.eq.s32.totalorder %s26, 1
      %p259 = por %p257, %p258
      %p260 = scmp.ne.s32.totalorder %s251, %s252
      %p261 = scmp.eq.s32.totalorder %s26, 0
      %p262 = por %p260, %p261
      %p263 = scmp.ne.s32.totalorder %s251, %s252
      %p264 = scmp.eq.s32.totalorder %s27, 1
      %p265 = por %p263, %p264
      %p267 = scmp.ne.s32.totalorder %s252, %s266
      %p268 = scmp.eq.s32.totalorder %s27, 0
      %p269 = por %p267, %p268
      %s271 = sadd.s32 %s270, 1
      %p274 = scmp.eq.s32.totalorder %s21, 1
      %p275 = scmp.ne.s32.totalorder %s270, %s272
      %p276 = scmp.eq.s32.totalorder %s21, 0
      %p277 = por %p275, %p276
      %p278 = scmp.ne.s32.totalorder %s270, %s272
      %p279 = scmp.eq.s32.totalorder %s26, 1
      %p280 = por %p278, %p279
      %p281 = scmp.ne.s32.totalorder %s272, %s273
      %p282 = scmp.eq.s32.totalorder %s26, 0
      %p283 = por %p281, %p282
      %p284 = scmp.ne.s32.totalorder %s272, %s273
      %p285 = scmp.eq.s32.totalorder %s27, 1
      %p286 = por %p284, %p285
      %p288 = scmp.ne.s32.totalorder %s273, %s287
      %p289 = scmp.eq.s32.totalorder %s27, 0
      %p290 = por %p288, %p289
      %s292 = sadd.s32 %s291, 1
      %p295 = scmp.eq.s32.totalorder %s21, 1
      %p296 = scmp.ne.s32.totalorder %s291, %s293
      %p297 = scmp.eq.s32.totalorder %s21, 0
      %p298 = por %p296, %p297
      %p299 = scmp.ne.s32.totalorder %s291, %s293
      %p300 = scmp.eq.s32.totalorder %s26, 1
      %p301 = por %p299, %p300
      %p302 = scmp.ne.s32.totalorder %s293, %s294
      %p303 = scmp.eq.s32.totalorder %s26, 0
      %p304 = por %p302, %p303
      %p305 = scmp.ne.s32.totalorder %s293, %s294
      %p306 = scmp.eq.s32.totalorder %s27, 1
      %p307 = por %p305, %p306
      %p309 = scmp.ne.s32.totalorder %s294, %s308
      %p310 = scmp.eq.s32.totalorder %s27, 0
      %p311 = por %p309, %p310
      %s312 = ssub.s32 %s21, %s28
      %p313 = scmp.eq.s32.totalorder %s312, 0
      %s315 = sadd.s32 %s314, 1
      %s316 = scalar_select %p313, %s314, %s315
      %p319 = pneg %p313
      %p320 = scmp.eq.s32.totalorder %s21, 1
      %p321 = por %p319, %p320
      %p322 = scmp.ne.s32.totalorder %s314, %s317
      %p323 = scmp.eq.s32.totalorder %s21, 0
      %p324 = por %p322, %p323
      %p325 = scmp.ne.s32.totalorder %s314, %s317
      %p326 = scmp.eq.s32.totalorder %s26, 1
      %p327 = por %p325, %p326
      %p328 = scmp.ne.s32.totalorder %s317, %s318
      %p329 = scmp.eq.s32.totalorder %s26, 0
      %p330 = por %p328, %p329
      %p331 = scmp.ne.s32.totalorder %s317, %s318
      %p332 = scmp.eq.s32.totalorder %s27, 1
      %p333 = por %p331, %p332
      %p335 = scmp.ne.s32.totalorder %s318, %s334
      %p336 = scmp.eq.s32.totalorder %s27, 0
      %p337 = por %p335, %p336
      %p338 = scmp.le.s32.totalorder 1, %s21
      %p339 = scmp.lt.s32.totalorder %s21, 3
      %p340 = pnand %p338, %p339
      %p341 = pneg %p340
      // Predicated region
      $region9: #{encoder_forward.1} parent=5 // pred_check
        _
      $region10: #{encoder_forward.1} parent=5 // pred_check_branch
        %343 = sbr.rel (%p340) target = $region12
      $region11: #{encoder_forward.1} parent=5 // pred_region
        %s344 = ssub.s32 %s21, 1
        // Predicated region
        $region13: #{encoder_forward.1} parent=11 // pred_check
          %p345 = pneg %p42
        $region14: #{encoder_forward.1} parent=11 // pred_check_branch
          %347 = sbr.rel (%p345) target = $region16
        $region15: #{encoder_forward.1} parent=11 // pred_region
          _
        $region16: #{encoder_forward.1} parent=11 // pred_fallthru
          _
        // Predicated region
        $region17: #{encoder_forward.1} parent=11 // pred_check
          %p348 = pneg %p115
        $region18: #{encoder_forward.1} parent=11 // pred_check_branch
          %350 = sbr.rel (%p348) target = $region20
        $region19: #{encoder_forward.1} parent=11 // pred_region
          _
        $region20: #{encoder_forward.1} parent=11 // pred_fallthru
          _
        // Predicated region
        $region21: #{encoder_forward.1} parent=11 // pred_check
          %p351 = pneg %p136
        $region22: #{encoder_forward.1} parent=11 // pred_check_branch
          %353 = sbr.rel (%p351) target = $region24
        $region23: #{encoder_forward.1} parent=11 // pred_region
          %s355 = ssub.s32 10240, 10240
          %356 = vsyncadd [#allocation4], %s355
          %s357 = sshll.u32 [#allocation3], 4
          %s358 = int_to_ptr.vmem [resolvable:$true] %s357
          %363 = dma.hbm_to_vmem [thread:$0]  %s4, 10240, %s358, [#allocation4], 128, 128, 8
        $region24: #{encoder_forward.1} parent=11 // pred_fallthru
          _
        // Predicated region
        $region25: #{encoder_forward.1} parent=11 // pred_check
          %p364 = pneg %p157
        $region26: #{encoder_forward.1} parent=11 // pred_check_branch
          %366 = sbr.rel (%p364) target = $region28
        $region27: #{encoder_forward.1} parent=11 // pred_region
          _
        $region28: #{encoder_forward.1} parent=11 // pred_fallthru
          _
        // Predicated region
        $region29: #{encoder_forward.1} parent=11 // pred_check
          %p367 = pneg %p178
        $region30: #{encoder_forward.1} parent=11 // pred_check_branch
          %369 = sbr.rel (%p367) target = $region32
        $region31: #{encoder_forward.1} parent=11 // pred_region
          _
        $region32: #{encoder_forward.1} parent=11 // pred_fallthru
          _
        // Predicated region
        $region33: #{encoder_forward.1} parent=11 // pred_check
          %p370 = pneg %p199
        $region34: #{encoder_forward.1} parent=11 // pred_check_branch
          %372 = sbr.rel (%p370) target = $region36
        $region35: #{encoder_forward.1} parent=11 // pred_region
          _
        $region36: #{encoder_forward.1} parent=11 // pred_fallthru
          _
        // Predicated region
        $region37: #{encoder_forward.1} parent=11 // pred_check
          %p373 = pneg %p220
        $region38: #{encoder_forward.1} parent=11 // pred_check_branch
          %375 = sbr.rel (%p373) target = $region40
        $region39: #{encoder_forward.1} parent=11 // pred_region
          _
        $region40: #{encoder_forward.1} parent=11 // pred_fallthru
          _
        // Predicated region
        $region41: #{encoder_forward.1} parent=11 // pred_check
          %p376 = pneg %p241
        $region42: #{encoder_forward.1} parent=11 // pred_check_branch
          %378 = sbr.rel (%p376) target = $region44
        $region43: #{encoder_forward.1} parent=11 // pred_region
          %s380 = ssub.s32 10240, 10240
          %381 = vsyncadd [#allocation6], %s380
          %s382 = sshll.u32 [#allocation5], 4
          %s383 = int_to_ptr.vmem [resolvable:$true] %s382
          %388 = dma.hbm_to_vmem [thread:$0]  %s9, 10240, %s383, [#allocation6], 128, 128, 8
        $region44: #{encoder_forward.1} parent=11 // pred_fallthru
          _
        // Predicated region
        $region45: #{encoder_forward.1} parent=11 // pred_check
          %p389 = pneg %p262
        $region46: #{encoder_forward.1} parent=11 // pred_check_branch
          %391 = sbr.rel (%p389) target = $region48
        $region47: #{encoder_forward.1} parent=11 // pred_region
          %s393 = ssub.s32 5120, 5120
          %394 = vsyncadd [#allocation6], %s393
          %s395 = sshll.u32 [#allocation7], 4
          %s396 = int_to_ptr.vmem [resolvable:$true] %s395
          %401 = dma.hbm_to_vmem [thread:$0]  %s10, 5120, %s396, [#allocation6], 64, 64, 4
        $region48: #{encoder_forward.1} parent=11 // pred_fallthru
          _
        // Predicated region
        $region49: #{encoder_forward.1} parent=11 // pred_check
          %p402 = pneg %p283
        $region50: #{encoder_forward.1} parent=11 // pred_check_branch
          %404 = sbr.rel (%p402) target = $region52
        $region51: #{encoder_forward.1} parent=11 // pred_region
          _
        $region52: #{encoder_forward.1} parent=11 // pred_fallthru
          _
        // Predicated region
        $region53: #{encoder_forward.1} parent=11 // pred_check
          %p405 = pneg %p304
        $region54: #{encoder_forward.1} parent=11 // pred_check_branch
          %407 = sbr.rel (%p405) target = $region56
        $region55: #{encoder_forward.1} parent=11 // pred_region
          _
        $region56: #{encoder_forward.1} parent=11 // pred_fallthru
          _
      $region12: #{encoder_forward.1} parent=5 // pred_fallthru
        _
      %p408 = scmp.lt.s32.totalorder %s21, 2
      // Predicated region
      $region57: #{encoder_forward.1} parent=5 // pred_check
        %p409 = pneg %p408
      $region58: #{encoder_forward.1} parent=5 // pred_check_branch
        %411 = sbr.rel (%p409) target = $region60
      $region59: #{encoder_forward.1} parent=5 // pred_region
        // Predicated region
        $region61: #{encoder_forward.1} parent=59 // pred_check
          %p412 = pneg %p62
        $region62: #{encoder_forward.1} parent=59 // pred_check_branch
          %414 = sbr.rel (%p412) target = $region64
        $region63: #{encoder_forward.1} parent=59 // pred_region
          %p415 = scmp.lt.s32.totalorder %s21, 1
          %s416 = scalar_select %p415, %s21, 1
          %s417 = smul.addr %s416, 2
          %s418 = smul.addr %s417, 8
          %s419 = scalar_lea.vmem %s1, %s418
        $region64: #{encoder_forward.1} parent=59 // pred_fallthru
          _
        // Predicated region
        $region65: #{encoder_forward.1} parent=59 // pred_check
          %p420 = pneg %p88
        $region66: #{encoder_forward.1} parent=59 // pred_check_branch
          %422 = sbr.rel (%p420) target = $region68
        $region67: #{encoder_forward.1} parent=59 // pred_region
          %s423 = sand.u32 %s78, 1
          %s424 = sand.u32 %s78, 1
          %s425 = smul.addr %s424, 32
          %s426 = scalar_lea.vmem [#allocation2], %s425
          %s427 = smul.addr %s21, 2
          %s428 = smul.addr %s427, 8
          %s429 = scalar_lea.vmem %s2, %s428
          // Predicated region
          $region69: #{encoder_forward.1} parent=67 // pred_check
            _
          $region70: #{encoder_forward.1} parent=67 // pred_check_branch
            %431 = sbr.rel (0) target = $region72
          $region71: #{encoder_forward.1} parent=67 // pred_region
            // Predicated region
            $region73: #{encoder_forward.1} parent=71 // pred_check
              _
            $region74: #{encoder_forward.1} parent=71 // pred_check_branch
              %433 = sbr.rel (0) target = $region76
            $region75: #{encoder_forward.1} parent=71 // pred_region
              // Predicated region
              $region88: #{encoder_forward.1} parent=75 // pred_check
                _
              $region89: #{encoder_forward.1} parent=75 // pred_check_branch
                %454 = sbr.rel (0) target = $region91
              $region90: #{encoder_forward.1} parent=75 // pred_region
                loop: start=0, step=1, limit=1
                $region92: #{encoder_forward.1} parent=90 // loop_pre_header
                  _
                $region93: #{encoder_forward.1} parent=90 // loop_header
                  %s456 = sphi 0, %s460
                  %p457 = scmp.ge.s32.totalorder %s456, 1
                  %s461 = sphi %s429, %s429
                  %s462 = sphi %s426, %s426
                $region94: #{encoder_forward.1} parent=90 // loop_header_branch
                  %459 = sbr.rel (%p457) target = $region98
                $region95: #{encoder_forward.1} parent=90 // loop_body
                  %v463 = vld [vmem:[%s461] sm:$0xff]
                  %464 = vst [vmem:[%s462] sm:$0xff] %v463
                  %v465 = vld [vmem:[%s461 + $0x8] sm:$0xff]
                  %466 = vst [vmem:[%s462 + $0x8] sm:$0xff] %v465
                  %v467 = vld [vmem:[%s461 + $0x20] sm:$0xff]
                  %468 = vst [vmem:[%s462 + $0x10] sm:$0xff] %v467
                  %v469 = vld [vmem:[%s461 + $0x28] sm:$0xff]
                  %470 = vst [vmem:[%s462 + $0x18] sm:$0xff] %v469
                $region96: #{encoder_forward.1} parent=90 // loop_footer
                  %s460 = sadd.s32 1, %s456
                $region97: #{encoder_forward.1} parent=90 // loop_footer_branch
                  %455 = sbr.rel target = $region93
                $region98: #{encoder_forward.1} parent=90 // loop_exit
                  _
              $region91: #{encoder_forward.1} parent=75 // pred_fallthru
                _
              // Predicated region
              $region99: #{encoder_forward.1} parent=75 // pred_check
                _
              $region100: #{encoder_forward.1} parent=75 // pred_check_branch
                %472 = sbr.rel target = $region102
              $region101: #{encoder_forward.1} parent=75 // pred_region
                _
              $region102: #{encoder_forward.1} parent=75 // pred_fallthru
                _
            $region76: #{encoder_forward.1} parent=71 // pred_fallthru
              _
            // Predicated region
            $region77: #{encoder_forward.1} parent=71 // pred_check
              _
            $region78: #{encoder_forward.1} parent=71 // pred_check_branch
              %435 = sbr.rel target = $region80
            $region79: #{encoder_forward.1} parent=71 // pred_region
              loop: start=0, step=1, limit=1
              $region81: #{encoder_forward.1} parent=79 // loop_pre_header
                _
              $region82: #{encoder_forward.1} parent=79 // loop_header
                %s438 = sphi 0, %s442
                %p439 = scmp.ge.s32.totalorder %s438, 1
                %s443 = sphi %s429, %s429
                %s444 = sphi %s426, %s426
              $region83: #{encoder_forward.1} parent=79 // loop_header_branch
                %441 = sbr.rel (%p439) target = $region87
              $region84: #{encoder_forward.1} parent=79 // loop_body
                %v445 = vld [vmem:[%s443] sm:$0xff]
                %446 = vst [vmem:[%s444] sm:$0xff] %v445
                %v447 = vld [vmem:[%s443 + $0x8] sm:$0xff]
                %448 = vst [vmem:[%s444 + $0x8] sm:$0xff] %v447
                %v449 = vld [vmem:[%s443 + $0x20] sm:$0xff]
                %450 = vst [vmem:[%s444 + $0x10] sm:$0xff] %v449
                %v451 = vld [vmem:[%s443 + $0x28] sm:$0xff]
                %452 = vst [vmem:[%s444 + $0x18] sm:$0xff] %v451
              $region85: #{encoder_forward.1} parent=79 // loop_footer
                %s442 = sadd.s32 1, %s438
              $region86: #{encoder_forward.1} parent=79 // loop_footer_branch
                %437 = sbr.rel target = $region82
              $region87: #{encoder_forward.1} parent=79 // loop_exit
                _
            $region80: #{encoder_forward.1} parent=71 // pred_fallthru
              _
          $region72: #{encoder_forward.1} parent=67 // pred_fallthru
            _
          %473 = vnop
        $region68: #{encoder_forward.1} parent=59 // pred_fallthru
          _
      $region60: #{encoder_forward.1} parent=5 // pred_fallthru
        _
      %p474 = scmp.le.s32.totalorder 1, %s21
      %p475 = scmp.lt.s32.totalorder %s21, 3
      %p476 = pnand %p474, %p475
      %p477 = pneg %p476
      // Predicated region
      $region103: #{encoder_forward.1} parent=5 // pred_check
        _
      $region104: #{encoder_forward.1} parent=5 // pred_check_branch
        %479 = sbr.rel (%p476) target = $region106
      $region105: #{encoder_forward.1} parent=5 // pred_region
        %s480 = ssub.s32 %s21, 1
        %s481 = sand.u32 %s81, 1
        %s482 = sand.u32 %s81, 1
        %s483 = smul.addr %s482, 32
        %s484 = scalar_lea.vmem [#allocation2], %s483
        // Predicated region
        $region107: #{encoder_forward.1} parent=105 // pred_check
          %p485 = pneg %p94
        $region108: #{encoder_forward.1} parent=105 // pred_check_branch
          %487 = sbr.rel (%p485) target = $region110
        $region109: #{encoder_forward.1} parent=105 // pred_region
          _
        $region110: #{encoder_forward.1} parent=105 // pred_fallthru
          _
        // Predicated region
        $region111: #{encoder_forward.1} parent=105 // pred_check
          %p488 = pneg %p136
        $region112: #{encoder_forward.1} parent=105 // pred_check_branch
          %490 = sbr.rel (%p488) target = $region114
        $region113: #{encoder_forward.1} parent=105 // pred_region
          %491 = dma.done [#allocation4], 10240
        $region114: #{encoder_forward.1} parent=105 // pred_fallthru
          _
        // Predicated region
        $region115: #{encoder_forward.1} parent=105 // pred_check
          %p492 = pneg %p241
        $region116: #{encoder_forward.1} parent=105 // pred_check_branch
          %494 = sbr.rel (%p492) target = $region118
        $region117: #{encoder_forward.1} parent=105 // pred_region
          %495 = dma.done [#allocation6], 10240
        $region118: #{encoder_forward.1} parent=105 // pred_fallthru
          _
        // Predicated region
        $region119: #{encoder_forward.1} parent=105 // pred_check
          %p496 = pneg %p262
        $region120: #{encoder_forward.1} parent=105 // pred_check_branch
          %498 = sbr.rel (%p496) target = $region122
        $region121: #{encoder_forward.1} parent=105 // pred_region
          %499 = dma.done [#allocation6], 5120
        $region122: #{encoder_forward.1} parent=105 // pred_fallthru
          _
        %p500 = pneg %p42
        %p501 = pneg %p39
        %p502 = scmp.lt.s32.totalorder %s26, 1
        %s503 = scalar_select %p502, %s26, 1
        %s504 = smul.addr %s503, 2
        %s505 = smul.addr %s504, 8
        %s506 = scalar_lea.vmem %s1, %s505
        %p507 = pneg %p68
        %p508 = pneg %p65
        %s509 = sand.u32 %s81, 1
        %s510 = sand.u32 %s81, 1
        %s511 = smul.addr %s510, 32
        %s512 = scalar_lea.vmem [#allocation2], %s511
        %p513 = pneg %p94
        %p514 = pneg %p91
        %p515 = pneg %p115
        %p516 = pneg %p112
        %p517 = pneg %p136
        %p518 = pneg %p133
        %p519 = pneg %p157
        %p520 = pneg %p154
        %p521 = pneg %p178
        %p522 = pneg %p175
        %p523 = pneg %p199
        %p524 = pneg %p196
        %p525 = pneg %p220
        %p526 = pneg %p217
        %p527 = pneg %p241
        %p528 = pneg %p238
        %p529 = pneg %p262
        %p530 = pneg %p259
        %p531 = pneg %p283
        %p532 = pneg %p280
        %p533 = pneg %p304
        %p534 = pneg %p301
        %p535 = pneg %p330
        %p536 = pneg %p327
        %s537 = sand.u32 %s317, 1
        %s538 = sand.u32 %s317, 1
        %s539 = smul.addr %s538, 32
        %s540 = scalar_lea.vmem [#allocation8], %s539
        %p541 = scmp.lt.s32.totalorder %s26, 1
        %s542 = scalar_select %p541, %s26, 1
        %s543 = smul.addr %s542, 2
        %s544 = smul.addr %s543, 8
        %s545 = scalar_lea.vmem %s1, %s544
        %v547 = vld [vmem:[%s545] sm:$0xff]
        %v548 = vld [vmem:[%s545 + $0x8] sm:$0xff]
        %v549 = vld [vmem:[%s484] sm:$0xff]
        %v550 = vld [vmem:[%s484 + $0x8] sm:$0xff]
        %v551 = vpack.c.bf16 %v548, %v547
        %v552 = vld [vmem:[%s3] sm:$0xff]
        %v553 = vld [vmem:[%s3 + $0x8] sm:$0xf]
        %v554 = vld [vmem:[%s3 + $0xc] sm:$0xff]
        %v555 = vld [vmem:[%s3 + $0x14] sm:$0xf]
        %v556 = vld [vmem:[%s0] sm:$0xf]
        %v557 = vld [vmem:[%s0 + $0x4] sm:$0xf]
        %v560 = vunpack.c.l.b16 %v556
        %v561 = vunpack.c.l.b16 %v557
        %v562 = vpack.c.b16 %v561, %v560
        %vm563 = vcmask 130048
        %v565 = vsel %vm563, %v562, 0
        %567 = vmatprep.subr.bf16.mxu0 0
        %568 = vmatpush1.bf16.msra.mxu0 %v551
        %569 = vmatprep.subr.bf16.mxu0 0
        %570 = vmatpush1.bf16.msra.mxu0 0
        %571 = vmatprep.subr.bf16.mxu0 0
        %572 = vmatpush1.bf16.msra.mxu0 0
        %573 = vmatprep.subr.bf16.mxu0 0
        %574 = vmatpush1.bf16.msra.mxu0 0
        %575 = vmatprep.subr.bf16.mxu0 0
        %576 = vmatpush1.bf16.msra.mxu0 0
        %577 = vmatprep.subr.bf16.mxu0 0
        %578 = vmatpush1.bf16.msra.mxu0 0
        %579 = vmatprep.subr.bf16.mxu0 0
        %580 = vmatpush1.bf16.msra.mxu0 0
        %581 = vmatprep.subr.bf16.mxu0 0
        %582 = vmatpush1.bf16.msra.mxu0 0
        %583 = vmatprep.subr.bf16.mxu0 0
        %584 = vmatpush1.bf16.msra.mxu0 0
        %585 = vmatprep.subr.bf16.mxu0 0
        %586 = vmatpush1.bf16.msra.mxu0 0
        %587 = vmatprep.subr.bf16.mxu0 0
        %588 = vmatpush1.bf16.msra.mxu0 0
        %589 = vmatprep.subr.bf16.mxu0 0
        %590 = vmatpush1.bf16.msra.mxu0 0
        %591 = vmatprep.subr.bf16.mxu0 0
        %592 = vmatpush1.bf16.msra.mxu0 0
        %593 = vmatprep.subr.bf16.mxu0 0
        %594 = vmatpush1.bf16.msra.mxu0 0
        %595 = vmatprep.subr.bf16.mxu0 0
        %596 = vmatpush1.bf16.msra.mxu0 0
        %597 = vmatprep.subr.bf16.mxu0 0
        %598 = vmatpush1.bf16.msra.mxu0 0
        %599 = vmatprep.mubr.bf16.mxu0 0
        %600 = vmatmul.mubr.bf16.gmra.mrb[0].mxu0 %v565
        %v601 = vpop.f32.mrb[0].mxu0
        %v602 = vadd.f32 0.0, %v601
        %v603 = vpop.f32.mrb[0].mxu0
        %v604 = vpop.f32.mrb[0].mxu0
        %v605 = vadd.f32 0.0, %v604
        %v606 = vpop.f32.mrb[0].mxu0
        %607 = vdwg.mxu0
        %v608 = vpack.c.bf16 %v605, %v602
        %s609 = scalar_lea.vmem %s3, 24
        %v610 = vld [vmem:[%s609] sm:$0xff]
        %v611 = vld [vmem:[%s609 + $0x8] sm:$0xf]
        %v612 = vld [vmem:[%s609 + $0xc] sm:$0xff]
        %v613 = vld [vmem:[%s609 + $0x14] sm:$0xf]
        %v618 = vunpack.c.l.b16 %v610
        %v619 = vunpack.c.h.b16 %v610
        %v620 = vunpack.c.l.b16 %v611
        %v621 = vunpack.c.l.b16 %v612
        %v622 = vunpack.c.h.b16 %v612
        %v623 = vunpack.c.l.b16 %v613
        %v624 = vpack.c.b16 %v621, %v618
        %v625 = vpack.c.b16 %v622, %v619
        %v626 = vpack.c.b16 %v623, %v620
        %v631 = vsel %vm563, %v608, 0
        %633 = vmatprep.subr.bf16.mxu0 %v625
        %634 = vmatpush1.bf16.msra.mxu0 %v624
        %635 = vmatprep.subr.bf16.mxu0 0
        %636 = vmatpush1.bf16.msra.mxu0 0
        %637 = vmatprep.subr.bf16.mxu0 0
        %638 = vmatpush1.bf16.msra.mxu0 0
        %639 = vmatprep.subr.bf16.mxu0 0
        %640 = vmatpush1.bf16.msra.mxu0 0
        %641 = vmatprep.subr.bf16.mxu0 0
        %642 = vmatpush1.bf16.msra.mxu0 0
        %643 = vmatprep.subr.bf16.mxu0 0
        %644 = vmatpush1.bf16.msra.mxu0 0
        %645 = vmatprep.subr.bf16.mxu0 0
        %646 = vmatpush1.bf16.msra.mxu0 0
        %647 = vmatprep.subr.bf16.mxu0 0
        %648 = vmatpush1.bf16.msra.mxu0 0
        %649 = vmatprep.subr.bf16.mxu0 0
        %650 = vmatpush1.bf16.msra.mxu0 0
        %651 = vmatprep.subr.bf16.mxu0 0
        %652 = vmatpush1.bf16.msra.mxu0 0
        %653 = vmatprep.subr.bf16.mxu0 0
        %654 = vmatpush1.bf16.msra.mxu0 0
        %655 = vmatprep.subr.bf16.mxu0 0
        %656 = vmatpush1.bf16.msra.mxu0 0
        %657 = vmatprep.subr.bf16.mxu0 0
        %658 = vmatpush1.bf16.msra.mxu0 0
        %659 = vmatprep.subr.bf16.mxu0 0
        %660 = vmatpush1.bf16.msra.mxu0 0
        %661 = vmatprep.subr.bf16.mxu0 0
        %662 = vmatpush1.bf16.msra.mxu0 0
        %663 = vmatprep.subr.bf16.mxu0 0
        %664 = vmatpush1.bf16.msra.mxu0 0
        %665 = vmatprep.mubr.bf16.mxu0 0
        %666 = vmatmul.mubr.bf16.gmra.mrb[0].mxu0 %v631
        %v667 = vpop.f32.mrb[0].mxu0
        %v668 = vadd.f32 0.0, %v667
        %v669 = vpop.f32.mrb[0].mxu0
        %v670 = vadd.f32 0.0, %v669
        %v671 = vpop.f32.mrb[0].mxu0
        %v672 = vadd.f32 0.0, %v671
        %v673 = vpop.f32.mrb[0].mxu0
        %v674 = vadd.f32 0.0, %v673
        %675 = vdwg.mxu0
        %676 = vmatprep.subr.bf16.mxu0 0
        %677 = vmatpush1.bf16.msra.mxu0 %v626
        %678 = vmatprep.subr.bf16.mxu0 0
        %679 = vmatpush1.bf16.msra.mxu0 0
        %680 = vmatprep.subr.bf16.mxu0 0
        %681 = vmatpush1.bf16.msra.mxu0 0
        %682 = vmatprep.subr.bf16.mxu0 0
        %683 = vmatpush1.bf16.msra.mxu0 0
        %684 = vmatprep.subr.bf16.mxu0 0
        %685 = vmatpush1.bf16.msra.mxu0 0
        %686 = vmatprep.subr.bf16.mxu0 0
        %687 = vmatpush1.bf16.msra.mxu0 0
        %688 = vmatprep.subr.bf16.mxu0 0
        %689 = vmatpush1.bf16.msra.mxu0 0
        %690 = vmatprep.subr.bf16.mxu0 0
        %691 = vmatpush1.bf16.msra.mxu0 0
        %692 = vmatprep.subr.bf16.mxu0 0
        %693 = vmatpush1.bf16.msra.mxu0 0
        %694 = vmatprep.subr.bf16.mxu0 0
        %695 = vmatpush1.bf16.msra.mxu0 0
        %696 = vmatprep.subr.bf16.mxu0 0
        %697 = vmatpush1.bf16.msra.mxu0 0
        %698 = vmatprep.subr.bf16.mxu0 0
        %699 = vmatpush1.bf16.msra.mxu0 0
        %700 = vmatprep.subr.bf16.mxu0 0
        %701 = vmatpush1.bf16.msra.mxu0 0
        %702 = vmatprep.subr.bf16.mxu0 0
        %703 = vmatpush1.bf16.msra.mxu0 0
        %704 = vmatprep.subr.bf16.mxu0 0
        %705 = vmatpush1.bf16.msra.mxu0 0
        %706 = vmatprep.subr.bf16.mxu0 0
        %707 = vmatpush1.bf16.msra.mxu0 0
        %708 = vmatprep.mubr.bf16.mxu0 0
        %709 = vmatmul.mubr.bf16.gmra.mrb[0].mxu0 %v631
        %v710 = vpop.f32.mrb[0].mxu0
        %v711 = vadd.f32 0.0, %v710
        %v712 = vpop.f32.mrb[0].mxu0
        %v713 = vpop.f32.mrb[0].mxu0
        %v714 = vadd.f32 0.0, %v713
        %v715 = vpop.f32.mrb[0].mxu0
        %716 = vdwg.mxu0
        %v721 = vunpack.c.l.b16 %v552
        %v722 = vunpack.c.h.b16 %v552
        %v723 = vunpack.c.l.b16 %v553
        %v724 = vunpack.c.l.b16 %v554
        %v725 = vunpack.c.h.b16 %v554
        %v726 = vunpack.c.l.b16 %v555
        %v727 = vpack.c.b16 %v724, %v721
        %v728 = vpack.c.b16 %v725, %v722
        %v729 = vpack.c.b16 %v726, %v723
        %v734 = vsel %vm563, %v551, 0
        %736 = vmatprep.subr.bf16.mxu0 %v728
        %737 = vmatpush1.bf16.msra.mxu0 %v727
        %738 = vmatprep.subr.bf16.mxu0 0
        %739 = vmatpush1.bf16.msra.mxu0 0
        %740 = vmatprep.subr.bf16.mxu0 0
        %741 = vmatpush1.bf16.msra.mxu0 0
        %742 = vmatprep.subr.bf16.mxu0 0
        %743 = vmatpush1.bf16.msra.mxu0 0
        %744 = vmatprep.subr.bf16.mxu0 0
        %745 = vmatpush1.bf16.msra.mxu0 0
        %746 = vmatprep.subr.bf16.mxu0 0
        %747 = vmatpush1.bf16.msra.mxu0 0
        %748 = vmatprep.subr.bf16.mxu0 0
        %749 = vmatpush1.bf16.msra.mxu0 0
        %750 = vmatprep.subr.bf16.mxu0 0
        %751 = vmatpush1.bf16.msra.mxu0 0
        %752 = vmatprep.subr.bf16.mxu0 0
        %753 = vmatpush1.bf16.msra.mxu0 0
        %754 = vmatprep.subr.bf16.mxu0 0
        %755 = vmatpush1.bf16.msra.mxu0 0
        %756 = vmatprep.subr.bf16.mxu0 0
        %757 = vmatpush1.bf16.msra.mxu0 0
        %758 = vmatprep.subr.bf16.mxu0 0
        %759 = vmatpush1.bf16.msra.mxu0 0
        %760 = vmatprep.subr.bf16.mxu0 0
        %761 = vmatpush1.bf16.msra.mxu0 0
        %762 = vmatprep.subr.bf16.mxu0 0
        %763 = vmatpush1.bf16.msra.mxu0 0
        %764 = vmatprep.subr.bf16.mxu0 0
        %765 = vmatpush1.bf16.msra.mxu0 0
        %766 = vmatprep.subr.bf16.mxu0 0
        %767 = vmatpush1.bf16.msra.mxu0 0
        %768 = vmatprep.mubr.bf16.mxu0 0
        %769 = vmatmul.mubr.bf16.gmra.mrb[0].mxu0 %v734
        %v770 = vpop.f32.mrb[0].mxu0
        %v771 = vadd.f32 %v668, %v770
        %v772 = vpop.f32.mrb[0].mxu0
        %v773 = vadd.f32 %v670, %v772
        %v774 = vpop.f32.mrb[0].mxu0
        %v775 = vadd.f32 %v672, %v774
        %v776 = vpop.f32.mrb[0].mxu0
        %v777 = vadd.f32 %v674, %v776
        %778 = vdwg.mxu0
        %779 = vmatprep.subr.bf16.mxu0 0
        %780 = vmatpush1.bf16.msra.mxu0 %v729
        %781 = vmatprep.subr.bf16.mxu0 0
        %782 = vmatpush1.bf16.msra.mxu0 0
        %783 = vmatprep.subr.bf16.mxu0 0
        %784 = vmatpush1.bf16.msra.mxu0 0
        %785 = vmatprep.subr.bf16.mxu0 0
        %786 = vmatpush1.bf16.msra.mxu0 0
        %787 = vmatprep.subr.bf16.mxu0 0
        %788 = vmatpush1.bf16.msra.mxu0 0
        %789 = vmatprep.subr.bf16.mxu0 0
        %790 = vmatpush1.bf16.msra.mxu0 0
        %791 = vmatprep.subr.bf16.mxu0 0
        %792 = vmatpush1.bf16.msra.mxu0 0
        %793 = vmatprep.subr.bf16.mxu0 0
        %794 = vmatpush1.bf16.msra.mxu0 0
        %795 = vmatprep.subr.bf16.mxu0 0
        %796 = vmatpush1.bf16.msra.mxu0 0
        %797 = vmatprep.subr.bf16.mxu0 0
        %798 = vmatpush1.bf16.msra.mxu0 0
        %799 = vmatprep.subr.bf16.mxu0 0
        %800 = vmatpush1.bf16.msra.mxu0 0
        %801 = vmatprep.subr.bf16.mxu0 0
        %802 = vmatpush1.bf16.msra.mxu0 0
        %803 = vmatprep.subr.bf16.mxu0 0
        %804 = vmatpush1.bf16.msra.mxu0 0
        %805 = vmatprep.subr.bf16.mxu0 0
        %806 = vmatpush1.bf16.msra.mxu0 0
        %807 = vmatprep.subr.bf16.mxu0 0
        %808 = vmatpush1.bf16.msra.mxu0 0
        %809 = vmatprep.subr.bf16.mxu0 0
        %810 = vmatpush1.bf16.msra.mxu0 0
        %811 = vmatprep.mubr.bf16.mxu0 0
        %812 = vmatmul.mubr.bf16.gmra.mrb[0].mxu0 %v734
        %v813 = vpop.f32.mrb[0].mxu0
        %v814 = vadd.f32 %v711, %v813
        %v815 = vpop.f32.mrb[0].mxu0
        %v816 = vpop.f32.mrb[0].mxu0
        %v817 = vadd.f32 %v714, %v816
        %v818 = vpop.f32.mrb[0].mxu0
        %819 = vdwg.mxu0
        %820 = vmatprep.subr.bf16.mxu0 0
        %821 = vmatpush1.bf16.msra.mxu0 %v608
        %822 = vmatprep.subr.bf16.mxu0 0
        %823 = vmatpush1.bf16.msra.mxu0 0
        %824 = vmatprep.subr.bf16.mxu0 0
        %825 = vmatpush1.bf16.msra.mxu0 0
        %826 = vmatprep.subr.bf16.mxu0 0
        %827 = vmatpush1.bf16.msra.mxu0 0
        %828 = vmatprep.subr.bf16.mxu0 0
        %829 = vmatpush1.bf16.msra.mxu0 0
        %830 = vmatprep.subr.bf16.mxu0 0
        %831 = vmatpush1.bf16.msra.mxu0 0
        %832 = vmatprep.subr.bf16.mxu0 0
        %833 = vmatpush1.bf16.msra.mxu0 0
        %834 = vmatprep.subr.bf16.mxu0 0
        %835 = vmatpush1.bf16.msra.mxu0 0
        %836 = vmatprep.subr.bf16.mxu0 0
        %837 = vmatpush1.bf16.msra.mxu0 0
        %838 = vmatprep.subr.bf16.mxu0 0
        %839 = vmatpush1.bf16.msra.mxu0 0
        %840 = vmatprep.subr.bf16.mxu0 0
        %841 = vmatpush1.bf16.msra.mxu0 0
        %842 = vmatprep.subr.bf16.mxu0 0
        %843 = vmatpush1.bf16.msra.mxu0 0
        %844 = vmatprep.subr.bf16.mxu0 0
        %845 = vmatpush1.bf16.msra.mxu0 0
        %846 = vmatprep.subr.bf16.mxu0 0
        %847 = vmatpush1.bf16.msra.mxu0 0
        %848 = vmatprep.subr.bf16.mxu0 0
        %849 = vmatpush1.bf16.msra.mxu0 0
        %850 = vmatprep.subr.bf16.mxu0 0
        %851 = vmatpush1.bf16.msra.mxu0 0
        %852 = vmatprep.mubr.bf16.mxu0 0
        %853 = vmatmul.mubr.bf16.gmra.mrb[0].mxu0 %v565
        %v854 = vpop.f32.mrb[0].mxu0
        %v855 = vadd.f32 0.0, %v854
        %v856 = vpop.f32.mrb[0].mxu0
        %v857 = vpop.f32.mrb[0].mxu0
        %v858 = vadd.f32 0.0, %v857
        %v859 = vpop.f32.mrb[0].mxu0
        %860 = vdwg.mxu0
        %v861 = vmul.f32 %v855, 2.0
        %v862 = vmul.f32 %v858, 2.0
        %v863 = vsub.f32 %v861, %v547
        %v864 = vsub.f32 %v862, %v548
        %v865 = vpack.c.bf16 %v864, %v863
        %s866 = scalar_lea.vmem %s3, 48
        %v867 = vld [vmem:[%s866] sm:$0xff]
        %v868 = vld [vmem:[%s866 + $0x8] sm:$0xf]
        %v869 = vld [vmem:[%s866 + $0xc] sm:$0xff]
        %v870 = vld [vmem:[%s866 + $0x14] sm:$0xf]
        %v875 = vunpack.c.l.b16 %v867
        %v876 = vunpack.c.h.b16 %v867
        %v877 = vunpack.c.l.b16 %v868
        %v878 = vunpack.c.l.b16 %v869
        %v879 = vunpack.c.h.b16 %v869
        %v880 = vunpack.c.l.b16 %v870
        %v881 = vpack.c.b16 %v878, %v875
        %v882 = vpack.c.b16 %v879, %v876
        %v883 = vpack.c.b16 %v880, %v877
        %v888 = vsel %vm563, %v865, 0
        %890 = vmatprep.subr.bf16.mxu0 %v882
        %891 = vmatpush1.bf16.msra.mxu0 %v881
        %892 = vmatprep.subr.bf16.mxu0 0
        %893 = vmatpush1.bf16.msra.mxu0 0
        %894 = vmatprep.subr.bf16.mxu0 0
        %895 = vmatpush1.bf16.msra.mxu0 0
        %896 = vmatprep.subr.bf16.mxu0 0
        %897 = vmatpush1.bf16.msra.mxu0 0
        %898 = vmatprep.subr.bf16.mxu0 0
        %899 = vmatpush1.bf16.msra.mxu0 0
        %900 = vmatprep.subr.bf16.mxu0 0
        %901 = vmatpush1.bf16.msra.mxu0 0
        %902 = vmatprep.subr.bf16.mxu0 0
        %903 = vmatpush1.bf16.msra.mxu0 0
        %904 = vmatprep.subr.bf16.mxu0 0
        %905 = vmatpush1.bf16.msra.mxu0 0
        %906 = vmatprep.subr.bf16.mxu0 0
        %907 = vmatpush1.bf16.msra.mxu0 0
        %908 = vmatprep.subr.bf16.mxu0 0
        %909 = vmatpush1.bf16.msra.mxu0 0
        %910 = vmatprep.subr.bf16.mxu0 0
        %911 = vmatpush1.bf16.msra.mxu0 0
        %912 = vmatprep.subr.bf16.mxu0 0
        %913 = vmatpush1.bf16.msra.mxu0 0
        %914 = vmatprep.subr.bf16.mxu0 0
        %915 = vmatpush1.bf16.msra.mxu0 0
        %916 = vmatprep.subr.bf16.mxu0 0
        %917 = vmatpush1.bf16.msra.mxu0 0
        %918 = vmatprep.subr.bf16.mxu0 0
        %919 = vmatpush1.bf16.msra.mxu0 0
        %920 = vmatprep.subr.bf16.mxu0 0
        %921 = vmatpush1.bf16.msra.mxu0 0
        %922 = vmatprep.mubr.bf16.mxu0 0
        %923 = vmatmul.mubr.bf16.gmra.mrb[0].mxu0 %v888
        %v924 = vpop.f32.mrb[0].mxu0
        %v925 = vadd.f32 0.0, %v924
        %v926 = vpop.f32.mrb[0].mxu0
        %v927 = vadd.f32 0.0, %v926
        %v928 = vpop.f32.mrb[0].mxu0
        %v929 = vadd.f32 0.0, %v928
        %v930 = vpop.f32.mrb[0].mxu0
        %v931 = vadd.f32 0.0, %v930
        %932 = vdwg.mxu0
        %933 = vmatprep.subr.bf16.mxu0 0
        %934 = vmatpush1.bf16.msra.mxu0 %v883
        %935 = vmatprep.subr.bf16.mxu0 0
        %936 = vmatpush1.bf16.msra.mxu0 0
        %937 = vmatprep.subr.bf16.mxu0 0
        %938 = vmatpush1.bf16.msra.mxu0 0
        %939 = vmatprep.subr.bf16.mxu0 0
        %940 = vmatpush1.bf16.msra.mxu0 0
        %941 = vmatprep.subr.bf16.mxu0 0
        %942 = vmatpush1.bf16.msra.mxu0 0
        %943 = vmatprep.subr.bf16.mxu0 0
        %944 = vmatpush1.bf16.msra.mxu0 0
        %945 = vmatprep.subr.bf16.mxu0 0
        %946 = vmatpush1.bf16.msra.mxu0 0
        %947 = vmatprep.subr.bf16.mxu0 0
        %948 = vmatpush1.bf16.msra.mxu0 0
        %949 = vmatprep.subr.bf16.mxu0 0
        %950 = vmatpush1.bf16.msra.mxu0 0
        %951 = vmatprep.subr.bf16.mxu0 0
        %952 = vmatpush1.bf16.msra.mxu0 0
        %953 = vmatprep.subr.bf16.mxu0 0
        %954 = vmatpush1.bf16.msra.mxu0 0
        %955 = vmatprep.subr.bf16.mxu0 0
        %956 = vmatpush1.bf16.msra.mxu0 0
        %957 = vmatprep.subr.bf16.mxu0 0
        %958 = vmatpush1.bf16.msra.mxu0 0
        %959 = vmatprep.subr.bf16.mxu0 0
        %960 = vmatpush1.bf16.msra.mxu0 0
        %961 = vmatprep.subr.bf16.mxu0 0
        %962 = vmatpush1.bf16.msra.mxu0 0
        %963 = vmatprep.subr.bf16.mxu0 0
        %964 = vmatpush1.bf16.msra.mxu0 0
        %965 = vmatprep.mubr.bf16.mxu0 0
        %966 = vmatmul.mubr.bf16.gmra.mrb[0].mxu0 %v888
        %v967 = vpop.f32.mrb[0].mxu0
        %v968 = vadd.f32 0.0, %v967
        %v969 = vpop.f32.mrb[0].mxu0
        %v970 = vpop.f32.mrb[0].mxu0
        %v971 = vadd.f32 0.0, %v970
        %v972 = vpop.f32.mrb[0].mxu0
        %973 = vdwg.mxu0
        %v974 = vadd.f32 %v771, %v925
        %v975 = vadd.f32 %v773, %v927
        %v976 = vadd.f32 %v814, %v968
        %v977 = vadd.f32 %v775, %v929
        %v978 = vadd.f32 %v777, %v931
        %v979 = vadd.f32 %v817, %v971
        %s980 = scalar_lea.vmem %s0, 8
        %v981 = vld [vmem:[%s980] sm:$0xf]
        %v982 = vld [vmem:[%s980 + $0x4] sm:$0xf]
        %v985 = vunpack.c.l.b16 %v981
        %v986 = vunpack.c.l.b16 %v982
        %v987 = vpack.c.b16 %v986, %v985
        %v989 = vsel %vm563, %v987, 0
        %991 = vmatprep.subr.bf16.mxu0 0
        %992 = vmatpush1.bf16.msra.mxu0 %v608
        %993 = vmatprep.subr.bf16.mxu0 0
        %994 = vmatpush1.bf16.msra.mxu0 0
        %995 = vmatprep.subr.bf16.mxu0 0
        %996 = vmatpush1.bf16.msra.mxu0 0
        %997 = vmatprep.subr.bf16.mxu0 0
        %998 = vmatpush1.bf16.msra.mxu0 0
        %999 = vmatprep.subr.bf16.mxu0 0
        %1000 = vmatpush1.bf16.msra.mxu0 0
        %1001 = vmatprep.subr.bf16.mxu0 0
        %1002 = vmatpush1.bf16.msra.mxu0 0
        %1003 = vmatprep.subr.bf16.mxu0 0
        %1004 = vmatpush1.bf16.msra.mxu0 0
        %1005 = vmatprep.subr.bf16.mxu0 0
        %1006 = vmatpush1.bf16.msra.mxu0 0
        %1007 = vmatprep.subr.bf16.mxu0 0
        %1008 = vmatpush1.bf16.msra.mxu0 0
        %1009 = vmatprep.subr.bf16.mxu0 0
        %1010 = vmatpush1.bf16.msra.mxu0 0
        %1011 = vmatprep.subr.bf16.mxu0 0
        %1012 = vmatpush1.bf16.msra.mxu0 0
        %1013 = vmatprep.subr.bf16.mxu0 0
        %1014 = vmatpush1.bf16.msra.mxu0 0
        %1015 = vmatprep.subr.bf16.mxu0 0
        %1016 = vmatpush1.bf16.msra.mxu0 0
        %1017 = vmatprep.subr.bf16.mxu0 0
        %1018 = vmatpush1.bf16.msra.mxu0 0
        %1019 = vmatprep.subr.bf16.mxu0 0
        %1020 = vmatpush1.bf16.msra.mxu0 0
        %1021 = vmatprep.subr.bf16.mxu0 0
        %1022 = vmatpush1.bf16.msra.mxu0 0
        %1023 = vmatprep.mubr.bf16.mxu0 0
        %1024 = vmatmul.mubr.bf16.gmra.mrb[0].mxu0 %v989
        %v1025 = vpop.f32.mrb[0].mxu0
        %v1026 = vadd.f32 0.0, %v1025
        %v1027 = vpop.f32.mrb[0].mxu0
        %v1028 = vpop.f32.mrb[0].mxu0
        %v1029 = vadd.f32 0.0, %v1028
        %v1030 = vpop.f32.mrb[0].mxu0
        %1031 = vdwg.mxu0
        %v1032 = vpack.c.bf16 %v1029, %v1026
        %s1033 = scalar_lea.vmem %s3, 72
        %v1034 = vld [vmem:[%s1033] sm:$0xff]
        %v1035 = vld [vmem:[%s1033 + $0x8] sm:$0xf]
        %v1036 = vld [vmem:[%s1033 + $0xc] sm:$0xff]
        %v1037 = vld [vmem:[%s1033 + $0x14] sm:$0xf]
        %v1042 = vunpack.c.l.b16 %v1034
        %v1043 = vunpack.c.h.b16 %v1034
        %v1044 = vunpack.c.l.b16 %v1035
        %v1045 = vunpack.c.l.b16 %v1036
        %v1046 = vunpack.c.h.b16 %v1036
        %v1047 = vunpack.c.l.b16 %v1037
        %v1048 = vpack.c.b16 %v1045, %v1042
        %v1049 = vpack.c.b16 %v1046, %v1043
        %v1050 = vpack.c.b16 %v1047, %v1044
        %v1055 = vsel %vm563, %v1032, 0
        %1057 = vmatprep.subr.bf16.mxu0 %v1049
        %1058 = vmatpush1.bf16.msra.mxu0 %v1048
        %1059 = vmatprep.subr.bf16.mxu0 0
        %1060 = vmatpush1.bf16.msra.mxu0 0
        %1061 = vmatprep.subr.bf16.mxu0 0
        %1062 = vmatpush1.bf16.msra.mxu0 0
        %1063 = vmatprep.subr.bf16.mxu0 0
        %1064 = vmatpush1.bf16.msra.mxu0 0
        %1065 = vmatprep.subr.bf16.mxu0 0
        %1066 = vmatpush1.bf16.msra.mxu0 0
        %1067 = vmatprep.subr.bf16.mxu0 0
        %1068 = vmatpush1.bf16.msra.mxu0 0
        %1069 = vmatprep.subr.bf16.mxu0 0
        %1070 = vmatpush1.bf16.msra.mxu0 0
        %1071 = vmatprep.subr.bf16.mxu0 0
        %1072 = vmatpush1.bf16.msra.mxu0 0
        %1073 = vmatprep.subr.bf16.mxu0 0
        %1074 = vmatpush1.bf16.msra.mxu0 0
        %1075 = vmatprep.subr.bf16.mxu0 0
        %1076 = vmatpush1.bf16.msra.mxu0 0
        %1077 = vmatprep.subr.bf16.mxu0 0
        %1078 = vmatpush1.bf16.msra.mxu0 0
        %1079 = vmatprep.subr.bf16.mxu0 0
        %1080 = vmatpush1.bf16.msra.mxu0 0
        %1081 = vmatprep.subr.bf16.mxu0 0
        %1082 = vmatpush1.bf16.msra.mxu0 0
        %1083 = vmatprep.subr.bf16.mxu0 0
        %1084 = vmatpush1.bf16.msra.mxu0 0
        %1085 = vmatprep.subr.bf16.mxu0 0
        %1086 = vmatpush1.bf16.msra.mxu0 0
        %1087 = vmatprep.subr.bf16.mxu0 0
        %1088 = vmatpush1.bf16.msra.mxu0 0
        %1089 = vmatprep.mubr.bf16.mxu0 0
        %1090 = vmatmul.mubr.bf16.gmra.mrb[0].mxu0 %v1055
        %v1091 = vpop.f32.mrb[0].mxu0
        %v1092 = vadd.f32 0.0, %v1091
        %v1093 = vpop.f32.mrb[0].mxu0
        %v1094 = vadd.f32 0.0, %v1093
        %v1095 = vpop.f32.mrb[0].mxu0
        %v1096 = vadd.f32 0.0, %v1095
        %v1097 = vpop.f32.mrb[0].mxu0
        %v1098 = vadd.f32 0.0, %v1097
        %1099 = vdwg.mxu0
        %1100 = vmatprep.subr.bf16.mxu0 0
        %1101 = vmatpush1.bf16.msra.mxu0 %v1050
        %1102 = vmatprep.subr.bf16.mxu0 0
        %1103 = vmatpush1.bf16.msra.mxu0 0
        %1104 = vmatprep.subr.bf16.mxu0 0
        %1105 = vmatpush1.bf16.msra.mxu0 0
        %1106 = vmatprep.subr.bf16.mxu0 0
        %1107 = vmatpush1.bf16.msra.mxu0 0
        %1108 = vmatprep.subr.bf16.mxu0 0
        %1109 = vmatpush1.bf16.msra.mxu0 0
        %1110 = vmatprep.subr.bf16.mxu0 0
        %1111 = vmatpush1.bf16.msra.mxu0 0
        %1112 = vmatprep.subr.bf16.mxu0 0
        %1113 = vmatpush1.bf16.msra.mxu0 0
        %1114 = vmatprep.subr.bf16.mxu0 0
        %1115 = vmatpush1.bf16.msra.mxu0 0
        %1116 = vmatprep.subr.bf16.mxu0 0
        %1117 = vmatpush1.bf16.msra.mxu0 0
        %1118 = vmatprep.subr.bf16.mxu0 0
        %1119 = vmatpush1.bf16.msra.mxu0 0
        %1120 = vmatprep.subr.bf16.mxu0 0
        %1121 = vmatpush1.bf16.msra.mxu0 0
        %1122 = vmatprep.subr.bf16.mxu0 0
        %1123 = vmatpush1.bf16.msra.mxu0 0
        %1124 = vmatprep.subr.bf16.mxu0 0
        %1125 = vmatpush1.bf16.msra.mxu0 0
        %1126 = vmatprep.subr.bf16.mxu0 0
        %1127 = vmatpush1.bf16.msra.mxu0 0
        %1128 = vmatprep.subr.bf16.mxu0 0
        %1129 = vmatpush1.bf16.msra.mxu0 0
        %1130 = vmatprep.subr.bf16.mxu0 0
        %1131 = vmatpush1.bf16.msra.mxu0 0
        %1132 = vmatprep.mubr.bf16.mxu0 0
        %1133 = vmatmul.mubr.bf16.gmra.mrb[0].mxu0 %v1055
        %v1134 = vpop.f32.mrb[0].mxu0
        %v1135 = vadd.f32 0.0, %v1134
        %v1136 = vpop.f32.mrb[0].mxu0
        %v1137 = vpop.f32.mrb[0].mxu0
        %v1138 = vadd.f32 0.0, %v1137
        %v1139 = vpop.f32.mrb[0].mxu0
        %1140 = vdwg.mxu0
        %v1141 = vadd.f32 %v974, %v1092
        %v1142 = vadd.f32 %v975, %v1094
        %v1143 = vadd.f32 %v976, %v1135
        %v1144 = vadd.f32 %v977, %v1096
        %v1145 = vadd.f32 %v978, %v1098
        %v1146 = vadd.f32 %v979, %v1138
        %1147 = vmatprep.subr.bf16.mxu0 0
        %1148 = vmatpush1.bf16.msra.mxu0 %v1032
        %1149 = vmatprep.subr.bf16.mxu0 0
        %1150 = vmatpush1.bf16.msra.mxu0 0
        %1151 = vmatprep.subr.bf16.mxu0 0
        %1152 = vmatpush1.bf16.msra.mxu0 0
        %1153 = vmatprep.subr.bf16.mxu0 0
        %1154 = vmatpush1.bf16.msra.mxu0 0
        %1155 = vmatprep.subr.bf16.mxu0 0
        %1156 = vmatpush1.bf16.msra.mxu0 0
        %1157 = vmatprep.subr.bf16.mxu0 0
        %1158 = vmatpush1.bf16.msra.mxu0 0
        %1159 = vmatprep.subr.bf16.mxu0 0
        %1160 = vmatpush1.bf16.msra.mxu0 0
        %1161 = vmatprep.subr.bf16.mxu0 0
        %1162 = vmatpush1.bf16.msra.mxu0 0
        %1163 = vmatprep.subr.bf16.mxu0 0
        %1164 = vmatpush1.bf16.msra.mxu0 0
        %1165 = vmatprep.subr.bf16.mxu0 0
        %1166 = vmatpush1.bf16.msra.mxu0 0
        %1167 = vmatprep.subr.bf16.mxu0 0
        %1168 = vmatpush1.bf16.msra.mxu0 0
        %1169 = vmatprep.subr.bf16.mxu0 0
        %1170 = vmatpush1.bf16.msra.mxu0 0
        %1171 = vmatprep.subr.bf16.mxu0 0
        %1172 = vmatpush1.bf16.msra.mxu0 0
        %1173 = vmatprep.subr.bf16.mxu0 0
        %1174 = vmatpush1.bf16.msra.mxu0 0
        %1175 = vmatprep.subr.bf16.mxu0 0
        %1176 = vmatpush1.bf16.msra.mxu0 0
        %1177 = vmatprep.subr.bf16.mxu0 0
        %1178 = vmatpush1.bf16.msra.mxu0 0
        %1179 = vmatprep.mubr.bf16.mxu0 0
        %1180 = vmatmul.mubr.bf16.gmra.mrb[0].mxu0 %v989
        %v1181 = vpop.f32.mrb[0].mxu0
        %v1182 = vadd.f32 0.0, %v1181
        %v1183 = vpop.f32.mrb[0].mxu0
        %v1184 = vpop.f32.mrb[0].mxu0
        %v1185 = vadd.f32 0.0, %v1184
        %v1186 = vpop.f32.mrb[0].mxu0
        %1187 = vdwg.mxu0
        %v1188 = vmul.f32 %v1182, 2.0
        %v1189 = vmul.f32 %v1185, 2.0
        %v1190 = vsub.f32 %v1188, %v602
        %v1191 = vsub.f32 %v1189, %v605
        %v1192 = vpack.c.bf16 %v1191, %v1190
        %s1193 = scalar_lea.vmem %s3, 96
        %v1194 = vld [vmem:[%s1193] sm:$0xff]
        %v1195 = vld [vmem:[%s1193 + $0x8] sm:$0xf]
        %v1196 = vld [vmem:[%s1193 + $0xc] sm:$0xff]
        %v1197 = vld [vmem:[%s1193 + $0x14] sm:$0xf]
        %v1202 = vunpack.c.l.b16 %v1194
        %v1203 = vunpack.c.h.b16 %v1194
        %v1204 = vunpack.c.l.b16 %v1195
        %v1205 = vunpack.c.l.b16 %v1196
        %v1206 = vunpack.c.h.b16 %v1196
        %v1207 = vunpack.c.l.b16 %v1197
        %v1208 = vpack.c.b16 %v1205, %v1202
        %v1209 = vpack.c.b16 %v1206, %v1203
        %v1210 = vpack.c.b16 %v1207, %v1204
        %v1215 = vsel %vm563, %v1192, 0
        %1217 = vmatprep.subr.bf16.mxu0 %v1209
        %1218 = vmatpush1.bf16.msra.mxu0 %v1208
        %1219 = vmatprep.subr.bf16.mxu0 0
        %1220 = vmatpush1.bf16.msra.mxu0 0
        %1221 = vmatprep.subr.bf16.mxu0 0
        %1222 = vmatpush1.bf16.msra.mxu0 0
        %1223 = vmatprep.subr.bf16.mxu0 0
        %1224 = vmatpush1.bf16.msra.mxu0 0
        %1225 = vmatprep.subr.bf16.mxu0 0
        %1226 = vmatpush1.bf16.msra.mxu0 0
        %1227 = vmatprep.subr.bf16.mxu0 0
        %1228 = vmatpush1.bf16.msra.mxu0 0
        %1229 = vmatprep.subr.bf16.mxu0 0
        %1230 = vmatpush1.bf16.msra.mxu0 0
        %1231 = vmatprep.subr.bf16.mxu0 0
        %1232 = vmatpush1.bf16.msra.mxu0 0
        %1233 = vmatprep.subr.bf16.mxu0 0
        %1234 = vmatpush1.bf16.msra.mxu0 0
        %1235 = vmatprep.subr.bf16.mxu0 0
        %1236 = vmatpush1.bf16.msra.mxu0 0
        %1237 = vmatprep.subr.bf16.mxu0 0
        %1238 = vmatpush1.bf16.msra.mxu0 0
        %1239 = vmatprep.subr.bf16.mxu0 0
        %1240 = vmatpush1.bf16.msra.mxu0 0
        %1241 = vmatprep.subr.bf16.mxu0 0
        %1242 = vmatpush1.bf16.msra.mxu0 0
        %1243 = vmatprep.subr.bf16.mxu0 0
        %1244 = vmatpush1.bf16.msra.mxu0 0
        %1245 = vmatprep.subr.bf16.mxu0 0
        %1246 = vmatpush1.bf16.msra.mxu0 0
        %1247 = vmatprep.subr.bf16.mxu0 0
        %1248 = vmatpush1.bf16.msra.mxu0 0
        %1249 = vmatprep.mubr.bf16.mxu0 0
        %1250 = vmatmul.mubr.bf16.gmra.mrb[0].mxu0 %v1215
        %v1251 = vpop.f32.mrb[0].mxu0
        %v1252 = vadd.f32 0.0, %v1251
        %v1253 = vpop.f32.mrb[0].mxu0
        %v1254 = vadd.f32 0.0, %v1253
        %v1255 = vpop.f32.mrb[0].mxu0
        %v1256 = vadd.f32 0.0, %v1255
        %v1257 = vpop.f32.mrb[0].mxu0
        %v1258 = vadd.f32 0.0, %v1257
        %1259 = vdwg.mxu0
        %1260 = vmatprep.subr.bf16.mxu0 0
        %1261 = vmatpush1.bf16.msra.mxu0 %v1210
        %1262 = vmatprep.subr.bf16.mxu0 0
        %1263 = vmatpush1.bf16.msra.mxu0 0
        %1264 = vmatprep.subr.bf16.mxu0 0
        %1265 = vmatpush1.bf16.msra.mxu0 0
        %1266 = vmatprep.subr.bf16.mxu0 0
        %1267 = vmatpush1.bf16.msra.mxu0 0
        %1268 = vmatprep.subr.bf16.mxu0 0
        %1269 = vmatpush1.bf16.msra.mxu0 0
        %1270 = vmatprep.subr.bf16.mxu0 0
        %1271 = vmatpush1.bf16.msra.mxu0 0
        %1272 = vmatprep.subr.bf16.mxu0 0
        %1273 = vmatpush1.bf16.msra.mxu0 0
        %1274 = vmatprep.subr.bf16.mxu0 0
        %1275 = vmatpush1.bf16.msra.mxu0 0
        %1276 = vmatprep.subr.bf16.mxu0 0
        %1277 = vmatpush1.bf16.msra.mxu0 0
        %1278 = vmatprep.subr.bf16.mxu0 0
        %1279 = vmatpush1.bf16.msra.mxu0 0
        %1280 = vmatprep.subr.bf16.mxu0 0
        %1281 = vmatpush1.bf16.msra.mxu0 0
        %1282 = vmatprep.subr.bf16.mxu0 0
        %1283 = vmatpush1.bf16.msra.mxu0 0
        %1284 = vmatprep.subr.bf16.mxu0 0
        %1285 = vmatpush1.bf16.msra.mxu0 0
        %1286 = vmatprep.subr.bf16.mxu0 0
        %1287 = vmatpush1.bf16.msra.mxu0 0
        %1288 = vmatprep.subr.bf16.mxu0 0
        %1289 = vmatpush1.bf16.msra.mxu0 0
        %1290 = vmatprep.subr.bf16.mxu0 0
        %1291 = vmatpush1.bf16.msra.mxu0 0
        %1292 = vmatprep.mubr.bf16.mxu0 0
        %1293 = vmatmul.mubr.bf16.gmra.mrb[0].mxu0 %v1215
        %v1294 = vpop.f32.mrb[0].mxu0
        %v1295 = vadd.f32 0.0, %v1294
        %v1296 = vpop.f32.mrb[0].mxu0
        %v1297 = vpop.f32.mrb[0].mxu0
        %v1298 = vadd.f32 0.0, %v1297
        %v1299 = vpop.f32.mrb[0].mxu0
        %1300 = vdwg.mxu0
        %v1301 = vadd.f32 %v1141, %v1252
        %v1302 = vadd.f32 %v1142, %v1254
        %v1303 = vadd.f32 %v1143, %v1295
        %v1304 = vadd.f32 %v1144, %v1256
        %v1305 = vadd.f32 %v1145, %v1258
        %v1306 = vadd.f32 %v1146, %v1298
        %v1307 = vpack.c.bf16 %v550, %v549
        %v1308 = vld [vmem:[#allocation3] sm:$0xff]
        %v1309 = vld [vmem:[#allocation3 + $0x8] sm:$0xff]
        %v1310 = vld [vmem:[#allocation3 + $0x10] sm:$0xff]
        %v1311 = vld [vmem:[#allocation3 + $0x18] sm:$0xff]
        %v1312 = vld [vmem:[#allocation3 + $0x20] sm:$0xff]
        %v1313 = vld [vmem:[#allocation3 + $0x28] sm:$0xff]
        %v1314 = vld [vmem:[#allocation3 + $0x30] sm:$0xff]
        %v1315 = vld [vmem:[#allocation3 + $0x38] sm:$0xff]
        %v1316 = vld [vmem:[#allocation3 + $0x40] sm:$0xff]
        %v1317 = vld [vmem:[#allocation3 + $0x48] sm:$0xff]
        %v1318 = vld [vmem:[#allocation3 + $0x50] sm:$0xff]
        %v1319 = vld [vmem:[#allocation3 + $0x58] sm:$0xff]
        %v1320 = vld [vmem:[#allocation3 + $0x60] sm:$0xff]
        %v1321 = vld [vmem:[#allocation3 + $0x68] sm:$0xff]
        %v1322 = vld [vmem:[#allocation3 + $0x70] sm:$0xff]
        %v1323 = vld [vmem:[#allocation3 + $0x78] sm:$0xff]
        %1324 = vmatprep.subr.bf16.mxu0 0
        %1325 = vmatpush1.bf16.msra.mxu0 %v1307
        %1326 = vmatprep.subr.bf16.mxu0 0
        %1327 = vmatpush1.bf16.msra.mxu0 0
        %1328 = vmatprep.subr.bf16.mxu0 0
        %1329 = vmatpush1.bf16.msra.mxu0 0
        %1330 = vmatprep.subr.bf16.mxu0 0
        %1331 = vmatpush1.bf16.msra.mxu0 0
        %1332 = vmatprep.subr.bf16.mxu0 0
        %1333 = vmatpush1.bf16.msra.mxu0 0
        %1334 = vmatprep.subr.bf16.mxu0 0
        %1335 = vmatpush1.bf16.msra.mxu0 0
        %1336 = vmatprep.subr.bf16.mxu0 0
        %1337 = vmatpush1.bf16.msra.mxu0 0
        %1338 = vmatprep.subr.bf16.mxu0 0
        %1339 = vmatpush1.bf16.msra.mxu0 0
        %1340 = vmatprep.subr.bf16.mxu0 0
        %1341 = vmatpush1.bf16.msra.mxu0 0
        %1342 = vmatprep.subr.bf16.mxu0 0
        %1343 = vmatpush1.bf16.msra.mxu0 0
        %1344 = vmatprep.subr.bf16.mxu0 0
        %1345 = vmatpush1.bf16.msra.mxu0 0
        %1346 = vmatprep.subr.bf16.mxu0 0
        %1347 = vmatpush1.bf16.msra.mxu0 0
        %1348 = vmatprep.subr.bf16.mxu0 0
        %1349 = vmatpush1.bf16.msra.mxu0 0
        %1350 = vmatprep.subr.bf16.mxu0 0
        %1351 = vmatpush1.bf16.msra.mxu0 0
        %1352 = vmatprep.subr.bf16.mxu0 0
        %1353 = vmatpush1.bf16.msra.mxu0 0
        %1354 = vmatprep.subr.bf16.mxu0 0
        %1355 = vmatpush1.bf16.msra.mxu0 0
        %1356 = vmatprep.mubr.bf16.mxu0 0
        %1357 = vmatmul.mubr.bf16.gmra.mrb[0].mxu0 %v565
        %v1358 = vpop.f32.mrb[0].mxu0
        %v1359 = vadd.f32 0.0, %v1358
        %v1360 = vpop.f32.mrb[0].mxu0
        %v1361 = vpop.f32.mrb[0].mxu0
        %v1362 = vadd.f32 0.0, %v1361
        %v1363 = vpop.f32.mrb[0].mxu0
        %1364 = vdwg.mxu0
        %v1365 = vpack.c.bf16 %v1362, %v1359
        %s1366 = scalar_lea.vmem [#allocation3], 128
        %v1367 = vld [vmem:[%s1366] sm:$0xff]
        %v1368 = vld [vmem:[%s1366 + $0x8] sm:$0xff]
        %v1369 = vld [vmem:[%s1366 + $0x10] sm:$0xff]
        %v1370 = vld [vmem:[%s1366 + $0x18] sm:$0xff]
        %v1371 = vld [vmem:[%s1366 + $0x20] sm:$0xff]
        %v1372 = vld [vmem:[%s1366 + $0x28] sm:$0xff]
        %v1373 = vld [vmem:[%s1366 + $0x30] sm:$0xff]
        %v1374 = vld [vmem:[%s1366 + $0x38] sm:$0xff]
        %v1375 = vld [vmem:[%s1366 + $0x40] sm:$0xff]
        %v1376 = vld [vmem:[%s1366 + $0x48] sm:$0xff]
        %v1377 = vld [vmem:[%s1366 + $0x50] sm:$0xff]
        %v1378 = vld [vmem:[%s1366 + $0x58] sm:$0xff]
        %v1379 = vld [vmem:[%s1366 + $0x60] sm:$0xff]
        %v1380 = vld [vmem:[%s1366 + $0x68] sm:$0xff]
        %v1381 = vld [vmem:[%s1366 + $0x70] sm:$0xff]
        %v1382 = vld [vmem:[%s1366 + $0x78] sm:$0xff]
        %v1399 = vunpack.c.l.b16 %v1367
        %v1400 = vunpack.c.h.b16 %v1367
        %v1401 = vunpack.c.l.b16 %v1368
        %v1402 = vunpack.c.h.b16 %v1368
        %v1403 = vunpack.c.l.b16 %v1369
        %v1404 = vunpack.c.h.b16 %v1369
        %v1405 = vunpack.c.l.b16 %v1370
        %v1406 = vunpack.c.h.b16 %v1370
        %v1407 = vunpack.c.l.b16 %v1371
        %v1408 = vunpack.c.h.b16 %v1371
        %v1409 = vunpack.c.l.b16 %v1372
        %v1410 = vunpack.c.h.b16 %v1372
        %v1411 = vunpack.c.l.b16 %v1373
        %v1412 = vunpack.c.h.b16 %v1373
        %v1413 = vunpack.c.l.b16 %v1374
        %v1414 = vunpack.c.h.b16 %v1374
        %v1415 = vunpack.c.l.b16 %v1375
        %v1416 = vunpack.c.h.b16 %v1375
        %v1417 = vunpack.c.l.b16 %v1376
        %v1418 = vunpack.c.h.b16 %v1376
        %v1419 = vunpack.c.l.b16 %v1377
        %v1420 = vunpack.c.h.b16 %v1377
        %v1421 = vunpack.c.l.b16 %v1378
        %v1422 = vunpack.c.h.b16 %v1378
        %v1423 = vunpack.c.l.b16 %v1379
        %v1424 = vunpack.c.h.b16 %v1379
        %v1425 = vunpack.c.l.b16 %v1380
        %v1426 = vunpack.c.h.b16 %v1380
        %v1427 = vunpack.c.l.b16 %v1381
        %v1428 = vunpack.c.h.b16 %v1381
        %v1429 = vunpack.c.l.b16 %v1382
        %v1430 = vunpack.c.h.b16 %v1382
        %v1431 = vpack.c.b16 %v1401, %v1399
        %v1432 = vpack.c.b16 %v1402, %v1400
        %v1433 = vpack.c.b16 %v1405, %v1403
        %v1434 = vpack.c.b16 %v1406, %v1404
        %v1435 = vpack.c.b16 %v1409, %v1407
        %v1436 = vpack.c.b16 %v1410, %v1408
        %v1437 = vpack.c.b16 %v1413, %v1411
        %v1438 = vpack.c.b16 %v1414, %v1412
        %v1439 = vpack.c.b16 %v1417, %v1415
        %v1440 = vpack.c.b16 %v1418, %v1416
        %v1441 = vpack.c.b16 %v1421, %v1419
        %v1442 = vpack.c.b16 %v1422, %v1420
        %v1443 = vpack.c.b16 %v1425, %v1423
        %v1444 = vpack.c.b16 %v1426, %v1424
        %v1445 = vpack.c.b16 %v1429, %v1427
        %v1446 = vpack.c.b16 %v1430, %v1428
        %1463 = vmatprep.subr.bf16.mxu0 %v1432
        %1464 = vmatpush1.bf16.msra.mxu0 %v1431
        %1465 = vmatprep.subr.bf16.mxu0 %v1434
        %1466 = vmatpush1.bf16.msra.mxu0 %v1433
        %1467 = vmatprep.subr.bf16.mxu0 %v1436
        %1468 = vmatpush1.bf16.msra.mxu0 %v1435
        %1469 = vmatprep.subr.bf16.mxu0 %v1438
        %1470 = vmatpush1.bf16.msra.mxu0 %v1437
        %1471 = vmatprep.subr.bf16.mxu0 %v1440
        %1472 = vmatpush1.bf16.msra.mxu0 %v1439
        %1473 = vmatprep.subr.bf16.mxu0 %v1442
        %1474 = vmatpush1.bf16.msra.mxu0 %v1441
        %1475 = vmatprep.subr.bf16.mxu0 %v1444
        %1476 = vmatpush1.bf16.msra.mxu0 %v1443
        %1477 = vmatprep.subr.bf16.mxu0 %v1446
        %1478 = vmatpush1.bf16.msra.mxu0 %v1445
        %1479 = vmatprep.subr.bf16.mxu0 0
        %1480 = vmatpush1.bf16.msra.mxu0 0
        %1481 = vmatprep.subr.bf16.mxu0 0
        %1482 = vmatpush1.bf16.msra.mxu0 0
        %1483 = vmatprep.subr.bf16.mxu0 0
        %1484 = vmatpush1.bf16.msra.mxu0 0
        %1485 = vmatprep.subr.bf16.mxu0 0
        %1486 = vmatpush1.bf16.msra.mxu0 0
        %1487 = vmatprep.subr.bf16.mxu0 0
        %1488 = vmatpush1.bf16.msra.mxu0 0
        %1489 = vmatprep.subr.bf16.mxu0 0
        %1490 = vmatpush1.bf16.msra.mxu0 0
        %1491 = vmatprep.subr.bf16.mxu0 0
        %1492 = vmatpush1.bf16.msra.mxu0 0
        %1493 = vmatprep.subr.bf16.mxu0 0
        %1494 = vmatpush1.bf16.msra.mxu0 0
        %1495 = vmatprep.mubr.bf16.mxu0 0
        %1496 = vmatmul.mubr.bf16.gmra.mrb[0].mxu0 %v1365
        %v1497 = vpop.f32.mrb[0].mxu0
        %v1498 = vadd.f32 0.0, %v1497
        %v1499 = vpop.f32.mrb[0].mxu0
        %v1500 = vadd.f32 0.0, %v1499
        %v1501 = vpop.f32.mrb[0].mxu0
        %v1502 = vadd.f32 0.0, %v1501
        %v1503 = vpop.f32.mrb[0].mxu0
        %v1504 = vadd.f32 0.0, %v1503
        %1505 = vdwg.mxu0
        %v1522 = vunpack.c.l.b16 %v1308
        %v1523 = vunpack.c.h.b16 %v1308
        %v1524 = vunpack.c.l.b16 %v1309
        %v1525 = vunpack.c.h.b16 %v1309
        %v1526 = vunpack.c.l.b16 %v1310
        %v1527 = vunpack.c.h.b16 %v1310
        %v1528 = vunpack.c.l.b16 %v1311
        %v1529 = vunpack.c.h.b16 %v1311
        %v1530 = vunpack.c.l.b16 %v1312
        %v1531 = vunpack.c.h.b16 %v1312
        %v1532 = vunpack.c.l.b16 %v1313
        %v1533 = vunpack.c.h.b16 %v1313
        %v1534 = vunpack.c.l.b16 %v1314
        %v1535 = vunpack.c.h.b16 %v1314
        %v1536 = vunpack.c.l.b16 %v1315
        %v1537 = vunpack.c.h.b16 %v1315
        %v1538 = vunpack.c.l.b16 %v1316
        %v1539 = vunpack.c.h.b16 %v1316
        %v1540 = vunpack.c.l.b16 %v1317
        %v1541 = vunpack.c.h.b16 %v1317
        %v1542 = vunpack.c.l.b16 %v1318
        %v1543 = vunpack.c.h.b16 %v1318
        %v1544 = vunpack.c.l.b16 %v1319
        %v1545 = vunpack.c.h.b16 %v1319
        %v1546 = vunpack.c.l.b16 %v1320
        %v1547 = vunpack.c.h.b16 %v1320
        %v1548 = vunpack.c.l.b16 %v1321
        %v1549 = vunpack.c.h.b16 %v1321
        %v1550 = vunpack.c.l.b16 %v1322
        %v1551 = vunpack.c.h.b16 %v1322
        %v1552 = vunpack.c.l.b16 %v1323
        %v1553 = vunpack.c.h.b16 %v1323
        %v1554 = vpack.c.b16 %v1524, %v1522
        %v1555 = vpack.c.b16 %v1525, %v1523
        %v1556 = vpack.c.b16 %v1528, %v1526
        %v1557 = vpack.c.b16 %v1529, %v1527
        %v1558 = vpack.c.b16 %v1532, %v1530
        %v1559 = vpack.c.b16 %v1533, %v1531
        %v1560 = vpack.c.b16 %v1536, %v1534
        %v1561 = vpack.c.b16 %v1537, %v1535
        %v1562 = vpack.c.b16 %v1540, %v1538
        %v1563 = vpack.c.b16 %v1541, %v1539
        %v1564 = vpack.c.b16 %v1544, %v1542
        %v1565 = vpack.c.b16 %v1545, %v1543
        %v1566 = vpack.c.b16 %v1548, %v1546
        %v1567 = vpack.c.b16 %v1549, %v1547
        %v1568 = vpack.c.b16 %v1552, %v1550
        %v1569 = vpack.c.b16 %v1553, %v1551
        %1586 = vmatprep.subr.bf16.mxu0 %v1555
        %1587 = vmatpush1.bf16.msra.mxu0 %v1554
        %1588 = vmatprep.subr.bf16.mxu0 %v1557
        %1589 = vmatpush1.bf16.msra.mxu0 %v1556
        %1590 = vmatprep.subr.bf16.mxu0 %v1559
        %1591 = vmatpush1.bf16.msra.mxu0 %v1558
        %1592 = vmatprep.subr.bf16.mxu0 %v1561
        %1593 = vmatpush1.bf16.msra.mxu0 %v1560
        %1594 = vmatprep.subr.bf16.mxu0 %v1563
        %1595 = vmatpush1.bf16.msra.mxu0 %v1562
        %1596 = vmatprep.subr.bf16.mxu0 %v1565
        %1597 = vmatpush1.bf16.msra.mxu0 %v1564
        %1598 = vmatprep.subr.bf16.mxu0 %v1567
        %1599 = vmatpush1.bf16.msra.mxu0 %v1566
        %1600 = vmatprep.subr.bf16.mxu0 %v1569
        %1601 = vmatpush1.bf16.msra.mxu0 %v1568
        %1602 = vmatprep.subr.bf16.mxu0 0
        %1603 = vmatpush1.bf16.msra.mxu0 0
        %1604 = vmatprep.subr.bf16.mxu0 0
        %1605 = vmatpush1.bf16.msra.mxu0 0
        %1606 = vmatprep.subr.bf16.mxu0 0
        %1607 = vmatpush1.bf16.msra.mxu0 0
        %1608 = vmatprep.subr.bf16.mxu0 0
        %1609 = vmatpush1.bf16.msra.mxu0 0
        %1610 = vmatprep.subr.bf16.mxu0 0
        %1611 = vmatpush1.bf16.msra.mxu0 0
        %1612 = vmatprep.subr.bf16.mxu0 0
        %1613 = vmatpush1.bf16.msra.mxu0 0
        %1614 = vmatprep.subr.bf16.mxu0 0
        %1615 = vmatpush1.bf16.msra.mxu0 0
        %1616 = vmatprep.subr.bf16.mxu0 0
        %1617 = vmatpush1.bf16.msra.mxu0 0
        %1618 = vmatprep.mubr.bf16.mxu0 0
        %1619 = vmatmul.mubr.bf16.gmra.mrb[0].mxu0 %v1307
        %v1620 = vpop.f32.mrb[0].mxu0
        %v1621 = vadd.f32 %v1498, %v1620
        %v1622 = vpop.f32.mrb[0].mxu0
        %v1623 = vadd.f32 %v1500, %v1622
        %v1624 = vpop.f32.mrb[0].mxu0
        %v1625 = vadd.f32 %v1502, %v1624
        %v1626 = vpop.f32.mrb[0].mxu0
        %v1627 = vadd.f32 %v1504, %v1626
        %1628 = vdwg.mxu0
        %1629 = vmatprep.subr.bf16.mxu0 0
        %1630 = vmatpush1.bf16.msra.mxu0 %v1365
        %1631 = vmatprep.subr.bf16.mxu0 0
        %1632 = vmatpush1.bf16.msra.mxu0 0
        %1633 = vmatprep.subr.bf16.mxu0 0
        %1634 = vmatpush1.bf16.msra.mxu0 0
        %1635 = vmatprep.subr.bf16.mxu0 0
        %1636 = vmatpush1.bf16.msra.mxu0 0
        %1637 = vmatprep.subr.bf16.mxu0 0
        %1638 = vmatpush1.bf16.msra.mxu0 0
        %1639 = vmatprep.subr.bf16.mxu0 0
        %1640 = vmatpush1.bf16.msra.mxu0 0
        %1641 = vmatprep.subr.bf16.mxu0 0
        %1642 = vmatpush1.bf16.msra.mxu0 0
        %1643 = vmatprep.subr.bf16.mxu0 0
        %1644 = vmatpush1.bf16.msra.mxu0 0
        %1645 = vmatprep.subr.bf16.mxu0 0
        %1646 = vmatpush1.bf16.msra.mxu0 0
        %1647 = vmatprep.subr.bf16.mxu0 0
        %1648 = vmatpush1.bf16.msra.mxu0 0
        %1649 = vmatprep.subr.bf16.mxu0 0
        %1650 = vmatpush1.bf16.msra.mxu0 0
        %1651 = vmatprep.subr.bf16.mxu0 0
        %1652 = vmatpush1.bf16.msra.mxu0 0
        %1653 = vmatprep.subr.bf16.mxu0 0
        %1654 = vmatpush1.bf16.msra.mxu0 0
        %1655 = vmatprep.subr.bf16.mxu0 0
        %1656 = vmatpush1.bf16.msra.mxu0 0
        %1657 = vmatprep.subr.bf16.mxu0 0
        %1658 = vmatpush1.bf16.msra.mxu0 0
        %1659 = vmatprep.subr.bf16.mxu0 0
        %1660 = vmatpush1.bf16.msra.mxu0 0
        %1661 = vmatprep.mubr.bf16.mxu0 0
        %1662 = vmatmul.mubr.bf16.gmra.mrb[0].mxu0 %v565
        %v1663 = vpop.f32.mrb[0].mxu0
        %v1664 = vadd.f32 0.0, %v1663
        %v1665 = vpop.f32.mrb[0].mxu0
        %v1666 = vpop.f32.mrb[0].mxu0
        %v1667 = vadd.f32 0.0, %v1666
        %v1668 = vpop.f32.mrb[0].mxu0
        %1669 = vdwg.mxu0
        %v1670 = vmul.f32 %v1664, 2.0
        %v1671 = vmul.f32 %v1667, 2.0
        %v1672 = vsub.f32 %v1670, %v549
        %v1673 = vsub.f32 %v1671, %v550
        %v1674 = vpack.c.bf16 %v1673, %v1672
        %s1675 = scalar_lea.vmem [#allocation3], 256
        %v1676 = vld [vmem:[%s1675] sm:$0xff]
        %v1677 = vld [vmem:[%s1675 + $0x8] sm:$0xff]
        %v1678 = vld [vmem:[%s1675 + $0x10] sm:$0xff]
        %v1679 = vld [vmem:[%s1675 + $0x18] sm:$0xff]
        %v1680 = vld [vmem:[%s1675 + $0x20] sm:$0xff]
        %v1681 = vld [vmem:[%s1675 + $0x28] sm:$0xff]
        %v1682 = vld [vmem:[%s1675 + $0x30] sm:$0xff]
        %v1683 = vld [vmem:[%s1675 + $0x38] sm:$0xff]
        %v1684 = vld [vmem:[%s1675 + $0x40] sm:$0xff]
        %v1685 = vld [vmem:[%s1675 + $0x48] sm:$0xff]
        %v1686 = vld [vmem:[%s1675 + $0x50] sm:$0xff]
        %v1687 = vld [vmem:[%s1675 + $0x58] sm:$0xff]
        %v1688 = vld [vmem:[%s1675 + $0x60] sm:$0xff]
        %v1689 = vld [vmem:[%s1675 + $0x68] sm:$0xff]
        %v1690 = vld [vmem:[%s1675 + $0x70] sm:$0xff]
        %v1691 = vld [vmem:[%s1675 + $0x78] sm:$0xff]
        %v1708 = vunpack.c.l.b16 %v1676
        %v1709 = vunpack.c.h.b16 %v1676
        %v1710 = vunpack.c.l.b16 %v1677
        %v1711 = vunpack.c.h.b16 %v1677
        %v1712 = vunpack.c.l.b16 %v1678
        %v1713 = vunpack.c.h.b16 %v1678
        %v1714 = vunpack.c.l.b16 %v1679
        %v1715 = vunpack.c.h.b16 %v1679
        %v1716 = vunpack.c.l.b16 %v1680
        %v1717 = vunpack.c.h.b16 %v1680
        %v1718 = vunpack.c.l.b16 %v1681
        %v1719 = vunpack.c.h.b16 %v1681
        %v1720 = vunpack.c.l.b16 %v1682
        %v1721 = vunpack.c.h.b16 %v1682
        %v1722 = vunpack.c.l.b16 %v1683
        %v1723 = vunpack.c.h.b16 %v1683
        %v1724 = vunpack.c.l.b16 %v1684
        %v1725 = vunpack.c.h.b16 %v1684
        %v1726 = vunpack.c.l.b16 %v1685
        %v1727 = vunpack.c.h.b16 %v1685
        %v1728 = vunpack.c.l.b16 %v1686
        %v1729 = vunpack.c.h.b16 %v1686
        %v1730 = vunpack.c.l.b16 %v1687
        %v1731 = vunpack.c.h.b16 %v1687
        %v1732 = vunpack.c.l.b16 %v1688
        %v1733 = vunpack.c.h.b16 %v1688
        %v1734 = vunpack.c.l.b16 %v1689
        %v1735 = vunpack.c.h.b16 %v1689
        %v1736 = vunpack.c.l.b16 %v1690
        %v1737 = vunpack.c.h.b16 %v1690
        %v1738 = vunpack.c.l.b16 %v1691
        %v1739 = vunpack.c.h.b16 %v1691
        %v1740 = vpack.c.b16 %v1710, %v1708
        %v1741 = vpack.c.b16 %v1711, %v1709
        %v1742 = vpack.c.b16 %v1714, %v1712
        %v1743 = vpack.c.b16 %v1715, %v1713
        %v1744 = vpack.c.b16 %v1718, %v1716
        %v1745 = vpack.c.b16 %v1719, %v1717
        %v1746 = vpack.c.b16 %v1722, %v1720
        %v1747 = vpack.c.b16 %v1723, %v1721
        %v1748 = vpack.c.b16 %v1726, %v1724
        %v1749 = vpack.c.b16 %v1727, %v1725
        %v1750 = vpack.c.b16 %v1730, %v1728
        %v1751 = vpack.c.b16 %v1731, %v1729
        %v1752 = vpack.c.b16 %v1734, %v1732
        %v1753 = vpack.c.b16 %v1735, %v1733
        %v1754 = vpack.c.b16 %v1738, %v1736
        %v1755 = vpack.c.b16 %v1739, %v1737
        %1772 = vmatprep.subr.bf16.mxu0 %v1741
        %1773 = vmatpush1.bf16.msra.mxu0 %v1740
        %1774 = vmatprep.subr.bf16.mxu0 %v1743
        %1775 = vmatpush1.bf16.msra.mxu0 %v1742
        %1776 = vmatprep.subr.bf16.mxu0 %v1745
        %1777 = vmatpush1.bf16.msra.mxu0 %v1744
        %1778 = vmatprep.subr.bf16.mxu0 %v1747
        %1779 = vmatpush1.bf16.msra.mxu0 %v1746
        %1780 = vmatprep.subr.bf16.mxu0 %v1749
        %1781 = vmatpush1.bf16.msra.mxu0 %v1748
        %1782 = vmatprep.subr.bf16.mxu0 %v1751
        %1783 = vmatpush1.bf16.msra.mxu0 %v1750
        %1784 = vmatprep.subr.bf16.mxu0 %v1753
        %1785 = vmatpush1.bf16.msra.mxu0 %v1752
        %1786 = vmatprep.subr.bf16.mxu0 %v1755
        %1787 = vmatpush1.bf16.msra.mxu0 %v1754
        %1788 = vmatprep.subr.bf16.mxu0 0
        %1789 = vmatpush1.bf16.msra.mxu0 0
        %1790 = vmatprep.subr.bf16.mxu0 0
        %1791 = vmatpush1.bf16.msra.mxu0 0
        %1792 = vmatprep.subr.bf16.mxu0 0
        %1793 = vmatpush1.bf16.msra.mxu0 0
        %1794 = vmatprep.subr.bf16.mxu0 0
        %1795 = vmatpush1.bf16.msra.mxu0 0
        %1796 = vmatprep.subr.bf16.mxu0 0
        %1797 = vmatpush1.bf16.msra.mxu0 0
        %1798 = vmatprep.subr.bf16.mxu0 0
        %1799 = vmatpush1.bf16.msra.mxu0 0
        %1800 = vmatprep.subr.bf16.mxu0 0
        %1801 = vmatpush1.bf16.msra.mxu0 0
        %1802 = vmatprep.subr.bf16.mxu0 0
        %1803 = vmatpush1.bf16.msra.mxu0 0
        %1804 = vmatprep.mubr.bf16.mxu0 0
        %1805 = vmatmul.mubr.bf16.gmra.mrb[0].mxu0 %v1674
        %v1806 = vpop.f32.mrb[0].mxu0
        %v1807 = vadd.f32 0.0, %v1806
        %v1808 = vpop.f32.mrb[0].mxu0
        %v1809 = vadd.f32 0.0, %v1808
        %v1810 = vpop.f32.mrb[0].mxu0
        %v1811 = vadd.f32 0.0, %v1810
        %v1812 = vpop.f32.mrb[0].mxu0
        %v1813 = vadd.f32 0.0, %v1812
        %1814 = vdwg.mxu0
        %v1815 = vadd.f32 %v1621, %v1807
        %v1816 = vadd.f32 %v1623, %v1809
        %v1817 = vadd.f32 %v1625, %v1811
        %v1818 = vadd.f32 %v1627, %v1813
        %1819 = vmatprep.subr.bf16.mxu0 0
        %1820 = vmatpush1.bf16.msra.mxu0 %v1365
        %1821 = vmatprep.subr.bf16.mxu0 0
        %1822 = vmatpush1.bf16.msra.mxu0 0
        %1823 = vmatprep.subr.bf16.mxu0 0
        %1824 = vmatpush1.bf16.msra.mxu0 0
        %1825 = vmatprep.subr.bf16.mxu0 0
        %1826 = vmatpush1.bf16.msra.mxu0 0
        %1827 = vmatprep.subr.bf16.mxu0 0
        %1828 = vmatpush1.bf16.msra.mxu0 0
        %1829 = vmatprep.subr.bf16.mxu0 0
        %1830 = vmatpush1.bf16.msra.mxu0 0
        %1831 = vmatprep.subr.bf16.mxu0 0
        %1832 = vmatpush1.bf16.msra.mxu0 0
        %1833 = vmatprep.subr.bf16.mxu0 0
        %1834 = vmatpush1.bf16.msra.mxu0 0
        %1835 = vmatprep.subr.bf16.mxu0 0
        %1836 = vmatpush1.bf16.msra.mxu0 0
        %1837 = vmatprep.subr.bf16.mxu0 0
        %1838 = vmatpush1.bf16.msra.mxu0 0
        %1839 = vmatprep.subr.bf16.mxu0 0
        %1840 = vmatpush1.bf16.msra.mxu0 0
        %1841 = vmatprep.subr.bf16.mxu0 0
        %1842 = vmatpush1.bf16.msra.mxu0 0
        %1843 = vmatprep.subr.bf16.mxu0 0
        %1844 = vmatpush1.bf16.msra.mxu0 0
        %1845 = vmatprep.subr.bf16.mxu0 0
        %1846 = vmatpush1.bf16.msra.mxu0 0
        %1847 = vmatprep.subr.bf16.mxu0 0
        %1848 = vmatpush1.bf16.msra.mxu0 0
        %1849 = vmatprep.subr.bf16.mxu0 0
        %1850 = vmatpush1.bf16.msra.mxu0 0
        %1851 = vmatprep.mubr.bf16.mxu0 0
        %1852 = vmatmul.mubr.bf16.gmra.mrb[0].mxu0 %v989
        %v1853 = vpop.f32.mrb[0].mxu0
        %v1854 = vadd.f32 0.0, %v1853
        %v1855 = vpop.f32.mrb[0].mxu0
        %v1856 = vpop.f32.mrb[0].mxu0
        %v1857 = vadd.f32 0.0, %v1856
        %v1858 = vpop.f32.mrb[0].mxu0
        %1859 = vdwg.mxu0
        %v1860 = vpack.c.bf16 %v1857, %v1854
        %s1861 = scalar_lea.vmem [#allocation3], 384
        %v1862 = vld [vmem:[%s1861] sm:$0xff]
        %v1863 = vld [vmem:[%s1861 + $0x8] sm:$0xff]
        %v1864 = vld [vmem:[%s1861 + $0x10] sm:$0xff]
        %v1865 = vld [vmem:[%s1861 + $0x18] sm:$0xff]
        %v1866 = vld [vmem:[%s1861 + $0x20] sm:$0xff]
        %v1867 = vld [vmem:[%s1861 + $0x28] sm:$0xff]
        %v1868 = vld [vmem:[%s1861 + $0x30] sm:$0xff]
        %v1869 = vld [vmem:[%s1861 + $0x38] sm:$0xff]
        %v1870 = vld [vmem:[%s1861 + $0x40] sm:$0xff]
        %v1871 = vld [vmem:[%s1861 + $0x48] sm:$0xff]
        %v1872 = vld [vmem:[%s1861 + $0x50] sm:$0xff]
        %v1873 = vld [vmem:[%s1861 + $0x58] sm:$0xff]
        %v1874 = vld [vmem:[%s1861 + $0x60] sm:$0xff]
        %v1875 = vld [vmem:[%s1861 + $0x68] sm:$0xff]
        %v1876 = vld [vmem:[%s1861 + $0x70] sm:$0xff]
        %v1877 = vld [vmem:[%s1861 + $0x78] sm:$0xff]
        %v1894 = vunpack.c.l.b16 %v1862
        %v1895 = vunpack.c.h.b16 %v1862
        %v1896 = vunpack.c.l.b16 %v1863
        %v1897 = vunpack.c.h.b16 %v1863
        %v1898 = vunpack.c.l.b16 %v1864
        %v1899 = vunpack.c.h.b16 %v1864
        %v1900 = vunpack.c.l.b16 %v1865
        %v1901 = vunpack.c.h.b16 %v1865
        %v1902 = vunpack.c.l.b16 %v1866
        %v1903 = vunpack.c.h.b16 %v1866
        %v1904 = vunpack.c.l.b16 %v1867
        %v1905 = vunpack.c.h.b16 %v1867
        %v1906 = vunpack.c.l.b16 %v1868
        %v1907 = vunpack.c.h.b16 %v1868
        %v1908 = vunpack.c.l.b16 %v1869
        %v1909 = vunpack.c.h.b16 %v1869
        %v1910 = vunpack.c.l.b16 %v1870
        %v1911 = vunpack.c.h.b16 %v1870
        %v1912 = vunpack.c.l.b16 %v1871
        %v1913 = vunpack.c.h.b16 %v1871
        %v1914 = vunpack.c.l.b16 %v1872
        %v1915 = vunpack.c.h.b16 %v1872
        %v1916 = vunpack.c.l.b16 %v1873
        %v1917 = vunpack.c.h.b16 %v1873
        %v1918 = vunpack.c.l.b16 %v1874
        %v1919 = vunpack.c.h.b16 %v1874
        %v1920 = vunpack.c.l.b16 %v1875
        %v1921 = vunpack.c.h.b16 %v1875
        %v1922 = vunpack.c.l.b16 %v1876
        %v1923 = vunpack.c.h.b16 %v1876
        %v1924 = vunpack.c.l.b16 %v1877
        %v1925 = vunpack.c.h.b16 %v1877
        %v1926 = vpack.c.b16 %v1896, %v1894
        %v1927 = vpack.c.b16 %v1897, %v1895
        %v1928 = vpack.c.b16 %v1900, %v1898
        %v1929 = vpack.c.b16 %v1901, %v1899
        %v1930 = vpack.c.b16 %v1904, %v1902
        %v1931 = vpack.c.b16 %v1905, %v1903
        %v1932 = vpack.c.b16 %v1908, %v1906
        %v1933 = vpack.c.b16 %v1909, %v1907
        %v1934 = vpack.c.b16 %v1912, %v1910
        %v1935 = vpack.c.b16 %v1913, %v1911
        %v1936 = vpack.c.b16 %v1916, %v1914
        %v1937 = vpack.c.b16 %v1917, %v1915
        %v1938 = vpack.c.b16 %v1920, %v1918
        %v1939 = vpack.c.b16 %v1921, %v1919
        %v1940 = vpack.c.b16 %v1924, %v1922
        %v1941 = vpack.c.b16 %v1925, %v1923
        %1958 = vmatprep.subr.bf16.mxu0 %v1927
        %1959 = vmatpush1.bf16.msra.mxu0 %v1926
        %1960 = vmatprep.subr.bf16.mxu0 %v1929
        %1961 = vmatpush1.bf16.msra.mxu0 %v1928
        %1962 = vmatprep.subr.bf16.mxu0 %v1931
        %1963 = vmatpush1.bf16.msra.mxu0 %v1930
        %1964 = vmatprep.subr.bf16.mxu0 %v1933
        %1965 = vmatpush1.bf16.msra.mxu0 %v1932
        %1966 = vmatprep.subr.bf16.mxu0 %v1935
        %1967 = vmatpush1.bf16.msra.mxu0 %v1934
        %1968 = vmatprep.subr.bf16.mxu0 %v1937
        %1969 = vmatpush1.bf16.msra.mxu0 %v1936
        %1970 = vmatprep.subr.bf16.mxu0 %v1939
        %1971 = vmatpush1.bf16.msra.mxu0 %v1938
        %1972 = vmatprep.subr.bf16.mxu0 %v1941
        %1973 = vmatpush1.bf16.msra.mxu0 %v1940
        %1974 = vmatprep.subr.bf16.mxu0 0
        %1975 = vmatpush1.bf16.msra.mxu0 0
        %1976 = vmatprep.subr.bf16.mxu0 0
        %1977 = vmatpush1.bf16.msra.mxu0 0
        %1978 = vmatprep.subr.bf16.mxu0 0
        %1979 = vmatpush1.bf16.msra.mxu0 0
        %1980 = vmatprep.subr.bf16.mxu0 0
        %1981 = vmatpush1.bf16.msra.mxu0 0
        %1982 = vmatprep.subr.bf16.mxu0 0
        %1983 = vmatpush1.bf16.msra.mxu0 0
        %1984 = vmatprep.subr.bf16.mxu0 0
        %1985 = vmatpush1.bf16.msra.mxu0 0
        %1986 = vmatprep.subr.bf16.mxu0 0
        %1987 = vmatpush1.bf16.msra.mxu0 0
        %1988 = vmatprep.subr.bf16.mxu0 0
        %1989 = vmatpush1.bf16.msra.mxu0 0
        %1990 = vmatprep.mubr.bf16.mxu0 0
        %1991 = vmatmul.mubr.bf16.gmra.mrb[0].mxu0 %v1860
        %v1992 = vpop.f32.mrb[0].mxu0
        %v1993 = vadd.f32 0.0, %v1992
        %v1994 = vpop.f32.mrb[0].mxu0
        %v1995 = vadd.f32 0.0, %v1994
        %v1996 = vpop.f32.mrb[0].mxu0
        %v1997 = vadd.f32 0.0, %v1996
        %v1998 = vpop.f32.mrb[0].mxu0
        %v1999 = vadd.f32 0.0, %v1998
        %2000 = vdwg.mxu0
        %v2001 = vadd.f32 %v1815, %v1993
        %v2002 = vadd.f32 %v1816, %v1995
        %v2003 = vadd.f32 %v1817, %v1997
        %v2004 = vadd.f32 %v1818, %v1999
        %2005 = vmatprep.subr.bf16.mxu0 0
        %2006 = vmatpush1.bf16.msra.mxu0 %v1860
        %2007 = vmatprep.subr.bf16.mxu0 0
        %2008 = vmatpush1.bf16.msra.mxu0 0
        %2009 = vmatprep.subr.bf16.mxu0 0
        %2010 = vmatpush1.bf16.msra.mxu0 0
        %2011 = vmatprep.subr.bf16.mxu0 0
        %2012 = vmatpush1.bf16.msra.mxu0 0
        %2013 = vmatprep.subr.bf16.mxu0 0
        %2014 = vmatpush1.bf16.msra.mxu0 0
        %2015 = vmatprep.subr.bf16.mxu0 0
        %2016 = vmatpush1.bf16.msra.mxu0 0
        %2017 = vmatprep.subr.bf16.mxu0 0
        %2018 = vmatpush1.bf16.msra.mxu0 0
        %2019 = vmatprep.subr.bf16.mxu0 0
        %2020 = vmatpush1.bf16.msra.mxu0 0
        %2021 = vmatprep.subr.bf16.mxu0 0
        %2022 = vmatpush1.bf16.msra.mxu0 0
        %2023 = vmatprep.subr.bf16.mxu0 0
        %2024 = vmatpush1.bf16.msra.mxu0 0
        %2025 = vmatprep.subr.bf16.mxu0 0
        %2026 = vmatpush1.bf16.msra.mxu0 0
        %2027 = vmatprep.subr.bf16.mxu0 0
        %2028 = vmatpush1.bf16.msra.mxu0 0
        %2029 = vmatprep.subr.bf16.mxu0 0
        %2030 = vmatpush1.bf16.msra.mxu0 0
        %2031 = vmatprep.subr.bf16.mxu0 0
        %2032 = vmatpush1.bf16.msra.mxu0 0
        %2033 = vmatprep.subr.bf16.mxu0 0
        %2034 = vmatpush1.bf16.msra.mxu0 0
        %2035 = vmatprep.subr.bf16.mxu0 0
        %2036 = vmatpush1.bf16.msra.mxu0 0
        %2037 = vmatprep.mubr.bf16.mxu0 0
        %2038 = vmatmul.mubr.bf16.gmra.mrb[0].mxu0 %v989
        %v2039 = vpop.f32.mrb[0].mxu0
        %v2040 = vadd.f32 0.0, %v2039
        %v2041 = vpop.f32.mrb[0].mxu0
        %v2042 = vpop.f32.mrb[0].mxu0
        %v2043 = vadd.f32 0.0, %v2042
        %v2044 = vpop.f32.mrb[0].mxu0
        %2045 = vdwg.mxu0
        %v2046 = vmul.f32 %v2040, 2.0
        %v2047 = vmul.f32 %v2043, 2.0
        %v2048 = vsub.f32 %v2046, %v1359
        %v2049 = vsub.f32 %v2047, %v1362
        %v2050 = vpack.c.bf16 %v2049, %v2048
        %s2051 = scalar_lea.vmem [#allocation3], 512
        %v2052 = vld [vmem:[%s2051] sm:$0xff]
        %v2053 = vld [vmem:[%s2051 + $0x8] sm:$0xff]
        %v2054 = vld [vmem:[%s2051 + $0x10] sm:$0xff]
        %v2055 = vld [vmem:[%s2051 + $0x18] sm:$0xff]
        %v2056 = vld [vmem:[%s2051 + $0x20] sm:$0xff]
        %v2057 = vld [vmem:[%s2051 + $0x28] sm:$0xff]
        %v2058 = vld [vmem:[%s2051 + $0x30] sm:$0xff]
        %v2059 = vld [vmem:[%s2051 + $0x38] sm:$0xff]
        %v2060 = vld [vmem:[%s2051 + $0x40] sm:$0xff]
        %v2061 = vld [vmem:[%s2051 + $0x48] sm:$0xff]
        %v2062 = vld [vmem:[%s2051 + $0x50] sm:$0xff]
        %v2063 = vld [vmem:[%s2051 + $0x58] sm:$0xff]
        %v2064 = vld [vmem:[%s2051 + $0x60] sm:$0xff]
        %v2065 = vld [vmem:[%s2051 + $0x68] sm:$0xff]
        %v2066 = vld [vmem:[%s2051 + $0x70] sm:$0xff]
        %v2067 = vld [vmem:[%s2051 + $0x78] sm:$0xff]
        %v2084 = vunpack.c.l.b16 %v2052
        %v2085 = vunpack.c.h.b16 %v2052
        %v2086 = vunpack.c.l.b16 %v2053
        %v2087 = vunpack.c.h.b16 %v2053
        %v2088 = vunpack.c.l.b16 %v2054
        %v2089 = vunpack.c.h.b16 %v2054
        %v2090 = vunpack.c.l.b16 %v2055
        %v2091 = vunpack.c.h.b16 %v2055
        %v2092 = vunpack.c.l.b16 %v2056
        %v2093 = vunpack.c.h.b16 %v2056
        %v2094 = vunpack.c.l.b16 %v2057
        %v2095 = vunpack.c.h.b16 %v2057
        %v2096 = vunpack.c.l.b16 %v2058
        %v2097 = vunpack.c.h.b16 %v2058
        %v2098 = vunpack.c.l.b16 %v2059
        %v2099 = vunpack.c.h.b16 %v2059
        %v2100 = vunpack.c.l.b16 %v2060
        %v2101 = vunpack.c.h.b16 %v2060
        %v2102 = vunpack.c.l.b16 %v2061
        %v2103 = vunpack.c.h.b16 %v2061
        %v2104 = vunpack.c.l.b16 %v2062
        %v2105 = vunpack.c.h.b16 %v2062
        %v2106 = vunpack.c.l.b16 %v2063
        %v2107 = vunpack.c.h.b16 %v2063
        %v2108 = vunpack.c.l.b16 %v2064
        %v2109 = vunpack.c.h.b16 %v2064
        %v2110 = vunpack.c.l.b16 %v2065
        %v2111 = vunpack.c.h.b16 %v2065
        %v2112 = vunpack.c.l.b16 %v2066
        %v2113 = vunpack.c.h.b16 %v2066
        %v2114 = vunpack.c.l.b16 %v2067
        %v2115 = vunpack.c.h.b16 %v2067
        %v2116 = vpack.c.b16 %v2086, %v2084
        %v2117 = vpack.c.b16 %v2087, %v2085
        %v2118 = vpack.c.b16 %v2090, %v2088
        %v2119 = vpack.c.b16 %v2091, %v2089
        %v2120 = vpack.c.b16 %v2094, %v2092
        %v2121 = vpack.c.b16 %v2095, %v2093
        %v2122 = vpack.c.b16 %v2098, %v2096
        %v2123 = vpack.c.b16 %v2099, %v2097
        %v2124 = vpack.c.b16 %v2102, %v2100
        %v2125 = vpack.c.b16 %v2103, %v2101
        %v2126 = vpack.c.b16 %v2106, %v2104
        %v2127 = vpack.c.b16 %v2107, %v2105
        %v2128 = vpack.c.b16 %v2110, %v2108
        %v2129 = vpack.c.b16 %v2111, %v2109
        %v2130 = vpack.c.b16 %v2114, %v2112
        %v2131 = vpack.c.b16 %v2115, %v2113
        %2148 = vmatprep.subr.bf16.mxu0 %v2117
        %2149 = vmatpush1.bf16.msra.mxu0 %v2116
        %2150 = vmatprep.subr.bf16.mxu0 %v2119
        %2151 = vmatpush1.bf16.msra.mxu0 %v2118
        %2152 = vmatprep.subr.bf16.mxu0 %v2121
        %2153 = vmatpush1.bf16.msra.mxu0 %v2120
        %2154 = vmatprep.subr.bf16.mxu0 %v2123
        %2155 = vmatpush1.bf16.msra.mxu0 %v2122
        %2156 = vmatprep.subr.bf16.mxu0 %v2125
        %2157 = vmatpush1.bf16.msra.mxu0 %v2124
        %2158 = vmatprep.subr.bf16.mxu0 %v2127
        %2159 = vmatpush1.bf16.msra.mxu0 %v2126
        %2160 = vmatprep.subr.bf16.mxu0 %v2129
        %2161 = vmatpush1.bf16.msra.mxu0 %v2128
        %2162 = vmatprep.subr.bf16.mxu0 %v2131
        %2163 = vmatpush1.bf16.msra.mxu0 %v2130
        %2164 = vmatprep.subr.bf16.mxu0 0
        %2165 = vmatpush1.bf16.msra.mxu0 0
        %2166 = vmatprep.subr.bf16.mxu0 0
        %2167 = vmatpush1.bf16.msra.mxu0 0
        %2168 = vmatprep.subr.bf16.mxu0 0
        %2169 = vmatpush1.bf16.msra.mxu0 0
        %2170 = vmatprep.subr.bf16.mxu0 0
        %2171 = vmatpush1.bf16.msra.mxu0 0
        %2172 = vmatprep.subr.bf16.mxu0 0
        %2173 = vmatpush1.bf16.msra.mxu0 0
        %2174 = vmatprep.subr.bf16.mxu0 0
        %2175 = vmatpush1.bf16.msra.mxu0 0
        %2176 = vmatprep.subr.bf16.mxu0 0
        %2177 = vmatpush1.bf16.msra.mxu0 0
        %2178 = vmatprep.subr.bf16.mxu0 0
        %2179 = vmatpush1.bf16.msra.mxu0 0
        %2180 = vmatprep.mubr.bf16.mxu0 0
        %2181 = vmatmul.mubr.bf16.gmra.mrb[0].mxu0 %v2050
        %v2182 = vpop.f32.mrb[0].mxu0
        %v2183 = vadd.f32 0.0, %v2182
        %v2184 = vpop.f32.mrb[0].mxu0
        %v2185 = vadd.f32 0.0, %v2184
        %v2186 = vpop.f32.mrb[0].mxu0
        %v2187 = vadd.f32 0.0, %v2186
        %v2188 = vpop.f32.mrb[0].mxu0
        %v2189 = vadd.f32 0.0, %v2188
        %2190 = vdwg.mxu0
        %v2191 = vadd.f32 %v2001, %v2183
        %v2192 = vadd.f32 %v2002, %v2185
        %v2193 = vadd.f32 %v2003, %v2187
        %v2194 = vadd.f32 %v2004, %v2189
        %v2195 = vadd.f32 %v1301, %v2191
        %v2196 = vadd.f32 %v1302, %v2192
        %v2197 = vadd.f32 %v1304, %v2193
        %v2198 = vadd.f32 %v1305, %v2194
        %v2199 = vld [vmem:[%s6] sm:$0x3]
        %v2201 = vlaneseq
        %v2202 = vshrl.u32 %v2201, 7
        %v2203 = vsub.s32 0, %v2202
        %v2204 = vrot.slane %v2199, %v2203
        %v2205 = vlaneseq
        %v2206 = vshrl.u32 %v2205, 7
        %v2207 = vsub.s32 1, %v2206
        %v2208 = vrot.slane %v2199, %v2207
        %v2211 = vadd.f32 %v2195, %v2204
        %v2212 = vadd.f32 %v2196, %v2208
        %v2213 = vadd.f32 %v2197, %v2204
        %v2214 = vadd.f32 %v2198, %v2208
        %v2215 = vsub.f32 0.0, %v2211
        %v2216 = vsub.f32 0.0, %v2212
        %v2217 = vsub.f32 0.0, %v2213
        %v2218 = vsub.f32 0.0, %v2214
        %v2219 = vmul.f32 %v2215, 1.442695
        %v2220 = vpow.pop %v2219
        %v2221 = vmul.f32 %v2216, 1.442695
        %v2222 = vpow.pop %v2221
        %v2223 = vmul.f32 %v2217, 1.442695
        %v2224 = vpow.pop %v2223
        %v2225 = vmul.f32 %v2218, 1.442695
        %v2226 = vpow.pop %v2225
        %v2227 = vadd.f32 %v2220, 1.0
        %v2228 = vadd.f32 %v2222, 1.0
        %v2229 = vadd.f32 %v2224, 1.0
        %v2230 = vadd.f32 %v2226, 1.0
        %v2231 = vrcp.pop %v2227
        %v2232 = vrcp.pop %v2228
        %v2233 = vrcp.pop %v2229
        %v2234 = vrcp.pop %v2230
        %v2235 = vmul.f32 %v2231, %v549
        %v2236 = vmul.f32 %v2233, %v550
        %v2237 = vpack.c.bf16 %v2236, %v2235
        %v2238 = vld [vmem:[%s5] sm:$0xf]
        %v2239 = vld [vmem:[%s5 + $0x4] sm:$0xf]
        %v2240 = vld [vmem:[%s5 + $0x8] sm:$0xf]
        %v2241 = vld [vmem:[%s5 + $0xc] sm:$0xf]
        %v2242 = vld [vmem:[%s5 + $0x10] sm:$0xf]
        %v2243 = vld [vmem:[%s5 + $0x14] sm:$0xf]
        %v2244 = vld [vmem:[%s5 + $0x18] sm:$0xf]
        %v2245 = vld [vmem:[%s5 + $0x1c] sm:$0xf]
        %v2246 = vld [vmem:[%s5 + $0x20] sm:$0xf]
        %v2247 = vld [vmem:[%s5 + $0x24] sm:$0xf]
        %v2248 = vld [vmem:[%s5 + $0x28] sm:$0xf]
        %v2249 = vld [vmem:[%s5 + $0x2c] sm:$0xf]
        %v2250 = vld [vmem:[%s5 + $0x30] sm:$0xf]
        %v2251 = vld [vmem:[%s5 + $0x34] sm:$0xf]
        %v2252 = vld [vmem:[%s5 + $0x38] sm:$0xf]
        %v2253 = vld [vmem:[%s5 + $0x3c] sm:$0xf]
        %2254 = vmatprep.subr.bf16.mxu0 0
        %2255 = vmatpush1.bf16.msra.mxu0 %v2237
        %2256 = vmatprep.subr.bf16.mxu0 0
        %2257 = vmatpush1.bf16.msra.mxu0 0
        %2258 = vmatprep.subr.bf16.mxu0 0
        %2259 = vmatpush1.bf16.msra.mxu0 0
        %2260 = vmatprep.subr.bf16.mxu0 0
        %2261 = vmatpush1.bf16.msra.mxu0 0
        %2262 = vmatprep.subr.bf16.mxu0 0
        %2263 = vmatpush1.bf16.msra.mxu0 0
        %2264 = vmatprep.subr.bf16.mxu0 0
        %2265 = vmatpush1.bf16.msra.mxu0 0
        %2266 = vmatprep.subr.bf16.mxu0 0
        %2267 = vmatpush1.bf16.msra.mxu0 0
        %2268 = vmatprep.subr.bf16.mxu0 0
        %2269 = vmatpush1.bf16.msra.mxu0 0
        %2270 = vmatprep.subr.bf16.mxu0 0
        %2271 = vmatpush1.bf16.msra.mxu0 0
        %2272 = vmatprep.subr.bf16.mxu0 0
        %2273 = vmatpush1.bf16.msra.mxu0 0
        %2274 = vmatprep.subr.bf16.mxu0 0
        %2275 = vmatpush1.bf16.msra.mxu0 0
        %2276 = vmatprep.subr.bf16.mxu0 0
        %2277 = vmatpush1.bf16.msra.mxu0 0
        %2278 = vmatprep.subr.bf16.mxu0 0
        %2279 = vmatpush1.bf16.msra.mxu0 0
        %2280 = vmatprep.subr.bf16.mxu0 0
        %2281 = vmatpush1.bf16.msra.mxu0 0
        %2282 = vmatprep.subr.bf16.mxu0 0
        %2283 = vmatpush1.bf16.msra.mxu0 0
        %2284 = vmatprep.subr.bf16.mxu0 0
        %2285 = vmatpush1.bf16.msra.mxu0 0
        %2286 = vmatprep.mubr.bf16.mxu0 0
        %2287 = vmatmul.mubr.bf16.gmra.mrb[0].mxu0 %v565
        %v2288 = vpop.f32.mrb[0].mxu0
        %v2289 = vadd.f32 0.0, %v2288
        %v2290 = vpop.f32.mrb[0].mxu0
        %v2291 = vpop.f32.mrb[0].mxu0
        %v2292 = vadd.f32 0.0, %v2291
        %v2293 = vpop.f32.mrb[0].mxu0
        %2294 = vdwg.mxu0
        %v2295 = vpack.c.bf16 %v2292, %v2289
        %s2296 = scalar_lea.vmem %s5, 64
        %v2297 = vld [vmem:[%s2296] sm:$0xf]
        %v2298 = vld [vmem:[%s2296 + $0x4] sm:$0xf]
        %v2299 = vld [vmem:[%s2296 + $0x8] sm:$0xf]
        %v2300 = vld [vmem:[%s2296 + $0xc] sm:$0xf]
        %v2301 = vld [vmem:[%s2296 + $0x10] sm:$0xf]
        %v2302 = vld [vmem:[%s2296 + $0x14] sm:$0xf]
        %v2303 = vld [vmem:[%s2296 + $0x18] sm:$0xf]
        %v2304 = vld [vmem:[%s2296 + $0x1c] sm:$0xf]
        %v2305 = vld [vmem:[%s2296 + $0x20] sm:$0xf]
        %v2306 = vld [vmem:[%s2296 + $0x24] sm:$0xf]
        %v2307 = vld [vmem:[%s2296 + $0x28] sm:$0xf]
        %v2308 = vld [vmem:[%s2296 + $0x2c] sm:$0xf]
        %v2309 = vld [vmem:[%s2296 + $0x30] sm:$0xf]
        %v2310 = vld [vmem:[%s2296 + $0x34] sm:$0xf]
        %v2311 = vld [vmem:[%s2296 + $0x38] sm:$0xf]
        %v2312 = vld [vmem:[%s2296 + $0x3c] sm:$0xf]
        %v2329 = vunpack.c.l.b16 %v2297
        %v2330 = vunpack.c.l.b16 %v2298
        %v2331 = vunpack.c.l.b16 %v2299
        %v2332 = vunpack.c.l.b16 %v2300
        %v2333 = vunpack.c.l.b16 %v2301
        %v2334 = vunpack.c.l.b16 %v2302
        %v2335 = vunpack.c.l.b16 %v2303
        %v2336 = vunpack.c.l.b16 %v2304
        %v2337 = vunpack.c.l.b16 %v2305
        %v2338 = vunpack.c.l.b16 %v2306
        %v2339 = vunpack.c.l.b16 %v2307
        %v2340 = vunpack.c.l.b16 %v2308
        %v2341 = vunpack.c.l.b16 %v2309
        %v2342 = vunpack.c.l.b16 %v2310
        %v2343 = vunpack.c.l.b16 %v2311
        %v2344 = vunpack.c.l.b16 %v2312
        %v2345 = vpack.c.b16 %v2330, %v2329
        %v2346 = vpack.c.b16 %v2332, %v2331
        %v2347 = vpack.c.b16 %v2334, %v2333
        %v2348 = vpack.c.b16 %v2336, %v2335
        %v2349 = vpack.c.b16 %v2338, %v2337
        %v2350 = vpack.c.b16 %v2340, %v2339
        %v2351 = vpack.c.b16 %v2342, %v2341
        %v2352 = vpack.c.b16 %v2344, %v2343
        %2361 = vmatprep.subr.bf16.mxu0 0
        %2362 = vmatpush1.bf16.msra.mxu0 %v2345
        %2363 = vmatprep.subr.bf16.mxu0 0
        %2364 = vmatpush1.bf16.msra.mxu0 %v2346
        %2365 = vmatprep.subr.bf16.mxu0 0
        %2366 = vmatpush1.bf16.msra.mxu0 %v2347
        %2367 = vmatprep.subr.bf16.mxu0 0
        %2368 = vmatpush1.bf16.msra.mxu0 %v2348
        %2369 = vmatprep.subr.bf16.mxu0 0
        %2370 = vmatpush1.bf16.msra.mxu0 %v2349
        %2371 = vmatprep.subr.bf16.mxu0 0
        %2372 = vmatpush1.bf16.msra.mxu0 %v2350
        %2373 = vmatprep.subr.bf16.mxu0 0
        %2374 = vmatpush1.bf16.msra.mxu0 %v2351
        %2375 = vmatprep.subr.bf16.mxu0 0
        %2376 = vmatpush1.bf16.msra.mxu0 %v2352
        %2377 = vmatprep.subr.bf16.mxu0 0
        %2378 = vmatpush1.bf16.msra.mxu0 0
        %2379 = vmatprep.subr.bf16.mxu0 0
        %2380 = vmatpush1.bf16.msra.mxu0 0
        %2381 = vmatprep.subr.bf16.mxu0 0
        %2382 = vmatpush1.bf16.msra.mxu0 0
        %2383 = vmatprep.subr.bf16.mxu0 0
        %2384 = vmatpush1.bf16.msra.mxu0 0
        %2385 = vmatprep.subr.bf16.mxu0 0
        %2386 = vmatpush1.bf16.msra.mxu0 0
        %2387 = vmatprep.subr.bf16.mxu0 0
        %2388 = vmatpush1.bf16.msra.mxu0 0
        %2389 = vmatprep.subr.bf16.mxu0 0
        %2390 = vmatpush1.bf16.msra.mxu0 0
        %2391 = vmatprep.subr.bf16.mxu0 0
        %2392 = vmatpush1.bf16.msra.mxu0 0
        %2393 = vmatprep.mubr.bf16.mxu0 0
        %2394 = vmatmul.mubr.bf16.gmra.mrb[0].mxu0 %v2295
        %v2395 = vpop.f32.mrb[0].mxu0
        %v2396 = vadd.f32 0.0, %v2395
        %v2397 = vpop.f32.mrb[0].mxu0
        %v2398 = vpop.f32.mrb[0].mxu0
        %v2399 = vadd.f32 0.0, %v2398
        %v2400 = vpop.f32.mrb[0].mxu0
        %2401 = vdwg.mxu0
        %v2418 = vunpack.c.l.b16 %v2238
        %v2419 = vunpack.c.l.b16 %v2239
        %v2420 = vunpack.c.l.b16 %v2240
        %v2421 = vunpack.c.l.b16 %v2241
        %v2422 = vunpack.c.l.b16 %v2242
        %v2423 = vunpack.c.l.b16 %v2243
        %v2424 = vunpack.c.l.b16 %v2244
        %v2425 = vunpack.c.l.b16 %v2245
        %v2426 = vunpack.c.l.b16 %v2246
        %v2427 = vunpack.c.l.b16 %v2247
        %v2428 = vunpack.c.l.b16 %v2248
        %v2429 = vunpack.c.l.b16 %v2249
        %v2430 = vunpack.c.l.b16 %v2250
        %v2431 = vunpack.c.l.b16 %v2251
        %v2432 = vunpack.c.l.b16 %v2252
        %v2433 = vunpack.c.l.b16 %v2253
        %v2434 = vpack.c.b16 %v2419, %v2418
        %v2435 = vpack.c.b16 %v2421, %v2420
        %v2436 = vpack.c.b16 %v2423, %v2422
        %v2437 = vpack.c.b16 %v2425, %v2424
        %v2438 = vpack.c.b16 %v2427, %v2426
        %v2439 = vpack.c.b16 %v2429, %v2428
        %v2440 = vpack.c.b16 %v2431, %v2430
        %v2441 = vpack.c.b16 %v2433, %v2432
        %2450 = vmatprep.subr.bf16.mxu0 0
        %2451 = vmatpush1.bf16.msra.mxu0 %v2434
        %2452 = vmatprep.subr.bf16.mxu0 0
        %2453 = vmatpush1.bf16.msra.mxu0 %v2435
        %2454 = vmatprep.subr.bf16.mxu0 0
        %2455 = vmatpush1.bf16.msra.mxu0 %v2436
        %2456 = vmatprep.subr.bf16.mxu0 0
        %2457 = vmatpush1.bf16.msra.mxu0 %v2437
        %2458 = vmatprep.subr.bf16.mxu0 0
        %2459 = vmatpush1.bf16.msra.mxu0 %v2438
        %2460 = vmatprep.subr.bf16.mxu0 0
        %2461 = vmatpush1.bf16.msra.mxu0 %v2439
        %2462 = vmatprep.subr.bf16.mxu0 0
        %2463 = vmatpush1.bf16.msra.mxu0 %v2440
        %2464 = vmatprep.subr.bf16.mxu0 0
        %2465 = vmatpush1.bf16.msra.mxu0 %v2441
        %2466 = vmatprep.subr.bf16.mxu0 0
        %2467 = vmatpush1.bf16.msra.mxu0 0
        %2468 = vmatprep.subr.bf16.mxu0 0
        %2469 = vmatpush1.bf16.msra.mxu0 0
        %2470 = vmatprep.subr.bf16.mxu0 0
        %2471 = vmatpush1.bf16.msra.mxu0 0
        %2472 = vmatprep.subr.bf16.mxu0 0
        %2473 = vmatpush1.bf16.msra.mxu0 0
        %2474 = vmatprep.subr.bf16.mxu0 0
        %2475 = vmatpush1.bf16.msra.mxu0 0
        %2476 = vmatprep.subr.bf16.mxu0 0
        %2477 = vmatpush1.bf16.msra.mxu0 0
        %2478 = vmatprep.subr.bf16.mxu0 0
        %2479 = vmatpush1.bf16.msra.mxu0 0
        %2480 = vmatprep.subr.bf16.mxu0 0
        %2481 = vmatpush1.bf16.msra.mxu0 0
        %2482 = vmatprep.mubr.bf16.mxu0 0
        %2483 = vmatmul.mubr.bf16.gmra.mrb[0].mxu0 %v2237
        %v2484 = vpop.f32.mrb[0].mxu0
        %v2485 = vadd.f32 %v2396, %v2484
        %v2486 = vpop.f32.mrb[0].mxu0
        %v2487 = vpop.f32.mrb[0].mxu0
        %v2488 = vadd.f32 %v2399, %v2487
        %v2489 = vpop.f32.mrb[0].mxu0
        %2490 = vdwg.mxu0
        %2491 = vmatprep.subr.bf16.mxu0 0
        %2492 = vmatpush1.bf16.msra.mxu0 %v2295
        %2493 = vmatprep.subr.bf16.mxu0 0
        %2494 = vmatpush1.bf16.msra.mxu0 0
        %2495 = vmatprep.subr.bf16.mxu0 0
        %2496 = vmatpush1.bf16.msra.mxu0 0
        %2497 = vmatprep.subr.bf16.mxu0 0
        %2498 = vmatpush1.bf16.msra.mxu0 0
        %2499 = vmatprep.subr.bf16.mxu0 0
        %2500 = vmatpush1.bf16.msra.mxu0 0
        %2501 = vmatprep.subr.bf16.mxu0 0
        %2502 = vmatpush1.bf16.msra.mxu0 0
        %2503 = vmatprep.subr.bf16.mxu0 0
        %2504 = vmatpush1.bf16.msra.mxu0 0
        %2505 = vmatprep.subr.bf16.mxu0 0
        %2506 = vmatpush1.bf16.msra.mxu0 0
        %2507 = vmatprep.subr.bf16.mxu0 0
        %2508 = vmatpush1.bf16.msra.mxu0 0
        %2509 = vmatprep.subr.bf16.mxu0 0
        %2510 = vmatpush1.bf16.msra.mxu0 0
        %2511 = vmatprep.subr.bf16.mxu0 0
        %2512 = vmatpush1.bf16.msra.mxu0 0
        %2513 = vmatprep.subr.bf16.mxu0 0
        %2514 = vmatpush1.bf16.msra.mxu0 0
        %2515 = vmatprep.subr.bf16.mxu0 0
        %2516 = vmatpush1.bf16.msra.mxu0 0
        %2517 = vmatprep.subr.bf16.mxu0 0
        %2518 = vmatpush1.bf16.msra.mxu0 0
        %2519 = vmatprep.subr.bf16.mxu0 0
        %2520 = vmatpush1.bf16.msra.mxu0 0
        %2521 = vmatprep.subr.bf16.mxu0 0
        %2522 = vmatpush1.bf16.msra.mxu0 0
        %2523 = vmatprep.mubr.bf16.mxu0 0
        %2524 = vmatmul.mubr.bf16.gmra.mrb[0].mxu0 %v565
        %v2525 = vpop.f32.mrb[0].mxu0
        %v2526 = vadd.f32 0.0, %v2525
        %v2527 = vpop.f32.mrb[0].mxu0
        %v2528 = vpop.f32.mrb[0].mxu0
        %v2529 = vadd.f32 0.0, %v2528
        %v2530 = vpop.f32.mrb[0].mxu0
        %2531 = vdwg.mxu0
        %v2532 = vmul.f32 %v2526, 2.0
        %v2533 = vmul.f32 %v2529, 2.0
        %v2534 = vsub.f32 %v2532, %v2235
        %v2535 = vsub.f32 %v2533, %v2236
        %v2536 = vpack.c.bf16 %v2535, %v2534
        %s2537 = scalar_lea.vmem %s5, 128
        %v2538 = vld [vmem:[%s2537] sm:$0xf]
        %v2539 = vld [vmem:[%s2537 + $0x4] sm:$0xf]
        %v2540 = vld [vmem:[%s2537 + $0x8] sm:$0xf]
        %v2541 = vld [vmem:[%s2537 + $0xc] sm:$0xf]
        %v2542 = vld [vmem:[%s2537 + $0x10] sm:$0xf]
        %v2543 = vld [vmem:[%s2537 + $0x14] sm:$0xf]
        %v2544 = vld [vmem:[%s2537 + $0x18] sm:$0xf]
        %v2545 = vld [vmem:[%s2537 + $0x1c] sm:$0xf]
        %v2546 = vld [vmem:[%s2537 + $0x20] sm:$0xf]
        %v2547 = vld [vmem:[%s2537 + $0x24] sm:$0xf]
        %v2548 = vld [vmem:[%s2537 + $0x28] sm:$0xf]
        %v2549 = vld [vmem:[%s2537 + $0x2c] sm:$0xf]
        %v2550 = vld [vmem:[%s2537 + $0x30] sm:$0xf]
        %v2551 = vld [vmem:[%s2537 + $0x34] sm:$0xf]
        %v2552 = vld [vmem:[%s2537 + $0x38] sm:$0xf]
        %v2553 = vld [vmem:[%s2537 + $0x3c] sm:$0xf]
        %v2570 = vunpack.c.l.b16 %v2538
        %v2571 = vunpack.c.l.b16 %v2539
        %v2572 = vunpack.c.l.b16 %v2540
        %v2573 = vunpack.c.l.b16 %v2541
        %v2574 = vunpack.c.l.b16 %v2542
        %v2575 = vunpack.c.l.b16 %v2543
        %v2576 = vunpack.c.l.b16 %v2544
        %v2577 = vunpack.c.l.b16 %v2545
        %v2578 = vunpack.c.l.b16 %v2546
        %v2579 = vunpack.c.l.b16 %v2547
        %v2580 = vunpack.c.l.b16 %v2548
        %v2581 = vunpack.c.l.b16 %v2549
        %v2582 = vunpack.c.l.b16 %v2550
        %v2583 = vunpack.c.l.b16 %v2551
        %v2584 = vunpack.c.l.b16 %v2552
        %v2585 = vunpack.c.l.b16 %v2553
        %v2586 = vpack.c.b16 %v2571, %v2570
        %v2587 = vpack.c.b16 %v2573, %v2572
        %v2588 = vpack.c.b16 %v2575, %v2574
        %v2589 = vpack.c.b16 %v2577, %v2576
        %v2590 = vpack.c.b16 %v2579, %v2578
        %v2591 = vpack.c.b16 %v2581, %v2580
        %v2592 = vpack.c.b16 %v2583, %v2582
        %v2593 = vpack.c.b16 %v2585, %v2584
        %2602 = vmatprep.subr.bf16.mxu0 0
        %2603 = vmatpush1.bf16.msra.mxu0 %v2586
        %2604 = vmatprep.subr.bf16.mxu0 0
        %2605 = vmatpush1.bf16.msra.mxu0 %v2587
        %2606 = vmatprep.subr.bf16.mxu0 0
        %2607 = vmatpush1.bf16.msra.mxu0 %v2588
        %2608 = vmatprep.subr.bf16.mxu0 0
        %2609 = vmatpush1.bf16.msra.mxu0 %v2589
        %2610 = vmatprep.subr.bf16.mxu0 0
        %2611 = vmatpush1.bf16.msra.mxu0 %v2590
        %2612 = vmatprep.subr.bf16.mxu0 0
        %2613 = vmatpush1.bf16.msra.mxu0 %v2591
        %2614 = vmatprep.subr.bf16.mxu0 0
        %2615 = vmatpush1.bf16.msra.mxu0 %v2592
        %2616 = vmatprep.subr.bf16.mxu0 0
        %2617 = vmatpush1.bf16.msra.mxu0 %v2593
        %2618 = vmatprep.subr.bf16.mxu0 0
        %2619 = vmatpush1.bf16.msra.mxu0 0
        %2620 = vmatprep.subr.bf16.mxu0 0
        %2621 = vmatpush1.bf16.msra.mxu0 0
        %2622 = vmatprep.subr.bf16.mxu0 0
        %2623 = vmatpush1.bf16.msra.mxu0 0
        %2624 = vmatprep.subr.bf16.mxu0 0
        %2625 = vmatpush1.bf16.msra.mxu0 0
        %2626 = vmatprep.subr.bf16.mxu0 0
        %2627 = vmatpush1.bf16.msra.mxu0 0
        %2628 = vmatprep.subr.bf16.mxu0 0
        %2629 = vmatpush1.bf16.msra.mxu0 0
        %2630 = vmatprep.subr.bf16.mxu0 0
        %2631 = vmatpush1.bf16.msra.mxu0 0
        %2632 = vmatprep.subr.bf16.mxu0 0
        %2633 = vmatpush1.bf16.msra.mxu0 0
        %2634 = vmatprep.mubr.bf16.mxu0 0
        %2635 = vmatmul.mubr.bf16.gmra.mrb[0].mxu0 %v2536
        %v2636 = vpop.f32.mrb[0].mxu0
        %v2637 = vadd.f32 0.0, %v2636
        %v2638 = vpop.f32.mrb[0].mxu0
        %v2639 = vpop.f32.mrb[0].mxu0
        %v2640 = vadd.f32 0.0, %v2639
        %v2641 = vpop.f32.mrb[0].mxu0
        %2642 = vdwg.mxu0
        %v2643 = vadd.f32 %v2485, %v2637
        %v2644 = vadd.f32 %v2488, %v2640
        %2645 = vmatprep.subr.bf16.mxu0 0
        %2646 = vmatpush1.bf16.msra.mxu0 %v2295
        %2647 = vmatprep.subr.bf16.mxu0 0
        %2648 = vmatpush1.bf16.msra.mxu0 0
        %2649 = vmatprep.subr.bf16.mxu0 0
        %2650 = vmatpush1.bf16.msra.mxu0 0
        %2651 = vmatprep.subr.bf16.mxu0 0
        %2652 = vmatpush1.bf16.msra.mxu0 0
        %2653 = vmatprep.subr.bf16.mxu0 0
        %2654 = vmatpush1.bf16.msra.mxu0 0
        %2655 = vmatprep.subr.bf16.mxu0 0
        %2656 = vmatpush1.bf16.msra.mxu0 0
        %2657 = vmatprep.subr.bf16.mxu0 0
        %2658 = vmatpush1.bf16.msra.mxu0 0
        %2659 = vmatprep.subr.bf16.mxu0 0
        %2660 = vmatpush1.bf16.msra.mxu0 0
        %2661 = vmatprep.subr.bf16.mxu0 0
        %2662 = vmatpush1.bf16.msra.mxu0 0
        %2663 = vmatprep.subr.bf16.mxu0 0
        %2664 = vmatpush1.bf16.msra.mxu0 0
        %2665 = vmatprep.subr.bf16.mxu0 0
        %2666 = vmatpush1.bf16.msra.mxu0 0
        %2667 = vmatprep.subr.bf16.mxu0 0
        %2668 = vmatpush1.bf16.msra.mxu0 0
        %2669 = vmatprep.subr.bf16.mxu0 0
        %2670 = vmatpush1.bf16.msra.mxu0 0
        %2671 = vmatprep.subr.bf16.mxu0 0
        %2672 = vmatpush1.bf16.msra.mxu0 0
        %2673 = vmatprep.subr.bf16.mxu0 0
        %2674 = vmatpush1.bf16.msra.mxu0 0
        %2675 = vmatprep.subr.bf16.mxu0 0
        %2676 = vmatpush1.bf16.msra.mxu0 0
        %2677 = vmatprep.mubr.bf16.mxu0 0
        %2678 = vmatmul.mubr.bf16.gmra.mrb[0].mxu0 %v989
        %v2679 = vpop.f32.mrb[0].mxu0
        %v2680 = vadd.f32 0.0, %v2679
        %v2681 = vpop.f32.mrb[0].mxu0
        %v2682 = vpop.f32.mrb[0].mxu0
        %v2683 = vadd.f32 0.0, %v2682
        %v2684 = vpop.f32.mrb[0].mxu0
        %2685 = vdwg.mxu0
        %v2686 = vpack.c.bf16 %v2683, %v2680
        %s2687 = scalar_lea.vmem %s5, 192
        %v2688 = vld [vmem:[%s2687] sm:$0xf]
        %v2689 = vld [vmem:[%s2687 + $0x4] sm:$0xf]
        %v2690 = vld [vmem:[%s2687 + $0x8] sm:$0xf]
        %v2691 = vld [vmem:[%s2687 + $0xc] sm:$0xf]
        %v2692 = vld [vmem:[%s2687 + $0x10] sm:$0xf]
        %v2693 = vld [vmem:[%s2687 + $0x14] sm:$0xf]
        %v2694 = vld [vmem:[%s2687 + $0x18] sm:$0xf]
        %v2695 = vld [vmem:[%s2687 + $0x1c] sm:$0xf]
        %v2696 = vld [vmem:[%s2687 + $0x20] sm:$0xf]
        %v2697 = vld [vmem:[%s2687 + $0x24] sm:$0xf]
        %v2698 = vld [vmem:[%s2687 + $0x28] sm:$0xf]
        %v2699 = vld [vmem:[%s2687 + $0x2c] sm:$0xf]
        %v2700 = vld [vmem:[%s2687 + $0x30] sm:$0xf]
        %v2701 = vld [vmem:[%s2687 + $0x34] sm:$0xf]
        %v2702 = vld [vmem:[%s2687 + $0x38] sm:$0xf]
        %v2703 = vld [vmem:[%s2687 + $0x3c] sm:$0xf]
        %v2720 = vunpack.c.l.b16 %v2688
        %v2721 = vunpack.c.l.b16 %v2689
        %v2722 = vunpack.c.l.b16 %v2690
        %v2723 = vunpack.c.l.b16 %v2691
        %v2724 = vunpack.c.l.b16 %v2692
        %v2725 = vunpack.c.l.b16 %v2693
        %v2726 = vunpack.c.l.b16 %v2694
        %v2727 = vunpack.c.l.b16 %v2695
        %v2728 = vunpack.c.l.b16 %v2696
        %v2729 = vunpack.c.l.b16 %v2697
        %v2730 = vunpack.c.l.b16 %v2698
        %v2731 = vunpack.c.l.b16 %v2699
        %v2732 = vunpack.c.l.b16 %v2700
        %v2733 = vunpack.c.l.b16 %v2701
        %v2734 = vunpack.c.l.b16 %v2702
        %v2735 = vunpack.c.l.b16 %v2703
        %v2736 = vpack.c.b16 %v2721, %v2720
        %v2737 = vpack.c.b16 %v2723, %v2722
        %v2738 = vpack.c.b16 %v2725, %v2724
        %v2739 = vpack.c.b16 %v2727, %v2726
        %v2740 = vpack.c.b16 %v2729, %v2728
        %v2741 = vpack.c.b16 %v2731, %v2730
        %v2742 = vpack.c.b16 %v2733, %v2732
        %v2743 = vpack.c.b16 %v2735, %v2734
        %2752 = vmatprep.subr.bf16.mxu0 0
        %2753 = vmatpush1.bf16.msra.mxu0 %v2736
        %2754 = vmatprep.subr.bf16.mxu0 0
        %2755 = vmatpush1.bf16.msra.mxu0 %v2737
        %2756 = vmatprep.subr.bf16.mxu0 0
        %2757 = vmatpush1.bf16.msra.mxu0 %v2738
        %2758 = vmatprep.subr.bf16.mxu0 0
        %2759 = vmatpush1.bf16.msra.mxu0 %v2739
        %2760 = vmatprep.subr.bf16.mxu0 0
        %2761 = vmatpush1.bf16.msra.mxu0 %v2740
        %2762 = vmatprep.subr.bf16.mxu0 0
        %2763 = vmatpush1.bf16.msra.mxu0 %v2741
        %2764 = vmatprep.subr.bf16.mxu0 0
        %2765 = vmatpush1.bf16.msra.mxu0 %v2742
        %2766 = vmatprep.subr.bf16.mxu0 0
        %2767 = vmatpush1.bf16.msra.mxu0 %v2743
        %2768 = vmatprep.subr.bf16.mxu0 0
        %2769 = vmatpush1.bf16.msra.mxu0 0
        %2770 = vmatprep.subr.bf16.mxu0 0
        %2771 = vmatpush1.bf16.msra.mxu0 0
        %2772 = vmatprep.subr.bf16.mxu0 0
        %2773 = vmatpush1.bf16.msra.mxu0 0
        %2774 = vmatprep.subr.bf16.mxu0 0
        %2775 = vmatpush1.bf16.msra.mxu0 0
        %2776 = vmatprep.subr.bf16.mxu0 0
        %2777 = vmatpush1.bf16.msra.mxu0 0
        %2778 = vmatprep.subr.bf16.mxu0 0
        %2779 = vmatpush1.bf16.msra.mxu0 0
        %2780 = vmatprep.subr.bf16.mxu0 0
        %2781 = vmatpush1.bf16.msra.mxu0 0
        %2782 = vmatprep.subr.bf16.mxu0 0
        %2783 = vmatpush1.bf16.msra.mxu0 0
        %2784 = vmatprep.mubr.bf16.mxu0 0
        %2785 = vmatmul.mubr.bf16.gmra.mrb[0].mxu0 %v2686
        %v2786 = vpop.f32.mrb[0].mxu0
        %v2787 = vadd.f32 0.0, %v2786
        %v2788 = vpop.f32.mrb[0].mxu0
        %v2789 = vpop.f32.mrb[0].mxu0
        %v2790 = vadd.f32 0.0, %v2789
        %v2791 = vpop.f32.mrb[0].mxu0
        %2792 = vdwg.mxu0
        %v2793 = vadd.f32 %v2643, %v2787
        %v2794 = vadd.f32 %v2644, %v2790
        %2795 = vmatprep.subr.bf16.mxu0 0
        %2796 = vmatpush1.bf16.msra.mxu0 %v2686
        %2797 = vmatprep.subr.bf16.mxu0 0
        %2798 = vmatpush1.bf16.msra.mxu0 0
        %2799 = vmatprep.subr.bf16.mxu0 0
        %2800 = vmatpush1.bf16.msra.mxu0 0
        %2801 = vmatprep.subr.bf16.mxu0 0
        %2802 = vmatpush1.bf16.msra.mxu0 0
        %2803 = vmatprep.subr.bf16.mxu0 0
        %2804 = vmatpush1.bf16.msra.mxu0 0
        %2805 = vmatprep.subr.bf16.mxu0 0
        %2806 = vmatpush1.bf16.msra.mxu0 0
        %2807 = vmatprep.subr.bf16.mxu0 0
        %2808 = vmatpush1.bf16.msra.mxu0 0
        %2809 = vmatprep.subr.bf16.mxu0 0
        %2810 = vmatpush1.bf16.msra.mxu0 0
        %2811 = vmatprep.subr.bf16.mxu0 0
        %2812 = vmatpush1.bf16.msra.mxu0 0
        %2813 = vmatprep.subr.bf16.mxu0 0
        %2814 = vmatpush1.bf16.msra.mxu0 0
        %2815 = vmatprep.subr.bf16.mxu0 0
        %2816 = vmatpush1.bf16.msra.mxu0 0
        %2817 = vmatprep.subr.bf16.mxu0 0
        %2818 = vmatpush1.bf16.msra.mxu0 0
        %2819 = vmatprep.subr.bf16.mxu0 0
        %2820 = vmatpush1.bf16.msra.mxu0 0
        %2821 = vmatprep.subr.bf16.mxu0 0
        %2822 = vmatpush1.bf16.msra.mxu0 0
        %2823 = vmatprep.subr.bf16.mxu0 0
        %2824 = vmatpush1.bf16.msra.mxu0 0
        %2825 = vmatprep.subr.bf16.mxu0 0
        %2826 = vmatpush1.bf16.msra.mxu0 0
        %2827 = vmatprep.mubr.bf16.mxu0 0
        %2828 = vmatmul.mubr.bf16.gmra.mrb[0].mxu0 %v989
        %v2829 = vpop.f32.mrb[0].mxu0
        %v2830 = vadd.f32 0.0, %v2829
        %v2831 = vpop.f32.mrb[0].mxu0
        %v2832 = vpop.f32.mrb[0].mxu0
        %v2833 = vadd.f32 0.0, %v2832
        %v2834 = vpop.f32.mrb[0].mxu0
        %2835 = vdwg.mxu0
        %v2836 = vmul.f32 %v2830, 2.0
        %v2837 = vmul.f32 %v2833, 2.0
        %v2838 = vsub.f32 %v2836, %v2289
        %v2839 = vsub.f32 %v2837, %v2292
        %v2840 = vpack.c.bf16 %v2839, %v2838
        %s2841 = scalar_lea.vmem %s5, 256
        %v2842 = vld [vmem:[%s2841] sm:$0xf]
        %v2843 = vld [vmem:[%s2841 + $0x4] sm:$0xf]
        %v2844 = vld [vmem:[%s2841 + $0x8] sm:$0xf]
        %v2845 = vld [vmem:[%s2841 + $0xc] sm:$0xf]
        %v2846 = vld [vmem:[%s2841 + $0x10] sm:$0xf]
        %v2847 = vld [vmem:[%s2841 + $0x14] sm:$0xf]
        %v2848 = vld [vmem:[%s2841 + $0x18] sm:$0xf]
        %v2849 = vld [vmem:[%s2841 + $0x1c] sm:$0xf]
        %v2850 = vld [vmem:[%s2841 + $0x20] sm:$0xf]
        %v2851 = vld [vmem:[%s2841 + $0x24] sm:$0xf]
        %v2852 = vld [vmem:[%s2841 + $0x28] sm:$0xf]
        %v2853 = vld [vmem:[%s2841 + $0x2c] sm:$0xf]
        %v2854 = vld [vmem:[%s2841 + $0x30] sm:$0xf]
        %v2855 = vld [vmem:[%s2841 + $0x34] sm:$0xf]
        %v2856 = vld [vmem:[%s2841 + $0x38] sm:$0xf]
        %v2857 = vld [vmem:[%s2841 + $0x3c] sm:$0xf]
        %v2874 = vunpack.c.l.b16 %v2842
        %v2875 = vunpack.c.l.b16 %v2843
        %v2876 = vunpack.c.l.b16 %v2844
        %v2877 = vunpack.c.l.b16 %v2845
        %v2878 = vunpack.c.l.b16 %v2846
        %v2879 = vunpack.c.l.b16 %v2847
        %v2880 = vunpack.c.l.b16 %v2848
        %v2881 = vunpack.c.l.b16 %v2849
        %v2882 = vunpack.c.l.b16 %v2850
        %v2883 = vunpack.c.l.b16 %v2851
        %v2884 = vunpack.c.l.b16 %v2852
        %v2885 = vunpack.c.l.b16 %v2853
        %v2886 = vunpack.c.l.b16 %v2854
        %v2887 = vunpack.c.l.b16 %v2855
        %v2888 = vunpack.c.l.b16 %v2856
        %v2889 = vunpack.c.l.b16 %v2857
        %v2890 = vpack.c.b16 %v2875, %v2874
        %v2891 = vpack.c.b16 %v2877, %v2876
        %v2892 = vpack.c.b16 %v2879, %v2878
        %v2893 = vpack.c.b16 %v2881, %v2880
        %v2894 = vpack.c.b16 %v2883, %v2882
        %v2895 = vpack.c.b16 %v2885, %v2884
        %v2896 = vpack.c.b16 %v2887, %v2886
        %v2897 = vpack.c.b16 %v2889, %v2888
        %2906 = vmatprep.subr.bf16.mxu0 0
        %2907 = vmatpush1.bf16.msra.mxu0 %v2890
        %2908 = vmatprep.subr.bf16.mxu0 0
        %2909 = vmatpush1.bf16.msra.mxu0 %v2891
        %2910 = vmatprep.subr.bf16.mxu0 0
        %2911 = vmatpush1.bf16.msra.mxu0 %v2892
        %2912 = vmatprep.subr.bf16.mxu0 0
        %2913 = vmatpush1.bf16.msra.mxu0 %v2893
        %2914 = vmatprep.subr.bf16.mxu0 0
        %2915 = vmatpush1.bf16.msra.mxu0 %v2894
        %2916 = vmatprep.subr.bf16.mxu0 0
        %2917 = vmatpush1.bf16.msra.mxu0 %v2895
        %2918 = vmatprep.subr.bf16.mxu0 0
        %2919 = vmatpush1.bf16.msra.mxu0 %v2896
        %2920 = vmatprep.subr.bf16.mxu0 0
        %2921 = vmatpush1.bf16.msra.mxu0 %v2897
        %2922 = vmatprep.subr.bf16.mxu0 0
        %2923 = vmatpush1.bf16.msra.mxu0 0
        %2924 = vmatprep.subr.bf16.mxu0 0
        %2925 = vmatpush1.bf16.msra.mxu0 0
        %2926 = vmatprep.subr.bf16.mxu0 0
        %2927 = vmatpush1.bf16.msra.mxu0 0
        %2928 = vmatprep.subr.bf16.mxu0 0
        %2929 = vmatpush1.bf16.msra.mxu0 0
        %2930 = vmatprep.subr.bf16.mxu0 0
        %2931 = vmatpush1.bf16.msra.mxu0 0
        %2932 = vmatprep.subr.bf16.mxu0 0
        %2933 = vmatpush1.bf16.msra.mxu0 0
        %2934 = vmatprep.subr.bf16.mxu0 0
        %2935 = vmatpush1.bf16.msra.mxu0 0
        %2936 = vmatprep.subr.bf16.mxu0 0
        %2937 = vmatpush1.bf16.msra.mxu0 0
        %2938 = vmatprep.mubr.bf16.mxu0 0
        %2939 = vmatmul.mubr.bf16.gmra.mrb[0].mxu0 %v2840
        %v2940 = vpop.f32.mrb[0].mxu0
        %v2941 = vadd.f32 0.0, %v2940
        %v2942 = vpop.f32.mrb[0].mxu0
        %v2943 = vpop.f32.mrb[0].mxu0
        %v2944 = vadd.f32 0.0, %v2943
        %v2945 = vpop.f32.mrb[0].mxu0
        %2946 = vdwg.mxu0
        %v2947 = vadd.f32 %v2793, %v2941
        %v2948 = vadd.f32 %v2794, %v2944
        %v2949 = vadd.f32 %v1303, %v2947
        %v2950 = vadd.f32 %v1306, %v2948
        %v2951 = vld [vmem:[%s7] sm:$0x1]
        %v2953 = vlaneseq
        %v2954 = vshrl.u32 %v2953, 7
        %v2955 = vsub.s32 0, %v2954
        %v2956 = vrot.slane %v2951, %v2955
        %v2958 = vadd.f32 %v2949, %v2956
        %v2959 = vadd.f32 %v2950, %v2956
        %v2960 = vtanh.pop %v2958
        %v2961 = vtanh.pop %v2959
        %v2962 = vmul.f32 %v2232, %v549
        %v2963 = vmul.f32 %v2234, %v550
        %v2964 = vsub.f32 1.0, %v2232
        %v2965 = vsub.f32 1.0, %v2234
        %v2966 = vmul.f32 %v2964, %v2960
        %v2967 = vmul.f32 %v2965, %v2961
        %v2968 = vadd.f32 %v2962, %v2966
        %v2969 = vadd.f32 %v2963, %v2967
        %2970 = vst [vmem:[%s540] sm:$0xff] %v2968
        %2971 = vst [vmem:[%s540 + $0x8] sm:$0xff] %v2969
        %s2972 = scalar_lea.vmem %s484, 16 [#allocation2]
        %v2973 = vld [vmem:[%s2972] sm:$0xff]
        %v2974 = vld [vmem:[%s2972 + $0x8] sm:$0xff]
        %v2975 = vpack.c.bf16 %v2969, %v2968
        %v2976 = vld [vmem:[%s8] sm:$0xff]
        %v2977 = vld [vmem:[%s8 + $0x8] sm:$0xf]
        %v2978 = vld [vmem:[%s8 + $0xc] sm:$0xff]
        %v2979 = vld [vmem:[%s8 + $0x14] sm:$0xf]
        %v2980 = vld [vmem:[%s8 + $0x18] sm:$0xff]
        %v2981 = vld [vmem:[%s8 + $0x20] sm:$0xf]
        %v2982 = vld [vmem:[%s8 + $0x24] sm:$0xff]
        %v2983 = vld [vmem:[%s8 + $0x2c] sm:$0xf]
        %v2984 = vld [vmem:[%s8 + $0x30] sm:$0xff]
        %v2985 = vld [vmem:[%s8 + $0x38] sm:$0xf]
        %v2986 = vld [vmem:[%s8 + $0x3c] sm:$0xff]
        %v2987 = vld [vmem:[%s8 + $0x44] sm:$0xf]
        %v2988 = vld [vmem:[%s8 + $0x48] sm:$0xff]
        %v2989 = vld [vmem:[%s8 + $0x50] sm:$0xf]
        %v2990 = vld [vmem:[%s8 + $0x54] sm:$0xff]
        %v2991 = vld [vmem:[%s8 + $0x5c] sm:$0xf]
        %v2992 = vld [vmem:[%s8 + $0x60] sm:$0xff]
        %v2993 = vld [vmem:[%s8 + $0x68] sm:$0xf]
        %v2994 = vld [vmem:[%s8 + $0x6c] sm:$0xff]
        %v2995 = vld [vmem:[%s8 + $0x74] sm:$0xf]
        %v2996 = vld [vmem:[%s8 + $0x78] sm:$0xff]
        %v2997 = vld [vmem:[%s8 + $0x80] sm:$0xf]
        %v2998 = vld [vmem:[%s8 + $0x84] sm:$0xff]
        %v2999 = vld [vmem:[%s8 + $0x8c] sm:$0xf]
        %v3000 = vld [vmem:[%s8 + $0x90] sm:$0xff]
        %v3001 = vld [vmem:[%s8 + $0x98] sm:$0xf]
        %v3002 = vld [vmem:[%s8 + $0x9c] sm:$0xff]
        %v3003 = vld [vmem:[%s8 + $0xa4] sm:$0xf]
        %v3004 = vld [vmem:[%s8 + $0xa8] sm:$0xff]
        %v3005 = vld [vmem:[%s8 + $0xb0] sm:$0xf]
        %v3006 = vld [vmem:[%s8 + $0xb4] sm:$0xff]
        %v3007 = vld [vmem:[%s8 + $0xbc] sm:$0xf]
        %v3008 = vld [vmem:[%s0] sm:$0xf]
        %v3009 = vld [vmem:[%s0 + $0x4] sm:$0xf]
        %v3012 = vunpack.c.l.b16 %v3008
        %v3013 = vunpack.c.l.b16 %v3009
        %v3014 = vpack.c.b16 %v3013, %v3012
        %v3016 = vsel %vm563, %v3014, 0
        %3018 = vmatprep.subr.bf16.mxu0 0
        %3019 = vmatpush1.bf16.msra.mxu0 %v2975
        %3020 = vmatprep.subr.bf16.mxu0 0
        %3021 = vmatpush1.bf16.msra.mxu0 0
        %3022 = vmatprep.subr.bf16.mxu0 0
        %3023 = vmatpush1.bf16.msra.mxu0 0
        %3024 = vmatprep.subr.bf16.mxu0 0
        %3025 = vmatpush1.bf16.msra.mxu0 0
        %3026 = vmatprep.subr.bf16.mxu0 0
        %3027 = vmatpush1.bf16.msra.mxu0 0
        %3028 = vmatprep.subr.bf16.mxu0 0
        %3029 = vmatpush1.bf16.msra.mxu0 0
        %3030 = vmatprep.subr.bf16.mxu0 0
        %3031 = vmatpush1.bf16.msra.mxu0 0
        %3032 = vmatprep.subr.bf16.mxu0 0
        %3033 = vmatpush1.bf16.msra.mxu0 0
        %3034 = vmatprep.subr.bf16.mxu0 0
        %3035 = vmatpush1.bf16.msra.mxu0 0
        %3036 = vmatprep.subr.bf16.mxu0 0
        %3037 = vmatpush1.bf16.msra.mxu0 0
        %3038 = vmatprep.subr.bf16.mxu0 0
        %3039 = vmatpush1.bf16.msra.mxu0 0
        %3040 = vmatprep.subr.bf16.mxu0 0
        %3041 = vmatpush1.bf16.msra.mxu0 0
        %3042 = vmatprep.subr.bf16.mxu0 0
        %3043 = vmatpush1.bf16.msra.mxu0 0
        %3044 = vmatprep.subr.bf16.mxu0 0
        %3045 = vmatpush1.bf16.msra.mxu0 0
        %3046 = vmatprep.subr.bf16.mxu0 0
        %3047 = vmatpush1.bf16.msra.mxu0 0
        %3048 = vmatprep.subr.bf16.mxu0 0
        %3049 = vmatpush1.bf16.msra.mxu0 0
        %3050 = vmatprep.mubr.bf16.mxu0 0
        %3051 = vmatmul.mubr.bf16.gmra.mrb[0].mxu0 %v3016
        %v3052 = vpop.f32.mrb[0].mxu0
        %v3053 = vadd.f32 0.0, %v3052
        %v3054 = vpop.f32.mrb[0].mxu0
        %v3055 = vpop.f32.mrb[0].mxu0
        %v3056 = vadd.f32 0.0, %v3055
        %v3057 = vpop.f32.mrb[0].mxu0
        %3058 = vdwg.mxu0
        %v3059 = vpack.c.bf16 %v3056, %v3053
        %s3060 = scalar_lea.vmem %s8, 192
        %v3061 = vld [vmem:[%s3060] sm:$0xff]
        %v3062 = vld [vmem:[%s3060 + $0x8] sm:$0xf]
        %v3063 = vld [vmem:[%s3060 + $0xc] sm:$0xff]
        %v3064 = vld [vmem:[%s3060 + $0x14] sm:$0xf]
        %v3065 = vld [vmem:[%s3060 + $0x18] sm:$0xff]
        %v3066 = vld [vmem:[%s3060 + $0x20] sm:$0xf]
        %v3067 = vld [vmem:[%s3060 + $0x24] sm:$0xff]
        %v3068 = vld [vmem:[%s3060 + $0x2c] sm:$0xf]
        %v3069 = vld [vmem:[%s3060 + $0x30] sm:$0xff]
        %v3070 = vld [vmem:[%s3060 + $0x38] sm:$0xf]
        %v3071 = vld [vmem:[%s3060 + $0x3c] sm:$0xff]
        %v3072 = vld [vmem:[%s3060 + $0x44] sm:$0xf]
        %v3073 = vld [vmem:[%s3060 + $0x48] sm:$0xff]
        %v3074 = vld [vmem:[%s3060 + $0x50] sm:$0xf]
        %v3075 = vld [vmem:[%s3060 + $0x54] sm:$0xff]
        %v3076 = vld [vmem:[%s3060 + $0x5c] sm:$0xf]
        %v3077 = vld [vmem:[%s3060 + $0x60] sm:$0xff]
        %v3078 = vld [vmem:[%s3060 + $0x68] sm:$0xf]
        %v3079 = vld [vmem:[%s3060 + $0x6c] sm:$0xff]
        %v3080 = vld [vmem:[%s3060 + $0x74] sm:$0xf]
        %v3081 = vld [vmem:[%s3060 + $0x78] sm:$0xff]
        %v3082 = vld [vmem:[%s3060 + $0x80] sm:$0xf]
        %v3083 = vld [vmem:[%s3060 + $0x84] sm:$0xff]
        %v3084 = vld [vmem:[%s3060 + $0x8c] sm:$0xf]
        %v3085 = vld [vmem:[%s3060 + $0x90] sm:$0xff]
        %v3086 = vld [vmem:[%s3060 + $0x98] sm:$0xf]
        %v3087 = vld [vmem:[%s3060 + $0x9c] sm:$0xff]
        %v3088 = vld [vmem:[%s3060 + $0xa4] sm:$0xf]
        %v3089 = vld [vmem:[%s3060 + $0xa8] sm:$0xff]
        %v3090 = vld [vmem:[%s3060 + $0xb0] sm:$0xf]
        %v3091 = vld [vmem:[%s3060 + $0xb4] sm:$0xff]
        %v3092 = vld [vmem:[%s3060 + $0xbc] sm:$0xf]
        %v3125 = vunpack.c.l.b16 %v3061
        %v3126 = vunpack.c.h.b16 %v3061
        %v3127 = vunpack.c.l.b16 %v3062
        %v3128 = vunpack.c.l.b16 %v3063
        %v3129 = vunpack.c.h.b16 %v3063
        %v3130 = vunpack.c.l.b16 %v3064
        %v3131 = vunpack.c.l.b16 %v3065
        %v3132 = vunpack.c.h.b16 %v3065
        %v3133 = vunpack.c.l.b16 %v3066
        %v3134 = vunpack.c.l.b16 %v3067
        %v3135 = vunpack.c.h.b16 %v3067
        %v3136 = vunpack.c.l.b16 %v3068
        %v3137 = vunpack.c.l.b16 %v3069
        %v3138 = vunpack.c.h.b16 %v3069
        %v3139 = vunpack.c.l.b16 %v3070
        %v3140 = vunpack.c.l.b16 %v3071
        %v3141 = vunpack.c.h.b16 %v3071
        %v3142 = vunpack.c.l.b16 %v3072
        %v3143 = vunpack.c.l.b16 %v3073
        %v3144 = vunpack.c.h.b16 %v3073
        %v3145 = vunpack.c.l.b16 %v3074
        %v3146 = vunpack.c.l.b16 %v3075
        %v3147 = vunpack.c.h.b16 %v3075
        %v3148 = vunpack.c.l.b16 %v3076
        %v3149 = vunpack.c.l.b16 %v3077
        %v3150 = vunpack.c.h.b16 %v3077
        %v3151 = vunpack.c.l.b16 %v3078
        %v3152 = vunpack.c.l.b16 %v3079
        %v3153 = vunpack.c.h.b16 %v3079
        %v3154 = vunpack.c.l.b16 %v3080
        %v3155 = vunpack.c.l.b16 %v3081
        %v3156 = vunpack.c.h.b16 %v3081
        %v3157 = vunpack.c.l.b16 %v3082
        %v3158 = vunpack.c.l.b16 %v3083
        %v3159 = vunpack.c.h.b16 %v3083
        %v3160 = vunpack.c.l.b16 %v3084
        %v3161 = vunpack.c.l.b16 %v3085
        %v3162 = vunpack.c.h.b16 %v3085
        %v3163 = vunpack.c.l.b16 %v3086
        %v3164 = vunpack.c.l.b16 %v3087
        %v3165 = vunpack.c.h.b16 %v3087
        %v3166 = vunpack.c.l.b16 %v3088
        %v3167 = vunpack.c.l.b16 %v3089
        %v3168 = vunpack.c.h.b16 %v3089
        %v3169 = vunpack.c.l.b16 %v3090
        %v3170 = vunpack.c.l.b16 %v3091
        %v3171 = vunpack.c.h.b16 %v3091
        %v3172 = vunpack.c.l.b16 %v3092
        %v3173 = vpack.c.b16 %v3128, %v3125
        %v3174 = vpack.c.b16 %v3129, %v3126
        %v3175 = vpack.c.b16 %v3130, %v3127
        %v3176 = vpack.c.b16 %v3134, %v3131
        %v3177 = vpack.c.b16 %v3135, %v3132
        %v3178 = vpack.c.b16 %v3136, %v3133
        %v3179 = vpack.c.b16 %v3140, %v3137
        %v3180 = vpack.c.b16 %v3141, %v3138
        %v3181 = vpack.c.b16 %v3142, %v3139
        %v3182 = vpack.c.b16 %v3146, %v3143
        %v3183 = vpack.c.b16 %v3147, %v3144
        %v3184 = vpack.c.b16 %v3148, %v3145
        %v3185 = vpack.c.b16 %v3152, %v3149
        %v3186 = vpack.c.b16 %v3153, %v3150
        %v3187 = vpack.c.b16 %v3154, %v3151
        %v3188 = vpack.c.b16 %v3158, %v3155
        %v3189 = vpack.c.b16 %v3159, %v3156
        %v3190 = vpack.c.b16 %v3160, %v3157
        %v3191 = vpack.c.b16 %v3164, %v3161
        %v3192 = vpack.c.b16 %v3165, %v3162
        %v3193 = vpack.c.b16 %v3166, %v3163
        %v3194 = vpack.c.b16 %v3170, %v3167
        %v3195 = vpack.c.b16 %v3171, %v3168
        %v3196 = vpack.c.b16 %v3172, %v3169
        %3221 = vmatprep.subr.bf16.mxu0 %v3174
        %3222 = vmatpush1.bf16.msra.mxu0 %v3173
        %3223 = vmatprep.subr.bf16.mxu0 %v3177
        %3224 = vmatpush1.bf16.msra.mxu0 %v3176
        %3225 = vmatprep.subr.bf16.mxu0 %v3180
        %3226 = vmatpush1.bf16.msra.mxu0 %v3179
        %3227 = vmatprep.subr.bf16.mxu0 %v3183
        %3228 = vmatpush1.bf16.msra.mxu0 %v3182
        %3229 = vmatprep.subr.bf16.mxu0 %v3186
        %3230 = vmatpush1.bf16.msra.mxu0 %v3185
        %3231 = vmatprep.subr.bf16.mxu0 %v3189
        %3232 = vmatpush1.bf16.msra.mxu0 %v3188
        %3233 = vmatprep.subr.bf16.mxu0 %v3192
        %3234 = vmatpush1.bf16.msra.mxu0 %v3191
        %3235 = vmatprep.subr.bf16.mxu0 %v3195
        %3236 = vmatpush1.bf16.msra.mxu0 %v3194
        %3237 = vmatprep.subr.bf16.mxu0 0
        %3238 = vmatpush1.bf16.msra.mxu0 0
        %3239 = vmatprep.subr.bf16.mxu0 0
        %3240 = vmatpush1.bf16.msra.mxu0 0
        %3241 = vmatprep.subr.bf16.mxu0 0
        %3242 = vmatpush1.bf16.msra.mxu0 0
        %3243 = vmatprep.subr.bf16.mxu0 0
        %3244 = vmatpush1.bf16.msra.mxu0 0
        %3245 = vmatprep.subr.bf16.mxu0 0
        %3246 = vmatpush1.bf16.msra.mxu0 0
        %3247 = vmatprep.subr.bf16.mxu0 0
        %3248 = vmatpush1.bf16.msra.mxu0 0
        %3249 = vmatprep.subr.bf16.mxu0 0
        %3250 = vmatpush1.bf16.msra.mxu0 0
        %3251 = vmatprep.subr.bf16.mxu0 0
        %3252 = vmatpush1.bf16.msra.mxu0 0
        %3253 = vmatprep.mubr.bf16.mxu0 0
        %3254 = vmatmul.mubr.bf16.gmra.mrb[0].mxu0 %v3059
        %v3255 = vpop.f32.mrb[0].mxu0
        %v3256 = vadd.f32 0.0, %v3255
        %v3257 = vpop.f32.mrb[0].mxu0
        %v3258 = vadd.f32 0.0, %v3257
        %v3259 = vpop.f32.mrb[0].mxu0
        %v3260 = vadd.f32 0.0, %v3259
        %v3261 = vpop.f32.mrb[0].mxu0
        %v3262 = vadd.f32 0.0, %v3261
        %3263 = vdwg.mxu0
        %3264 = vmatprep.subr.bf16.mxu0 0
        %3265 = vmatpush1.bf16.msra.mxu0 %v3175
        %3266 = vmatprep.subr.bf16.mxu0 0
        %3267 = vmatpush1.bf16.msra.mxu0 %v3178
        %3268 = vmatprep.subr.bf16.mxu0 0
        %3269 = vmatpush1.bf16.msra.mxu0 %v3181
        %3270 = vmatprep.subr.bf16.mxu0 0
        %3271 = vmatpush1.bf16.msra.mxu0 %v3184
        %3272 = vmatprep.subr.bf16.mxu0 0
        %3273 = vmatpush1.bf16.msra.mxu0 %v3187
        %3274 = vmatprep.subr.bf16.mxu0 0
        %3275 = vmatpush1.bf16.msra.mxu0 %v3190
        %3276 = vmatprep.subr.bf16.mxu0 0
        %3277 = vmatpush1.bf16.msra.mxu0 %v3193
        %3278 = vmatprep.subr.bf16.mxu0 0
        %3279 = vmatpush1.bf16.msra.mxu0 %v3196
        %3280 = vmatprep.subr.bf16.mxu0 0
        %3281 = vmatpush1.bf16.msra.mxu0 0
        %3282 = vmatprep.subr.bf16.mxu0 0
        %3283 = vmatpush1.bf16.msra.mxu0 0
        %3284 = vmatprep.subr.bf16.mxu0 0
        %3285 = vmatpush1.bf16.msra.mxu0 0
        %3286 = vmatprep.subr.bf16.mxu0 0
        %3287 = vmatpush1.bf16.msra.mxu0 0
        %3288 = vmatprep.subr.bf16.mxu0 0
        %3289 = vmatpush1.bf16.msra.mxu0 0
        %3290 = vmatprep.subr.bf16.mxu0 0
        %3291 = vmatpush1.bf16.msra.mxu0 0
        %3292 = vmatprep.subr.bf16.mxu0 0
        %3293 = vmatpush1.bf16.msra.mxu0 0
        %3294 = vmatprep.subr.bf16.mxu0 0
        %3295 = vmatpush1.bf16.msra.mxu0 0
        %3296 = vmatprep.mubr.bf16.mxu0 0
        %3297 = vmatmul.mubr.bf16.gmra.mrb[0].mxu0 %v3059
        %v3298 = vpop.f32.mrb[0].mxu0
        %v3299 = vadd.f32 0.0, %v3298
        %v3300 = vpop.f32.mrb[0].mxu0
        %v3301 = vpop.f32.mrb[0].mxu0
        %v3302 = vadd.f32 0.0, %v3301
        %v3303 = vpop.f32.mrb[0].mxu0
        %3304 = vdwg.mxu0
        %v3337 = vunpack.c.l.b16 %v2976
        %v3338 = vunpack.c.h.b16 %v2976
        %v3339 = vunpack.c.l.b16 %v2977
        %v3340 = vunpack.c.l.b16 %v2978
        %v3341 = vunpack.c.h.b16 %v2978
        %v3342 = vunpack.c.l.b16 %v2979
        %v3343 = vunpack.c.l.b16 %v2980
        %v3344 = vunpack.c.h.b16 %v2980
        %v3345 = vunpack.c.l.b16 %v2981
        %v3346 = vunpack.c.l.b16 %v2982
        %v3347 = vunpack.c.h.b16 %v2982
        %v3348 = vunpack.c.l.b16 %v2983
        %v3349 = vunpack.c.l.b16 %v2984
        %v3350 = vunpack.c.h.b16 %v2984
        %v3351 = vunpack.c.l.b16 %v2985
        %v3352 = vunpack.c.l.b16 %v2986
        %v3353 = vunpack.c.h.b16 %v2986
        %v3354 = vunpack.c.l.b16 %v2987
        %v3355 = vunpack.c.l.b16 %v2988
        %v3356 = vunpack.c.h.b16 %v2988
        %v3357 = vunpack.c.l.b16 %v2989
        %v3358 = vunpack.c.l.b16 %v2990
        %v3359 = vunpack.c.h.b16 %v2990
        %v3360 = vunpack.c.l.b16 %v2991
        %v3361 = vunpack.c.l.b16 %v2992
        %v3362 = vunpack.c.h.b16 %v2992
        %v3363 = vunpack.c.l.b16 %v2993
        %v3364 = vunpack.c.l.b16 %v2994
        %v3365 = vunpack.c.h.b16 %v2994
        %v3366 = vunpack.c.l.b16 %v2995
        %v3367 = vunpack.c.l.b16 %v2996
        %v3368 = vunpack.c.h.b16 %v2996
        %v3369 = vunpack.c.l.b16 %v2997
        %v3370 = vunpack.c.l.b16 %v2998
        %v3371 = vunpack.c.h.b16 %v2998
        %v3372 = vunpack.c.l.b16 %v2999
        %v3373 = vunpack.c.l.b16 %v3000
        %v3374 = vunpack.c.h.b16 %v3000
        %v3375 = vunpack.c.l.b16 %v3001
        %v3376 = vunpack.c.l.b16 %v3002
        %v3377 = vunpack.c.h.b16 %v3002
        %v3378 = vunpack.c.l.b16 %v3003
        %v3379 = vunpack.c.l.b16 %v3004
        %v3380 = vunpack.c.h.b16 %v3004
        %v3381 = vunpack.c.l.b16 %v3005
        %v3382 = vunpack.c.l.b16 %v3006
        %v3383 = vunpack.c.h.b16 %v3006
        %v3384 = vunpack.c.l.b16 %v3007
        %v3385 = vpack.c.b16 %v3340, %v3337
        %v3386 = vpack.c.b16 %v3341, %v3338
        %v3387 = vpack.c.b16 %v3342, %v3339
        %v3388 = vpack.c.b16 %v3346, %v3343
        %v3389 = vpack.c.b16 %v3347, %v3344
        %v3390 = vpack.c.b16 %v3348, %v3345
        %v3391 = vpack.c.b16 %v3352, %v3349
        %v3392 = vpack.c.b16 %v3353, %v3350
        %v3393 = vpack.c.b16 %v3354, %v3351
        %v3394 = vpack.c.b16 %v3358, %v3355
        %v3395 = vpack.c.b16 %v3359, %v3356
        %v3396 = vpack.c.b16 %v3360, %v3357
        %v3397 = vpack.c.b16 %v3364, %v3361
        %v3398 = vpack.c.b16 %v3365, %v3362
        %v3399 = vpack.c.b16 %v3366, %v3363
        %v3400 = vpack.c.b16 %v3370, %v3367
        %v3401 = vpack.c.b16 %v3371, %v3368
        %v3402 = vpack.c.b16 %v3372, %v3369
        %v3403 = vpack.c.b16 %v3376, %v3373
        %v3404 = vpack.c.b16 %v3377, %v3374
        %v3405 = vpack.c.b16 %v3378, %v3375
        %v3406 = vpack.c.b16 %v3382, %v3379
        %v3407 = vpack.c.b16 %v3383, %v3380
        %v3408 = vpack.c.b16 %v3384, %v3381
        %3433 = vmatprep.subr.bf16.mxu0 %v3386
        %3434 = vmatpush1.bf16.msra.mxu0 %v3385
        %3435 = vmatprep.subr.bf16.mxu0 %v3389
        %3436 = vmatpush1.bf16.msra.mxu0 %v3388
        %3437 = vmatprep.subr.bf16.mxu0 %v3392
        %3438 = vmatpush1.bf16.msra.mxu0 %v3391
        %3439 = vmatprep.subr.bf16.mxu0 %v3395
        %3440 = vmatpush1.bf16.msra.mxu0 %v3394
        %3441 = vmatprep.subr.bf16.mxu0 %v3398
        %3442 = vmatpush1.bf16.msra.mxu0 %v3397
        %3443 = vmatprep.subr.bf16.mxu0 %v3401
        %3444 = vmatpush1.bf16.msra.mxu0 %v3400
        %3445 = vmatprep.subr.bf16.mxu0 %v3404
        %3446 = vmatpush1.bf16.msra.mxu0 %v3403
        %3447 = vmatprep.subr.bf16.mxu0 %v3407
        %3448 = vmatpush1.bf16.msra.mxu0 %v3406
        %3449 = vmatprep.subr.bf16.mxu0 0
        %3450 = vmatpush1.bf16.msra.mxu0 0
        %3451 = vmatprep.subr.bf16.mxu0 0
        %3452 = vmatpush1.bf16.msra.mxu0 0
        %3453 = vmatprep.subr.bf16.mxu0 0
        %3454 = vmatpush1.bf16.msra.mxu0 0
        %3455 = vmatprep.subr.bf16.mxu0 0
        %3456 = vmatpush1.bf16.msra.mxu0 0
        %3457 = vmatprep.subr.bf16.mxu0 0
        %3458 = vmatpush1.bf16.msra.mxu0 0
        %3459 = vmatprep.subr.bf16.mxu0 0
        %3460 = vmatpush1.bf16.msra.mxu0 0
        %3461 = vmatprep.subr.bf16.mxu0 0
        %3462 = vmatpush1.bf16.msra.mxu0 0
        %3463 = vmatprep.subr.bf16.mxu0 0
        %3464 = vmatpush1.bf16.msra.mxu0 0
        %3465 = vmatprep.mubr.bf16.mxu0 0
        %3466 = vmatmul.mubr.bf16.gmra.mrb[0].mxu0 %v2975
        %v3467 = vpop.f32.mrb[0].mxu0
        %v3468 = vadd.f32 %v3256, %v3467
        %v3469 = vpop.f32.mrb[0].mxu0
        %v3470 = vadd.f32 %v3258, %v3469
        %v3471 = vpop.f32.mrb[0].mxu0
        %v3472 = vadd.f32 %v3260, %v3471
        %v3473 = vpop.f32.mrb[0].mxu0
        %v3474 = vadd.f32 %v3262, %v3473
        %3475 = vdwg.mxu0
        %3476 = vmatprep.subr.bf16.mxu0 0
        %3477 = vmatpush1.bf16.msra.mxu0 %v3387
        %3478 = vmatprep.subr.bf16.mxu0 0
        %3479 = vmatpush1.bf16.msra.mxu0 %v3390
        %3480 = vmatprep.subr.bf16.mxu0 0
        %3481 = vmatpush1.bf16.msra.mxu0 %v3393
        %3482 = vmatprep.subr.bf16.mxu0 0
        %3483 = vmatpush1.bf16.msra.mxu0 %v3396
        %3484 = vmatprep.subr.bf16.mxu0 0
        %3485 = vmatpush1.bf16.msra.mxu0 %v3399
        %3486 = vmatprep.subr.bf16.mxu0 0
        %3487 = vmatpush1.bf16.msra.mxu0 %v3402
        %3488 = vmatprep.subr.bf16.mxu0 0
        %3489 = vmatpush1.bf16.msra.mxu0 %v3405
        %3490 = vmatprep.subr.bf16.mxu0 0
        %3491 = vmatpush1.bf16.msra.mxu0 %v3408
        %3492 = vmatprep.subr.bf16.mxu0 0
        %3493 = vmatpush1.bf16.msra.mxu0 0
        %3494 = vmatprep.subr.bf16.mxu0 0
        %3495 = vmatpush1.bf16.msra.mxu0 0
        %3496 = vmatprep.subr.bf16.mxu0 0
        %3497 = vmatpush1.bf16.msra.mxu0 0
        %3498 = vmatprep.subr.bf16.mxu0 0
        %3499 = vmatpush1.bf16.msra.mxu0 0
        %3500 = vmatprep.subr.bf16.mxu0 0
        %3501 = vmatpush1.bf16.msra.mxu0 0
        %3502 = vmatprep.subr.bf16.mxu0 0
        %3503 = vmatpush1.bf16.msra.mxu0 0
        %3504 = vmatprep.subr.bf16.mxu0 0
        %3505 = vmatpush1.bf16.msra.mxu0 0
        %3506 = vmatprep.subr.bf16.mxu0 0
        %3507 = vmatpush1.bf16.msra.mxu0 0
        %3508 = vmatprep.mubr.bf16.mxu0 0
        %3509 = vmatmul.mubr.bf16.gmra.mrb[0].mxu0 %v2975
        %v3510 = vpop.f32.mrb[0].mxu0
        %v3511 = vadd.f32 %v3299, %v3510
        %v3512 = vpop.f32.mrb[0].mxu0
        %v3513 = vpop.f32.mrb[0].mxu0
        %v3514 = vadd.f32 %v3302, %v3513
        %v3515 = vpop.f32.mrb[0].mxu0
        %3516 = vdwg.mxu0
        %3517 = vmatprep.subr.bf16.mxu0 0
        %3518 = vmatpush1.bf16.msra.mxu0 %v3059
        %3519 = vmatprep.subr.bf16.mxu0 0
        %3520 = vmatpush1.bf16.msra.mxu0 0
        %3521 = vmatprep.subr.bf16.mxu0 0
        %3522 = vmatpush1.bf16.msra.mxu0 0
        %3523 = vmatprep.subr.bf16.mxu0 0
        %3524 = vmatpush1.bf16.msra.mxu0 0
        %3525 = vmatprep.subr.bf16.mxu0 0
        %3526 = vmatpush1.bf16.msra.mxu0 0
        %3527 = vmatprep.subr.bf16.mxu0 0
        %3528 = vmatpush1.bf16.msra.mxu0 0
        %3529 = vmatprep.subr.bf16.mxu0 0
        %3530 = vmatpush1.bf16.msra.mxu0 0
        %3531 = vmatprep.subr.bf16.mxu0 0
        %3532 = vmatpush1.bf16.msra.mxu0 0
        %3533 = vmatprep.subr.bf16.mxu0 0
        %3534 = vmatpush1.bf16.msra.mxu0 0
        %3535 = vmatprep.subr.bf16.mxu0 0
        %3536 = vmatpush1.bf16.msra.mxu0 0
        %3537 = vmatprep.subr.bf16.mxu0 0
        %3538 = vmatpush1.bf16.msra.mxu0 0
        %3539 = vmatprep.subr.bf16.mxu0 0
        %3540 = vmatpush1.bf16.msra.mxu0 0
        %3541 = vmatprep.subr.bf16.mxu0 0
        %3542 = vmatpush1.bf16.msra.mxu0 0
        %3543 = vmatprep.subr.bf16.mxu0 0
        %3544 = vmatpush1.bf16.msra.mxu0 0
        %3545 = vmatprep.subr.bf16.mxu0 0
        %3546 = vmatpush1.bf16.msra.mxu0 0
        %3547 = vmatprep.subr.bf16.mxu0 0
        %3548 = vmatpush1.bf16.msra.mxu0 0
        %3549 = vmatprep.mubr.bf16.mxu0 0
        %3550 = vmatmul.mubr.bf16.gmra.mrb[0].mxu0 %v3016
        %v3551 = vpop.f32.mrb[0].mxu0
        %v3552 = vadd.f32 0.0, %v3551
        %v3553 = vpop.f32.mrb[0].mxu0
        %v3554 = vpop.f32.mrb[0].mxu0
        %v3555 = vadd.f32 0.0, %v3554
        %v3556 = vpop.f32.mrb[0].mxu0
        %3557 = vdwg.mxu0
        %v3558 = vmul.f32 %v3552, 2.0
        %v3559 = vmul.f32 %v3555, 2.0
        %v3560 = vsub.f32 %v3558, %v2968
        %v3561 = vsub.f32 %v3559, %v2969
        %v3562 = vpack.c.bf16 %v3561, %v3560
        %s3563 = scalar_lea.vmem %s8, 384
        %v3564 = vld [vmem:[%s3563] sm:$0xff]
        %v3565 = vld [vmem:[%s3563 + $0x8] sm:$0xf]
        %v3566 = vld [vmem:[%s3563 + $0xc] sm:$0xff]
        %v3567 = vld [vmem:[%s3563 + $0x14] sm:$0xf]
        %v3568 = vld [vmem:[%s3563 + $0x18] sm:$0xff]
        %v3569 = vld [vmem:[%s3563 + $0x20] sm:$0xf]
        %v3570 = vld [vmem:[%s3563 + $0x24] sm:$0xff]
        %v3571 = vld [vmem:[%s3563 + $0x2c] sm:$0xf]
        %v3572 = vld [vmem:[%s3563 + $0x30] sm:$0xff]
        %v3573 = vld [vmem:[%s3563 + $0x38] sm:$0xf]
        %v3574 = vld [vmem:[%s3563 + $0x3c] sm:$0xff]
        %v3575 = vld [vmem:[%s3563 + $0x44] sm:$0xf]
        %v3576 = vld [vmem:[%s3563 + $0x48] sm:$0xff]
        %v3577 = vld [vmem:[%s3563 + $0x50] sm:$0xf]
        %v3578 = vld [vmem:[%s3563 + $0x54] sm:$0xff]
        %v3579 = vld [vmem:[%s3563 + $0x5c] sm:$0xf]
        %v3580 = vld [vmem:[%s3563 + $0x60] sm:$0xff]
        %v3581 = vld [vmem:[%s3563 + $0x68] sm:$0xf]
        %v3582 = vld [vmem:[%s3563 + $0x6c] sm:$0xff]
        %v3583 = vld [vmem:[%s3563 + $0x74] sm:$0xf]
        %v3584 = vld [vmem:[%s3563 + $0x78] sm:$0xff]
        %v3585 = vld [vmem:[%s3563 + $0x80] sm:$0xf]
        %v3586 = vld [vmem:[%s3563 + $0x84] sm:$0xff]
        %v3587 = vld [vmem:[%s3563 + $0x8c] sm:$0xf]
        %v3588 = vld [vmem:[%s3563 + $0x90] sm:$0xff]
        %v3589 = vld [vmem:[%s3563 + $0x98] sm:$0xf]
        %v3590 = vld [vmem:[%s3563 + $0x9c] sm:$0xff]
        %v3591 = vld [vmem:[%s3563 + $0xa4] sm:$0xf]
        %v3592 = vld [vmem:[%s3563 + $0xa8] sm:$0xff]
        %v3593 = vld [vmem:[%s3563 + $0xb0] sm:$0xf]
        %v3594 = vld [vmem:[%s3563 + $0xb4] sm:$0xff]
        %v3595 = vld [vmem:[%s3563 + $0xbc] sm:$0xf]
        %v3628 = vunpack.c.l.b16 %v3564
        %v3629 = vunpack.c.h.b16 %v3564
        %v3630 = vunpack.c.l.b16 %v3565
        %v3631 = vunpack.c.l.b16 %v3566
        %v3632 = vunpack.c.h.b16 %v3566
        %v3633 = vunpack.c.l.b16 %v3567
        %v3634 = vunpack.c.l.b16 %v3568
        %v3635 = vunpack.c.h.b16 %v3568
        %v3636 = vunpack.c.l.b16 %v3569
        %v3637 = vunpack.c.l.b16 %v3570
        %v3638 = vunpack.c.h.b16 %v3570
        %v3639 = vunpack.c.l.b16 %v3571
        %v3640 = vunpack.c.l.b16 %v3572
        %v3641 = vunpack.c.h.b16 %v3572
        %v3642 = vunpack.c.l.b16 %v3573
        %v3643 = vunpack.c.l.b16 %v3574
        %v3644 = vunpack.c.h.b16 %v3574
        %v3645 = vunpack.c.l.b16 %v3575
        %v3646 = vunpack.c.l.b16 %v3576
        %v3647 = vunpack.c.h.b16 %v3576
        %v3648 = vunpack.c.l.b16 %v3577
        %v3649 = vunpack.c.l.b16 %v3578
        %v3650 = vunpack.c.h.b16 %v3578
        %v3651 = vunpack.c.l.b16 %v3579
        %v3652 = vunpack.c.l.b16 %v3580
        %v3653 = vunpack.c.h.b16 %v3580
        %v3654 = vunpack.c.l.b16 %v3581
        %v3655 = vunpack.c.l.b16 %v3582
        %v3656 = vunpack.c.h.b16 %v3582
        %v3657 = vunpack.c.l.b16 %v3583
        %v3658 = vunpack.c.l.b16 %v3584
        %v3659 = vunpack.c.h.b16 %v3584
        %v3660 = vunpack.c.l.b16 %v3585
        %v3661 = vunpack.c.l.b16 %v3586
        %v3662 = vunpack.c.h.b16 %v3586
        %v3663 = vunpack.c.l.b16 %v3587
        %v3664 = vunpack.c.l.b16 %v3588
        %v3665 = vunpack.c.h.b16 %v3588
        %v3666 = vunpack.c.l.b16 %v3589
        %v3667 = vunpack.c.l.b16 %v3590
        %v3668 = vunpack.c.h.b16 %v3590
        %v3669 = vunpack.c.l.b16 %v3591
        %v3670 = vunpack.c.l.b16 %v3592
        %v3671 = vunpack.c.h.b16 %v3592
        %v3672 = vunpack.c.l.b16 %v3593
        %v3673 = vunpack.c.l.b16 %v3594
        %v3674 = vunpack.c.h.b16 %v3594
        %v3675 = vunpack.c.l.b16 %v3595
        %v3676 = vpack.c.b16 %v3631, %v3628
        %v3677 = vpack.c.b16 %v3632, %v3629
        %v3678 = vpack.c.b16 %v3633, %v3630
        %v3679 = vpack.c.b16 %v3637, %v3634
        %v3680 = vpack.c.b16 %v3638, %v3635
        %v3681 = vpack.c.b16 %v3639, %v3636
        %v3682 = vpack.c.b16 %v3643, %v3640
        %v3683 = vpack.c.b16 %v3644, %v3641
        %v3684 = vpack.c.b16 %v3645, %v3642
        %v3685 = vpack.c.b16 %v3649, %v3646
        %v3686 = vpack.c.b16 %v3650, %v3647
        %v3687 = vpack.c.b16 %v3651, %v3648
        %v3688 = vpack.c.b16 %v3655, %v3652
        %v3689 = vpack.c.b16 %v3656, %v3653
        %v3690 = vpack.c.b16 %v3657, %v3654
        %v3691 = vpack.c.b16 %v3661, %v3658
        %v3692 = vpack.c.b16 %v3662, %v3659
        %v3693 = vpack.c.b16 %v3663, %v3660
        %v3694 = vpack.c.b16 %v3667, %v3664
        %v3695 = vpack.c.b16 %v3668, %v3665
        %v3696 = vpack.c.b16 %v3669, %v3666
        %v3697 = vpack.c.b16 %v3673, %v3670
        %v3698 = vpack.c.b16 %v3674, %v3671
        %v3699 = vpack.c.b16 %v3675, %v3672
        %3724 = vmatprep.subr.bf16.mxu0 %v3677
        %3725 = vmatpush1.bf16.msra.mxu0 %v3676
        %3726 = vmatprep.subr.bf16.mxu0 %v3680
        %3727 = vmatpush1.bf16.msra.mxu0 %v3679
        %3728 = vmatprep.subr.bf16.mxu0 %v3683
        %3729 = vmatpush1.bf16.msra.mxu0 %v3682
        %3730 = vmatprep.subr.bf16.mxu0 %v3686
        %3731 = vmatpush1.bf16.msra.mxu0 %v3685
        %3732 = vmatprep.subr.bf16.mxu0 %v3689
        %3733 = vmatpush1.bf16.msra.mxu0 %v3688
        %3734 = vmatprep.subr.bf16.mxu0 %v3692
        %3735 = vmatpush1.bf16.msra.mxu0 %v3691
        %3736 = vmatprep.subr.bf16.mxu0 %v3695
        %3737 = vmatpush1.bf16.msra.mxu0 %v3694
        %3738 = vmatprep.subr.bf16.mxu0 %v3698
        %3739 = vmatpush1.bf16.msra.mxu0 %v3697
        %3740 = vmatprep.subr.bf16.mxu0 0
        %3741 = vmatpush1.bf16.msra.mxu0 0
        %3742 = vmatprep.subr.bf16.mxu0 0
        %3743 = vmatpush1.bf16.msra.mxu0 0
        %3744 = vmatprep.subr.bf16.mxu0 0
        %3745 = vmatpush1.bf16.msra.mxu0 0
        %3746 = vmatprep.subr.bf16.mxu0 0
        %3747 = vmatpush1.bf16.msra.mxu0 0
        %3748 = vmatprep.subr.bf16.mxu0 0
        %3749 = vmatpush1.bf16.msra.mxu0 0
        %3750 = vmatprep.subr.bf16.mxu0 0
        %3751 = vmatpush1.bf16.msra.mxu0 0
        %3752 = vmatprep.subr.bf16.mxu0 0
        %3753 = vmatpush1.bf16.msra.mxu0 0
        %3754 = vmatprep.subr.bf16.mxu0 0
        %3755 = vmatpush1.bf16.msra.mxu0 0
        %3756 = vmatprep.mubr.bf16.mxu0 0
        %3757 = vmatmul.mubr.bf16.gmra.mrb[0].mxu0 %v3562
        %v3758 = vpop.f32.mrb[0].mxu0
        %v3759 = vadd.f32 0.0, %v3758
        %v3760 = vpop.f32.mrb[0].mxu0
        %v3761 = vadd.f32 0.0, %v3760
        %v3762 = vpop.f32.mrb[0].mxu0
        %v3763 = vadd.f32 0.0, %v3762
        %v3764 = vpop.f32.mrb[0].mxu0
        %v3765 = vadd.f32 0.0, %v3764
        %3766 = vdwg.mxu0
        %3767 = vmatprep.subr.bf16.mxu0 0
        %3768 = vmatpush1.bf16.msra.mxu0 %v3678
        %3769 = vmatprep.subr.bf16.mxu0 0
        %3770 = vmatpush1.bf16.msra.mxu0 %v3681
        %3771 = vmatprep.subr.bf16.mxu0 0
        %3772 = vmatpush1.bf16.msra.mxu0 %v3684
        %3773 = vmatprep.subr.bf16.mxu0 0
        %3774 = vmatpush1.bf16.msra.mxu0 %v3687
        %3775 = vmatprep.subr.bf16.mxu0 0
        %3776 = vmatpush1.bf16.msra.mxu0 %v3690
        %3777 = vmatprep.subr.bf16.mxu0 0
        %3778 = vmatpush1.bf16.msra.mxu0 %v3693
        %3779 = vmatprep.subr.bf16.mxu0 0
        %3780 = vmatpush1.bf16.msra.mxu0 %v3696
        %3781 = vmatprep.subr.bf16.mxu0 0
        %3782 = vmatpush1.bf16.msra.mxu0 %v3699
        %3783 = vmatprep.subr.bf16.mxu0 0
        %3784 = vmatpush1.bf16.msra.mxu0 0
        %3785 = vmatprep.subr.bf16.mxu0 0
        %3786 = vmatpush1.bf16.msra.mxu0 0
        %3787 = vmatprep.subr.bf16.mxu0 0
        %3788 = vmatpush1.bf16.msra.mxu0 0
        %3789 = vmatprep.subr.bf16.mxu0 0
        %3790 = vmatpush1.bf16.msra.mxu0 0
        %3791 = vmatprep.subr.bf16.mxu0 0
        %3792 = vmatpush1.bf16.msra.mxu0 0
        %3793 = vmatprep.subr.bf16.mxu0 0
        %3794 = vmatpush1.bf16.msra.mxu0 0
        %3795 = vmatprep.subr.bf16.mxu0 0
        %3796 = vmatpush1.bf16.msra.mxu0 0
        %3797 = vmatprep.subr.bf16.mxu0 0
        %3798 = vmatpush1.bf16.msra.mxu0 0
        %3799 = vmatprep.mubr.bf16.mxu0 0
        %3800 = vmatmul.mubr.bf16.gmra.mrb[0].mxu0 %v3562
        %v3801 = vpop.f32.mrb[0].mxu0
        %v3802 = vadd.f32 0.0, %v3801
        %v3803 = vpop.f32.mrb[0].mxu0
        %v3804 = vpop.f32.mrb[0].mxu0
        %v3805 = vadd.f32 0.0, %v3804
        %v3806 = vpop.f32.mrb[0].mxu0
        %3807 = vdwg.mxu0
        %v3808 = vadd.f32 %v3468, %v3759
        %v3809 = vadd.f32 %v3470, %v3761
        %v3810 = vadd.f32 %v3511, %v3802
        %v3811 = vadd.f32 %v3472, %v3763
        %v3812 = vadd.f32 %v3474, %v3765
        %v3813 = vadd.f32 %v3514, %v3805
        %v3814 = vld [vmem:[%s980] sm:$0xf]
        %v3815 = vld [vmem:[%s980 + $0x4] sm:$0xf]
        %v3818 = vunpack.c.l.b16 %v3814
        %v3819 = vunpack.c.l.b16 %v3815
        %v3820 = vpack.c.b16 %v3819, %v3818
        %v3822 = vsel %vm563, %v3820, 0
        %3824 = vmatprep.subr.bf16.mxu0 0
        %3825 = vmatpush1.bf16.msra.mxu0 %v3059
        %3826 = vmatprep.subr.bf16.mxu0 0
        %3827 = vmatpush1.bf16.msra.mxu0 0
        %3828 = vmatprep.subr.bf16.mxu0 0
        %3829 = vmatpush1.bf16.msra.mxu0 0
        %3830 = vmatprep.subr.bf16.mxu0 0
        %3831 = vmatpush1.bf16.msra.mxu0 0
        %3832 = vmatprep.subr.bf16.mxu0 0
        %3833 = vmatpush1.bf16.msra.mxu0 0
        %3834 = vmatprep.subr.bf16.mxu0 0
        %3835 = vmatpush1.bf16.msra.mxu0 0
        %3836 = vmatprep.subr.bf16.mxu0 0
        %3837 = vmatpush1.bf16.msra.mxu0 0
        %3838 = vmatprep.subr.bf16.mxu0 0
        %3839 = vmatpush1.bf16.msra.mxu0 0
        %3840 = vmatprep.subr.bf16.mxu0 0
        %3841 = vmatpush1.bf16.msra.mxu0 0
        %3842 = vmatprep.subr.bf16.mxu0 0
        %3843 = vmatpush1.bf16.msra.mxu0 0
        %3844 = vmatprep.subr.bf16.mxu0 0
        %3845 = vmatpush1.bf16.msra.mxu0 0
        %3846 = vmatprep.subr.bf16.mxu0 0
        %3847 = vmatpush1.bf16.msra.mxu0 0
        %3848 = vmatprep.subr.bf16.mxu0 0
        %3849 = vmatpush1.bf16.msra.mxu0 0
        %3850 = vmatprep.subr.bf16.mxu0 0
        %3851 = vmatpush1.bf16.msra.mxu0 0
        %3852 = vmatprep.subr.bf16.mxu0 0
        %3853 = vmatpush1.bf16.msra.mxu0 0
        %3854 = vmatprep.subr.bf16.mxu0 0
        %3855 = vmatpush1.bf16.msra.mxu0 0
        %3856 = vmatprep.mubr.bf16.mxu0 0
        %3857 = vmatmul.mubr.bf16.gmra.mrb[0].mxu0 %v3822
        %v3858 = vpop.f32.mrb[0].mxu0
        %v3859 = vadd.f32 0.0, %v3858
        %v3860 = vpop.f32.mrb[0].mxu0
        %v3861 = vpop.f32.mrb[0].mxu0
        %v3862 = vadd.f32 0.0, %v3861
        %v3863 = vpop.f32.mrb[0].mxu0
        %3864 = vdwg.mxu0
        %v3865 = vpack.c.bf16 %v3862, %v3859
        %s3866 = scalar_lea.vmem %s8, 576
        %v3867 = vld [vmem:[%s3866] sm:$0xff]
        %v3868 = vld [vmem:[%s3866 + $0x8] sm:$0xf]
        %v3869 = vld [vmem:[%s3866 + $0xc] sm:$0xff]
        %v3870 = vld [vmem:[%s3866 + $0x14] sm:$0xf]
        %v3871 = vld [vmem:[%s3866 + $0x18] sm:$0xff]
        %v3872 = vld [vmem:[%s3866 + $0x20] sm:$0xf]
        %v3873 = vld [vmem:[%s3866 + $0x24] sm:$0xff]
        %v3874 = vld [vmem:[%s3866 + $0x2c] sm:$0xf]
        %v3875 = vld [vmem:[%s3866 + $0x30] sm:$0xff]
        %v3876 = vld [vmem:[%s3866 + $0x38] sm:$0xf]
        %v3877 = vld [vmem:[%s3866 + $0x3c] sm:$0xff]
        %v3878 = vld [vmem:[%s3866 + $0x44] sm:$0xf]
        %v3879 = vld [vmem:[%s3866 + $0x48] sm:$0xff]
        %v3880 = vld [vmem:[%s3866 + $0x50] sm:$0xf]
        %v3881 = vld [vmem:[%s3866 + $0x54] sm:$0xff]
        %v3882 = vld [vmem:[%s3866 + $0x5c] sm:$0xf]
        %v3883 = vld [vmem:[%s3866 + $0x60] sm:$0xff]
        %v3884 = vld [vmem:[%s3866 + $0x68] sm:$0xf]
        %v3885 = vld [vmem:[%s3866 + $0x6c] sm:$0xff]
        %v3886 = vld [vmem:[%s3866 + $0x74] sm:$0xf]
        %v3887 = vld [vmem:[%s3866 + $0x78] sm:$0xff]
        %v3888 = vld [vmem:[%s3866 + $0x80] sm:$0xf]
        %v3889 = vld [vmem:[%s3866 + $0x84] sm:$0xff]
        %v3890 = vld [vmem:[%s3866 + $0x8c] sm:$0xf]
        %v3891 = vld [vmem:[%s3866 + $0x90] sm:$0xff]
        %v3892 = vld [vmem:[%s3866 + $0x98] sm:$0xf]
        %v3893 = vld [vmem:[%s3866 + $0x9c] sm:$0xff]
        %v3894 = vld [vmem:[%s3866 + $0xa4] sm:$0xf]
        %v3895 = vld [vmem:[%s3866 + $0xa8] sm:$0xff]
        %v3896 = vld [vmem:[%s3866 + $0xb0] sm:$0xf]
        %v3897 = vld [vmem:[%s3866 + $0xb4] sm:$0xff]
        %v3898 = vld [vmem:[%s3866 + $0xbc] sm:$0xf]
        %v3931 = vunpack.c.l.b16 %v3867
        %v3932 = vunpack.c.h.b16 %v3867
        %v3933 = vunpack.c.l.b16 %v3868
        %v3934 = vunpack.c.l.b16 %v3869
        %v3935 = vunpack.c.h.b16 %v3869
        %v3936 = vunpack.c.l.b16 %v3870
        %v3937 = vunpack.c.l.b16 %v3871
        %v3938 = vunpack.c.h.b16 %v3871
        %v3939 = vunpack.c.l.b16 %v3872
        %v3940 = vunpack.c.l.b16 %v3873
        %v3941 = vunpack.c.h.b16 %v3873
        %v3942 = vunpack.c.l.b16 %v3874
        %v3943 = vunpack.c.l.b16 %v3875
        %v3944 = vunpack.c.h.b16 %v3875
        %v3945 = vunpack.c.l.b16 %v3876
        %v3946 = vunpack.c.l.b16 %v3877
        %v3947 = vunpack.c.h.b16 %v3877
        %v3948 = vunpack.c.l.b16 %v3878
        %v3949 = vunpack.c.l.b16 %v3879
        %v3950 = vunpack.c.h.b16 %v3879
        %v3951 = vunpack.c.l.b16 %v3880
        %v3952 = vunpack.c.l.b16 %v3881
        %v3953 = vunpack.c.h.b16 %v3881
        %v3954 = vunpack.c.l.b16 %v3882
        %v3955 = vunpack.c.l.b16 %v3883
        %v3956 = vunpack.c.h.b16 %v3883
        %v3957 = vunpack.c.l.b16 %v3884
        %v3958 = vunpack.c.l.b16 %v3885
        %v3959 = vunpack.c.h.b16 %v3885
        %v3960 = vunpack.c.l.b16 %v3886
        %v3961 = vunpack.c.l.b16 %v3887
        %v3962 = vunpack.c.h.b16 %v3887
        %v3963 = vunpack.c.l.b16 %v3888
        %v3964 = vunpack.c.l.b16 %v3889
        %v3965 = vunpack.c.h.b16 %v3889
        %v3966 = vunpack.c.l.b16 %v3890
        %v3967 = vunpack.c.l.b16 %v3891
        %v3968 = vunpack.c.h.b16 %v3891
        %v3969 = vunpack.c.l.b16 %v3892
        %v3970 = vunpack.c.l.b16 %v3893
        %v3971 = vunpack.c.h.b16 %v3893
        %v3972 = vunpack.c.l.b16 %v3894
        %v3973 = vunpack.c.l.b16 %v3895
        %v3974 = vunpack.c.h.b16 %v3895
        %v3975 = vunpack.c.l.b16 %v3896
        %v3976 = vunpack.c.l.b16 %v3897
        %v3977 = vunpack.c.h.b16 %v3897
        %v3978 = vunpack.c.l.b16 %v3898
        %v3979 = vpack.c.b16 %v3934, %v3931
        %v3980 = vpack.c.b16 %v3935, %v3932
        %v3981 = vpack.c.b16 %v3936, %v3933
        %v3982 = vpack.c.b16 %v3940, %v3937
        %v3983 = vpack.c.b16 %v3941, %v3938
        %v3984 = vpack.c.b16 %v3942, %v3939
        %v3985 = vpack.c.b16 %v3946, %v3943
        %v3986 = vpack.c.b16 %v3947, %v3944
        %v3987 = vpack.c.b16 %v3948, %v3945
        %v3988 = vpack.c.b16 %v3952, %v3949
        %v3989 = vpack.c.b16 %v3953, %v3950
        %v3990 = vpack.c.b16 %v3954, %v3951
        %v3991 = vpack.c.b16 %v3958, %v3955
        %v3992 = vpack.c.b16 %v3959, %v3956
        %v3993 = vpack.c.b16 %v3960, %v3957
        %v3994 = vpack.c.b16 %v3964, %v3961
        %v3995 = vpack.c.b16 %v3965, %v3962
        %v3996 = vpack.c.b16 %v3966, %v3963
        %v3997 = vpack.c.b16 %v3970, %v3967
        %v3998 = vpack.c.b16 %v3971, %v3968
        %v3999 = vpack.c.b16 %v3972, %v3969
        %v4000 = vpack.c.b16 %v3976, %v3973
        %v4001 = vpack.c.b16 %v3977, %v3974
        %v4002 = vpack.c.b16 %v3978, %v3975
        %4027 = vmatprep.subr.bf16.mxu0 %v3980
        %4028 = vmatpush1.bf16.msra.mxu0 %v3979
        %4029 = vmatprep.subr.bf16.mxu0 %v3983
        %4030 = vmatpush1.bf16.msra.mxu0 %v3982
        %4031 = vmatprep.subr.bf16.mxu0 %v3986
        %4032 = vmatpush1.bf16.msra.mxu0 %v3985
        %4033 = vmatprep.subr.bf16.mxu0 %v3989
        %4034 = vmatpush1.bf16.msra.mxu0 %v3988
        %4035 = vmatprep.subr.bf16.mxu0 %v3992
        %4036 = vmatpush1.bf16.msra.mxu0 %v3991
        %4037 = vmatprep.subr.bf16.mxu0 %v3995
        %4038 = vmatpush1.bf16.msra.mxu0 %v3994
        %4039 = vmatprep.subr.bf16.mxu0 %v3998
        %4040 = vmatpush1.bf16.msra.mxu0 %v3997
        %4041 = vmatprep.subr.bf16.mxu0 %v4001
        %4042 = vmatpush1.bf16.msra.mxu0 %v4000
        %4043 = vmatprep.subr.bf16.mxu0 0
        %4044 = vmatpush1.bf16.msra.mxu0 0
        %4045 = vmatprep.subr.bf16.mxu0 0
        %4046 = vmatpush1.bf16.msra.mxu0 0
        %4047 = vmatprep.subr.bf16.mxu0 0
        %4048 = vmatpush1.bf16.msra.mxu0 0
        %4049 = vmatprep.subr.bf16.mxu0 0
        %4050 = vmatpush1.bf16.msra.mxu0 0
        %4051 = vmatprep.subr.bf16.mxu0 0
        %4052 = vmatpush1.bf16.msra.mxu0 0
        %4053 = vmatprep.subr.bf16.mxu0 0
        %4054 = vmatpush1.bf16.msra.mxu0 0
        %4055 = vmatprep.subr.bf16.mxu0 0
        %4056 = vmatpush1.bf16.msra.mxu0 0
        %4057 = vmatprep.subr.bf16.mxu0 0
        %4058 = vmatpush1.bf16.msra.mxu0 0
        %4059 = vmatprep.mubr.bf16.mxu0 0
        %4060 = vmatmul.mubr.bf16.gmra.mrb[0].mxu0 %v3865
        %v4061 = vpop.f32.mrb[0].mxu0
        %v4062 = vadd.f32 0.0, %v4061
        %v4063 = vpop.f32.mrb[0].mxu0
        %v4064 = vadd.f32 0.0, %v4063
        %v4065 = vpop.f32.mrb[0].mxu0
        %v4066 = vadd.f32 0.0, %v4065
        %v4067 = vpop.f32.mrb[0].mxu0
        %v4068 = vadd.f32 0.0, %v4067
        %4069 = vdwg.mxu0
        %4070 = vmatprep.subr.bf16.mxu0 0
        %4071 = vmatpush1.bf16.msra.mxu0 %v3981
        %4072 = vmatprep.subr.bf16.mxu0 0
        %4073 = vmatpush1.bf16.msra.mxu0 %v3984
        %4074 = vmatprep.subr.bf16.mxu0 0
        %4075 = vmatpush1.bf16.msra.mxu0 %v3987
        %4076 = vmatprep.subr.bf16.mxu0 0
        %4077 = vmatpush1.bf16.msra.mxu0 %v3990
        %4078 = vmatprep.subr.bf16.mxu0 0
        %4079 = vmatpush1.bf16.msra.mxu0 %v3993
        %4080 = vmatprep.subr.bf16.mxu0 0
        %4081 = vmatpush1.bf16.msra.mxu0 %v3996
        %4082 = vmatprep.subr.bf16.mxu0 0
        %4083 = vmatpush1.bf16.msra.mxu0 %v3999
        %4084 = vmatprep.subr.bf16.mxu0 0
        %4085 = vmatpush1.bf16.msra.mxu0 %v4002
        %4086 = vmatprep.subr.bf16.mxu0 0
        %4087 = vmatpush1.bf16.msra.mxu0 0
        %4088 = vmatprep.subr.bf16.mxu0 0
        %4089 = vmatpush1.bf16.msra.mxu0 0
        %4090 = vmatprep.subr.bf16.mxu0 0
        %4091 = vmatpush1.bf16.msra.mxu0 0
        %4092 = vmatprep.subr.bf16.mxu0 0
        %4093 = vmatpush1.bf16.msra.mxu0 0
        %4094 = vmatprep.subr.bf16.mxu0 0
        %4095 = vmatpush1.bf16.msra.mxu0 0
        %4096 = vmatprep.subr.bf16.mxu0 0
        %4097 = vmatpush1.bf16.msra.mxu0 0
        %4098 = vmatprep.subr.bf16.mxu0 0
        %4099 = vmatpush1.bf16.msra.mxu0 0
        %4100 = vmatprep.subr.bf16.mxu0 0
        %4101 = vmatpush1.bf16.msra.mxu0 0
        %4102 = vmatprep.mubr.bf16.mxu0 0
        %4103 = vmatmul.mubr.bf16.gmra.mrb[0].mxu0 %v3865
        %v4104 = vpop.f32.mrb[0].mxu0
        %v4105 = vadd.f32 0.0, %v4104
        %v4106 = vpop.f32.mrb[0].mxu0
        %v4107 = vpop.f32.mrb[0].mxu0
        %v4108 = vadd.f32 0.0, %v4107
        %v4109 = vpop.f32.mrb[0].mxu0
        %4110 = vdwg.mxu0
        %v4111 = vadd.f32 %v3808, %v4062
        %v4112 = vadd.f32 %v3809, %v4064
        %v4113 = vadd.f32 %v3810, %v4105
        %v4114 = vadd.f32 %v3811, %v4066
        %v4115 = vadd.f32 %v3812, %v4068
        %v4116 = vadd.f32 %v3813, %v4108
        %4117 = vmatprep.subr.bf16.mxu0 0
        %4118 = vmatpush1.bf16.msra.mxu0 %v3865
        %4119 = vmatprep.subr.bf16.mxu0 0
        %4120 = vmatpush1.bf16.msra.mxu0 0
        %4121 = vmatprep.subr.bf16.mxu0 0
        %4122 = vmatpush1.bf16.msra.mxu0 0
        %4123 = vmatprep.subr.bf16.mxu0 0
        %4124 = vmatpush1.bf16.msra.mxu0 0
        %4125 = vmatprep.subr.bf16.mxu0 0
        %4126 = vmatpush1.bf16.msra.mxu0 0
        %4127 = vmatprep.subr.bf16.mxu0 0
        %4128 = vmatpush1.bf16.msra.mxu0 0
        %4129 = vmatprep.subr.bf16.mxu0 0
        %4130 = vmatpush1.bf16.msra.mxu0 0
        %4131 = vmatprep.subr.bf16.mxu0 0
        %4132 = vmatpush1.bf16.msra.mxu0 0
        %4133 = vmatprep.subr.bf16.mxu0 0
        %4134 = vmatpush1.bf16.msra.mxu0 0
        %4135 = vmatprep.subr.bf16.mxu0 0
        %4136 = vmatpush1.bf16.msra.mxu0 0
        %4137 = vmatprep.subr.bf16.mxu0 0
        %4138 = vmatpush1.bf16.msra.mxu0 0
        %4139 = vmatprep.subr.bf16.mxu0 0
        %4140 = vmatpush1.bf16.msra.mxu0 0
        %4141 = vmatprep.subr.bf16.mxu0 0
        %4142 = vmatpush1.bf16.msra.mxu0 0
        %4143 = vmatprep.subr.bf16.mxu0 0
        %4144 = vmatpush1.bf16.msra.mxu0 0
        %4145 = vmatprep.subr.bf16.mxu0 0
        %4146 = vmatpush1.bf16.msra.mxu0 0
        %4147 = vmatprep.subr.bf16.mxu0 0
        %4148 = vmatpush1.bf16.msra.mxu0 0
        %4149 = vmatprep.mubr.bf16.mxu0 0
        %4150 = vmatmul.mubr.bf16.gmra.mrb[0].mxu0 %v3822
        %v4151 = vpop.f32.mrb[0].mxu0
        %v4152 = vadd.f32 0.0, %v4151
        %v4153 = vpop.f32.mrb[0].mxu0
        %v4154 = vpop.f32.mrb[0].mxu0
        %v4155 = vadd.f32 0.0, %v4154
        %v4156 = vpop.f32.mrb[0].mxu0
        %4157 = vdwg.mxu0
        %v4158 = vmul.f32 %v4152, 2.0
        %v4159 = vmul.f32 %v4155, 2.0
        %v4160 = vsub.f32 %v4158, %v3053
        %v4161 = vsub.f32 %v4159, %v3056
        %v4162 = vpack.c.bf16 %v4161, %v4160
        %s4163 = scalar_lea.vmem %s8, 768
        %v4164 = vld [vmem:[%s4163] sm:$0xff]
        %v4165 = vld [vmem:[%s4163 + $0x8] sm:$0xf]
        %v4166 = vld [vmem:[%s4163 + $0xc] sm:$0xff]
        %v4167 = vld [vmem:[%s4163 + $0x14] sm:$0xf]
        %v4168 = vld [vmem:[%s4163 + $0x18] sm:$0xff]
        %v4169 = vld [vmem:[%s4163 + $0x20] sm:$0xf]
        %v4170 = vld [vmem:[%s4163 + $0x24] sm:$0xff]
        %v4171 = vld [vmem:[%s4163 + $0x2c] sm:$0xf]
        %v4172 = vld [vmem:[%s4163 + $0x30] sm:$0xff]
        %v4173 = vld [vmem:[%s4163 + $0x38] sm:$0xf]
        %v4174 = vld [vmem:[%s4163 + $0x3c] sm:$0xff]
        %v4175 = vld [vmem:[%s4163 + $0x44] sm:$0xf]
        %v4176 = vld [vmem:[%s4163 + $0x48] sm:$0xff]
        %v4177 = vld [vmem:[%s4163 + $0x50] sm:$0xf]
        %v4178 = vld [vmem:[%s4163 + $0x54] sm:$0xff]
        %v4179 = vld [vmem:[%s4163 + $0x5c] sm:$0xf]
        %v4180 = vld [vmem:[%s4163 + $0x60] sm:$0xff]
        %v4181 = vld [vmem:[%s4163 + $0x68] sm:$0xf]
        %v4182 = vld [vmem:[%s4163 + $0x6c] sm:$0xff]
        %v4183 = vld [vmem:[%s4163 + $0x74] sm:$0xf]
        %v4184 = vld [vmem:[%s4163 + $0x78] sm:$0xff]
        %v4185 = vld [vmem:[%s4163 + $0x80] sm:$0xf]
        %v4186 = vld [vmem:[%s4163 + $0x84] sm:$0xff]
        %v4187 = vld [vmem:[%s4163 + $0x8c] sm:$0xf]
        %v4188 = vld [vmem:[%s4163 + $0x90] sm:$0xff]
        %v4189 = vld [vmem:[%s4163 + $0x98] sm:$0xf]
        %v4190 = vld [vmem:[%s4163 + $0x9c] sm:$0xff]
        %v4191 = vld [vmem:[%s4163 + $0xa4] sm:$0xf]
        %v4192 = vld [vmem:[%s4163 + $0xa8] sm:$0xff]
        %v4193 = vld [vmem:[%s4163 + $0xb0] sm:$0xf]
        %v4194 = vld [vmem:[%s4163 + $0xb4] sm:$0xff]
        %v4195 = vld [vmem:[%s4163 + $0xbc] sm:$0xf]
        %v4228 = vunpack.c.l.b16 %v4164
        %v4229 = vunpack.c.h.b16 %v4164
        %v4230 = vunpack.c.l.b16 %v4165
        %v4231 = vunpack.c.l.b16 %v4166
        %v4232 = vunpack.c.h.b16 %v4166
        %v4233 = vunpack.c.l.b16 %v4167
        %v4234 = vunpack.c.l.b16 %v4168
        %v4235 = vunpack.c.h.b16 %v4168
        %v4236 = vunpack.c.l.b16 %v4169
        %v4237 = vunpack.c.l.b16 %v4170
        %v4238 = vunpack.c.h.b16 %v4170
        %v4239 = vunpack.c.l.b16 %v4171
        %v4240 = vunpack.c.l.b16 %v4172
        %v4241 = vunpack.c.h.b16 %v4172
        %v4242 = vunpack.c.l.b16 %v4173
        %v4243 = vunpack.c.l.b16 %v4174
        %v4244 = vunpack.c.h.b16 %v4174
        %v4245 = vunpack.c.l.b16 %v4175
        %v4246 = vunpack.c.l.b16 %v4176
        %v4247 = vunpack.c.h.b16 %v4176
        %v4248 = vunpack.c.l.b16 %v4177
        %v4249 = vunpack.c.l.b16 %v4178
        %v4250 = vunpack.c.h.b16 %v4178
        %v4251 = vunpack.c.l.b16 %v4179
        %v4252 = vunpack.c.l.b16 %v4180
        %v4253 = vunpack.c.h.b16 %v4180
        %v4254 = vunpack.c.l.b16 %v4181
        %v4255 = vunpack.c.l.b16 %v4182
        %v4256 = vunpack.c.h.b16 %v4182
        %v4257 = vunpack.c.l.b16 %v4183
        %v4258 = vunpack.c.l.b16 %v4184
        %v4259 = vunpack.c.h.b16 %v4184
        %v4260 = vunpack.c.l.b16 %v4185
        %v4261 = vunpack.c.l.b16 %v4186
        %v4262 = vunpack.c.h.b16 %v4186
        %v4263 = vunpack.c.l.b16 %v4187
        %v4264 = vunpack.c.l.b16 %v4188
        %v4265 = vunpack.c.h.b16 %v4188
        %v4266 = vunpack.c.l.b16 %v4189
        %v4267 = vunpack.c.l.b16 %v4190
        %v4268 = vunpack.c.h.b16 %v4190
        %v4269 = vunpack.c.l.b16 %v4191
        %v4270 = vunpack.c.l.b16 %v4192
        %v4271 = vunpack.c.h.b16 %v4192
        %v4272 = vunpack.c.l.b16 %v4193
        %v4273 = vunpack.c.l.b16 %v4194
        %v4274 = vunpack.c.h.b16 %v4194
        %v4275 = vunpack.c.l.b16 %v4195
        %v4276 = vpack.c.b16 %v4231, %v4228
        %v4277 = vpack.c.b16 %v4232, %v4229
        %v4278 = vpack.c.b16 %v4233, %v4230
        %v4279 = vpack.c.b16 %v4237, %v4234
        %v4280 = vpack.c.b16 %v4238, %v4235
        %v4281 = vpack.c.b16 %v4239, %v4236
        %v4282 = vpack.c.b16 %v4243, %v4240
        %v4283 = vpack.c.b16 %v4244, %v4241
        %v4284 = vpack.c.b16 %v4245, %v4242
        %v4285 = vpack.c.b16 %v4249, %v4246
        %v4286 = vpack.c.b16 %v4250, %v4247
        %v4287 = vpack.c.b16 %v4251, %v4248
        %v4288 = vpack.c.b16 %v4255, %v4252
        %v4289 = vpack.c.b16 %v4256, %v4253
        %v4290 = vpack.c.b16 %v4257, %v4254
        %v4291 = vpack.c.b16 %v4261, %v4258
        %v4292 = vpack.c.b16 %v4262, %v4259
        %v4293 = vpack.c.b16 %v4263, %v4260
        %v4294 = vpack.c.b16 %v4267, %v4264
        %v4295 = vpack.c.b16 %v4268, %v4265
        %v4296 = vpack.c.b16 %v4269, %v4266
        %v4297 = vpack.c.b16 %v4273, %v4270
        %v4298 = vpack.c.b16 %v4274, %v4271
        %v4299 = vpack.c.b16 %v4275, %v4272
        %4324 = vmatprep.subr.bf16.mxu0 %v4277
        %4325 = vmatpush1.bf16.msra.mxu0 %v4276
        %4326 = vmatprep.subr.bf16.mxu0 %v4280
        %4327 = vmatpush1.bf16.msra.mxu0 %v4279
        %4328 = vmatprep.subr.bf16.mxu0 %v4283
        %4329 = vmatpush1.bf16.msra.mxu0 %v4282
        %4330 = vmatprep.subr.bf16.mxu0 %v4286
        %4331 = vmatpush1.bf16.msra.mxu0 %v4285
        %4332 = vmatprep.subr.bf16.mxu0 %v4289
        %4333 = vmatpush1.bf16.msra.mxu0 %v4288
        %4334 = vmatprep.subr.bf16.mxu0 %v4292
        %4335 = vmatpush1.bf16.msra.mxu0 %v4291
        %4336 = vmatprep.subr.bf16.mxu0 %v4295
        %4337 = vmatpush1.bf16.msra.mxu0 %v4294
        %4338 = vmatprep.subr.bf16.mxu0 %v4298
        %4339 = vmatpush1.bf16.msra.mxu0 %v4297
        %4340 = vmatprep.subr.bf16.mxu0 0
        %4341 = vmatpush1.bf16.msra.mxu0 0
        %4342 = vmatprep.subr.bf16.mxu0 0
        %4343 = vmatpush1.bf16.msra.mxu0 0
        %4344 = vmatprep.subr.bf16.mxu0 0
        %4345 = vmatpush1.bf16.msra.mxu0 0
        %4346 = vmatprep.subr.bf16.mxu0 0
        %4347 = vmatpush1.bf16.msra.mxu0 0
        %4348 = vmatprep.subr.bf16.mxu0 0
        %4349 = vmatpush1.bf16.msra.mxu0 0
        %4350 = vmatprep.subr.bf16.mxu0 0
        %4351 = vmatpush1.bf16.msra.mxu0 0
        %4352 = vmatprep.subr.bf16.mxu0 0
        %4353 = vmatpush1.bf16.msra.mxu0 0
        %4354 = vmatprep.subr.bf16.mxu0 0
        %4355 = vmatpush1.bf16.msra.mxu0 0
        %4356 = vmatprep.mubr.bf16.mxu0 0
        %4357 = vmatmul.mubr.bf16.gmra.mrb[0].mxu0 %v4162
        %v4358 = vpop.f32.mrb[0].mxu0
        %v4359 = vadd.f32 0.0, %v4358
        %v4360 = vpop.f32.mrb[0].mxu0
        %v4361 = vadd.f32 0.0, %v4360
        %v4362 = vpop.f32.mrb[0].mxu0
        %v4363 = vadd.f32 0.0, %v4362
        %v4364 = vpop.f32.mrb[0].mxu0
        %v4365 = vadd.f32 0.0, %v4364
        %4366 = vdwg.mxu0
        %4367 = vmatprep.subr.bf16.mxu0 0
        %4368 = vmatpush1.bf16.msra.mxu0 %v4278
        %4369 = vmatprep.subr.bf16.mxu0 0
        %4370 = vmatpush1.bf16.msra.mxu0 %v4281
        %4371 = vmatprep.subr.bf16.mxu0 0
        %4372 = vmatpush1.bf16.msra.mxu0 %v4284
        %4373 = vmatprep.subr.bf16.mxu0 0
        %4374 = vmatpush1.bf16.msra.mxu0 %v4287
        %4375 = vmatprep.subr.bf16.mxu0 0
        %4376 = vmatpush1.bf16.msra.mxu0 %v4290
        %4377 = vmatprep.subr.bf16.mxu0 0
        %4378 = vmatpush1.bf16.msra.mxu0 %v4293
        %4379 = vmatprep.subr.bf16.mxu0 0
        %4380 = vmatpush1.bf16.msra.mxu0 %v4296
        %4381 = vmatprep.subr.bf16.mxu0 0
        %4382 = vmatpush1.bf16.msra.mxu0 %v4299
        %4383 = vmatprep.subr.bf16.mxu0 0
        %4384 = vmatpush1.bf16.msra.mxu0 0
        %4385 = vmatprep.subr.bf16.mxu0 0
        %4386 = vmatpush1.bf16.msra.mxu0 0
        %4387 = vmatprep.subr.bf16.mxu0 0
        %4388 = vmatpush1.bf16.msra.mxu0 0
        %4389 = vmatprep.subr.bf16.mxu0 0
        %4390 = vmatpush1.bf16.msra.mxu0 0
        %4391 = vmatprep.subr.bf16.mxu0 0
        %4392 = vmatpush1.bf16.msra.mxu0 0
        %4393 = vmatprep.subr.bf16.mxu0 0
        %4394 = vmatpush1.bf16.msra.mxu0 0
        %4395 = vmatprep.subr.bf16.mxu0 0
        %4396 = vmatpush1.bf16.msra.mxu0 0
        %4397 = vmatprep.subr.bf16.mxu0 0
        %4398 = vmatpush1.bf16.msra.mxu0 0
        %4399 = vmatprep.mubr.bf16.mxu0 0
        %4400 = vmatmul.mubr.bf16.gmra.mrb[0].mxu0 %v4162
        %v4401 = vpop.f32.mrb[0].mxu0
        %v4402 = vadd.f32 0.0, %v4401
        %v4403 = vpop.f32.mrb[0].mxu0
        %v4404 = vpop.f32.mrb[0].mxu0
        %v4405 = vadd.f32 0.0, %v4404
        %v4406 = vpop.f32.mrb[0].mxu0
        %4407 = vdwg.mxu0
        %v4408 = vadd.f32 %v4111, %v4359
        %v4409 = vadd.f32 %v4112, %v4361
        %v4410 = vadd.f32 %v4113, %v4402
        %v4411 = vadd.f32 %v4114, %v4363
        %v4412 = vadd.f32 %v4115, %v4365
        %v4413 = vadd.f32 %v4116, %v4405
        %v4414 = vpack.c.bf16 %v2974, %v2973
        %v4415 = vld [vmem:[#allocation5] sm:$0xff]
        %v4416 = vld [vmem:[#allocation5 + $0x8] sm:$0xff]
        %v4417 = vld [vmem:[#allocation5 + $0x10] sm:$0xff]
        %v4418 = vld [vmem:[#allocation5 + $0x18] sm:$0xff]
        %v4419 = vld [vmem:[#allocation5 + $0x20] sm:$0xff]
        %v4420 = vld [vmem:[#allocation5 + $0x28] sm:$0xff]
        %v4421 = vld [vmem:[#allocation5 + $0x30] sm:$0xff]
        %v4422 = vld [vmem:[#allocation5 + $0x38] sm:$0xff]
        %v4423 = vld [vmem:[#allocation5 + $0x40] sm:$0xff]
        %v4424 = vld [vmem:[#allocation5 + $0x48] sm:$0xff]
        %v4425 = vld [vmem:[#allocation5 + $0x50] sm:$0xff]
        %v4426 = vld [vmem:[#allocation5 + $0x58] sm:$0xff]
        %v4427 = vld [vmem:[#allocation5 + $0x60] sm:$0xff]
        %v4428 = vld [vmem:[#allocation5 + $0x68] sm:$0xff]
        %v4429 = vld [vmem:[#allocation5 + $0x70] sm:$0xff]
        %v4430 = vld [vmem:[#allocation5 + $0x78] sm:$0xff]
        %4431 = vmatprep.subr.bf16.mxu0 0
        %4432 = vmatpush1.bf16.msra.mxu0 %v4414
        %4433 = vmatprep.subr.bf16.mxu0 0
        %4434 = vmatpush1.bf16.msra.mxu0 0
        %4435 = vmatprep.subr.bf16.mxu0 0
        %4436 = vmatpush1.bf16.msra.mxu0 0
        %4437 = vmatprep.subr.bf16.mxu0 0
        %4438 = vmatpush1.bf16.msra.mxu0 0
        %4439 = vmatprep.subr.bf16.mxu0 0
        %4440 = vmatpush1.bf16.msra.mxu0 0
        %4441 = vmatprep.subr.bf16.mxu0 0
        %4442 = vmatpush1.bf16.msra.mxu0 0
        %4443 = vmatprep.subr.bf16.mxu0 0
        %4444 = vmatpush1.bf16.msra.mxu0 0
        %4445 = vmatprep.subr.bf16.mxu0 0
        %4446 = vmatpush1.bf16.msra.mxu0 0
        %4447 = vmatprep.subr.bf16.mxu0 0
        %4448 = vmatpush1.bf16.msra.mxu0 0
        %4449 = vmatprep.subr.bf16.mxu0 0
        %4450 = vmatpush1.bf16.msra.mxu0 0
        %4451 = vmatprep.subr.bf16.mxu0 0
        %4452 = vmatpush1.bf16.msra.mxu0 0
        %4453 = vmatprep.subr.bf16.mxu0 0
        %4454 = vmatpush1.bf16.msra.mxu0 0
        %4455 = vmatprep.subr.bf16.mxu0 0
        %4456 = vmatpush1.bf16.msra.mxu0 0
        %4457 = vmatprep.subr.bf16.mxu0 0
        %4458 = vmatpush1.bf16.msra.mxu0 0
        %4459 = vmatprep.subr.bf16.mxu0 0
        %4460 = vmatpush1.bf16.msra.mxu0 0
        %4461 = vmatprep.subr.bf16.mxu0 0
        %4462 = vmatpush1.bf16.msra.mxu0 0
        %4463 = vmatprep.mubr.bf16.mxu0 0
        %4464 = vmatmul.mubr.bf16.gmra.mrb[0].mxu0 %v3016
        %v4465 = vpop.f32.mrb[0].mxu0
        %v4466 = vadd.f32 0.0, %v4465
        %v4467 = vpop.f32.mrb[0].mxu0
        %v4468 = vpop.f32.mrb[0].mxu0
        %v4469 = vadd.f32 0.0, %v4468
        %v4470 = vpop.f32.mrb[0].mxu0
        %4471 = vdwg.mxu0
        %v4472 = vpack.c.bf16 %v4469, %v4466
        %s4473 = scalar_lea.vmem [#allocation5], 128
        %v4474 = vld [vmem:[%s4473] sm:$0xff]
        %v4475 = vld [vmem:[%s4473 + $0x8] sm:$0xff]
        %v4476 = vld [vmem:[%s4473 + $0x10] sm:$0xff]
        %v4477 = vld [vmem:[%s4473 + $0x18] sm:$0xff]
        %v4478 = vld [vmem:[%s4473 + $0x20] sm:$0xff]
        %v4479 = vld [vmem:[%s4473 + $0x28] sm:$0xff]
        %v4480 = vld [vmem:[%s4473 + $0x30] sm:$0xff]
        %v4481 = vld [vmem:[%s4473 + $0x38] sm:$0xff]
        %v4482 = vld [vmem:[%s4473 + $0x40] sm:$0xff]
        %v4483 = vld [vmem:[%s4473 + $0x48] sm:$0xff]
        %v4484 = vld [vmem:[%s4473 + $0x50] sm:$0xff]
        %v4485 = vld [vmem:[%s4473 + $0x58] sm:$0xff]
        %v4486 = vld [vmem:[%s4473 + $0x60] sm:$0xff]
        %v4487 = vld [vmem:[%s4473 + $0x68] sm:$0xff]
        %v4488 = vld [vmem:[%s4473 + $0x70] sm:$0xff]
        %v4489 = vld [vmem:[%s4473 + $0x78] sm:$0xff]
        %v4506 = vunpack.c.l.b16 %v4474
        %v4507 = vunpack.c.h.b16 %v4474
        %v4508 = vunpack.c.l.b16 %v4475
        %v4509 = vunpack.c.h.b16 %v4475
        %v4510 = vunpack.c.l.b16 %v4476
        %v4511 = vunpack.c.h.b16 %v4476
        %v4512 = vunpack.c.l.b16 %v4477
        %v4513 = vunpack.c.h.b16 %v4477
        %v4514 = vunpack.c.l.b16 %v4478
        %v4515 = vunpack.c.h.b16 %v4478
        %v4516 = vunpack.c.l.b16 %v4479
        %v4517 = vunpack.c.h.b16 %v4479
        %v4518 = vunpack.c.l.b16 %v4480
        %v4519 = vunpack.c.h.b16 %v4480
        %v4520 = vunpack.c.l.b16 %v4481
        %v4521 = vunpack.c.h.b16 %v4481
        %v4522 = vunpack.c.l.b16 %v4482
        %v4523 = vunpack.c.h.b16 %v4482
        %v4524 = vunpack.c.l.b16 %v4483
        %v4525 = vunpack.c.h.b16 %v4483
        %v4526 = vunpack.c.l.b16 %v4484
        %v4527 = vunpack.c.h.b16 %v4484
        %v4528 = vunpack.c.l.b16 %v4485
        %v4529 = vunpack.c.h.b16 %v4485
        %v4530 = vunpack.c.l.b16 %v4486
        %v4531 = vunpack.c.h.b16 %v4486
        %v4532 = vunpack.c.l.b16 %v4487
        %v4533 = vunpack.c.h.b16 %v4487
        %v4534 = vunpack.c.l.b16 %v4488
        %v4535 = vunpack.c.h.b16 %v4488
        %v4536 = vunpack.c.l.b16 %v4489
        %v4537 = vunpack.c.h.b16 %v4489
        %v4538 = vpack.c.b16 %v4508, %v4506
        %v4539 = vpack.c.b16 %v4509, %v4507
        %v4540 = vpack.c.b16 %v4512, %v4510
        %v4541 = vpack.c.b16 %v4513, %v4511
        %v4542 = vpack.c.b16 %v4516, %v4514
        %v4543 = vpack.c.b16 %v4517, %v4515
        %v4544 = vpack.c.b16 %v4520, %v4518
        %v4545 = vpack.c.b16 %v4521, %v4519
        %v4546 = vpack.c.b16 %v4524, %v4522
        %v4547 = vpack.c.b16 %v4525, %v4523
        %v4548 = vpack.c.b16 %v4528, %v4526
        %v4549 = vpack.c.b16 %v4529, %v4527
        %v4550 = vpack.c.b16 %v4532, %v4530
        %v4551 = vpack.c.b16 %v4533, %v4531
        %v4552 = vpack.c.b16 %v4536, %v4534
        %v4553 = vpack.c.b16 %v4537, %v4535
        %4570 = vmatprep.subr.bf16.mxu0 %v4539
        %4571 = vmatpush1.bf16.msra.mxu0 %v4538
        %4572 = vmatprep.subr.bf16.mxu0 %v4541
        %4573 = vmatpush1.bf16.msra.mxu0 %v4540
        %4574 = vmatprep.subr.bf16.mxu0 %v4543
        %4575 = vmatpush1.bf16.msra.mxu0 %v4542
        %4576 = vmatprep.subr.bf16.mxu0 %v4545
        %4577 = vmatpush1.bf16.msra.mxu0 %v4544
        %4578 = vmatprep.subr.bf16.mxu0 %v4547
        %4579 = vmatpush1.bf16.msra.mxu0 %v4546
        %4580 = vmatprep.subr.bf16.mxu0 %v4549
        %4581 = vmatpush1.bf16.msra.mxu0 %v4548
        %4582 = vmatprep.subr.bf16.mxu0 %v4551
        %4583 = vmatpush1.bf16.msra.mxu0 %v4550
        %4584 = vmatprep.subr.bf16.mxu0 %v4553
        %4585 = vmatpush1.bf16.msra.mxu0 %v4552
        %4586 = vmatprep.subr.bf16.mxu0 0
        %4587 = vmatpush1.bf16.msra.mxu0 0
        %4588 = vmatprep.subr.bf16.mxu0 0
        %4589 = vmatpush1.bf16.msra.mxu0 0
        %4590 = vmatprep.subr.bf16.mxu0 0
        %4591 = vmatpush1.bf16.msra.mxu0 0
        %4592 = vmatprep.subr.bf16.mxu0 0
        %4593 = vmatpush1.bf16.msra.mxu0 0
        %4594 = vmatprep.subr.bf16.mxu0 0
        %4595 = vmatpush1.bf16.msra.mxu0 0
        %4596 = vmatprep.subr.bf16.mxu0 0
        %4597 = vmatpush1.bf16.msra.mxu0 0
        %4598 = vmatprep.subr.bf16.mxu0 0
        %4599 = vmatpush1.bf16.msra.mxu0 0
        %4600 = vmatprep.subr.bf16.mxu0 0
        %4601 = vmatpush1.bf16.msra.mxu0 0
        %4602 = vmatprep.mubr.bf16.mxu0 0
        %4603 = vmatmul.mubr.bf16.gmra.mrb[0].mxu0 %v4472
        %v4604 = vpop.f32.mrb[0].mxu0
        %v4605 = vadd.f32 0.0, %v4604
        %v4606 = vpop.f32.mrb[0].mxu0
        %v4607 = vadd.f32 0.0, %v4606
        %v4608 = vpop.f32.mrb[0].mxu0
        %v4609 = vadd.f32 0.0, %v4608
        %v4610 = vpop.f32.mrb[0].mxu0
        %v4611 = vadd.f32 0.0, %v4610
        %4612 = vdwg.mxu0
        %v4629 = vunpack.c.l.b16 %v4415
        %v4630 = vunpack.c.h.b16 %v4415
        %v4631 = vunpack.c.l.b16 %v4416
        %v4632 = vunpack.c.h.b16 %v4416
        %v4633 = vunpack.c.l.b16 %v4417
        %v4634 = vunpack.c.h.b16 %v4417
        %v4635 = vunpack.c.l.b16 %v4418
        %v4636 = vunpack.c.h.b16 %v4418
        %v4637 = vunpack.c.l.b16 %v4419
        %v4638 = vunpack.c.h.b16 %v4419
        %v4639 = vunpack.c.l.b16 %v4420
        %v4640 = vunpack.c.h.b16 %v4420
        %v4641 = vunpack.c.l.b16 %v4421
        %v4642 = vunpack.c.h.b16 %v4421
        %v4643 = vunpack.c.l.b16 %v4422
        %v4644 = vunpack.c.h.b16 %v4422
        %v4645 = vunpack.c.l.b16 %v4423
        %v4646 = vunpack.c.h.b16 %v4423
        %v4647 = vunpack.c.l.b16 %v4424
        %v4648 = vunpack.c.h.b16 %v4424
        %v4649 = vunpack.c.l.b16 %v4425
        %v4650 = vunpack.c.h.b16 %v4425
        %v4651 = vunpack.c.l.b16 %v4426
        %v4652 = vunpack.c.h.b16 %v4426
        %v4653 = vunpack.c.l.b16 %v4427
        %v4654 = vunpack.c.h.b16 %v4427
        %v4655 = vunpack.c.l.b16 %v4428
        %v4656 = vunpack.c.h.b16 %v4428
        %v4657 = vunpack.c.l.b16 %v4429
        %v4658 = vunpack.c.h.b16 %v4429
        %v4659 = vunpack.c.l.b16 %v4430
        %v4660 = vunpack.c.h.b16 %v4430
        %v4661 = vpack.c.b16 %v4631, %v4629
        %v4662 = vpack.c.b16 %v4632, %v4630
        %v4663 = vpack.c.b16 %v4635, %v4633
        %v4664 = vpack.c.b16 %v4636, %v4634
        %v4665 = vpack.c.b16 %v4639, %v4637
        %v4666 = vpack.c.b16 %v4640, %v4638
        %v4667 = vpack.c.b16 %v4643, %v4641
        %v4668 = vpack.c.b16 %v4644, %v4642
        %v4669 = vpack.c.b16 %v4647, %v4645
        %v4670 = vpack.c.b16 %v4648, %v4646
        %v4671 = vpack.c.b16 %v4651, %v4649
        %v4672 = vpack.c.b16 %v4652, %v4650
        %v4673 = vpack.c.b16 %v4655, %v4653
        %v4674 = vpack.c.b16 %v4656, %v4654
        %v4675 = vpack.c.b16 %v4659, %v4657
        %v4676 = vpack.c.b16 %v4660, %v4658
        %4693 = vmatprep.subr.bf16.mxu0 %v4662
        %4694 = vmatpush1.bf16.msra.mxu0 %v4661
        %4695 = vmatprep.subr.bf16.mxu0 %v4664
        %4696 = vmatpush1.bf16.msra.mxu0 %v4663
        %4697 = vmatprep.subr.bf16.mxu0 %v4666
        %4698 = vmatpush1.bf16.msra.mxu0 %v4665
        %4699 = vmatprep.subr.bf16.mxu0 %v4668
        %4700 = vmatpush1.bf16.msra.mxu0 %v4667
        %4701 = vmatprep.subr.bf16.mxu0 %v4670
        %4702 = vmatpush1.bf16.msra.mxu0 %v4669
        %4703 = vmatprep.subr.bf16.mxu0 %v4672
        %4704 = vmatpush1.bf16.msra.mxu0 %v4671
        %4705 = vmatprep.subr.bf16.mxu0 %v4674
        %4706 = vmatpush1.bf16.msra.mxu0 %v4673
        %4707 = vmatprep.subr.bf16.mxu0 %v4676
        %4708 = vmatpush1.bf16.msra.mxu0 %v4675
        %4709 = vmatprep.subr.bf16.mxu0 0
        %4710 = vmatpush1.bf16.msra.mxu0 0
        %4711 = vmatprep.subr.bf16.mxu0 0
        %4712 = vmatpush1.bf16.msra.mxu0 0
        %4713 = vmatprep.subr.bf16.mxu0 0
        %4714 = vmatpush1.bf16.msra.mxu0 0
        %4715 = vmatprep.subr.bf16.mxu0 0
        %4716 = vmatpush1.bf16.msra.mxu0 0
        %4717 = vmatprep.subr.bf16.mxu0 0
        %4718 = vmatpush1.bf16.msra.mxu0 0
        %4719 = vmatprep.subr.bf16.mxu0 0
        %4720 = vmatpush1.bf16.msra.mxu0 0
        %4721 = vmatprep.subr.bf16.mxu0 0
        %4722 = vmatpush1.bf16.msra.mxu0 0
        %4723 = vmatprep.subr.bf16.mxu0 0
        %4724 = vmatpush1.bf16.msra.mxu0 0
        %4725 = vmatprep.mubr.bf16.mxu0 0
        %4726 = vmatmul.mubr.bf16.gmra.mrb[0].mxu0 %v4414
        %v4727 = vpop.f32.mrb[0].mxu0
        %v4728 = vadd.f32 %v4605, %v4727
        %v4729 = vpop.f32.mrb[0].mxu0
        %v4730 = vadd.f32 %v4607, %v4729
        %v4731 = vpop.f32.mrb[0].mxu0
        %v4732 = vadd.f32 %v4609, %v4731
        %v4733 = vpop.f32.mrb[0].mxu0
        %v4734 = vadd.f32 %v4611, %v4733
        %4735 = vdwg.mxu0
        %4736 = vmatprep.subr.bf16.mxu0 0
        %4737 = vmatpush1.bf16.msra.mxu0 %v4472
        %4738 = vmatprep.subr.bf16.mxu0 0
        %4739 = vmatpush1.bf16.msra.mxu0 0
        %4740 = vmatprep.subr.bf16.mxu0 0
        %4741 = vmatpush1.bf16.msra.mxu0 0
        %4742 = vmatprep.subr.bf16.mxu0 0
        %4743 = vmatpush1.bf16.msra.mxu0 0
        %4744 = vmatprep.subr.bf16.mxu0 0
        %4745 = vmatpush1.bf16.msra.mxu0 0
        %4746 = vmatprep.subr.bf16.mxu0 0
        %4747 = vmatpush1.bf16.msra.mxu0 0
        %4748 = vmatprep.subr.bf16.mxu0 0
        %4749 = vmatpush1.bf16.msra.mxu0 0
        %4750 = vmatprep.subr.bf16.mxu0 0
        %4751 = vmatpush1.bf16.msra.mxu0 0
        %4752 = vmatprep.subr.bf16.mxu0 0
        %4753 = vmatpush1.bf16.msra.mxu0 0
        %4754 = vmatprep.subr.bf16.mxu0 0
        %4755 = vmatpush1.bf16.msra.mxu0 0
        %4756 = vmatprep.subr.bf16.mxu0 0
        %4757 = vmatpush1.bf16.msra.mxu0 0
        %4758 = vmatprep.subr.bf16.mxu0 0
        %4759 = vmatpush1.bf16.msra.mxu0 0
        %4760 = vmatprep.subr.bf16.mxu0 0
        %4761 = vmatpush1.bf16.msra.mxu0 0
        %4762 = vmatprep.subr.bf16.mxu0 0
        %4763 = vmatpush1.bf16.msra.mxu0 0
        %4764 = vmatprep.subr.bf16.mxu0 0
        %4765 = vmatpush1.bf16.msra.mxu0 0
        %4766 = vmatprep.subr.bf16.mxu0 0
        %4767 = vmatpush1.bf16.msra.mxu0 0
        %4768 = vmatprep.mubr.bf16.mxu0 0
        %4769 = vmatmul.mubr.bf16.gmra.mrb[0].mxu0 %v3016
        %v4770 = vpop.f32.mrb[0].mxu0
        %v4771 = vadd.f32 0.0, %v4770
        %v4772 = vpop.f32.mrb[0].mxu0
        %v4773 = vpop.f32.mrb[0].mxu0
        %v4774 = vadd.f32 0.0, %v4773
        %v4775 = vpop.f32.mrb[0].mxu0
        %4776 = vdwg.mxu0
        %v4777 = vmul.f32 %v4771, 2.0
        %v4778 = vmul.f32 %v4774, 2.0
        %v4779 = vsub.f32 %v4777, %v2973
        %v4780 = vsub.f32 %v4778, %v2974
        %v4781 = vpack.c.bf16 %v4780, %v4779
        %s4782 = scalar_lea.vmem [#allocation5], 256
        %v4783 = vld [vmem:[%s4782] sm:$0xff]
        %v4784 = vld [vmem:[%s4782 + $0x8] sm:$0xff]
        %v4785 = vld [vmem:[%s4782 + $0x10] sm:$0xff]
        %v4786 = vld [vmem:[%s4782 + $0x18] sm:$0xff]
        %v4787 = vld [vmem:[%s4782 + $0x20] sm:$0xff]
        %v4788 = vld [vmem:[%s4782 + $0x28] sm:$0xff]
        %v4789 = vld [vmem:[%s4782 + $0x30] sm:$0xff]
        %v4790 = vld [vmem:[%s4782 + $0x38] sm:$0xff]
        %v4791 = vld [vmem:[%s4782 + $0x40] sm:$0xff]
        %v4792 = vld [vmem:[%s4782 + $0x48] sm:$0xff]
        %v4793 = vld [vmem:[%s4782 + $0x50] sm:$0xff]
        %v4794 = vld [vmem:[%s4782 + $0x58] sm:$0xff]
        %v4795 = vld [vmem:[%s4782 + $0x60] sm:$0xff]
        %v4796 = vld [vmem:[%s4782 + $0x68] sm:$0xff]
        %v4797 = vld [vmem:[%s4782 + $0x70] sm:$0xff]
        %v4798 = vld [vmem:[%s4782 + $0x78] sm:$0xff]
        %v4815 = vunpack.c.l.b16 %v4783
        %v4816 = vunpack.c.h.b16 %v4783
        %v4817 = vunpack.c.l.b16 %v4784
        %v4818 = vunpack.c.h.b16 %v4784
        %v4819 = vunpack.c.l.b16 %v4785
        %v4820 = vunpack.c.h.b16 %v4785
        %v4821 = vunpack.c.l.b16 %v4786
        %v4822 = vunpack.c.h.b16 %v4786
        %v4823 = vunpack.c.l.b16 %v4787
        %v4824 = vunpack.c.h.b16 %v4787
        %v4825 = vunpack.c.l.b16 %v4788
        %v4826 = vunpack.c.h.b16 %v4788
        %v4827 = vunpack.c.l.b16 %v4789
        %v4828 = vunpack.c.h.b16 %v4789
        %v4829 = vunpack.c.l.b16 %v4790
        %v4830 = vunpack.c.h.b16 %v4790
        %v4831 = vunpack.c.l.b16 %v4791
        %v4832 = vunpack.c.h.b16 %v4791
        %v4833 = vunpack.c.l.b16 %v4792
        %v4834 = vunpack.c.h.b16 %v4792
        %v4835 = vunpack.c.l.b16 %v4793
        %v4836 = vunpack.c.h.b16 %v4793
        %v4837 = vunpack.c.l.b16 %v4794
        %v4838 = vunpack.c.h.b16 %v4794
        %v4839 = vunpack.c.l.b16 %v4795
        %v4840 = vunpack.c.h.b16 %v4795
        %v4841 = vunpack.c.l.b16 %v4796
        %v4842 = vunpack.c.h.b16 %v4796
        %v4843 = vunpack.c.l.b16 %v4797
        %v4844 = vunpack.c.h.b16 %v4797
        %v4845 = vunpack.c.l.b16 %v4798
        %v4846 = vunpack.c.h.b16 %v4798
        %v4847 = vpack.c.b16 %v4817, %v4815
        %v4848 = vpack.c.b16 %v4818, %v4816
        %v4849 = vpack.c.b16 %v4821, %v4819
        %v4850 = vpack.c.b16 %v4822, %v4820
        %v4851 = vpack.c.b16 %v4825, %v4823
        %v4852 = vpack.c.b16 %v4826, %v4824
        %v4853 = vpack.c.b16 %v4829, %v4827
        %v4854 = vpack.c.b16 %v4830, %v4828
        %v4855 = vpack.c.b16 %v4833, %v4831
        %v4856 = vpack.c.b16 %v4834, %v4832
        %v4857 = vpack.c.b16 %v4837, %v4835
        %v4858 = vpack.c.b16 %v4838, %v4836
        %v4859 = vpack.c.b16 %v4841, %v4839
        %v4860 = vpack.c.b16 %v4842, %v4840
        %v4861 = vpack.c.b16 %v4845, %v4843
        %v4862 = vpack.c.b16 %v4846, %v4844
        %4879 = vmatprep.subr.bf16.mxu0 %v4848
        %4880 = vmatpush1.bf16.msra.mxu0 %v4847
        %4881 = vmatprep.subr.bf16.mxu0 %v4850
        %4882 = vmatpush1.bf16.msra.mxu0 %v4849
        %4883 = vmatprep.subr.bf16.mxu0 %v4852
        %4884 = vmatpush1.bf16.msra.mxu0 %v4851
        %4885 = vmatprep.subr.bf16.mxu0 %v4854
        %4886 = vmatpush1.bf16.msra.mxu0 %v4853
        %4887 = vmatprep.subr.bf16.mxu0 %v4856
        %4888 = vmatpush1.bf16.msra.mxu0 %v4855
        %4889 = vmatprep.subr.bf16.mxu0 %v4858
        %4890 = vmatpush1.bf16.msra.mxu0 %v4857
        %4891 = vmatprep.subr.bf16.mxu0 %v4860
        %4892 = vmatpush1.bf16.msra.mxu0 %v4859
        %4893 = vmatprep.subr.bf16.mxu0 %v4862
        %4894 = vmatpush1.bf16.msra.mxu0 %v4861
        %4895 = vmatprep.subr.bf16.mxu0 0
        %4896 = vmatpush1.bf16.msra.mxu0 0
        %4897 = vmatprep.subr.bf16.mxu0 0
        %4898 = vmatpush1.bf16.msra.mxu0 0
        %4899 = vmatprep.subr.bf16.mxu0 0
        %4900 = vmatpush1.bf16.msra.mxu0 0
        %4901 = vmatprep.subr.bf16.mxu0 0
        %4902 = vmatpush1.bf16.msra.mxu0 0
        %4903 = vmatprep.subr.bf16.mxu0 0
        %4904 = vmatpush1.bf16.msra.mxu0 0
        %4905 = vmatprep.subr.bf16.mxu0 0
        %4906 = vmatpush1.bf16.msra.mxu0 0
        %4907 = vmatprep.subr.bf16.mxu0 0
        %4908 = vmatpush1.bf16.msra.mxu0 0
        %4909 = vmatprep.subr.bf16.mxu0 0
        %4910 = vmatpush1.bf16.msra.mxu0 0
        %4911 = vmatprep.mubr.bf16.mxu0 0
        %4912 = vmatmul.mubr.bf16.gmra.mrb[0].mxu0 %v4781
        %v4913 = vpop.f32.mrb[0].mxu0
        %v4914 = vadd.f32 0.0, %v4913
        %v4915 = vpop.f32.mrb[0].mxu0
        %v4916 = vadd.f32 0.0, %v4915
        %v4917 = vpop.f32.mrb[0].mxu0
        %v4918 = vadd.f32 0.0, %v4917
        %v4919 = vpop.f32.mrb[0].mxu0
        %v4920 = vadd.f32 0.0, %v4919
        %4921 = vdwg.mxu0
        %v4922 = vadd.f32 %v4728, %v4914
        %v4923 = vadd.f32 %v4730, %v4916
        %v4924 = vadd.f32 %v4732, %v4918
        %v4925 = vadd.f32 %v4734, %v4920
        %4926 = vmatprep.subr.bf16.mxu0 0
        %4927 = vmatpush1.bf16.msra.mxu0 %v4472
        %4928 = vmatprep.subr.bf16.mxu0 0
        %4929 = vmatpush1.bf16.msra.mxu0 0
        %4930 = vmatprep.subr.bf16.mxu0 0
        %4931 = vmatpush1.bf16.msra.mxu0 0
        %4932 = vmatprep.subr.bf16.mxu0 0
        %4933 = vmatpush1.bf16.msra.mxu0 0
        %4934 = vmatprep.subr.bf16.mxu0 0
        %4935 = vmatpush1.bf16.msra.mxu0 0
        %4936 = vmatprep.subr.bf16.mxu0 0
        %4937 = vmatpush1.bf16.msra.mxu0 0
        %4938 = vmatprep.subr.bf16.mxu0 0
        %4939 = vmatpush1.bf16.msra.mxu0 0
        %4940 = vmatprep.subr.bf16.mxu0 0
        %4941 = vmatpush1.bf16.msra.mxu0 0
        %4942 = vmatprep.subr.bf16.mxu0 0
        %4943 = vmatpush1.bf16.msra.mxu0 0
        %4944 = vmatprep.subr.bf16.mxu0 0
        %4945 = vmatpush1.bf16.msra.mxu0 0
        %4946 = vmatprep.subr.bf16.mxu0 0
        %4947 = vmatpush1.bf16.msra.mxu0 0
        %4948 = vmatprep.subr.bf16.mxu0 0
        %4949 = vmatpush1.bf16.msra.mxu0 0
        %4950 = vmatprep.subr.bf16.mxu0 0
        %4951 = vmatpush1.bf16.msra.mxu0 0
        %4952 = vmatprep.subr.bf16.mxu0 0
        %4953 = vmatpush1.bf16.msra.mxu0 0
        %4954 = vmatprep.subr.bf16.mxu0 0
        %4955 = vmatpush1.bf16.msra.mxu0 0
        %4956 = vmatprep.subr.bf16.mxu0 0
        %4957 = vmatpush1.bf16.msra.mxu0 0
        %4958 = vmatprep.mubr.bf16.mxu0 0
        %4959 = vmatmul.mubr.bf16.gmra.mrb[0].mxu0 %v3822
        %v4960 = vpop.f32.mrb[0].mxu0
        %v4961 = vadd.f32 0.0, %v4960
        %v4962 = vpop.f32.mrb[0].mxu0
        %v4963 = vpop.f32.mrb[0].mxu0
        %v4964 = vadd.f32 0.0, %v4963
        %v4965 = vpop.f32.mrb[0].mxu0
        %4966 = vdwg.mxu0
        %v4967 = vpack.c.bf16 %v4964, %v4961
        %s4968 = scalar_lea.vmem [#allocation5], 384
        %v4969 = vld [vmem:[%s4968] sm:$0xff]
        %v4970 = vld [vmem:[%s4968 + $0x8] sm:$0xff]
        %v4971 = vld [vmem:[%s4968 + $0x10] sm:$0xff]
        %v4972 = vld [vmem:[%s4968 + $0x18] sm:$0xff]
        %v4973 = vld [vmem:[%s4968 + $0x20] sm:$0xff]
        %v4974 = vld [vmem:[%s4968 + $0x28] sm:$0xff]
        %v4975 = vld [vmem:[%s4968 + $0x30] sm:$0xff]
        %v4976 = vld [vmem:[%s4968 + $0x38] sm:$0xff]
        %v4977 = vld [vmem:[%s4968 + $0x40] sm:$0xff]
        %v4978 = vld [vmem:[%s4968 + $0x48] sm:$0xff]
        %v4979 = vld [vmem:[%s4968 + $0x50] sm:$0xff]
        %v4980 = vld [vmem:[%s4968 + $0x58] sm:$0xff]
        %v4981 = vld [vmem:[%s4968 + $0x60] sm:$0xff]
        %v4982 = vld [vmem:[%s4968 + $0x68] sm:$0xff]
        %v4983 = vld [vmem:[%s4968 + $0x70] sm:$0xff]
        %v4984 = vld [vmem:[%s4968 + $0x78] sm:$0xff]
        %v5001 = vunpack.c.l.b16 %v4969
        %v5002 = vunpack.c.h.b16 %v4969
        %v5003 = vunpack.c.l.b16 %v4970
        %v5004 = vunpack.c.h.b16 %v4970
        %v5005 = vunpack.c.l.b16 %v4971
        %v5006 = vunpack.c.h.b16 %v4971
        %v5007 = vunpack.c.l.b16 %v4972
        %v5008 = vunpack.c.h.b16 %v4972
        %v5009 = vunpack.c.l.b16 %v4973
        %v5010 = vunpack.c.h.b16 %v4973
        %v5011 = vunpack.c.l.b16 %v4974
        %v5012 = vunpack.c.h.b16 %v4974
        %v5013 = vunpack.c.l.b16 %v4975
        %v5014 = vunpack.c.h.b16 %v4975
        %v5015 = vunpack.c.l.b16 %v4976
        %v5016 = vunpack.c.h.b16 %v4976
        %v5017 = vunpack.c.l.b16 %v4977
        %v5018 = vunpack.c.h.b16 %v4977
        %v5019 = vunpack.c.l.b16 %v4978
        %v5020 = vunpack.c.h.b16 %v4978
        %v5021 = vunpack.c.l.b16 %v4979
        %v5022 = vunpack.c.h.b16 %v4979
        %v5023 = vunpack.c.l.b16 %v4980
        %v5024 = vunpack.c.h.b16 %v4980
        %v5025 = vunpack.c.l.b16 %v4981
        %v5026 = vunpack.c.h.b16 %v4981
        %v5027 = vunpack.c.l.b16 %v4982
        %v5028 = vunpack.c.h.b16 %v4982
        %v5029 = vunpack.c.l.b16 %v4983
        %v5030 = vunpack.c.h.b16 %v4983
        %v5031 = vunpack.c.l.b16 %v4984
        %v5032 = vunpack.c.h.b16 %v4984
        %v5033 = vpack.c.b16 %v5003, %v5001
        %v5034 = vpack.c.b16 %v5004, %v5002
        %v5035 = vpack.c.b16 %v5007, %v5005
        %v5036 = vpack.c.b16 %v5008, %v5006
        %v5037 = vpack.c.b16 %v5011, %v5009
        %v5038 = vpack.c.b16 %v5012, %v5010
        %v5039 = vpack.c.b16 %v5015, %v5013
        %v5040 = vpack.c.b16 %v5016, %v5014
        %v5041 = vpack.c.b16 %v5019, %v5017
        %v5042 = vpack.c.b16 %v5020, %v5018
        %v5043 = vpack.c.b16 %v5023, %v5021
        %v5044 = vpack.c.b16 %v5024, %v5022
        %v5045 = vpack.c.b16 %v5027, %v5025
        %v5046 = vpack.c.b16 %v5028, %v5026
        %v5047 = vpack.c.b16 %v5031, %v5029
        %v5048 = vpack.c.b16 %v5032, %v5030
        %5065 = vmatprep.subr.bf16.mxu0 %v5034
        %5066 = vmatpush1.bf16.msra.mxu0 %v5033
        %5067 = vmatprep.subr.bf16.mxu0 %v5036
        %5068 = vmatpush1.bf16.msra.mxu0 %v5035
        %5069 = vmatprep.subr.bf16.mxu0 %v5038
        %5070 = vmatpush1.bf16.msra.mxu0 %v5037
        %5071 = vmatprep.subr.bf16.mxu0 %v5040
        %5072 = vmatpush1.bf16.msra.mxu0 %v5039
        %5073 = vmatprep.subr.bf16.mxu0 %v5042
        %5074 = vmatpush1.bf16.msra.mxu0 %v5041
        %5075 = vmatprep.subr.bf16.mxu0 %v5044
        %5076 = vmatpush1.bf16.msra.mxu0 %v5043
        %5077 = vmatprep.subr.bf16.mxu0 %v5046
        %5078 = vmatpush1.bf16.msra.mxu0 %v5045
        %5079 = vmatprep.subr.bf16.mxu0 %v5048
        %5080 = vmatpush1.bf16.msra.mxu0 %v5047
        %5081 = vmatprep.subr.bf16.mxu0 0
        %5082 = vmatpush1.bf16.msra.mxu0 0
        %5083 = vmatprep.subr.bf16.mxu0 0
        %5084 = vmatpush1.bf16.msra.mxu0 0
        %5085 = vmatprep.subr.bf16.mxu0 0
        %5086 = vmatpush1.bf16.msra.mxu0 0
        %5087 = vmatprep.subr.bf16.mxu0 0
        %5088 = vmatpush1.bf16.msra.mxu0 0
        %5089 = vmatprep.subr.bf16.mxu0 0
        %5090 = vmatpush1.bf16.msra.mxu0 0
        %5091 = vmatprep.subr.bf16.mxu0 0
        %5092 = vmatpush1.bf16.msra.mxu0 0
        %5093 = vmatprep.subr.bf16.mxu0 0
        %5094 = vmatpush1.bf16.msra.mxu0 0
        %5095 = vmatprep.subr.bf16.mxu0 0
        %5096 = vmatpush1.bf16.msra.mxu0 0
        %5097 = vmatprep.mubr.bf16.mxu0 0
        %5098 = vmatmul.mubr.bf16.gmra.mrb[0].mxu0 %v4967
        %v5099 = vpop.f32.mrb[0].mxu0
        %v5100 = vadd.f32 0.0, %v5099
        %v5101 = vpop.f32.mrb[0].mxu0
        %v5102 = vadd.f32 0.0, %v5101
        %v5103 = vpop.f32.mrb[0].mxu0
        %v5104 = vadd.f32 0.0, %v5103
        %v5105 = vpop.f32.mrb[0].mxu0
        %v5106 = vadd.f32 0.0, %v5105
        %5107 = vdwg.mxu0
        %v5108 = vadd.f32 %v4922, %v5100
        %v5109 = vadd.f32 %v4923, %v5102
        %v5110 = vadd.f32 %v4924, %v5104
        %v5111 = vadd.f32 %v4925, %v5106
        %5112 = vmatprep.subr.bf16.mxu0 0
        %5113 = vmatpush1.bf16.msra.mxu0 %v4967
        %5114 = vmatprep.subr.bf16.mxu0 0
        %5115 = vmatpush1.bf16.msra.mxu0 0
        %5116 = vmatprep.subr.bf16.mxu0 0
        %5117 = vmatpush1.bf16.msra.mxu0 0
        %5118 = vmatprep.subr.bf16.mxu0 0
        %5119 = vmatpush1.bf16.msra.mxu0 0
        %5120 = vmatprep.subr.bf16.mxu0 0
        %5121 = vmatpush1.bf16.msra.mxu0 0
        %5122 = vmatprep.subr.bf16.mxu0 0
        %5123 = vmatpush1.bf16.msra.mxu0 0
        %5124 = vmatprep.subr.bf16.mxu0 0
        %5125 = vmatpush1.bf16.msra.mxu0 0
        %5126 = vmatprep.subr.bf16.mxu0 0
        %5127 = vmatpush1.bf16.msra.mxu0 0
        %5128 = vmatprep.subr.bf16.mxu0 0
        %5129 = vmatpush1.bf16.msra.mxu0 0
        %5130 = vmatprep.subr.bf16.mxu0 0
        %5131 = vmatpush1.bf16.msra.mxu0 0
        %5132 = vmatprep.subr.bf16.mxu0 0
        %5133 = vmatpush1.bf16.msra.mxu0 0
        %5134 = vmatprep.subr.bf16.mxu0 0
        %5135 = vmatpush1.bf16.msra.mxu0 0
        %5136 = vmatprep.subr.bf16.mxu0 0
        %5137 = vmatpush1.bf16.msra.mxu0 0
        %5138 = vmatprep.subr.bf16.mxu0 0
        %5139 = vmatpush1.bf16.msra.mxu0 0
        %5140 = vmatprep.subr.bf16.mxu0 0
        %5141 = vmatpush1.bf16.msra.mxu0 0
        %5142 = vmatprep.subr.bf16.mxu0 0
        %5143 = vmatpush1.bf16.msra.mxu0 0
        %5144 = vmatprep.mubr.bf16.mxu0 0
        %5145 = vmatmul.mubr.bf16.gmra.mrb[0].mxu0 %v3822
        %v5146 = vpop.f32.mrb[0].mxu0
        %v5147 = vadd.f32 0.0, %v5146
        %v5148 = vpop.f32.mrb[0].mxu0
        %v5149 = vpop.f32.mrb[0].mxu0
        %v5150 = vadd.f32 0.0, %v5149
        %v5151 = vpop.f32.mrb[0].mxu0
        %5152 = vdwg.mxu0
        %v5153 = vmul.f32 %v5147, 2.0
        %v5154 = vmul.f32 %v5150, 2.0
        %v5155 = vsub.f32 %v5153, %v4466
        %v5156 = vsub.f32 %v5154, %v4469
        %v5157 = vpack.c.bf16 %v5156, %v5155
        %s5158 = scalar_lea.vmem [#allocation5], 512
        %v5159 = vld [vmem:[%s5158] sm:$0xff]
        %v5160 = vld [vmem:[%s5158 + $0x8] sm:$0xff]
        %v5161 = vld [vmem:[%s5158 + $0x10] sm:$0xff]
        %v5162 = vld [vmem:[%s5158 + $0x18] sm:$0xff]
        %v5163 = vld [vmem:[%s5158 + $0x20] sm:$0xff]
        %v5164 = vld [vmem:[%s5158 + $0x28] sm:$0xff]
        %v5165 = vld [vmem:[%s5158 + $0x30] sm:$0xff]
        %v5166 = vld [vmem:[%s5158 + $0x38] sm:$0xff]
        %v5167 = vld [vmem:[%s5158 + $0x40] sm:$0xff]
        %v5168 = vld [vmem:[%s5158 + $0x48] sm:$0xff]
        %v5169 = vld [vmem:[%s5158 + $0x50] sm:$0xff]
        %v5170 = vld [vmem:[%s5158 + $0x58] sm:$0xff]
        %v5171 = vld [vmem:[%s5158 + $0x60] sm:$0xff]
        %v5172 = vld [vmem:[%s5158 + $0x68] sm:$0xff]
        %v5173 = vld [vmem:[%s5158 + $0x70] sm:$0xff]
        %v5174 = vld [vmem:[%s5158 + $0x78] sm:$0xff]
        %v5191 = vunpack.c.l.b16 %v5159
        %v5192 = vunpack.c.h.b16 %v5159
        %v5193 = vunpack.c.l.b16 %v5160
        %v5194 = vunpack.c.h.b16 %v5160
        %v5195 = vunpack.c.l.b16 %v5161
        %v5196 = vunpack.c.h.b16 %v5161
        %v5197 = vunpack.c.l.b16 %v5162
        %v5198 = vunpack.c.h.b16 %v5162
        %v5199 = vunpack.c.l.b16 %v5163
        %v5200 = vunpack.c.h.b16 %v5163
        %v5201 = vunpack.c.l.b16 %v5164
        %v5202 = vunpack.c.h.b16 %v5164
        %v5203 = vunpack.c.l.b16 %v5165
        %v5204 = vunpack.c.h.b16 %v5165
        %v5205 = vunpack.c.l.b16 %v5166
        %v5206 = vunpack.c.h.b16 %v5166
        %v5207 = vunpack.c.l.b16 %v5167
        %v5208 = vunpack.c.h.b16 %v5167
        %v5209 = vunpack.c.l.b16 %v5168
        %v5210 = vunpack.c.h.b16 %v5168
        %v5211 = vunpack.c.l.b16 %v5169
        %v5212 = vunpack.c.h.b16 %v5169
        %v5213 = vunpack.c.l.b16 %v5170
        %v5214 = vunpack.c.h.b16 %v5170
        %v5215 = vunpack.c.l.b16 %v5171
        %v5216 = vunpack.c.h.b16 %v5171
        %v5217 = vunpack.c.l.b16 %v5172
        %v5218 = vunpack.c.h.b16 %v5172
        %v5219 = vunpack.c.l.b16 %v5173
        %v5220 = vunpack.c.h.b16 %v5173
        %v5221 = vunpack.c.l.b16 %v5174
        %v5222 = vunpack.c.h.b16 %v5174
        %v5223 = vpack.c.b16 %v5193, %v5191
        %v5224 = vpack.c.b16 %v5194, %v5192
        %v5225 = vpack.c.b16 %v5197, %v5195
        %v5226 = vpack.c.b16 %v5198, %v5196
        %v5227 = vpack.c.b16 %v5201, %v5199
        %v5228 = vpack.c.b16 %v5202, %v5200
        %v5229 = vpack.c.b16 %v5205, %v5203
        %v5230 = vpack.c.b16 %v5206, %v5204
        %v5231 = vpack.c.b16 %v5209, %v5207
        %v5232 = vpack.c.b16 %v5210, %v5208
        %v5233 = vpack.c.b16 %v5213, %v5211
        %v5234 = vpack.c.b16 %v5214, %v5212
        %v5235 = vpack.c.b16 %v5217, %v5215
        %v5236 = vpack.c.b16 %v5218, %v5216
        %v5237 = vpack.c.b16 %v5221, %v5219
        %v5238 = vpack.c.b16 %v5222, %v5220
        %5255 = vmatprep.subr.bf16.mxu0 %v5224
        %5256 = vmatpush1.bf16.msra.mxu0 %v5223
        %5257 = vmatprep.subr.bf16.mxu0 %v5226
        %5258 = vmatpush1.bf16.msra.mxu0 %v5225
        %5259 = vmatprep.subr.bf16.mxu0 %v5228
        %5260 = vmatpush1.bf16.msra.mxu0 %v5227
        %5261 = vmatprep.subr.bf16.mxu0 %v5230
        %5262 = vmatpush1.bf16.msra.mxu0 %v5229
        %5263 = vmatprep.subr.bf16.mxu0 %v5232
        %5264 = vmatpush1.bf16.msra.mxu0 %v5231
        %5265 = vmatprep.subr.bf16.mxu0 %v5234
        %5266 = vmatpush1.bf16.msra.mxu0 %v5233
        %5267 = vmatprep.subr.bf16.mxu0 %v5236
        %5268 = vmatpush1.bf16.msra.mxu0 %v5235
        %5269 = vmatprep.subr.bf16.mxu0 %v5238
        %5270 = vmatpush1.bf16.msra.mxu0 %v5237
        %5271 = vmatprep.subr.bf16.mxu0 0
        %5272 = vmatpush1.bf16.msra.mxu0 0
        %5273 = vmatprep.subr.bf16.mxu0 0
        %5274 = vmatpush1.bf16.msra.mxu0 0
        %5275 = vmatprep.subr.bf16.mxu0 0
        %5276 = vmatpush1.bf16.msra.mxu0 0
        %5277 = vmatprep.subr.bf16.mxu0 0
        %5278 = vmatpush1.bf16.msra.mxu0 0
        %5279 = vmatprep.subr.bf16.mxu0 0
        %5280 = vmatpush1.bf16.msra.mxu0 0
        %5281 = vmatprep.subr.bf16.mxu0 0
        %5282 = vmatpush1.bf16.msra.mxu0 0
        %5283 = vmatprep.subr.bf16.mxu0 0
        %5284 = vmatpush1.bf16.msra.mxu0 0
        %5285 = vmatprep.subr.bf16.mxu0 0
        %5286 = vmatpush1.bf16.msra.mxu0 0
        %5287 = vmatprep.mubr.bf16.mxu0 0
        %5288 = vmatmul.mubr.bf16.gmra.mrb[0].mxu0 %v5157
        %v5289 = vpop.f32.mrb[0].mxu0
        %v5290 = vadd.f32 0.0, %v5289
        %v5291 = vpop.f32.mrb[0].mxu0
        %v5292 = vadd.f32 0.0, %v5291
        %v5293 = vpop.f32.mrb[0].mxu0
        %v5294 = vadd.f32 0.0, %v5293
        %v5295 = vpop.f32.mrb[0].mxu0
        %v5296 = vadd.f32 0.0, %v5295
        %5297 = vdwg.mxu0
        %v5298 = vadd.f32 %v5108, %v5290
        %v5299 = vadd.f32 %v5109, %v5292
        %v5300 = vadd.f32 %v5110, %v5294
        %v5301 = vadd.f32 %v5111, %v5296
        %v5302 = vadd.f32 %v4408, %v5298
        %v5303 = vadd.f32 %v4409, %v5299
        %v5304 = vadd.f32 %v4411, %v5300
        %v5305 = vadd.f32 %v4412, %v5301
        %v5306 = vld [vmem:[%s11] sm:$0x3]
        %v5308 = vlaneseq
        %v5309 = vshrl.u32 %v5308, 7
        %v5310 = vsub.s32 0, %v5309
        %v5311 = vrot.slane %v5306, %v5310
        %v5312 = vlaneseq
        %v5313 = vshrl.u32 %v5312, 7
        %v5314 = vsub.s32 1, %v5313
        %v5315 = vrot.slane %v5306, %v5314
        %v5318 = vadd.f32 %v5302, %v5311
        %v5319 = vadd.f32 %v5303, %v5315
        %v5320 = vadd.f32 %v5304, %v5311
        %v5321 = vadd.f32 %v5305, %v5315
        %v5322 = vsub.f32 0.0, %v5318
        %v5323 = vsub.f32 0.0, %v5319
        %v5324 = vsub.f32 0.0, %v5320
        %v5325 = vsub.f32 0.0, %v5321
        %v5326 = vmul.f32 %v5322, 1.442695
        %v5327 = vpow.pop %v5326
        %v5328 = vmul.f32 %v5323, 1.442695
        %v5329 = vpow.pop %v5328
        %v5330 = vmul.f32 %v5324, 1.442695
        %v5331 = vpow.pop %v5330
        %v5332 = vmul.f32 %v5325, 1.442695
        %v5333 = vpow.pop %v5332
        %v5334 = vadd.f32 %v5327, 1.0
        %v5335 = vadd.f32 %v5329, 1.0
        %v5336 = vadd.f32 %v5331, 1.0
        %v5337 = vadd.f32 %v5333, 1.0
        %v5338 = vrcp.pop %v5334
        %v5339 = vrcp.pop %v5335
        %v5340 = vrcp.pop %v5336
        %v5341 = vrcp.pop %v5337
        %v5342 = vmul.f32 %v5338, %v2973
        %v5343 = vmul.f32 %v5340, %v2974
        %v5344 = vpack.c.bf16 %v5343, %v5342
        %v5345 = vld [vmem:[#allocation7] sm:$0xf]
        %v5346 = vld [vmem:[#allocation7 + $0x4] sm:$0xf]
        %v5347 = vld [vmem:[#allocation7 + $0x8] sm:$0xf]
        %v5348 = vld [vmem:[#allocation7 + $0xc] sm:$0xf]
        %v5349 = vld [vmem:[#allocation7 + $0x10] sm:$0xf]
        %v5350 = vld [vmem:[#allocation7 + $0x14] sm:$0xf]
        %v5351 = vld [vmem:[#allocation7 + $0x18] sm:$0xf]
        %v5352 = vld [vmem:[#allocation7 + $0x1c] sm:$0xf]
        %v5353 = vld [vmem:[#allocation7 + $0x20] sm:$0xf]
        %v5354 = vld [vmem:[#allocation7 + $0x24] sm:$0xf]
        %v5355 = vld [vmem:[#allocation7 + $0x28] sm:$0xf]
        %v5356 = vld [vmem:[#allocation7 + $0x2c] sm:$0xf]
        %v5357 = vld [vmem:[#allocation7 + $0x30] sm:$0xf]
        %v5358 = vld [vmem:[#allocation7 + $0x34] sm:$0xf]
        %v5359 = vld [vmem:[#allocation7 + $0x38] sm:$0xf]
        %v5360 = vld [vmem:[#allocation7 + $0x3c] sm:$0xf]
        %5361 = vmatprep.subr.bf16.mxu0 0
        %5362 = vmatpush1.bf16.msra.mxu0 %v5344
        %5363 = vmatprep.subr.bf16.mxu0 0
        %5364 = vmatpush1.bf16.msra.mxu0 0
        %5365 = vmatprep.subr.bf16.mxu0 0
        %5366 = vmatpush1.bf16.msra.mxu0 0
        %5367 = vmatprep.subr.bf16.mxu0 0
        %5368 = vmatpush1.bf16.msra.mxu0 0
        %5369 = vmatprep.subr.bf16.mxu0 0
        %5370 = vmatpush1.bf16.msra.mxu0 0
        %5371 = vmatprep.subr.bf16.mxu0 0
        %5372 = vmatpush1.bf16.msra.mxu0 0
        %5373 = vmatprep.subr.bf16.mxu0 0
        %5374 = vmatpush1.bf16.msra.mxu0 0
        %5375 = vmatprep.subr.bf16.mxu0 0
        %5376 = vmatpush1.bf16.msra.mxu0 0
        %5377 = vmatprep.subr.bf16.mxu0 0
        %5378 = vmatpush1.bf16.msra.mxu0 0
        %5379 = vmatprep.subr.bf16.mxu0 0
        %5380 = vmatpush1.bf16.msra.mxu0 0
        %5381 = vmatprep.subr.bf16.mxu0 0
        %5382 = vmatpush1.bf16.msra.mxu0 0
        %5383 = vmatprep.subr.bf16.mxu0 0
        %5384 = vmatpush1.bf16.msra.mxu0 0
        %5385 = vmatprep.subr.bf16.mxu0 0
        %5386 = vmatpush1.bf16.msra.mxu0 0
        %5387 = vmatprep.subr.bf16.mxu0 0
        %5388 = vmatpush1.bf16.msra.mxu0 0
        %5389 = vmatprep.subr.bf16.mxu0 0
        %5390 = vmatpush1.bf16.msra.mxu0 0
        %5391 = vmatprep.subr.bf16.mxu0 0
        %5392 = vmatpush1.bf16.msra.mxu0 0
        %5393 = vmatprep.mubr.bf16.mxu0 0
        %5394 = vmatmul.mubr.bf16.gmra.mrb[0].mxu0 %v3016
        %v5395 = vpop.f32.mrb[0].mxu0
        %v5396 = vadd.f32 0.0, %v5395
        %v5397 = vpop.f32.mrb[0].mxu0
        %v5398 = vpop.f32.mrb[0].mxu0
        %v5399 = vadd.f32 0.0, %v5398
        %v5400 = vpop.f32.mrb[0].mxu0
        %5401 = vdwg.mxu0
        %v5402 = vpack.c.bf16 %v5399, %v5396
        %s5403 = scalar_lea.vmem [#allocation7], 64
        %v5404 = vld [vmem:[%s5403] sm:$0xf]
        %v5405 = vld [vmem:[%s5403 + $0x4] sm:$0xf]
        %v5406 = vld [vmem:[%s5403 + $0x8] sm:$0xf]
        %v5407 = vld [vmem:[%s5403 + $0xc] sm:$0xf]
        %v5408 = vld [vmem:[%s5403 + $0x10] sm:$0xf]
        %v5409 = vld [vmem:[%s5403 + $0x14] sm:$0xf]
        %v5410 = vld [vmem:[%s5403 + $0x18] sm:$0xf]
        %v5411 = vld [vmem:[%s5403 + $0x1c] sm:$0xf]
        %v5412 = vld [vmem:[%s5403 + $0x20] sm:$0xf]
        %v5413 = vld [vmem:[%s5403 + $0x24] sm:$0xf]
        %v5414 = vld [vmem:[%s5403 + $0x28] sm:$0xf]
        %v5415 = vld [vmem:[%s5403 + $0x2c] sm:$0xf]
        %v5416 = vld [vmem:[%s5403 + $0x30] sm:$0xf]
        %v5417 = vld [vmem:[%s5403 + $0x34] sm:$0xf]
        %v5418 = vld [vmem:[%s5403 + $0x38] sm:$0xf]
        %v5419 = vld [vmem:[%s5403 + $0x3c] sm:$0xf]
        %v5436 = vunpack.c.l.b16 %v5404
        %v5437 = vunpack.c.l.b16 %v5405
        %v5438 = vunpack.c.l.b16 %v5406
        %v5439 = vunpack.c.l.b16 %v5407
        %v5440 = vunpack.c.l.b16 %v5408
        %v5441 = vunpack.c.l.b16 %v5409
        %v5442 = vunpack.c.l.b16 %v5410
        %v5443 = vunpack.c.l.b16 %v5411
        %v5444 = vunpack.c.l.b16 %v5412
        %v5445 = vunpack.c.l.b16 %v5413
        %v5446 = vunpack.c.l.b16 %v5414
        %v5447 = vunpack.c.l.b16 %v5415
        %v5448 = vunpack.c.l.b16 %v5416
        %v5449 = vunpack.c.l.b16 %v5417
        %v5450 = vunpack.c.l.b16 %v5418
        %v5451 = vunpack.c.l.b16 %v5419
        %v5452 = vpack.c.b16 %v5437, %v5436
        %v5453 = vpack.c.b16 %v5439, %v5438
        %v5454 = vpack.c.b16 %v5441, %v5440
        %v5455 = vpack.c.b16 %v5443, %v5442
        %v5456 = vpack.c.b16 %v5445, %v5444
        %v5457 = vpack.c.b16 %v5447, %v5446
        %v5458 = vpack.c.b16 %v5449, %v5448
        %v5459 = vpack.c.b16 %v5451, %v5450
        %5468 = vmatprep.subr.bf16.mxu0 0
        %5469 = vmatpush1.bf16.msra.mxu0 %v5452
        %5470 = vmatprep.subr.bf16.mxu0 0
        %5471 = vmatpush1.bf16.msra.mxu0 %v5453
        %5472 = vmatprep.subr.bf16.mxu0 0
        %5473 = vmatpush1.bf16.msra.mxu0 %v5454
        %5474 = vmatprep.subr.bf16.mxu0 0
        %5475 = vmatpush1.bf16.msra.mxu0 %v5455
        %5476 = vmatprep.subr.bf16.mxu0 0
        %5477 = vmatpush1.bf16.msra.mxu0 %v5456
        %5478 = vmatprep.subr.bf16.mxu0 0
        %5479 = vmatpush1.bf16.msra.mxu0 %v5457
        %5480 = vmatprep.subr.bf16.mxu0 0
        %5481 = vmatpush1.bf16.msra.mxu0 %v5458
        %5482 = vmatprep.subr.bf16.mxu0 0
        %5483 = vmatpush1.bf16.msra.mxu0 %v5459
        %5484 = vmatprep.subr.bf16.mxu0 0
        %5485 = vmatpush1.bf16.msra.mxu0 0
        %5486 = vmatprep.subr.bf16.mxu0 0
        %5487 = vmatpush1.bf16.msra.mxu0 0
        %5488 = vmatprep.subr.bf16.mxu0 0
        %5489 = vmatpush1.bf16.msra.mxu0 0
        %5490 = vmatprep.subr.bf16.mxu0 0
        %5491 = vmatpush1.bf16.msra.mxu0 0
        %5492 = vmatprep.subr.bf16.mxu0 0
        %5493 = vmatpush1.bf16.msra.mxu0 0
        %5494 = vmatprep.subr.bf16.mxu0 0
        %5495 = vmatpush1.bf16.msra.mxu0 0
        %5496 = vmatprep.subr.bf16.mxu0 0
        %5497 = vmatpush1.bf16.msra.mxu0 0
        %5498 = vmatprep.subr.bf16.mxu0 0
        %5499 = vmatpush1.bf16.msra.mxu0 0
        %5500 = vmatprep.mubr.bf16.mxu0 0
        %5501 = vmatmul.mubr.bf16.gmra.mrb[0].mxu0 %v5402
        %v5502 = vpop.f32.mrb[0].mxu0
        %v5503 = vadd.f32 0.0, %v5502
        %v5504 = vpop.f32.mrb[0].mxu0
        %v5505 = vpop.f32.mrb[0].mxu0
        %v5506 = vadd.f32 0.0, %v5505
        %v5507 = vpop.f32.mrb[0].mxu0
        %5508 = vdwg.mxu0
        %v5525 = vunpack.c.l.b16 %v5345
        %v5526 = vunpack.c.l.b16 %v5346
        %v5527 = vunpack.c.l.b16 %v5347
        %v5528 = vunpack.c.l.b16 %v5348
        %v5529 = vunpack.c.l.b16 %v5349
        %v5530 = vunpack.c.l.b16 %v5350
        %v5531 = vunpack.c.l.b16 %v5351
        %v5532 = vunpack.c.l.b16 %v5352
        %v5533 = vunpack.c.l.b16 %v5353
        %v5534 = vunpack.c.l.b16 %v5354
        %v5535 = vunpack.c.l.b16 %v5355
        %v5536 = vunpack.c.l.b16 %v5356
        %v5537 = vunpack.c.l.b16 %v5357
        %v5538 = vunpack.c.l.b16 %v5358
        %v5539 = vunpack.c.l.b16 %v5359
        %v5540 = vunpack.c.l.b16 %v5360
        %v5541 = vpack.c.b16 %v5526, %v5525
        %v5542 = vpack.c.b16 %v5528, %v5527
        %v5543 = vpack.c.b16 %v5530, %v5529
        %v5544 = vpack.c.b16 %v5532, %v5531
        %v5545 = vpack.c.b16 %v5534, %v5533
        %v5546 = vpack.c.b16 %v5536, %v5535
        %v5547 = vpack.c.b16 %v5538, %v5537
        %v5548 = vpack.c.b16 %v5540, %v5539
        %5557 = vmatprep.subr.bf16.mxu0 0
        %5558 = vmatpush1.bf16.msra.mxu0 %v5541
        %5559 = vmatprep.subr.bf16.mxu0 0
        %5560 = vmatpush1.bf16.msra.mxu0 %v5542
        %5561 = vmatprep.subr.bf16.mxu0 0
        %5562 = vmatpush1.bf16.msra.mxu0 %v5543
        %5563 = vmatprep.subr.bf16.mxu0 0
        %5564 = vmatpush1.bf16.msra.mxu0 %v5544
        %5565 = vmatprep.subr.bf16.mxu0 0
        %5566 = vmatpush1.bf16.msra.mxu0 %v5545
        %5567 = vmatprep.subr.bf16.mxu0 0
        %5568 = vmatpush1.bf16.msra.mxu0 %v5546
        %5569 = vmatprep.subr.bf16.mxu0 0
        %5570 = vmatpush1.bf16.msra.mxu0 %v5547
        %5571 = vmatprep.subr.bf16.mxu0 0
        %5572 = vmatpush1.bf16.msra.mxu0 %v5548
        %5573 = vmatprep.subr.bf16.mxu0 0
        %5574 = vmatpush1.bf16.msra.mxu0 0
        %5575 = vmatprep.subr.bf16.mxu0 0
        %5576 = vmatpush1.bf16.msra.mxu0 0
        %5577 = vmatprep.subr.bf16.mxu0 0
        %5578 = vmatpush1.bf16.msra.mxu0 0
        %5579 = vmatprep.subr.bf16.mxu0 0
        %5580 = vmatpush1.bf16.msra.mxu0 0
        %5581 = vmatprep.subr.bf16.mxu0 0
        %5582 = vmatpush1.bf16.msra.mxu0 0
        %5583 = vmatprep.subr.bf16.mxu0 0
        %5584 = vmatpush1.bf16.msra.mxu0 0
        %5585 = vmatprep.subr.bf16.mxu0 0
        %5586 = vmatpush1.bf16.msra.mxu0 0
        %5587 = vmatprep.subr.bf16.mxu0 0
        %5588 = vmatpush1.bf16.msra.mxu0 0
        %5589 = vmatprep.mubr.bf16.mxu0 0
        %5590 = vmatmul.mubr.bf16.gmra.mrb[0].mxu0 %v5344
        %v5591 = vpop.f32.mrb[0].mxu0
        %v5592 = vadd.f32 %v5503, %v5591
        %v5593 = vpop.f32.mrb[0].mxu0
        %v5594 = vpop.f32.mrb[0].mxu0
        %v5595 = vadd.f32 %v5506, %v5594
        %v5596 = vpop.f32.mrb[0].mxu0
        %5597 = vdwg.mxu0
        %5598 = vmatprep.subr.bf16.mxu0 0
        %5599 = vmatpush1.bf16.msra.mxu0 %v5402
        %5600 = vmatprep.subr.bf16.mxu0 0
        %5601 = vmatpush1.bf16.msra.mxu0 0
        %5602 = vmatprep.subr.bf16.mxu0 0
        %5603 = vmatpush1.bf16.msra.mxu0 0
        %5604 = vmatprep.subr.bf16.mxu0 0
        %5605 = vmatpush1.bf16.msra.mxu0 0
        %5606 = vmatprep.subr.bf16.mxu0 0
        %5607 = vmatpush1.bf16.msra.mxu0 0
        %5608 = vmatprep.subr.bf16.mxu0 0
        %5609 = vmatpush1.bf16.msra.mxu0 0
        %5610 = vmatprep.subr.bf16.mxu0 0
        %5611 = vmatpush1.bf16.msra.mxu0 0
        %5612 = vmatprep.subr.bf16.mxu0 0
        %5613 = vmatpush1.bf16.msra.mxu0 0
        %5614 = vmatprep.subr.bf16.mxu0 0
        %5615 = vmatpush1.bf16.msra.mxu0 0
        %5616 = vmatprep.subr.bf16.mxu0 0
        %5617 = vmatpush1.bf16.msra.mxu0 0
        %5618 = vmatprep.subr.bf16.mxu0 0
        %5619 = vmatpush1.bf16.msra.mxu0 0
        %5620 = vmatprep.subr.bf16.mxu0 0
        %5621 = vmatpush1.bf16.msra.mxu0 0
        %5622 = vmatprep.subr.bf16.mxu0 0
        %5623 = vmatpush1.bf16.msra.mxu0 0
        %5624 = vmatprep.subr.bf16.mxu0 0
        %5625 = vmatpush1.bf16.msra.mxu0 0
        %5626 = vmatprep.subr.bf16.mxu0 0
        %5627 = vmatpush1.bf16.msra.mxu0 0
        %5628 = vmatprep.subr.bf16.mxu0 0
        %5629 = vmatpush1.bf16.msra.mxu0 0
        %5630 = vmatprep.mubr.bf16.mxu0 0
        %5631 = vmatmul.mubr.bf16.gmra.mrb[0].mxu0 %v3016
        %v5632 = vpop.f32.mrb[0].mxu0
        %v5633 = vadd.f32 0.0, %v5632
        %v5634 = vpop.f32.mrb[0].mxu0
        %v5635 = vpop.f32.mrb[0].mxu0
        %v5636 = vadd.f32 0.0, %v5635
        %v5637 = vpop.f32.mrb[0].mxu0
        %5638 = vdwg.mxu0
        %v5639 = vmul.f32 %v5633, 2.0
        %v5640 = vmul.f32 %v5636, 2.0
        %v5641 = vsub.f32 %v5639, %v5342
        %v5642 = vsub.f32 %v5640, %v5343
        %v5643 = vpack.c.bf16 %v5642, %v5641
        %s5644 = scalar_lea.vmem [#allocation7], 128
        %v5645 = vld [vmem:[%s5644] sm:$0xf]
        %v5646 = vld [vmem:[%s5644 + $0x4] sm:$0xf]
        %v5647 = vld [vmem:[%s5644 + $0x8] sm:$0xf]
        %v5648 = vld [vmem:[%s5644 + $0xc] sm:$0xf]
        %v5649 = vld [vmem:[%s5644 + $0x10] sm:$0xf]
        %v5650 = vld [vmem:[%s5644 + $0x14] sm:$0xf]
        %v5651 = vld [vmem:[%s5644 + $0x18] sm:$0xf]
        %v5652 = vld [vmem:[%s5644 + $0x1c] sm:$0xf]
        %v5653 = vld [vmem:[%s5644 + $0x20] sm:$0xf]
        %v5654 = vld [vmem:[%s5644 + $0x24] sm:$0xf]
        %v5655 = vld [vmem:[%s5644 + $0x28] sm:$0xf]
        %v5656 = vld [vmem:[%s5644 + $0x2c] sm:$0xf]
        %v5657 = vld [vmem:[%s5644 + $0x30] sm:$0xf]
        %v5658 = vld [vmem:[%s5644 + $0x34] sm:$0xf]
        %v5659 = vld [vmem:[%s5644 + $0x38] sm:$0xf]
        %v5660 = vld [vmem:[%s5644 + $0x3c] sm:$0xf]
        %v5677 = vunpack.c.l.b16 %v5645
        %v5678 = vunpack.c.l.b16 %v5646
        %v5679 = vunpack.c.l.b16 %v5647
        %v5680 = vunpack.c.l.b16 %v5648
        %v5681 = vunpack.c.l.b16 %v5649
        %v5682 = vunpack.c.l.b16 %v5650
        %v5683 = vunpack.c.l.b16 %v5651
        %v5684 = vunpack.c.l.b16 %v5652
        %v5685 = vunpack.c.l.b16 %v5653
        %v5686 = vunpack.c.l.b16 %v5654
        %v5687 = vunpack.c.l.b16 %v5655
        %v5688 = vunpack.c.l.b16 %v5656
        %v5689 = vunpack.c.l.b16 %v5657
        %v5690 = vunpack.c.l.b16 %v5658
        %v5691 = vunpack.c.l.b16 %v5659
        %v5692 = vunpack.c.l.b16 %v5660
        %v5693 = vpack.c.b16 %v5678, %v5677
        %v5694 = vpack.c.b16 %v5680, %v5679
        %v5695 = vpack.c.b16 %v5682, %v5681
        %v5696 = vpack.c.b16 %v5684, %v5683
        %v5697 = vpack.c.b16 %v5686, %v5685
        %v5698 = vpack.c.b16 %v5688, %v5687
        %v5699 = vpack.c.b16 %v5690, %v5689
        %v5700 = vpack.c.b16 %v5692, %v5691
        %5709 = vmatprep.subr.bf16.mxu0 0
        %5710 = vmatpush1.bf16.msra.mxu0 %v5693
        %5711 = vmatprep.subr.bf16.mxu0 0
        %5712 = vmatpush1.bf16.msra.mxu0 %v5694
        %5713 = vmatprep.subr.bf16.mxu0 0
        %5714 = vmatpush1.bf16.msra.mxu0 %v5695
        %5715 = vmatprep.subr.bf16.mxu0 0
        %5716 = vmatpush1.bf16.msra.mxu0 %v5696
        %5717 = vmatprep.subr.bf16.mxu0 0
        %5718 = vmatpush1.bf16.msra.mxu0 %v5697
        %5719 = vmatprep.subr.bf16.mxu0 0
        %5720 = vmatpush1.bf16.msra.mxu0 %v5698
        %5721 = vmatprep.subr.bf16.mxu0 0
        %5722 = vmatpush1.bf16.msra.mxu0 %v5699
        %5723 = vmatprep.subr.bf16.mxu0 0
        %5724 = vmatpush1.bf16.msra.mxu0 %v5700
        %5725 = vmatprep.subr.bf16.mxu0 0
        %5726 = vmatpush1.bf16.msra.mxu0 0
        %5727 = vmatprep.subr.bf16.mxu0 0
        %5728 = vmatpush1.bf16.msra.mxu0 0
        %5729 = vmatprep.subr.bf16.mxu0 0
        %5730 = vmatpush1.bf16.msra.mxu0 0
        %5731 = vmatprep.subr.bf16.mxu0 0
        %5732 = vmatpush1.bf16.msra.mxu0 0
        %5733 = vmatprep.subr.bf16.mxu0 0
        %5734 = vmatpush1.bf16.msra.mxu0 0
        %5735 = vmatprep.subr.bf16.mxu0 0
        %5736 = vmatpush1.bf16.msra.mxu0 0
        %5737 = vmatprep.subr.bf16.mxu0 0
        %5738 = vmatpush1.bf16.msra.mxu0 0
        %5739 = vmatprep.subr.bf16.mxu0 0
        %5740 = vmatpush1.bf16.msra.mxu0 0
        %5741 = vmatprep.mubr.bf16.mxu0 0
        %5742 = vmatmul.mubr.bf16.gmra.mrb[0].mxu0 %v5643
        %v5743 = vpop.f32.mrb[0].mxu0
        %v5744 = vadd.f32 0.0, %v5743
        %v5745 = vpop.f32.mrb[0].mxu0
        %v5746 = vpop.f32.mrb[0].mxu0
        %v5747 = vadd.f32 0.0, %v5746
        %v5748 = vpop.f32.mrb[0].mxu0
        %5749 = vdwg.mxu0
        %v5750 = vadd.f32 %v5592, %v5744
        %v5751 = vadd.f32 %v5595, %v5747
        %5752 = vmatprep.subr.bf16.mxu0 0
        %5753 = vmatpush1.bf16.msra.mxu0 %v5402
        %5754 = vmatprep.subr.bf16.mxu0 0
        %5755 = vmatpush1.bf16.msra.mxu0 0
        %5756 = vmatprep.subr.bf16.mxu0 0
        %5757 = vmatpush1.bf16.msra.mxu0 0
        %5758 = vmatprep.subr.bf16.mxu0 0
        %5759 = vmatpush1.bf16.msra.mxu0 0
        %5760 = vmatprep.subr.bf16.mxu0 0
        %5761 = vmatpush1.bf16.msra.mxu0 0
        %5762 = vmatprep.subr.bf16.mxu0 0
        %5763 = vmatpush1.bf16.msra.mxu0 0
        %5764 = vmatprep.subr.bf16.mxu0 0
        %5765 = vmatpush1.bf16.msra.mxu0 0
        %5766 = vmatprep.subr.bf16.mxu0 0
        %5767 = vmatpush1.bf16.msra.mxu0 0
        %5768 = vmatprep.subr.bf16.mxu0 0
        %5769 = vmatpush1.bf16.msra.mxu0 0
        %5770 = vmatprep.subr.bf16.mxu0 0
        %5771 = vmatpush1.bf16.msra.mxu0 0
        %5772 = vmatprep.subr.bf16.mxu0 0
        %5773 = vmatpush1.bf16.msra.mxu0 0
        %5774 = vmatprep.subr.bf16.mxu0 0
        %5775 = vmatpush1.bf16.msra.mxu0 0
        %5776 = vmatprep.subr.bf16.mxu0 0
        %5777 = vmatpush1.bf16.msra.mxu0 0
        %5778 = vmatprep.subr.bf16.mxu0 0
        %5779 = vmatpush1.bf16.msra.mxu0 0
        %5780 = vmatprep.subr.bf16.mxu0 0
        %5781 = vmatpush1.bf16.msra.mxu0 0
        %5782 = vmatprep.subr.bf16.mxu0 0
        %5783 = vmatpush1.bf16.msra.mxu0 0
        %5784 = vmatprep.mubr.bf16.mxu0 0
        %5785 = vmatmul.mubr.bf16.gmra.mrb[0].mxu0 %v3822
        %v5786 = vpop.f32.mrb[0].mxu0
        %v5787 = vadd.f32 0.0, %v5786
        %v5788 = vpop.f32.mrb[0].mxu0
        %v5789 = vpop.f32.mrb[0].mxu0
        %v5790 = vadd.f32 0.0, %v5789
        %v5791 = vpop.f32.mrb[0].mxu0
        %5792 = vdwg.mxu0
        %v5793 = vpack.c.bf16 %v5790, %v5787
        %s5794 = scalar_lea.vmem [#allocation7], 192
        %v5795 = vld [vmem:[%s5794] sm:$0xf]
        %v5796 = vld [vmem:[%s5794 + $0x4] sm:$0xf]
        %v5797 = vld [vmem:[%s5794 + $0x8] sm:$0xf]
        %v5798 = vld [vmem:[%s5794 + $0xc] sm:$0xf]
        %v5799 = vld [vmem:[%s5794 + $0x10] sm:$0xf]
        %v5800 = vld [vmem:[%s5794 + $0x14] sm:$0xf]
        %v5801 = vld [vmem:[%s5794 + $0x18] sm:$0xf]
        %v5802 = vld [vmem:[%s5794 + $0x1c] sm:$0xf]
        %v5803 = vld [vmem:[%s5794 + $0x20] sm:$0xf]
        %v5804 = vld [vmem:[%s5794 + $0x24] sm:$0xf]
        %v5805 = vld [vmem:[%s5794 + $0x28] sm:$0xf]
        %v5806 = vld [vmem:[%s5794 + $0x2c] sm:$0xf]
        %v5807 = vld [vmem:[%s5794 + $0x30] sm:$0xf]
        %v5808 = vld [vmem:[%s5794 + $0x34] sm:$0xf]
        %v5809 = vld [vmem:[%s5794 + $0x38] sm:$0xf]
        %v5810 = vld [vmem:[%s5794 + $0x3c] sm:$0xf]
        %v5827 = vunpack.c.l.b16 %v5795
        %v5828 = vunpack.c.l.b16 %v5796
        %v5829 = vunpack.c.l.b16 %v5797
        %v5830 = vunpack.c.l.b16 %v5798
        %v5831 = vunpack.c.l.b16 %v5799
        %v5832 = vunpack.c.l.b16 %v5800
        %v5833 = vunpack.c.l.b16 %v5801
        %v5834 = vunpack.c.l.b16 %v5802
        %v5835 = vunpack.c.l.b16 %v5803
        %v5836 = vunpack.c.l.b16 %v5804
        %v5837 = vunpack.c.l.b16 %v5805
        %v5838 = vunpack.c.l.b16 %v5806
        %v5839 = vunpack.c.l.b16 %v5807
        %v5840 = vunpack.c.l.b16 %v5808
        %v5841 = vunpack.c.l.b16 %v5809
        %v5842 = vunpack.c.l.b16 %v5810
        %v5843 = vpack.c.b16 %v5828, %v5827
        %v5844 = vpack.c.b16 %v5830, %v5829
        %v5845 = vpack.c.b16 %v5832, %v5831
        %v5846 = vpack.c.b16 %v5834, %v5833
        %v5847 = vpack.c.b16 %v5836, %v5835
        %v5848 = vpack.c.b16 %v5838, %v5837
        %v5849 = vpack.c.b16 %v5840, %v5839
        %v5850 = vpack.c.b16 %v5842, %v5841
        %5859 = vmatprep.subr.bf16.mxu0 0
        %5860 = vmatpush1.bf16.msra.mxu0 %v5843
        %5861 = vmatprep.subr.bf16.mxu0 0
        %5862 = vmatpush1.bf16.msra.mxu0 %v5844
        %5863 = vmatprep.subr.bf16.mxu0 0
        %5864 = vmatpush1.bf16.msra.mxu0 %v5845
        %5865 = vmatprep.subr.bf16.mxu0 0
        %5866 = vmatpush1.bf16.msra.mxu0 %v5846
        %5867 = vmatprep.subr.bf16.mxu0 0
        %5868 = vmatpush1.bf16.msra.mxu0 %v5847
        %5869 = vmatprep.subr.bf16.mxu0 0
        %5870 = vmatpush1.bf16.msra.mxu0 %v5848
        %5871 = vmatprep.subr.bf16.mxu0 0
        %5872 = vmatpush1.bf16.msra.mxu0 %v5849
        %5873 = vmatprep.subr.bf16.mxu0 0
        %5874 = vmatpush1.bf16.msra.mxu0 %v5850
        %5875 = vmatprep.subr.bf16.mxu0 0
        %5876 = vmatpush1.bf16.msra.mxu0 0
        %5877 = vmatprep.subr.bf16.mxu0 0
        %5878 = vmatpush1.bf16.msra.mxu0 0
        %5879 = vmatprep.subr.bf16.mxu0 0
        %5880 = vmatpush1.bf16.msra.mxu0 0
        %5881 = vmatprep.subr.bf16.mxu0 0
        %5882 = vmatpush1.bf16.msra.mxu0 0
        %5883 = vmatprep.subr.bf16.mxu0 0
        %5884 = vmatpush1.bf16.msra.mxu0 0
        %5885 = vmatprep.subr.bf16.mxu0 0
        %5886 = vmatpush1.bf16.msra.mxu0 0
        %5887 = vmatprep.subr.bf16.mxu0 0
        %5888 = vmatpush1.bf16.msra.mxu0 0
        %5889 = vmatprep.subr.bf16.mxu0 0
        %5890 = vmatpush1.bf16.msra.mxu0 0
        %5891 = vmatprep.mubr.bf16.mxu0 0
        %5892 = vmatmul.mubr.bf16.gmra.mrb[0].mxu0 %v5793
        %v5893 = vpop.f32.mrb[0].mxu0
        %v5894 = vadd.f32 0.0, %v5893
        %v5895 = vpop.f32.mrb[0].mxu0
        %v5896 = vpop.f32.mrb[0].mxu0
        %v5897 = vadd.f32 0.0, %v5896
        %v5898 = vpop.f32.mrb[0].mxu0
        %5899 = vdwg.mxu0
        %v5900 = vadd.f32 %v5750, %v5894
        %v5901 = vadd.f32 %v5751, %v5897
        %5902 = vmatprep.subr.bf16.mxu0 0
        %5903 = vmatpush1.bf16.msra.mxu0 %v5793
        %5904 = vmatprep.subr.bf16.mxu0 0
        %5905 = vmatpush1.bf16.msra.mxu0 0
        %5906 = vmatprep.subr.bf16.mxu0 0
        %5907 = vmatpush1.bf16.msra.mxu0 0
        %5908 = vmatprep.subr.bf16.mxu0 0
        %5909 = vmatpush1.bf16.msra.mxu0 0
        %5910 = vmatprep.subr.bf16.mxu0 0
        %5911 = vmatpush1.bf16.msra.mxu0 0
        %5912 = vmatprep.subr.bf16.mxu0 0
        %5913 = vmatpush1.bf16.msra.mxu0 0
        %5914 = vmatprep.subr.bf16.mxu0 0
        %5915 = vmatpush1.bf16.msra.mxu0 0
        %5916 = vmatprep.subr.bf16.mxu0 0
        %5917 = vmatpush1.bf16.msra.mxu0 0
        %5918 = vmatprep.subr.bf16.mxu0 0
        %5919 = vmatpush1.bf16.msra.mxu0 0
        %5920 = vmatprep.subr.bf16.mxu0 0
        %5921 = vmatpush1.bf16.msra.mxu0 0
        %5922 = vmatprep.subr.bf16.mxu0 0
        %5923 = vmatpush1.bf16.msra.mxu0 0
        %5924 = vmatprep.subr.bf16.mxu0 0
        %5925 = vmatpush1.bf16.msra.mxu0 0
        %5926 = vmatprep.subr.bf16.mxu0 0
        %5927 = vmatpush1.bf16.msra.mxu0 0
        %5928 = vmatprep.subr.bf16.mxu0 0
        %5929 = vmatpush1.bf16.msra.mxu0 0
        %5930 = vmatprep.subr.bf16.mxu0 0
        %5931 = vmatpush1.bf16.msra.mxu0 0
        %5932 = vmatprep.subr.bf16.mxu0 0
        %5933 = vmatpush1.bf16.msra.mxu0 0
        %5934 = vmatprep.mubr.bf16.mxu0 0
        %5935 = vmatmul.mubr.bf16.gmra.mrb[0].mxu0 %v3822
        %v5936 = vpop.f32.mrb[0].mxu0
        %v5937 = vadd.f32 0.0, %v5936
        %v5938 = vpop.f32.mrb[0].mxu0
        %v5939 = vpop.f32.mrb[0].mxu0
        %v5940 = vadd.f32 0.0, %v5939
        %v5941 = vpop.f32.mrb[0].mxu0
        %5942 = vdwg.mxu0
        %v5943 = vmul.f32 %v5937, 2.0
        %v5944 = vmul.f32 %v5940, 2.0
        %v5945 = vsub.f32 %v5943, %v5396
        %v5946 = vsub.f32 %v5944, %v5399
        %v5947 = vpack.c.bf16 %v5946, %v5945
        %s5948 = scalar_lea.vmem [#allocation7], 256
        %v5949 = vld [vmem:[%s5948] sm:$0xf]
        %v5950 = vld [vmem:[%s5948 + $0x4] sm:$0xf]
        %v5951 = vld [vmem:[%s5948 + $0x8] sm:$0xf]
        %v5952 = vld [vmem:[%s5948 + $0xc] sm:$0xf]
        %v5953 = vld [vmem:[%s5948 + $0x10] sm:$0xf]
        %v5954 = vld [vmem:[%s5948 + $0x14] sm:$0xf]
        %v5955 = vld [vmem:[%s5948 + $0x18] sm:$0xf]
        %v5956 = vld [vmem:[%s5948 + $0x1c] sm:$0xf]
        %v5957 = vld [vmem:[%s5948 + $0x20] sm:$0xf]
        %v5958 = vld [vmem:[%s5948 + $0x24] sm:$0xf]
        %v5959 = vld [vmem:[%s5948 + $0x28] sm:$0xf]
        %v5960 = vld [vmem:[%s5948 + $0x2c] sm:$0xf]
        %v5961 = vld [vmem:[%s5948 + $0x30] sm:$0xf]
        %v5962 = vld [vmem:[%s5948 + $0x34] sm:$0xf]
        %v5963 = vld [vmem:[%s5948 + $0x38] sm:$0xf]
        %v5964 = vld [vmem:[%s5948 + $0x3c] sm:$0xf]
        %v5981 = vunpack.c.l.b16 %v5949
        %v5982 = vunpack.c.l.b16 %v5950
        %v5983 = vunpack.c.l.b16 %v5951
        %v5984 = vunpack.c.l.b16 %v5952
        %v5985 = vunpack.c.l.b16 %v5953
        %v5986 = vunpack.c.l.b16 %v5954
        %v5987 = vunpack.c.l.b16 %v5955
        %v5988 = vunpack.c.l.b16 %v5956
        %v5989 = vunpack.c.l.b16 %v5957
        %v5990 = vunpack.c.l.b16 %v5958
        %v5991 = vunpack.c.l.b16 %v5959
        %v5992 = vunpack.c.l.b16 %v5960
        %v5993 = vunpack.c.l.b16 %v5961
        %v5994 = vunpack.c.l.b16 %v5962
        %v5995 = vunpack.c.l.b16 %v5963
        %v5996 = vunpack.c.l.b16 %v5964
        %v5997 = vpack.c.b16 %v5982, %v5981
        %v5998 = vpack.c.b16 %v5984, %v5983
        %v5999 = vpack.c.b16 %v5986, %v5985
        %v6000 = vpack.c.b16 %v5988, %v5987
        %v6001 = vpack.c.b16 %v5990, %v5989
        %v6002 = vpack.c.b16 %v5992, %v5991
        %v6003 = vpack.c.b16 %v5994, %v5993
        %v6004 = vpack.c.b16 %v5996, %v5995
        %6013 = vmatprep.subr.bf16.mxu0 0
        %6014 = vmatpush1.bf16.msra.mxu0 %v5997
        %6015 = vmatprep.subr.bf16.mxu0 0
        %6016 = vmatpush1.bf16.msra.mxu0 %v5998
        %6017 = vmatprep.subr.bf16.mxu0 0
        %6018 = vmatpush1.bf16.msra.mxu0 %v5999
        %6019 = vmatprep.subr.bf16.mxu0 0
        %6020 = vmatpush1.bf16.msra.mxu0 %v6000
        %6021 = vmatprep.subr.bf16.mxu0 0
        %6022 = vmatpush1.bf16.msra.mxu0 %v6001
        %6023 = vmatprep.subr.bf16.mxu0 0
        %6024 = vmatpush1.bf16.msra.mxu0 %v6002
        %6025 = vmatprep.subr.bf16.mxu0 0
        %6026 = vmatpush1.bf16.msra.mxu0 %v6003
        %6027 = vmatprep.subr.bf16.mxu0 0
        %6028 = vmatpush1.bf16.msra.mxu0 %v6004
        %6029 = vmatprep.subr.bf16.mxu0 0
        %6030 = vmatpush1.bf16.msra.mxu0 0
        %6031 = vmatprep.subr.bf16.mxu0 0
        %6032 = vmatpush1.bf16.msra.mxu0 0
        %6033 = vmatprep.subr.bf16.mxu0 0
        %6034 = vmatpush1.bf16.msra.mxu0 0
        %6035 = vmatprep.subr.bf16.mxu0 0
        %6036 = vmatpush1.bf16.msra.mxu0 0
        %6037 = vmatprep.subr.bf16.mxu0 0
        %6038 = vmatpush1.bf16.msra.mxu0 0
        %6039 = vmatprep.subr.bf16.mxu0 0
        %6040 = vmatpush1.bf16.msra.mxu0 0
        %6041 = vmatprep.subr.bf16.mxu0 0
        %6042 = vmatpush1.bf16.msra.mxu0 0
        %6043 = vmatprep.subr.bf16.mxu0 0
        %6044 = vmatpush1.bf16.msra.mxu0 0
        %6045 = vmatprep.mubr.bf16.mxu0 0
        %6046 = vmatmul.mubr.bf16.gmra.mrb[0].mxu0 %v5947
        %v6047 = vpop.f32.mrb[0].mxu0
        %v6048 = vadd.f32 0.0, %v6047
        %v6049 = vpop.f32.mrb[0].mxu0
        %v6050 = vpop.f32.mrb[0].mxu0
        %v6051 = vadd.f32 0.0, %v6050
        %v6052 = vpop.f32.mrb[0].mxu0
        %6053 = vdwg.mxu0
        %v6054 = vadd.f32 %v5900, %v6048
        %v6055 = vadd.f32 %v5901, %v6051
        %v6056 = vadd.f32 %v4410, %v6054
        %v6057 = vadd.f32 %v4413, %v6055
        %v6058 = vld [vmem:[%s12] sm:$0x1]
        %v6060 = vlaneseq
        %v6061 = vshrl.u32 %v6060, 7
        %v6062 = vsub.s32 0, %v6061
        %v6063 = vrot.slane %v6058, %v6062
        %v6065 = vadd.f32 %v6056, %v6063
        %v6066 = vadd.f32 %v6057, %v6063
        %v6067 = vtanh.pop %v6065
        %v6068 = vtanh.pop %v6066
        %v6069 = vmul.f32 %v5339, %v2973
        %v6070 = vmul.f32 %v5341, %v2974
        %v6071 = vsub.f32 1.0, %v5339
        %v6072 = vsub.f32 1.0, %v5341
        %v6073 = vmul.f32 %v6071, %v6067
        %v6074 = vmul.f32 %v6072, %v6068
        %v6075 = vadd.f32 %v6069, %v6073
        %v6076 = vadd.f32 %v6070, %v6074
        %s6077 = scalar_lea.vmem %s540, 16 [#allocation8]
        %6078 = vst [vmem:[%s6077] sm:$0xff] %v6075
        %6079 = vst [vmem:[%s6077 + $0x8] sm:$0xff] %v6076
        %s6080 = sand.u32 %s317, 1
        %s6081 = sand.u32 %s317, 1
        %s6082 = smul.addr %s6081, 32
        %s6083 = scalar_lea.vmem [#allocation8], %s6082
        // Predicated region
        $region123: #{encoder_forward.1} parent=105 // pred_check
          %p6084 = pneg %p327
        $region124: #{encoder_forward.1} parent=105 // pred_check_branch
          %6086 = sbr.rel (%p6084) target = $region126
        $region125: #{encoder_forward.1} parent=105 // pred_region
          %s6087 = smul.addr %s26, 2
          %s6088 = smul.addr %s6087, 8
          %s6089 = scalar_lea.vmem %s13, %s6088
          // Predicated region
          $region127: #{encoder_forward.1} parent=125 // pred_check
            _
          $region128: #{encoder_forward.1} parent=125 // pred_check_branch
            %6091 = sbr.rel (0) target = $region130
          $region129: #{encoder_forward.1} parent=125 // pred_region
            // Predicated region
            $region131: #{encoder_forward.1} parent=129 // pred_check
              _
            $region132: #{encoder_forward.1} parent=129 // pred_check_branch
              %6093 = sbr.rel (0) target = $region134
            $region133: #{encoder_forward.1} parent=129 // pred_region
              // Predicated region
              $region146: #{encoder_forward.1} parent=133 // pred_check
                _
              $region147: #{encoder_forward.1} parent=133 // pred_check_branch
                %6114 = sbr.rel (0) target = $region149
              $region148: #{encoder_forward.1} parent=133 // pred_region
                loop: start=0, step=1, limit=1
                $region150: #{encoder_forward.1} parent=148 // loop_pre_header
                  _
                $region151: #{encoder_forward.1} parent=148 // loop_header
                  %s6116 = sphi 0, %s6120
                  %p6117 = scmp.ge.s32.totalorder %s6116, 1
                  %s6121 = sphi %s6083, %s6083
                  %s6122 = sphi %s6089, %s6089
                $region152: #{encoder_forward.1} parent=148 // loop_header_branch
                  %6119 = sbr.rel (%p6117) target = $region156
                $region153: #{encoder_forward.1} parent=148 // loop_body
                  %v6123 = vld [vmem:[%s6121] sm:$0xff]
                  %6124 = vst [vmem:[%s6122] sm:$0xff] %v6123
                  %v6125 = vld [vmem:[%s6121 + $0x8] sm:$0xff]
                  %6126 = vst [vmem:[%s6122 + $0x8] sm:$0xff] %v6125
                  %v6127 = vld [vmem:[%s6121 + $0x10] sm:$0xff]
                  %6128 = vst [vmem:[%s6122 + $0x20] sm:$0xff] %v6127
                  %v6129 = vld [vmem:[%s6121 + $0x18] sm:$0xff]
                  %6130 = vst [vmem:[%s6122 + $0x28] sm:$0xff] %v6129
                $region154: #{encoder_forward.1} parent=148 // loop_footer
                  %s6120 = sadd.s32 1, %s6116
                $region155: #{encoder_forward.1} parent=148 // loop_footer_branch
                  %6115 = sbr.rel target = $region151
                $region156: #{encoder_forward.1} parent=148 // loop_exit
                  _
              $region149: #{encoder_forward.1} parent=133 // pred_fallthru
                _
              // Predicated region
              $region157: #{encoder_forward.1} parent=133 // pred_check
                _
              $region158: #{encoder_forward.1} parent=133 // pred_check_branch
                %6132 = sbr.rel target = $region160
              $region159: #{encoder_forward.1} parent=133 // pred_region
                _
              $region160: #{encoder_forward.1} parent=133 // pred_fallthru
                _
            $region134: #{encoder_forward.1} parent=129 // pred_fallthru
              _
            // Predicated region
            $region135: #{encoder_forward.1} parent=129 // pred_check
              _
            $region136: #{encoder_forward.1} parent=129 // pred_check_branch
              %6095 = sbr.rel target = $region138
            $region137: #{encoder_forward.1} parent=129 // pred_region
              loop: start=0, step=1, limit=1
              $region139: #{encoder_forward.1} parent=137 // loop_pre_header
                _
              $region140: #{encoder_forward.1} parent=137 // loop_header
                %s6098 = sphi 0, %s6102
                %p6099 = scmp.ge.s32.totalorder %s6098, 1
                %s6103 = sphi %s6083, %s6083
                %s6104 = sphi %s6089, %s6089
              $region141: #{encoder_forward.1} parent=137 // loop_header_branch
                %6101 = sbr.rel (%p6099) target = $region145
              $region142: #{encoder_forward.1} parent=137 // loop_body
                %v6105 = vld [vmem:[%s6103] sm:$0xff]
                %6106 = vst [vmem:[%s6104] sm:$0xff] %v6105
                %v6107 = vld [vmem:[%s6103 + $0x8] sm:$0xff]
                %6108 = vst [vmem:[%s6104 + $0x8] sm:$0xff] %v6107
                %v6109 = vld [vmem:[%s6103 + $0x10] sm:$0xff]
                %6110 = vst [vmem:[%s6104 + $0x20] sm:$0xff] %v6109
                %v6111 = vld [vmem:[%s6103 + $0x18] sm:$0xff]
                %6112 = vst [vmem:[%s6104 + $0x28] sm:$0xff] %v6111
              $region143: #{encoder_forward.1} parent=137 // loop_footer
                %s6102 = sadd.s32 1, %s6098
              $region144: #{encoder_forward.1} parent=137 // loop_footer_branch
                %6097 = sbr.rel target = $region140
              $region145: #{encoder_forward.1} parent=137 // loop_exit
                _
            $region138: #{encoder_forward.1} parent=129 // pred_fallthru
              _
          $region130: #{encoder_forward.1} parent=125 // pred_fallthru
            _
          %6133 = vnop
        $region126: #{encoder_forward.1} parent=105 // pred_fallthru
          _
      $region106: #{encoder_forward.1} parent=5 // pred_fallthru
        _
      %p6134 = scmp.le.s32.totalorder 2, %s21
      // Predicated region
      $region161: #{encoder_forward.1} parent=5 // pred_check
        %p6135 = pneg %p6134
      $region162: #{encoder_forward.1} parent=5 // pred_check_branch
        %6137 = sbr.rel (%p6135) target = $region164
      $region163: #{encoder_forward.1} parent=5 // pred_region
        %s6138 = ssub.s32 %s21, 2
        // Predicated region
        $region165: #{encoder_forward.1} parent=163 // pred_check
          %p6139 = pneg %p333
        $region166: #{encoder_forward.1} parent=163 // pred_check_branch
          %6141 = sbr.rel (%p6139) target = $region168
        $region167: #{encoder_forward.1} parent=163 // pred_region
          %s6142 = sand.u32 %s318, 1
          %s6143 = sand.u32 %s318, 1
          %s6144 = smul.addr %s6143, 32
          %s6145 = scalar_lea.vmem [#allocation8], %s6144
        $region168: #{encoder_forward.1} parent=163 // pred_fallthru
          _
      $region164: #{encoder_forward.1} parent=5 // pred_fallthru
        _
    $region6: #{encoder_forward.1} parent=1 // loop_footer
      %s25 = sadd.s32 1, %s21
    $region7: #{encoder_forward.1} parent=1 // loop_footer_branch
      %20 = sbr.rel target = $region3
    $region8: #{encoder_forward.1} parent=1 // loop_exit
      _
    %6146 = vsyncpa [#allocation4], 1
    %s6147 = scalar_lea.sflag [#allocation4], 1
    %6148 = vsyncpa %s6147, 1
    %6149 = vsyncpa [#allocation6], 1

</llo_original>
